<compile_context>
chip_gen: v7x
topology: tpu7x:2x2x1
jax: 0.10.0
libtpu: 0.0.40
codegen_flags: <defaults>
</compile_context>

<pallas_src>
import jax
import jax.numpy as jnp
from jax.experimental import pallas as pl
from jax.experimental.pallas import tpu as pltpu


def _round_up(v, m):
    return (v + m - 1) // m * m


# --------------------------------------------------------------------------- #
# Fused kernel: conv1x1x1+bn1+relu -> conv3x3x3+bn2+relu -> conv1x1x1+bn3
#               + residual + relu, all on one (batch, depth-tile) block.
# --------------------------------------------------------------------------- #
def _make_bottleneck_kernel(td, wp, ps):
    """td: output depth slices per tile, wp: padded W, ps: padded plane stride."""
    mi = td * ps                       # lanes of (valid + plane-pad) output/tile

    def kernel(x_ref, m_ref, w1_ref, b1_ref, w2_ref, b2_ref, w3_ref, b3_ref,
               o_ref):
        xm = x_ref[...]                                     # (Cin, Mp)  bf16

        # ---- stage 1: 1x1x1 conv (BN scale folded into w1) + bias + ReLU ----
        h1 = jnp.dot(w1_ref[...], xm, preferred_element_type=jnp.float32)
        h1 = jnp.maximum(h1 + b1_ref[...], 0.0)
        # conv2 pads h1 (not x) with zeros, so force the bias/ReLU result at
        # every padding voxel back to zero before the 3x3x3 taps.
        h1 = (h1 * m_ref[...]).astype(jnp.bfloat16)         # (P, Mp)

        # ---- stage 2: 3x3x3 conv as 27 shifted-slice matmuls (f32 accum) ----
        p_out = w2_ref.shape[1]
        acc = jnp.zeros((p_out, mi), jnp.float32)
        for kd in range(3):
            for kh in range(3):
                for kw in range(3):
                    off = kd * ps + kh * wp + kw
                    acc = acc + jnp.dot(w2_ref[kd * 9 + kh * 3 + kw],
                                        h1[:, off:off + mi],
                                        preferred_element_type=jnp.float32)
        h2 = jnp.maximum(acc + b2_ref[...], 0.0).astype(jnp.bfloat16)

        # ---- stage 3: 1x1x1 conv + bias + residual (from resident x) + ReLU -
        r0 = ps + wp + 1                                    # halo centre offset
        res = xm[:, r0:r0 + mi].astype(jnp.float32)
        y = jnp.dot(w3_ref[...], h2, preferred_element_type=jnp.float32)
        y = jnp.maximum(y + b3_ref[...] + res, 0.0)
        o_ref[...] = y.astype(o_ref.dtype)

    return kernel


# --------------------------------------------------------------------------- #
# Wrapper: layout prep, BN fold, one pallas_call, interior extraction
# --------------------------------------------------------------------------- #
def bottleneck_forward(x, params, td=None):
    """x: (N, Cin, D, H, W) float32 with Cin == planes * 4 (identity residual)."""
    N, Cin, D, H, W = x.shape
    P = params["w1"].shape[0]                    # planes
    Cout = 4 * P
    assert Cin == Cout, "identity residual requires in_planes == planes * 4"

    if td is None:
        td = D
    assert D % td == 0, "depth tile must divide D"
    n_dt = D // td
    Td2 = td + 2
    Hp, Wp = H + 2, W + 2
    HWp = Hp * Wp
    PS = _round_up(HWp, 128)                     # lane-aligned plane stride
    Mi = td * PS                                 # output lanes per tile
    Mp = Td2 * PS + _round_up(2 * Wp + 2, 128)   # halo tile lanes (+tap slack)

    # ---- fold BatchNorm (inference) into weights / per-channel bias ---------
    def fold_bn(bn, eps=1e-5):
        s = bn["gamma"] / jnp.sqrt(bn["var"] + eps)
        b = bn["beta"] - bn["mean"] * s
        return s.astype(jnp.float32), b.astype(jnp.float32).reshape(-1, 1)

    s1, b1 = fold_bn(params["bn1"])
    s2, b2 = fold_bn(params["bn2"])
    s3, b3 = fold_bn(params["bn3"])

    w1 = (params["w1"].reshape(P, Cin) * s1[:, None]).astype(jnp.bfloat16)
    w2 = params["w2"].reshape(P, P, 27) * s2[:, None, None]
    w2 = jnp.transpose(w2, (2, 0, 1)).astype(jnp.bfloat16)      # (27, Pout, Pin)
    w3 = (params["w3"].reshape(Cout, P) * s3[:, None]).astype(jnp.bfloat16)

    # ---- build haloed, lane-aligned, flattened depth tiles of x -------------
    def tile_and_flatten(v):                     # v: (n, c, D, H, W) float32
        n, c = v.shape[0], v.shape[1]
        vp = jnp.pad(v, ((0, 0), (0, 0), (1, 1), (1, 1), (1, 1)))
        vp = vp.reshape(n, c, D + 2, HWp)
        vp = jnp.pad(vp, ((0, 0), (0, 0), (0, 0), (0, PS - HWp)))
        tiles = [vp[:, :, i * td:i * td + Td2, :] for i in range(n_dt)]
        vt = jnp.stack(tiles, axis=1)            # (n, n_dt, c, Td2, PS)
        vt = vt.reshape(n, n_dt, c, Td2 * PS)
        return jnp.pad(vt, ((0, 0), (0, 0), (0, 0), (0, Mp - Td2 * PS)))

    x_t = tile_and_flatten(x).astype(jnp.bfloat16)               # (N,n_dt,Cin,Mp)
    mask = tile_and_flatten(jnp.ones((1, 1, D, H, W), jnp.float32))
    mask = mask.reshape(n_dt, 1, Mp)                             # (n_dt, 1, Mp)

    kernel = _make_bottleneck_kernel(td, Wp, PS)
    out_flat = pl.pallas_call(
        kernel,
        out_shape=jax.ShapeDtypeStruct((N, Cout, D * PS), jnp.float32),
        grid=(N, n_dt),
        in_specs=[
            pl.BlockSpec((None, None, Cin, Mp), lambda n, d: (n, d, 0, 0)),
            pl.BlockSpec((None, 1, Mp), lambda n, d: (d, 0, 0)),
            pl.BlockSpec((P, Cin), lambda n, d: (0, 0)),
            pl.BlockSpec((P, 1), lambda n, d: (0, 0)),
            pl.BlockSpec((27, P, P), lambda n, d: (0, 0, 0)),
            pl.BlockSpec((P, 1), lambda n, d: (0, 0)),
            pl.BlockSpec((Cout, P), lambda n, d: (0, 0)),
            pl.BlockSpec((Cout, 1), lambda n, d: (0, 0)),
        ],
        out_specs=pl.BlockSpec((None, Cout, Mi), lambda n, d: (n, 0, d)),
        compiler_params=pltpu.CompilerParams(
            dimension_semantics=("parallel", "parallel"),
            vmem_limit_bytes=48 * 1024 * 1024),
    )(x_t, mask, w1, b1, w2, b2, w3, b3)

    # interior extraction (drops padded-plane garbage lanes); stays NCDHW order.
    out = out_flat.reshape(N, Cout, D, PS)[..., :HWp]
    out = out.reshape(N, Cout, D, Hp, Wp)[..., :H, :W]
    return out


# --------------------------------------------------------------------------- #
# Pure-JAX reference (f32 lax 3D conv) for correctness checking
# --------------------------------------------------------------------------- #
def _conv3d_ref(x, w, padding=0):
    return jax.lax.conv_general_dilated(
        x, w, window_strides=(1, 1, 1),
        padding=[(padding, padding)] * 3,
        dimension_numbers=("NCDHW", "OIDHW", "NCDHW"))


def bottleneck_reference(x, params):
    def bn(y, p, eps=1e-5):
        s = p["gamma"] / jnp.sqrt(p["var"] + eps)
        b = p["beta"] - p["mean"] * s
        return y * s.reshape(1, -1, 1, 1, 1) + b.reshape(1, -1, 1, 1, 1)

    out = jax.nn.relu(bn(_conv3d_ref(x, params["w1"]), params["bn1"]))
    out = jax.nn.relu(bn(_conv3d_ref(out, params["w2"], padding=1), params["bn2"]))
    out = bn(_conv3d_ref(out, params["w3"]), params["bn3"])
    return jax.nn.relu(out + x)


# --------------------------------------------------------------------------- #
if __name__ == "__main__":
    key = jax.random.PRNGKey(0)
    kx, k1, k2, k3 = jax.random.split(key, 4)

    N, planes = 2, 4
    in_planes = planes * 4                     # 16 -> identity residual path
    D, H, W = 8, 16, 16

    x = jax.random.normal(kx, (N, in_planes, D, H, W), dtype=jnp.float32)

    def bn_params(c):
        r = jnp.arange(c, dtype=jnp.float32)
        return {
            "gamma": 1.0 + 0.05 * r / c,
            "beta": 0.01 * r,
            "mean": 0.02 * r,
            "var": 1.0 + 0.1 * r / c,
        }

    params = {
        "w1": 0.1 * jax.random.normal(k1, (planes, in_planes, 1, 1, 1), jnp.float32),
        "w2": 0.1 * jax.random.normal(k2, (planes, planes, 3, 3, 3), jnp.float32),
        "w3": 0.1 * jax.random.normal(k3, (in_planes, planes, 1, 1, 1), jnp.float32),
        "bn1": bn_params(planes),
        "bn2": bn_params(planes),
        "bn3": bn_params(in_planes),
    }

    # td=4 -> 2 depth tiles per batch element (exercises the halo-tiling path).
    out = bottleneck_forward(x, params, td=4)
    jax.block_until_ready(out)

    ref = bottleneck_reference(x, params)
    jax.block_until_ready(ref)

    max_err = float(jnp.max(jnp.abs(out - ref)))
    assert out.shape == x.shape, f"bad output shape {out.shape}"
    # matmul operands are bf16 (f32 accumulation) -> loosened tolerance.
    assert max_err < 5e-2, f"mismatch vs reference, max abs err = {max_err}"

    print("KERNEL_OK")
</pallas_src>

<mosaic_0001>
module attributes {stable_mosaic.version = 11 : i64} {
  func.func @kernel(%arg0: i32, %arg1: i32, %arg2: memref<1x1x16x2432xbf16, #tpu.memory_space<vmem>>, %arg3: memref<1x1x2432xf32, #tpu.memory_space<vmem>>, %arg4: memref<4x16xbf16, #tpu.memory_space<vmem>>, %arg5: memref<4x1xf32, #tpu.memory_space<vmem>>, %arg6: memref<27x4x4xbf16, #tpu.memory_space<vmem>>, %arg7: memref<4x1xf32, #tpu.memory_space<vmem>>, %arg8: memref<16x4xbf16, #tpu.memory_space<vmem>>, %arg9: memref<16x1xf32, #tpu.memory_space<vmem>>, %arg10: memref<1x16x1536xf32, #tpu.memory_space<vmem>>) attributes {dimension_semantics = [#tpu.dimension_semantics<parallel>, #tpu.dimension_semantics<parallel>], iteration_bounds = array<i64: 2, 2>, scalar_prefetch = 0 : i64, scratch_operands = 0 : i64, tpu.core_type = #tpu.core_type<tc>, window_params = [{transform_indices = @transform_0, window_bounds = array<i64: 1, 1, 16, 2432>}, {transform_indices = @transform_1, window_bounds = array<i64: 1, 1, 2432>}, {pipeline_mode = #tpu.pipeline_mode<synchronous>, transform_indices = @transform_2, window_bounds = array<i64: 4, 16>}, {pipeline_mode = #tpu.pipeline_mode<synchronous>, transform_indices = @transform_3, window_bounds = array<i64: 4, 1>}, {pipeline_mode = #tpu.pipeline_mode<synchronous>, transform_indices = @transform_4, window_bounds = array<i64: 27, 4, 4>}, {pipeline_mode = #tpu.pipeline_mode<synchronous>, transform_indices = @transform_5, window_bounds = array<i64: 4, 1>}, {pipeline_mode = #tpu.pipeline_mode<synchronous>, transform_indices = @transform_6, window_bounds = array<i64: 16, 4>}, {pipeline_mode = #tpu.pipeline_mode<synchronous>, transform_indices = @transform_7, window_bounds = array<i64: 16, 1>}, {transform_indices = @transform_8, window_bounds = array<i64: 1, 16, 1536>}]} {
    %c0 = arith.constant 0 : index
    %c0_0 = arith.constant 0 : index
    %c0_1 = arith.constant 0 : index
    %c0_2 = arith.constant 0 : index
    %0 = vector.load %arg2[%c0, %c0_0, %c0_1, %c0_2] : memref<1x1x16x2432xbf16, #tpu.memory_space<vmem>>, vector<1x1x16x2432xbf16>
    %1 = vector.shape_cast %0 : vector<1x1x16x2432xbf16> to vector<16x2432xbf16>
    %c0_3 = arith.constant 0 : index
    %c0_4 = arith.constant 0 : index
    %2 = vector.load %arg4[%c0_3, %c0_4] : memref<4x16xbf16, #tpu.memory_space<vmem>>, vector<4x16xbf16>
    %cst = arith.constant dense<0.000000e+00> : vector<4x2432xf32>
    %3 = tpu.matmul %2, %1, %cst {dimension_numbers = #tpu.dot_dimension_numbers<[1], [0], [0], [1], [0, 0, 1, 1], [], []>} : vector<4x16xbf16>, vector<16x2432xbf16>, vector<4x2432xf32> -> vector<4x2432xf32>
    %c0_5 = arith.constant 0 : index
    %c0_6 = arith.constant 0 : index
    %4 = vector.load %arg5[%c0_5, %c0_6] : memref<4x1xf32, #tpu.memory_space<vmem>>, vector<4x1xf32>
    %5 = vector.broadcast %4 : vector<4x1xf32> to vector<4x2432xf32>
    %6 = arith.addf %3, %5 : vector<4x2432xf32>
    %cst_7 = arith.constant 0.000000e+00 : f32
    %7 = vector.broadcast %cst_7 : f32 to vector<4x2432xf32>
    %8 = arith.maximumf %6, %7 : vector<4x2432xf32>
    %c0_8 = arith.constant 0 : index
    %c0_9 = arith.constant 0 : index
    %c0_10 = arith.constant 0 : index
    %9 = vector.load %arg3[%c0_8, %c0_9, %c0_10] : memref<1x1x2432xf32, #tpu.memory_space<vmem>>, vector<1x1x2432xf32>
    %10 = vector.shape_cast %9 : vector<1x1x2432xf32> to vector<1x2432xf32>
    %11 = vector.broadcast %10 : vector<1x2432xf32> to vector<4x2432xf32>
    %12 = arith.mulf %8, %11 : vector<4x2432xf32>
    %13 = arith.truncf %12 : vector<4x2432xf32> to vector<4x2432xbf16>
    %cst_11 = arith.constant 0.000000e+00 : f32
    %14 = vector.broadcast %cst_11 : f32 to vector<4x1536xf32>
    %c0_12 = arith.constant 0 : index
    %c0_13 = arith.constant 0 : index
    %c0_14 = arith.constant 0 : index
    %15 = vector.load %arg6[%c0_12, %c0_13, %c0_14] : memref<27x4x4xbf16, #tpu.memory_space<vmem>>, vector<1x4x4xbf16>
    %16 = vector.shape_cast %15 : vector<1x4x4xbf16> to vector<4x4xbf16>
    %17 = vector.extract_strided_slice %13 {offsets = [0, 0], sizes = [4, 1536], strides = [1, 1]} : vector<4x2432xbf16> to vector<4x1536xbf16>
    %cst_15 = arith.constant dense<0.000000e+00> : vector<4x1536xf32>
    %18 = tpu.matmul %16, %17, %cst_15 {dimension_numbers = #tpu.dot_dimension_numbers<[1], [0], [0], [1], [0, 0, 1, 1], [], []>} : vector<4x4xbf16>, vector<4x1536xbf16>, vector<4x1536xf32> -> vector<4x1536xf32>
    %19 = arith.addf %14, %18 : vector<4x1536xf32>
    %c1 = arith.constant 1 : index
    %c0_16 = arith.constant 0 : index
    %c0_17 = arith.constant 0 : index
    %20 = vector.load %arg6[%c1, %c0_16, %c0_17] : memref<27x4x4xbf16, #tpu.memory_space<vmem>>, vector<1x4x4xbf16>
    %21 = vector.shape_cast %20 : vector<1x4x4xbf16> to vector<4x4xbf16>
    %22 = vector.extract_strided_slice %13 {offsets = [0, 1], sizes = [4, 1536], strides = [1, 1]} : vector<4x2432xbf16> to vector<4x1536xbf16>
    %cst_18 = arith.constant dense<0.000000e+00> : vector<4x1536xf32>
    %23 = tpu.matmul %21, %22, %cst_18 {dimension_numbers = #tpu.dot_dimension_numbers<[1], [0], [0], [1], [0, 0, 1, 1], [], []>} : vector<4x4xbf16>, vector<4x1536xbf16>, vector<4x1536xf32> -> vector<4x1536xf32>
    %24 = arith.addf %19, %23 : vector<4x1536xf32>
    %c2 = arith.constant 2 : index
    %c0_19 = arith.constant 0 : index
    %c0_20 = arith.constant 0 : index
    %25 = vector.load %arg6[%c2, %c0_19, %c0_20] : memref<27x4x4xbf16, #tpu.memory_space<vmem>>, vector<1x4x4xbf16>
    %26 = vector.shape_cast %25 : vector<1x4x4xbf16> to vector<4x4xbf16>
    %27 = vector.extract_strided_slice %13 {offsets = [0, 2], sizes = [4, 1536], strides = [1, 1]} : vector<4x2432xbf16> to vector<4x1536xbf16>
    %cst_21 = arith.constant dense<0.000000e+00> : vector<4x1536xf32>
    %28 = tpu.matmul %26, %27, %cst_21 {dimension_numbers = #tpu.dot_dimension_numbers<[1], [0], [0], [1], [0, 0, 1, 1], [], []>} : vector<4x4xbf16>, vector<4x1536xbf16>, vector<4x1536xf32> -> vector<4x1536xf32>
    %29 = arith.addf %24, %28 : vector<4x1536xf32>
    %c3 = arith.constant 3 : index
    %c0_22 = arith.constant 0 : index
    %c0_23 = arith.constant 0 : index
    %30 = vector.load %arg6[%c3, %c0_22, %c0_23] : memref<27x4x4xbf16, #tpu.memory_space<vmem>>, vector<1x4x4xbf16>
    %31 = vector.shape_cast %30 : vector<1x4x4xbf16> to vector<4x4xbf16>
    %32 = vector.extract_strided_slice %13 {offsets = [0, 18], sizes = [4, 1536], strides = [1, 1]} : vector<4x2432xbf16> to vector<4x1536xbf16>
    %cst_24 = arith.constant dense<0.000000e+00> : vector<4x1536xf32>
    %33 = tpu.matmul %31, %32, %cst_24 {dimension_numbers = #tpu.dot_dimension_numbers<[1], [0], [0], [1], [0, 0, 1, 1], [], []>} : vector<4x4xbf16>, vector<4x1536xbf16>, vector<4x1536xf32> -> vector<4x1536xf32>
    %34 = arith.addf %29, %33 : vector<4x1536xf32>
    %c4 = arith.constant 4 : index
    %c0_25 = arith.constant 0 : index
    %c0_26 = arith.constant 0 : index
    %35 = vector.load %arg6[%c4, %c0_25, %c0_26] : memref<27x4x4xbf16, #tpu.memory_space<vmem>>, vector<1x4x4xbf16>
    %36 = vector.shape_cast %35 : vector<1x4x4xbf16> to vector<4x4xbf16>
    %37 = vector.extract_strided_slice %13 {offsets = [0, 19], sizes = [4, 1536], strides = [1, 1]} : vector<4x2432xbf16> to vector<4x1536xbf16>
    %cst_27 = arith.constant dense<0.000000e+00> : vector<4x1536xf32>
    %38 = tpu.matmul %36, %37, %cst_27 {dimension_numbers = #tpu.dot_dimension_numbers<[1], [0], [0], [1], [0, 0, 1, 1], [], []>} : vector<4x4xbf16>, vector<4x1536xbf16>, vector<4x1536xf32> -> vector<4x1536xf32>
    %39 = arith.addf %34, %38 : vector<4x1536xf32>
    %c5 = arith.constant 5 : index
    %c0_28 = arith.constant 0 : index
    %c0_29 = arith.constant 0 : index
    %40 = vector.load %arg6[%c5, %c0_28, %c0_29] : memref<27x4x4xbf16, #tpu.memory_space<vmem>>, vector<1x4x4xbf16>
    %41 = vector.shape_cast %40 : vector<1x4x4xbf16> to vector<4x4xbf16>
    %42 = vector.extract_strided_slice %13 {offsets = [0, 20], sizes = [4, 1536], strides = [1, 1]} : vector<4x2432xbf16> to vector<4x1536xbf16>
    %cst_30 = arith.constant dense<0.000000e+00> : vector<4x1536xf32>
    %43 = tpu.matmul %41, %42, %cst_30 {dimension_numbers = #tpu.dot_dimension_numbers<[1], [0], [0], [1], [0, 0, 1, 1], [], []>} : vector<4x4xbf16>, vector<4x1536xbf16>, vector<4x1536xf32> -> vector<4x1536xf32>
    %44 = arith.addf %39, %43 : vector<4x1536xf32>
    %c6 = arith.constant 6 : index
    %c0_31 = arith.constant 0 : index
    %c0_32 = arith.constant 0 : index
    %45 = vector.load %arg6[%c6, %c0_31, %c0_32] : memref<27x4x4xbf16, #tpu.memory_space<vmem>>, vector<1x4x4xbf16>
    %46 = vector.shape_cast %45 : vector<1x4x4xbf16> to vector<4x4xbf16>
    %47 = vector.extract_strided_slice %13 {offsets = [0, 36], sizes = [4, 1536], strides = [1, 1]} : vector<4x2432xbf16> to vector<4x1536xbf16>
    %cst_33 = arith.constant dense<0.000000e+00> : vector<4x1536xf32>
    %48 = tpu.matmul %46, %47, %cst_33 {dimension_numbers = #tpu.dot_dimension_numbers<[1], [0], [0], [1], [0, 0, 1, 1], [], []>} : vector<4x4xbf16>, vector<4x1536xbf16>, vector<4x1536xf32> -> vector<4x1536xf32>
    %49 = arith.addf %44, %48 : vector<4x1536xf32>
    %c7 = arith.constant 7 : index
    %c0_34 = arith.constant 0 : index
    %c0_35 = arith.constant 0 : index
    %50 = vector.load %arg6[%c7, %c0_34, %c0_35] : memref<27x4x4xbf16, #tpu.memory_space<vmem>>, vector<1x4x4xbf16>
    %51 = vector.shape_cast %50 : vector<1x4x4xbf16> to vector<4x4xbf16>
    %52 = vector.extract_strided_slice %13 {offsets = [0, 37], sizes = [4, 1536], strides = [1, 1]} : vector<4x2432xbf16> to vector<4x1536xbf16>
    %cst_36 = arith.constant dense<0.000000e+00> : vector<4x1536xf32>
    %53 = tpu.matmul %51, %52, %cst_36 {dimension_numbers = #tpu.dot_dimension_numbers<[1], [0], [0], [1], [0, 0, 1, 1], [], []>} : vector<4x4xbf16>, vector<4x1536xbf16>, vector<4x1536xf32> -> vector<4x1536xf32>
    %54 = arith.addf %49, %53 : vector<4x1536xf32>
    %c8 = arith.constant 8 : index
    %c0_37 = arith.constant 0 : index
    %c0_38 = arith.constant 0 : index
    %55 = vector.load %arg6[%c8, %c0_37, %c0_38] : memref<27x4x4xbf16, #tpu.memory_space<vmem>>, vector<1x4x4xbf16>
    %56 = vector.shape_cast %55 : vector<1x4x4xbf16> to vector<4x4xbf16>
    %57 = vector.extract_strided_slice %13 {offsets = [0, 38], sizes = [4, 1536], strides = [1, 1]} : vector<4x2432xbf16> to vector<4x1536xbf16>
    %cst_39 = arith.constant dense<0.000000e+00> : vector<4x1536xf32>
    %58 = tpu.matmul %56, %57, %cst_39 {dimension_numbers = #tpu.dot_dimension_numbers<[1], [0], [0], [1], [0, 0, 1, 1], [], []>} : vector<4x4xbf16>, vector<4x1536xbf16>, vector<4x1536xf32> -> vector<4x1536xf32>
    %59 = arith.addf %54, %58 : vector<4x1536xf32>
    %c9 = arith.constant 9 : index
    %c0_40 = arith.constant 0 : index
    %c0_41 = arith.constant 0 : index
    %60 = vector.load %arg6[%c9, %c0_40, %c0_41] : memref<27x4x4xbf16, #tpu.memory_space<vmem>>, vector<1x4x4xbf16>
    %61 = vector.shape_cast %60 : vector<1x4x4xbf16> to vector<4x4xbf16>
    %62 = vector.extract_strided_slice %13 {offsets = [0, 384], sizes = [4, 1536], strides = [1, 1]} : vector<4x2432xbf16> to vector<4x1536xbf16>
    %cst_42 = arith.constant dense<0.000000e+00> : vector<4x1536xf32>
    %63 = tpu.matmul %61, %62, %cst_42 {dimension_numbers = #tpu.dot_dimension_numbers<[1], [0], [0], [1], [0, 0, 1, 1], [], []>} : vector<4x4xbf16>, vector<4x1536xbf16>, vector<4x1536xf32> -> vector<4x1536xf32>
    %64 = arith.addf %59, %63 : vector<4x1536xf32>
    %c10 = arith.constant 10 : index
    %c0_43 = arith.constant 0 : index
    %c0_44 = arith.constant 0 : index
    %65 = vector.load %arg6[%c10, %c0_43, %c0_44] : memref<27x4x4xbf16, #tpu.memory_space<vmem>>, vector<1x4x4xbf16>
    %66 = vector.shape_cast %65 : vector<1x4x4xbf16> to vector<4x4xbf16>
    %67 = vector.extract_strided_slice %13 {offsets = [0, 385], sizes = [4, 1536], strides = [1, 1]} : vector<4x2432xbf16> to vector<4x1536xbf16>
    %cst_45 = arith.constant dense<0.000000e+00> : vector<4x1536xf32>
    %68 = tpu.matmul %66, %67, %cst_45 {dimension_numbers = #tpu.dot_dimension_numbers<[1], [0], [0], [1], [0, 0, 1, 1], [], []>} : vector<4x4xbf16>, vector<4x1536xbf16>, vector<4x1536xf32> -> vector<4x1536xf32>
    %69 = arith.addf %64, %68 : vector<4x1536xf32>
    %c11 = arith.constant 11 : index
    %c0_46 = arith.constant 0 : index
    %c0_47 = arith.constant 0 : index
    %70 = vector.load %arg6[%c11, %c0_46, %c0_47] : memref<27x4x4xbf16, #tpu.memory_space<vmem>>, vector<1x4x4xbf16>
    %71 = vector.shape_cast %70 : vector<1x4x4xbf16> to vector<4x4xbf16>
    %72 = vector.extract_strided_slice %13 {offsets = [0, 386], sizes = [4, 1536], strides = [1, 1]} : vector<4x2432xbf16> to vector<4x1536xbf16>
    %cst_48 = arith.constant dense<0.000000e+00> : vector<4x1536xf32>
    %73 = tpu.matmul %71, %72, %cst_48 {dimension_numbers = #tpu.dot_dimension_numbers<[1], [0], [0], [1], [0, 0, 1, 1], [], []>} : vector<4x4xbf16>, vector<4x1536xbf16>, vector<4x1536xf32> -> vector<4x1536xf32>
    %74 = arith.addf %69, %73 : vector<4x1536xf32>
    %c12 = arith.constant 12 : index
    %c0_49 = arith.constant 0 : index
    %c0_50 = arith.constant 0 : index
    %75 = vector.load %arg6[%c12, %c0_49, %c0_50] : memref<27x4x4xbf16, #tpu.memory_space<vmem>>, vector<1x4x4xbf16>
    %76 = vector.shape_cast %75 : vector<1x4x4xbf16> to vector<4x4xbf16>
    %77 = vector.extract_strided_slice %13 {offsets = [0, 402], sizes = [4, 1536], strides = [1, 1]} : vector<4x2432xbf16> to vector<4x1536xbf16>
    %cst_51 = arith.constant dense<0.000000e+00> : vector<4x1536xf32>
    %78 = tpu.matmul %76, %77, %cst_51 {dimension_numbers = #tpu.dot_dimension_numbers<[1], [0], [0], [1], [0, 0, 1, 1], [], []>} : vector<4x4xbf16>, vector<4x1536xbf16>, vector<4x1536xf32> -> vector<4x1536xf32>
    %79 = arith.addf %74, %78 : vector<4x1536xf32>
    %c13 = arith.constant 13 : index
    %c0_52 = arith.constant 0 : index
    %c0_53 = arith.constant 0 : index
    %80 = vector.load %arg6[%c13, %c0_52, %c0_53] : memref<27x4x4xbf16, #tpu.memory_space<vmem>>, vector<1x4x4xbf16>
    %81 = vector.shape_cast %80 : vector<1x4x4xbf16> to vector<4x4xbf16>
    %82 = vector.extract_strided_slice %13 {offsets = [0, 403], sizes = [4, 1536], strides = [1, 1]} : vector<4x2432xbf16> to vector<4x1536xbf16>
    %cst_54 = arith.constant dense<0.000000e+00> : vector<4x1536xf32>
    %83 = tpu.matmul %81, %82, %cst_54 {dimension_numbers = #tpu.dot_dimension_numbers<[1], [0], [0], [1], [0, 0, 1, 1], [], []>} : vector<4x4xbf16>, vector<4x1536xbf16>, vector<4x1536xf32> -> vector<4x1536xf32>
    %84 = arith.addf %79, %83 : vector<4x1536xf32>
    %c14 = arith.constant 14 : index
    %c0_55 = arith.constant 0 : index
    %c0_56 = arith.constant 0 : index
    %85 = vector.load %arg6[%c14, %c0_55, %c0_56] : memref<27x4x4xbf16, #tpu.memory_space<vmem>>, vector<1x4x4xbf16>
    %86 = vector.shape_cast %85 : vector<1x4x4xbf16> to vector<4x4xbf16>
    %87 = vector.extract_strided_slice %13 {offsets = [0, 404], sizes = [4, 1536], strides = [1, 1]} : vector<4x2432xbf16> to vector<4x1536xbf16>
    %cst_57 = arith.constant dense<0.000000e+00> : vector<4x1536xf32>
    %88 = tpu.matmul %86, %87, %cst_57 {dimension_numbers = #tpu.dot_dimension_numbers<[1], [0], [0], [1], [0, 0, 1, 1], [], []>} : vector<4x4xbf16>, vector<4x1536xbf16>, vector<4x1536xf32> -> vector<4x1536xf32>
    %89 = arith.addf %84, %88 : vector<4x1536xf32>
    %c15 = arith.constant 15 : index
    %c0_58 = arith.constant 0 : index
    %c0_59 = arith.constant 0 : index
    %90 = vector.load %arg6[%c15, %c0_58, %c0_59] : memref<27x4x4xbf16, #tpu.memory_space<vmem>>, vector<1x4x4xbf16>
    %91 = vector.shape_cast %90 : vector<1x4x4xbf16> to vector<4x4xbf16>
    %92 = vector.extract_strided_slice %13 {offsets = [0, 420], sizes = [4, 1536], strides = [1, 1]} : vector<4x2432xbf16> to vector<4x1536xbf16>
    %cst_60 = arith.constant dense<0.000000e+00> : vector<4x1536xf32>
    %93 = tpu.matmul %91, %92, %cst_60 {dimension_numbers = #tpu.dot_dimension_numbers<[1], [0], [0], [1], [0, 0, 1, 1], [], []>} : vector<4x4xbf16>, vector<4x1536xbf16>, vector<4x1536xf32> -> vector<4x1536xf32>
    %94 = arith.addf %89, %93 : vector<4x1536xf32>
    %c16 = arith.constant 16 : index
    %c0_61 = arith.constant 0 : index
    %c0_62 = arith.constant 0 : index
    %95 = vector.load %arg6[%c16, %c0_61, %c0_62] : memref<27x4x4xbf16, #tpu.memory_space<vmem>>, vector<1x4x4xbf16>
    %96 = vector.shape_cast %95 : vector<1x4x4xbf16> to vector<4x4xbf16>
    %97 = vector.extract_strided_slice %13 {offsets = [0, 421], sizes = [4, 1536], strides = [1, 1]} : vector<4x2432xbf16> to vector<4x1536xbf16>
    %cst_63 = arith.constant dense<0.000000e+00> : vector<4x1536xf32>
    %98 = tpu.matmul %96, %97, %cst_63 {dimension_numbers = #tpu.dot_dimension_numbers<[1], [0], [0], [1], [0, 0, 1, 1], [], []>} : vector<4x4xbf16>, vector<4x1536xbf16>, vector<4x1536xf32> -> vector<4x1536xf32>
    %99 = arith.addf %94, %98 : vector<4x1536xf32>
    %c17 = arith.constant 17 : index
    %c0_64 = arith.constant 0 : index
    %c0_65 = arith.constant 0 : index
    %100 = vector.load %arg6[%c17, %c0_64, %c0_65] : memref<27x4x4xbf16, #tpu.memory_space<vmem>>, vector<1x4x4xbf16>
    %101 = vector.shape_cast %100 : vector<1x4x4xbf16> to vector<4x4xbf16>
    %102 = vector.extract_strided_slice %13 {offsets = [0, 422], sizes = [4, 1536], strides = [1, 1]} : vector<4x2432xbf16> to vector<4x1536xbf16>
    %cst_66 = arith.constant dense<0.000000e+00> : vector<4x1536xf32>
    %103 = tpu.matmul %101, %102, %cst_66 {dimension_numbers = #tpu.dot_dimension_numbers<[1], [0], [0], [1], [0, 0, 1, 1], [], []>} : vector<4x4xbf16>, vector<4x1536xbf16>, vector<4x1536xf32> -> vector<4x1536xf32>
    %104 = arith.addf %99, %103 : vector<4x1536xf32>
    %c18 = arith.constant 18 : index
    %c0_67 = arith.constant 0 : index
    %c0_68 = arith.constant 0 : index
    %105 = vector.load %arg6[%c18, %c0_67, %c0_68] : memref<27x4x4xbf16, #tpu.memory_space<vmem>>, vector<1x4x4xbf16>
    %106 = vector.shape_cast %105 : vector<1x4x4xbf16> to vector<4x4xbf16>
    %107 = vector.extract_strided_slice %13 {offsets = [0, 768], sizes = [4, 1536], strides = [1, 1]} : vector<4x2432xbf16> to vector<4x1536xbf16>
    %cst_69 = arith.constant dense<0.000000e+00> : vector<4x1536xf32>
    %108 = tpu.matmul %106, %107, %cst_69 {dimension_numbers = #tpu.dot_dimension_numbers<[1], [0], [0], [1], [0, 0, 1, 1], [], []>} : vector<4x4xbf16>, vector<4x1536xbf16>, vector<4x1536xf32> -> vector<4x1536xf32>
    %109 = arith.addf %104, %108 : vector<4x1536xf32>
    %c19 = arith.constant 19 : index
    %c0_70 = arith.constant 0 : index
    %c0_71 = arith.constant 0 : index
    %110 = vector.load %arg6[%c19, %c0_70, %c0_71] : memref<27x4x4xbf16, #tpu.memory_space<vmem>>, vector<1x4x4xbf16>
    %111 = vector.shape_cast %110 : vector<1x4x4xbf16> to vector<4x4xbf16>
    %112 = vector.extract_strided_slice %13 {offsets = [0, 769], sizes = [4, 1536], strides = [1, 1]} : vector<4x2432xbf16> to vector<4x1536xbf16>
    %cst_72 = arith.constant dense<0.000000e+00> : vector<4x1536xf32>
    %113 = tpu.matmul %111, %112, %cst_72 {dimension_numbers = #tpu.dot_dimension_numbers<[1], [0], [0], [1], [0, 0, 1, 1], [], []>} : vector<4x4xbf16>, vector<4x1536xbf16>, vector<4x1536xf32> -> vector<4x1536xf32>
    %114 = arith.addf %109, %113 : vector<4x1536xf32>
    %c20 = arith.constant 20 : index
    %c0_73 = arith.constant 0 : index
    %c0_74 = arith.constant 0 : index
    %115 = vector.load %arg6[%c20, %c0_73, %c0_74] : memref<27x4x4xbf16, #tpu.memory_space<vmem>>, vector<1x4x4xbf16>
    %116 = vector.shape_cast %115 : vector<1x4x4xbf16> to vector<4x4xbf16>
    %117 = vector.extract_strided_slice %13 {offsets = [0, 770], sizes = [4, 1536], strides = [1, 1]} : vector<4x2432xbf16> to vector<4x1536xbf16>
    %cst_75 = arith.constant dense<0.000000e+00> : vector<4x1536xf32>
    %118 = tpu.matmul %116, %117, %cst_75 {dimension_numbers = #tpu.dot_dimension_numbers<[1], [0], [0], [1], [0, 0, 1, 1], [], []>} : vector<4x4xbf16>, vector<4x1536xbf16>, vector<4x1536xf32> -> vector<4x1536xf32>
    %119 = arith.addf %114, %118 : vector<4x1536xf32>
    %c21 = arith.constant 21 : index
    %c0_76 = arith.constant 0 : index
    %c0_77 = arith.constant 0 : index
    %120 = vector.load %arg6[%c21, %c0_76, %c0_77] : memref<27x4x4xbf16, #tpu.memory_space<vmem>>, vector<1x4x4xbf16>
    %121 = vector.shape_cast %120 : vector<1x4x4xbf16> to vector<4x4xbf16>
    %122 = vector.extract_strided_slice %13 {offsets = [0, 786], sizes = [4, 1536], strides = [1, 1]} : vector<4x2432xbf16> to vector<4x1536xbf16>
    %cst_78 = arith.constant dense<0.000000e+00> : vector<4x1536xf32>
    %123 = tpu.matmul %121, %122, %cst_78 {dimension_numbers = #tpu.dot_dimension_numbers<[1], [0], [0], [1], [0, 0, 1, 1], [], []>} : vector<4x4xbf16>, vector<4x1536xbf16>, vector<4x1536xf32> -> vector<4x1536xf32>
    %124 = arith.addf %119, %123 : vector<4x1536xf32>
    %c22 = arith.constant 22 : index
    %c0_79 = arith.constant 0 : index
    %c0_80 = arith.constant 0 : index
    %125 = vector.load %arg6[%c22, %c0_79, %c0_80] : memref<27x4x4xbf16, #tpu.memory_space<vmem>>, vector<1x4x4xbf16>
    %126 = vector.shape_cast %125 : vector<1x4x4xbf16> to vector<4x4xbf16>
    %127 = vector.extract_strided_slice %13 {offsets = [0, 787], sizes = [4, 1536], strides = [1, 1]} : vector<4x2432xbf16> to vector<4x1536xbf16>
    %cst_81 = arith.constant dense<0.000000e+00> : vector<4x1536xf32>
    %128 = tpu.matmul %126, %127, %cst_81 {dimension_numbers = #tpu.dot_dimension_numbers<[1], [0], [0], [1], [0, 0, 1, 1], [], []>} : vector<4x4xbf16>, vector<4x1536xbf16>, vector<4x1536xf32> -> vector<4x1536xf32>
    %129 = arith.addf %124, %128 : vector<4x1536xf32>
    %c23 = arith.constant 23 : index
    %c0_82 = arith.constant 0 : index
    %c0_83 = arith.constant 0 : index
    %130 = vector.load %arg6[%c23, %c0_82, %c0_83] : memref<27x4x4xbf16, #tpu.memory_space<vmem>>, vector<1x4x4xbf16>
    %131 = vector.shape_cast %130 : vector<1x4x4xbf16> to vector<4x4xbf16>
    %132 = vector.extract_strided_slice %13 {offsets = [0, 788], sizes = [4, 1536], strides = [1, 1]} : vector<4x2432xbf16> to vector<4x1536xbf16>
    %cst_84 = arith.constant dense<0.000000e+00> : vector<4x1536xf32>
    %133 = tpu.matmul %131, %132, %cst_84 {dimension_numbers = #tpu.dot_dimension_numbers<[1], [0], [0], [1], [0, 0, 1, 1], [], []>} : vector<4x4xbf16>, vector<4x1536xbf16>, vector<4x1536xf32> -> vector<4x1536xf32>
    %134 = arith.addf %129, %133 : vector<4x1536xf32>
    %c24 = arith.constant 24 : index
    %c0_85 = arith.constant 0 : index
    %c0_86 = arith.constant 0 : index
    %135 = vector.load %arg6[%c24, %c0_85, %c0_86] : memref<27x4x4xbf16, #tpu.memory_space<vmem>>, vector<1x4x4xbf16>
    %136 = vector.shape_cast %135 : vector<1x4x4xbf16> to vector<4x4xbf16>
    %137 = vector.extract_strided_slice %13 {offsets = [0, 804], sizes = [4, 1536], strides = [1, 1]} : vector<4x2432xbf16> to vector<4x1536xbf16>
    %cst_87 = arith.constant dense<0.000000e+00> : vector<4x1536xf32>
    %138 = tpu.matmul %136, %137, %cst_87 {dimension_numbers = #tpu.dot_dimension_numbers<[1], [0], [0], [1], [0, 0, 1, 1], [], []>} : vector<4x4xbf16>, vector<4x1536xbf16>, vector<4x1536xf32> -> vector<4x1536xf32>
    %139 = arith.addf %134, %138 : vector<4x1536xf32>
    %c25 = arith.constant 25 : index
    %c0_88 = arith.constant 0 : index
    %c0_89 = arith.constant 0 : index
    %140 = vector.load %arg6[%c25, %c0_88, %c0_89] : memref<27x4x4xbf16, #tpu.memory_space<vmem>>, vector<1x4x4xbf16>
    %141 = vector.shape_cast %140 : vector<1x4x4xbf16> to vector<4x4xbf16>
    %142 = vector.extract_strided_slice %13 {offsets = [0, 805], sizes = [4, 1536], strides = [1, 1]} : vector<4x2432xbf16> to vector<4x1536xbf16>
    %cst_90 = arith.constant dense<0.000000e+00> : vector<4x1536xf32>
    %143 = tpu.matmul %141, %142, %cst_90 {dimension_numbers = #tpu.dot_dimension_numbers<[1], [0], [0], [1], [0, 0, 1, 1], [], []>} : vector<4x4xbf16>, vector<4x1536xbf16>, vector<4x1536xf32> -> vector<4x1536xf32>
    %144 = arith.addf %139, %143 : vector<4x1536xf32>
    %c26 = arith.constant 26 : index
    %c0_91 = arith.constant 0 : index
    %c0_92 = arith.constant 0 : index
    %145 = vector.load %arg6[%c26, %c0_91, %c0_92] : memref<27x4x4xbf16, #tpu.memory_space<vmem>>, vector<1x4x4xbf16>
    %146 = vector.shape_cast %145 : vector<1x4x4xbf16> to vector<4x4xbf16>
    %147 = vector.extract_strided_slice %13 {offsets = [0, 806], sizes = [4, 1536], strides = [1, 1]} : vector<4x2432xbf16> to vector<4x1536xbf16>
    %cst_93 = arith.constant dense<0.000000e+00> : vector<4x1536xf32>
    %148 = tpu.matmul %146, %147, %cst_93 {dimension_numbers = #tpu.dot_dimension_numbers<[1], [0], [0], [1], [0, 0, 1, 1], [], []>} : vector<4x4xbf16>, vector<4x1536xbf16>, vector<4x1536xf32> -> vector<4x1536xf32>
    %149 = arith.addf %144, %148 : vector<4x1536xf32>
    %c0_94 = arith.constant 0 : index
    %c0_95 = arith.constant 0 : index
    %150 = vector.load %arg7[%c0_94, %c0_95] : memref<4x1xf32, #tpu.memory_space<vmem>>, vector<4x1xf32>
    %151 = vector.broadcast %150 : vector<4x1xf32> to vector<4x1536xf32>
    %152 = arith.addf %149, %151 : vector<4x1536xf32>
    %cst_96 = arith.constant 0.000000e+00 : f32
    %153 = vector.broadcast %cst_96 : f32 to vector<4x1536xf32>
    %154 = arith.maximumf %152, %153 : vector<4x1536xf32>
    %155 = arith.truncf %154 : vector<4x1536xf32> to vector<4x1536xbf16>
    %156 = vector.extract_strided_slice %1 {offsets = [0, 403], sizes = [16, 1536], strides = [1, 1]} : vector<16x2432xbf16> to vector<16x1536xbf16>
    %157 = arith.extf %156 : vector<16x1536xbf16> to vector<16x1536xf32>
    %c0_97 = arith.constant 0 : index
    %c0_98 = arith.constant 0 : index
    %158 = vector.load %arg8[%c0_97, %c0_98] : memref<16x4xbf16, #tpu.memory_space<vmem>>, vector<16x4xbf16>
    %cst_99 = arith.constant dense<0.000000e+00> : vector<16x1536xf32>
    %159 = tpu.matmul %158, %155, %cst_99 {dimension_numbers = #tpu.dot_dimension_numbers<[1], [0], [0], [1], [0, 0, 1, 1], [], []>} : vector<16x4xbf16>, vector<4x1536xbf16>, vector<16x1536xf32> -> vector<16x1536xf32>
    %c0_100 = arith.constant 0 : index
    %c0_101 = arith.constant 0 : index
    %160 = vector.load %arg9[%c0_100, %c0_101] : memref<16x1xf32, #tpu.memory_space<vmem>>, vector<16x1xf32>
    %161 = vector.broadcast %160 : vector<16x1xf32> to vector<16x1536xf32>
    %162 = arith.addf %159, %161 : vector<16x1536xf32>
    %163 = arith.addf %162, %157 : vector<16x1536xf32>
    %cst_102 = arith.constant 0.000000e+00 : f32
    %164 = vector.broadcast %cst_102 : f32 to vector<16x1536xf32>
    %165 = arith.maximumf %163, %164 : vector<16x1536xf32>
    %c0_103 = arith.constant 0 : index
    %c0_104 = arith.constant 0 : index
    %c0_105 = arith.constant 0 : index
    %166 = vector.load %arg10[%c0_103, %c0_104, %c0_105] : memref<1x16x1536xf32, #tpu.memory_space<vmem>>, vector<1x16x1536xf32>
    %167 = vector.shape_cast %166 : vector<1x16x1536xf32> to vector<16x1536xf32>
    %168 = vector.shape_cast %165 : vector<16x1536xf32> to vector<1x16x1536xf32>
    tpu.vector_store %arg10[%c0_103, %c0_104, %c0_105], %168 {strides = array<i32>} : memref<1x16x1536xf32, #tpu.memory_space<vmem>>, vector<1x16x1536xf32>,
    return
  }
  func.func @transform_0(%arg0: i32, %arg1: i32) -> (i32, i32, i32, i32) {
    %c0_i32 = arith.constant 0 : i32
    %c0_i32_0 = arith.constant 0 : i32
    %c0_i32_1 = arith.constant 0 : i32
    return %arg0, %arg1, %c0_i32, %c0_i32_0 : i32, i32, i32, i32
  }
  func.func @transform_1(%arg0: i32, %arg1: i32) -> (i32, i32, i32) {
    %c0_i32 = arith.constant 0 : i32
    %c0_i32_0 = arith.constant 0 : i32
    %c0_i32_1 = arith.constant 0 : i32
    return %arg1, %c0_i32, %c0_i32_0 : i32, i32, i32
  }
  func.func @transform_2(%arg0: i32, %arg1: i32) -> (i32, i32) {
    %c0_i32 = arith.constant 0 : i32
    %c0_i32_0 = arith.constant 0 : i32
    %c0_i32_1 = arith.constant 0 : i32
    return %c0_i32, %c0_i32_0 : i32, i32
  }
  func.func @transform_3(%arg0: i32, %arg1: i32) -> (i32, i32) {
    %c0_i32 = arith.constant 0 : i32
    %c0_i32_0 = arith.constant 0 : i32
    %c0_i32_1 = arith.constant 0 : i32
    return %c0_i32, %c0_i32_0 : i32, i32
  }
  func.func @transform_4(%arg0: i32, %arg1: i32) -> (i32, i32, i32) {
    %c0_i32 = arith.constant 0 : i32
    %c0_i32_0 = arith.constant 0 : i32
    %c0_i32_1 = arith.constant 0 : i32
    %c0_i32_2 = arith.constant 0 : i32
    return %c0_i32, %c0_i32_0, %c0_i32_1 : i32, i32, i32
  }
  func.func @transform_5(%arg0: i32, %arg1: i32) -> (i32, i32) {
    %c0_i32 = arith.constant 0 : i32
    %c0_i32_0 = arith.constant 0 : i32
    %c0_i32_1 = arith.constant 0 : i32
    return %c0_i32, %c0_i32_0 : i32, i32
  }
  func.func @transform_6(%arg0: i32, %arg1: i32) -> (i32, i32) {
    %c0_i32 = arith.constant 0 : i32
    %c0_i32_0 = arith.constant 0 : i32
    %c0_i32_1 = arith.constant 0 : i32
    return %c0_i32, %c0_i32_0 : i32, i32
  }
  func.func @transform_7(%arg0: i32, %arg1: i32) -> (i32, i32) {
    %c0_i32 = arith.constant 0 : i32
    %c0_i32_0 = arith.constant 0 : i32
    %c0_i32_1 = arith.constant 0 : i32
    return %c0_i32, %c0_i32_0 : i32, i32
  }
  func.func @transform_8(%arg0: i32, %arg1: i32) -> (i32, i32, i32) {
    %c0_i32 = arith.constant 0 : i32
    %c0_i32_0 = arith.constant 0 : i32
    return %arg0, %c0_i32, %arg1 : i32, i32, i32
  }
}

</mosaic_0001>

<llo_original>
// kernel: tpu_custom_call.1
$region0: #{tpu_custom_call.1}
  #allocation0 [shape = 'u32[]', space=smem, size = 0x4, offset = 0x4, fixed_abs, tag = 'smem constant byte address 0x4 - core index']
  #allocation1 [shape = 'u32[144,128]{1,0:T(1,128)}', space=vmem, size = 0x12000, scoped, tag = 'internal scratch']
  %s0 = inlined_call_operand.hbm [shape: bf16[2,2,16,2432], index: 0, kind: input, shape index: {}]
  %s1 = inlined_call_operand.vmem [shape: f32[2,1,2432], index: 1, kind: input, shape index: {}]
  %s2 = inlined_call_operand.vmem [shape: bf16[4,16], index: 2, kind: input, shape index: {}]
  %s3 = inlined_call_operand.vmem [shape: f32[4,1], index: 3, kind: input, shape index: {}]
  %s4 = inlined_call_operand.vmem [shape: bf16[27,4,4], index: 4, kind: input, shape index: {}]
  %s5 = inlined_call_operand.vmem [shape: f32[4,1], index: 5, kind: input, shape index: {}]
  %s6 = inlined_call_operand.vmem [shape: bf16[16,4], index: 6, kind: input, shape index: {}]
  %s7 = inlined_call_operand.vmem [shape: f32[16,1], index: 7, kind: input, shape index: {}]
  %s8 = inlined_call_operand.hbm [shape: f32[2,16,3072], index: 8, kind: output, shape index: {}]
  %s9 = sld [smem:[#allocation0]]
  $region69: #{tpu_custom_call.1} parent=0
    _
  %s11 = ssub.s32 1, %s9
  %s12 = scalar_select 0, %s11, %s9
  $region1: #{tpu_custom_call.1} parent=0
    #allocation2 [shape = 'u8[155648]{0}', space=vmem, size = 0x26000, scoped, tag = 'input window, operand 0']
    #allocation3 [shape = 's32[2]{0}', space=sflag, size = 0x8, scoped, tag = 'scoped memory for tpu_custom_call.1']
    #allocation4 [shape = 's32[2]{0}', space=sflag, size = 0x8, scoped, tag = 'scoped memory for tpu_custom_call.1']
    #allocation5 [shape = 'u8[196608]{0}', space=vmem, size = 0x30000, scoped, tag = 'output window, operand 0']
    %13 = vsyncpa [#allocation3], 0
    %s14 = scalar_lea.sflag [#allocation3], 1
    %15 = vsyncpa %s14, 0
    %16 = vsyncpa [#allocation4], 0
    %s17 = scalar_lea.sflag [#allocation4], 1
    %18 = vsyncpa %s17, 0
    loop: start=0, step=1, limit=6
    $region2: #{tpu_custom_call.1} parent=1 // loop_pre_header
      _
    $region3: #{tpu_custom_call.1} parent=1 // loop_header
      %s20 = sphi 0, %s24
      %p21 = scmp.ge.s32.totalorder %s20, 6
      %s27 = sphi 0, %s39
      %s28 = sphi 0, %s35
      %s29 = sphi 0, %s27
      %s30 = sphi 0, %s28
      %s31 = sphi 0, %s29
      %s32 = sphi 0, %s30
      %s44 = sphi 0, %s46
      %s47 = sphi 0, %s44
      %s48 = sphi 0, %s47
      %s64 = sphi 0, %s48
      %s70 = sphi 0, %s72
      %s73 = sphi 0, %s70
      %s74 = sphi 0, %s73
      %s90 = sphi 0, %s74
      %s94 = sphi 0, %s94
      %s96 = sphi 0, %s94
      %s97 = sphi 0, %s96
      %s111 = sphi 0, %s97
      %s115 = sphi 0, %s115
      %s117 = sphi 0, %s115
      %s118 = sphi 0, %s117
      %s132 = sphi 0, %s118
      %s136 = sphi 0, %s136
      %s138 = sphi 0, %s136
      %s139 = sphi 0, %s138
      %s153 = sphi 0, %s139
      %s157 = sphi 0, %s157
      %s159 = sphi 0, %s157
      %s160 = sphi 0, %s159
      %s174 = sphi 0, %s160
      %s178 = sphi 0, %s178
      %s180 = sphi 0, %s178
      %s181 = sphi 0, %s180
      %s195 = sphi 0, %s181
      %s199 = sphi 0, %s199
      %s201 = sphi 0, %s199
      %s202 = sphi 0, %s201
      %s216 = sphi 0, %s202
      %s224 = sphi 0, %s226
      %s227 = sphi 0, %s224
      %s228 = sphi 0, %s227
      %s244 = sphi 0, %s228
    $region4: #{tpu_custom_call.1} parent=1 // loop_header_branch
      %23 = sbr.rel (%p21) target = $region8
    $region5: #{tpu_custom_call.1} parent=1 // loop_body
      %s25 = ssub.s32 %s20, 1
      %s26 = ssub.s32 %s20, 2
      %s33 = sadd.s32 1, %s28
      %p34 = scmp.ge.s32.totalorder %s33, 2
      %s35 = scalar_select %p34, 0, %s33
      %s36 = sadd.s32 1, %s27
      %s37 = scalar_select %p34, %s36, %s27
      %p38 = scmp.ge.s32.totalorder %s37, 2
      %s39 = scalar_select %p38, 0, %s37
      %s40 = ssub.s32 %s27, %s39
      %s41 = ssub.s32 %s28, %s35
      %s42 = sor.u32 %s40, %s41
      %p43 = scmp.eq.s32.totalorder %s42, 0
      %s45 = sadd.s32 %s44, 1
      %s46 = scalar_select %p43, %s44, %s45
      %p49 = pneg %p43
      %p50 = scmp.eq.s32.totalorder %s20, 3
      %p51 = por %p49, %p50
      %p52 = scmp.ne.s32.totalorder %s44, %s47
      %p53 = scmp.eq.s32.totalorder %s20, 0
      %p54 = por %p52, %p53
      %p55 = scmp.ne.s32.totalorder %s44, %s47
      %p56 = scmp.eq.s32.totalorder %s25, 3
      %p57 = por %p55, %p56
      %p58 = scmp.ne.s32.totalorder %s47, %s48
      %p59 = scmp.eq.s32.totalorder %s25, 0
      %p60 = por %p58, %p59
      %p61 = scmp.ne.s32.totalorder %s47, %s48
      %p62 = scmp.eq.s32.totalorder %s26, 3
      %p63 = por %p61, %p62
      %p65 = scmp.ne.s32.totalorder %s48, %s64
      %p66 = scmp.eq.s32.totalorder %s26, 0
      %p67 = por %p65, %p66
      %s68 = ssub.s32 %s28, %s35
      %p69 = scmp.eq.s32.totalorder %s68, 0
      %s71 = sadd.s32 %s70, 1
      %s72 = scalar_select %p69, %s70, %s71
      %p75 = pneg %p69
      %p76 = scmp.eq.s32.totalorder %s20, 3
      %p77 = por %p75, %p76
      %p78 = scmp.ne.s32.totalorder %s70, %s73
      %p79 = scmp.eq.s32.totalorder %s20, 0
      %p80 = por %p78, %p79
      %p81 = scmp.ne.s32.totalorder %s70, %s73
      %p82 = scmp.eq.s32.totalorder %s25, 3
      %p83 = por %p81, %p82
      %p84 = scmp.ne.s32.totalorder %s73, %s74
      %p85 = scmp.eq.s32.totalorder %s25, 0
      %p86 = por %p84, %p85
      %p87 = scmp.ne.s32.totalorder %s73, %s74
      %p88 = scmp.eq.s32.totalorder %s26, 3
      %p89 = por %p87, %p88
      %p91 = scmp.ne.s32.totalorder %s74, %s90
      %p92 = scmp.eq.s32.totalorder %s26, 0
      %p93 = por %p91, %p92
      %s95 = sadd.s32 %s94, 1
      %p98 = scmp.eq.s32.totalorder %s20, 3
      %p99 = scmp.ne.s32.totalorder %s94, %s96
      %p100 = scmp.eq.s32.totalorder %s20, 0
      %p101 = por %p99, %p100
      %p102 = scmp.ne.s32.totalorder %s94, %s96
      %p103 = scmp.eq.s32.totalorder %s25, 3
      %p104 = por %p102, %p103
      %p105 = scmp.ne.s32.totalorder %s96, %s97
      %p106 = scmp.eq.s32.totalorder %s25, 0
      %p107 = por %p105, %p106
      %p108 = scmp.ne.s32.totalorder %s96, %s97
      %p109 = scmp.eq.s32.totalorder %s26, 3
      %p110 = por %p108, %p109
      %p112 = scmp.ne.s32.totalorder %s97, %s111
      %p113 = scmp.eq.s32.totalorder %s26, 0
      %p114 = por %p112, %p113
      %s116 = sadd.s32 %s115, 1
      %p119 = scmp.eq.s32.totalorder %s20, 3
      %p120 = scmp.ne.s32.totalorder %s115, %s117
      %p121 = scmp.eq.s32.totalorder %s20, 0
      %p122 = por %p120, %p121
      %p123 = scmp.ne.s32.totalorder %s115, %s117
      %p124 = scmp.eq.s32.totalorder %s25, 3
      %p125 = por %p123, %p124
      %p126 = scmp.ne.s32.totalorder %s117, %s118
      %p127 = scmp.eq.s32.totalorder %s25, 0
      %p128 = por %p126, %p127
      %p129 = scmp.ne.s32.totalorder %s117, %s118
      %p130 = scmp.eq.s32.totalorder %s26, 3
      %p131 = por %p129, %p130
      %p133 = scmp.ne.s32.totalorder %s118, %s132
      %p134 = scmp.eq.s32.totalorder %s26, 0
      %p135 = por %p133, %p134
      %s137 = sadd.s32 %s136, 1
      %p140 = scmp.eq.s32.totalorder %s20, 3
      %p141 = scmp.ne.s32.totalorder %s136, %s138
      %p142 = scmp.eq.s32.totalorder %s20, 0
      %p143 = por %p141, %p142
      %p144 = scmp.ne.s32.totalorder %s136, %s138
      %p145 = scmp.eq.s32.totalorder %s25, 3
      %p146 = por %p144, %p145
      %p147 = scmp.ne.s32.totalorder %s138, %s139
      %p148 = scmp.eq.s32.totalorder %s25, 0
      %p149 = por %p147, %p148
      %p150 = scmp.ne.s32.totalorder %s138, %s139
      %p151 = scmp.eq.s32.totalorder %s26, 3
      %p152 = por %p150, %p151
      %p154 = scmp.ne.s32.totalorder %s139, %s153
      %p155 = scmp.eq.s32.totalorder %s26, 0
      %p156 = por %p154, %p155
      %s158 = sadd.s32 %s157, 1
      %p161 = scmp.eq.s32.totalorder %s20, 3
      %p162 = scmp.ne.s32.totalorder %s157, %s159
      %p163 = scmp.eq.s32.totalorder %s20, 0
      %p164 = por %p162, %p163
      %p165 = scmp.ne.s32.totalorder %s157, %s159
      %p166 = scmp.eq.s32.totalorder %s25, 3
      %p167 = por %p165, %p166
      %p168 = scmp.ne.s32.totalorder %s159, %s160
      %p169 = scmp.eq.s32.totalorder %s25, 0
      %p170 = por %p168, %p169
      %p171 = scmp.ne.s32.totalorder %s159, %s160
      %p172 = scmp.eq.s32.totalorder %s26, 3
      %p173 = por %p171, %p172
      %p175 = scmp.ne.s32.totalorder %s160, %s174
      %p176 = scmp.eq.s32.totalorder %s26, 0
      %p177 = por %p175, %p176
      %s179 = sadd.s32 %s178, 1
      %p182 = scmp.eq.s32.totalorder %s20, 3
      %p183 = scmp.ne.s32.totalorder %s178, %s180
      %p184 = scmp.eq.s32.totalorder %s20, 0
      %p185 = por %p183, %p184
      %p186 = scmp.ne.s32.totalorder %s178, %s180
      %p187 = scmp.eq.s32.totalorder %s25, 3
      %p188 = por %p186, %p187
      %p189 = scmp.ne.s32.totalorder %s180, %s181
      %p190 = scmp.eq.s32.totalorder %s25, 0
      %p191 = por %p189, %p190
      %p192 = scmp.ne.s32.totalorder %s180, %s181
      %p193 = scmp.eq.s32.totalorder %s26, 3
      %p194 = por %p192, %p193
      %p196 = scmp.ne.s32.totalorder %s181, %s195
      %p197 = scmp.eq.s32.totalorder %s26, 0
      %p198 = por %p196, %p197
      %s200 = sadd.s32 %s199, 1
      %p203 = scmp.eq.s32.totalorder %s20, 3
      %p204 = scmp.ne.s32.totalorder %s199, %s201
      %p205 = scmp.eq.s32.totalorder %s20, 0
      %p206 = por %p204, %p205
      %p207 = scmp.ne.s32.totalorder %s199, %s201
      %p208 = scmp.eq.s32.totalorder %s25, 3
      %p209 = por %p207, %p208
      %p210 = scmp.ne.s32.totalorder %s201, %s202
      %p211 = scmp.eq.s32.totalorder %s25, 0
      %p212 = por %p210, %p211
      %p213 = scmp.ne.s32.totalorder %s201, %s202
      %p214 = scmp.eq.s32.totalorder %s26, 3
      %p215 = por %p213, %p214
      %p217 = scmp.ne.s32.totalorder %s202, %s216
      %p218 = scmp.eq.s32.totalorder %s26, 0
      %p219 = por %p217, %p218
      %s220 = ssub.s32 %s27, %s39
      %s221 = ssub.s32 %s28, %s35
      %s222 = sor.u32 %s220, %s221
      %p223 = scmp.eq.s32.totalorder %s222, 0
      %s225 = sadd.s32 %s224, 1
      %s226 = scalar_select %p223, %s224, %s225
      %p229 = pneg %p223
      %p230 = scmp.eq.s32.totalorder %s20, 3
      %p231 = por %p229, %p230
      %p232 = scmp.ne.s32.totalorder %s224, %s227
      %p233 = scmp.eq.s32.totalorder %s20, 0
      %p234 = por %p232, %p233
      %p235 = scmp.ne.s32.totalorder %s224, %s227
      %p236 = scmp.eq.s32.totalorder %s25, 3
      %p237 = por %p235, %p236
      %p238 = scmp.ne.s32.totalorder %s227, %s228
      %p239 = scmp.eq.s32.totalorder %s25, 0
      %p240 = por %p238, %p239
      %p241 = scmp.ne.s32.totalorder %s227, %s228
      %p242 = scmp.eq.s32.totalorder %s26, 3
      %p243 = por %p241, %p242
      %p245 = scmp.ne.s32.totalorder %s228, %s244
      %p246 = scmp.eq.s32.totalorder %s26, 0
      %p247 = por %p245, %p246
      %p248 = scmp.le.s32.totalorder 1, %s20
      %p249 = scmp.lt.s32.totalorder %s20, 5
      %p250 = pnand %p248, %p249
      %p251 = pneg %p250
      // Predicated region
      $region9: #{tpu_custom_call.1} parent=5 // pred_check
        _
      $region10: #{tpu_custom_call.1} parent=5 // pred_check_branch
        %253 = sbr.rel (%p250) target = $region12
      $region11: #{tpu_custom_call.1} parent=5 // pred_region
        %s254 = ssub.s32 %s20, 1
        // Predicated region
        $region13: #{tpu_custom_call.1} parent=11 // pred_check
          %p255 = pneg %p107
        $region14: #{tpu_custom_call.1} parent=11 // pred_check_branch
          %257 = sbr.rel (%p255) target = $region16
        $region15: #{tpu_custom_call.1} parent=11 // pred_region
          _
        $region16: #{tpu_custom_call.1} parent=11 // pred_fallthru
          _
        // Predicated region
        $region17: #{tpu_custom_call.1} parent=11 // pred_check
          %p258 = pneg %p128
        $region18: #{tpu_custom_call.1} parent=11 // pred_check_branch
          %260 = sbr.rel (%p258) target = $region20
        $region19: #{tpu_custom_call.1} parent=11 // pred_region
          _
        $region20: #{tpu_custom_call.1} parent=11 // pred_fallthru
          _
        // Predicated region
        $region21: #{tpu_custom_call.1} parent=11 // pred_check
          %p261 = pneg %p149
        $region22: #{tpu_custom_call.1} parent=11 // pred_check_branch
          %263 = sbr.rel (%p261) target = $region24
        $region23: #{tpu_custom_call.1} parent=11 // pred_region
          _
        $region24: #{tpu_custom_call.1} parent=11 // pred_fallthru
          _
        // Predicated region
        $region25: #{tpu_custom_call.1} parent=11 // pred_check
          %p264 = pneg %p170
        $region26: #{tpu_custom_call.1} parent=11 // pred_check_branch
          %266 = sbr.rel (%p264) target = $region28
        $region27: #{tpu_custom_call.1} parent=11 // pred_region
          _
        $region28: #{tpu_custom_call.1} parent=11 // pred_fallthru
          _
        // Predicated region
        $region29: #{tpu_custom_call.1} parent=11 // pred_check
          %p267 = pneg %p191
        $region30: #{tpu_custom_call.1} parent=11 // pred_check_branch
          %269 = sbr.rel (%p267) target = $region32
        $region31: #{tpu_custom_call.1} parent=11 // pred_region
          _
        $region32: #{tpu_custom_call.1} parent=11 // pred_fallthru
          _
        // Predicated region
        $region33: #{tpu_custom_call.1} parent=11 // pred_check
          %p270 = pneg %p212
        $region34: #{tpu_custom_call.1} parent=11 // pred_check_branch
          %272 = sbr.rel (%p270) target = $region36
        $region35: #{tpu_custom_call.1} parent=11 // pred_region
          _
        $region36: #{tpu_custom_call.1} parent=11 // pred_fallthru
          _
      $region12: #{tpu_custom_call.1} parent=5 // pred_fallthru
        _
      %p273 = scmp.lt.s32.totalorder %s20, 4
      // Predicated region
      $region37: #{tpu_custom_call.1} parent=5 // pred_check
        %p274 = pneg %p273
      $region38: #{tpu_custom_call.1} parent=5 // pred_check_branch
        %276 = sbr.rel (%p274) target = $region40
      $region39: #{tpu_custom_call.1} parent=5 // pred_region
        // Predicated region
        $region41: #{tpu_custom_call.1} parent=39 // pred_check
          %p277 = pneg %p54
        $region42: #{tpu_custom_call.1} parent=39 // pred_check_branch
          %279 = sbr.rel (%p277) target = $region44
        $region43: #{tpu_custom_call.1} parent=39 // pred_region
          %s280 = sand.u32 %s44, 1
          %s281 = scalar_lea.sflag [#allocation3], %s280
          %s282 = sand.u32 %s44, 1
          %s283 = smul.addr %s282, 152
          %s284 = scalar_lea.vmem [#allocation2], %s283
          %s286 = ssub.s32 2432, 2432
          %287 = vsyncadd %s281, %s286
          %s288 = smul.addr %s28, 38
          %s289 = smul.addr %s27, 76
          %s290 = sadd.s32 %s288, %s289
          %s291 = smul.addr %s290, 64
          %s292 = scalar_lea.hbm %s0, %s291
          %s293 = sshll.u32 %s284, 4
          %s294 = int_to_ptr.vmem [resolvable:$true] %s293
          %299 = dma.hbm_to_vmem [thread:$0]  %s292, 2432, %s294, %s281, 1216, 1216, 76
        $region44: #{tpu_custom_call.1} parent=39 // pred_fallthru
          _
        // Predicated region
        $region45: #{tpu_custom_call.1} parent=39 // pred_check
          %p300 = pneg %p80
        $region46: #{tpu_custom_call.1} parent=39 // pred_check_branch
          %302 = sbr.rel (%p300) target = $region48
        $region47: #{tpu_custom_call.1} parent=39 // pred_region
          %p303 = scmp.lt.s32.totalorder %s28, 1
          %s304 = scalar_select %p303, %s28, 1
          %s305 = smul.addr %s304, 19
          %s306 = scalar_lea.vmem %s1, %s305
        $region48: #{tpu_custom_call.1} parent=39 // pred_fallthru
          _
      $region40: #{tpu_custom_call.1} parent=5 // pred_fallthru
        _
      %p307 = scmp.le.s32.totalorder 1, %s20
      %p308 = scmp.lt.s32.totalorder %s20, 5
      %p309 = pnand %p307, %p308
      %p310 = pneg %p309
      // Predicated region
      $region49: #{tpu_custom_call.1} parent=5 // pred_check
        _
      $region50: #{tpu_custom_call.1} parent=5 // pred_check_branch
        %312 = sbr.rel (%p309) target = $region52
      $region51: #{tpu_custom_call.1} parent=5 // pred_region
        %s313 = ssub.s32 %s20, 1
        %s314 = sand.u32 %s47, 1
        %s315 = scalar_lea.sflag [#allocation3], %s314
        %s316 = sand.u32 %s47, 1
        %s317 = smul.addr %s316, 152
        %s318 = scalar_lea.vmem [#allocation2], %s317
        // Predicated region
        $region53: #{tpu_custom_call.1} parent=51 // pred_check
          %p319 = pneg %p60
        $region54: #{tpu_custom_call.1} parent=51 // pred_check_branch
          %321 = sbr.rel (%p319) target = $region56
        $region55: #{tpu_custom_call.1} parent=51 // pred_region
          %322 = dma.done %s315, 2432
        $region56: #{tpu_custom_call.1} parent=51 // pred_fallthru
          _
        %s323 = sand.u32 %s47, 1
        %s324 = scalar_lea.sflag [#allocation3], %s323
        %s325 = sand.u32 %s47, 1
        %s326 = smul.addr %s325, 152
        %s327 = scalar_lea.vmem [#allocation2], %s326
        %p328 = pneg %p60
        %p329 = pneg %p57
        %p330 = scmp.lt.s32.totalorder %s30, 1
        %s331 = scalar_select %p330, %s30, 1
        %s332 = smul.addr %s331, 19
        %s333 = scalar_lea.vmem %s1, %s332
        %p334 = pneg %p86
        %p335 = pneg %p83
        %p336 = pneg %p107
        %p337 = pneg %p104
        %p338 = pneg %p128
        %p339 = pneg %p125
        %p340 = pneg %p149
        %p341 = pneg %p146
        %p342 = pneg %p170
        %p343 = pneg %p167
        %p344 = pneg %p191
        %p345 = pneg %p188
        %p346 = pneg %p212
        %p347 = pneg %p209
        %p348 = pneg %p240
        %p349 = pneg %p237
        %s350 = sand.u32 %s227, 1
        %s351 = scalar_lea.sflag [#allocation4], %s350
        %s352 = sand.u32 %s227, 1
        %s353 = smul.addr %s352, 192
        %s354 = scalar_lea.vmem [#allocation5], %s353
        %p355 = scmp.lt.s32.totalorder %s30, 1
        %s356 = scalar_select %p355, %s30, 1
        %s357 = smul.addr %s356, 19
        %s358 = scalar_lea.vmem %s1, %s357
        %s359 = smul.u32 12, %s30
        %v361 = vld [vmem:[%s318] sm:$0xff]
        %v362 = vld [vmem:[%s318 + $0x8] sm:$0xff]
        %v363 = vld [vmem:[%s318 + $0x10] sm:$0xff]
        %v364 = vld [vmem:[%s318 + $0x18] sm:$0xff]
        %v365 = vld [vmem:[%s318 + $0x20] sm:$0xff]
        %v366 = vld [vmem:[%s318 + $0x28] sm:$0xff]
        %v367 = vld [vmem:[%s318 + $0x30] sm:$0xff]
        %v368 = vld [vmem:[%s318 + $0x38] sm:$0xff]
        %v369 = vld [vmem:[%s318 + $0x40] sm:$0xff]
        %v370 = vld [vmem:[%s318 + $0x48] sm:$0xf]
        %v371 = vld [vmem:[%s318 + $0x4c] sm:$0xff]
        %v372 = vld [vmem:[%s318 + $0x54] sm:$0xff]
        %v373 = vld [vmem:[%s318 + $0x5c] sm:$0xff]
        %v374 = vld [vmem:[%s318 + $0x64] sm:$0xff]
        %v375 = vld [vmem:[%s318 + $0x6c] sm:$0xff]
        %v376 = vld [vmem:[%s318 + $0x74] sm:$0xff]
        %v377 = vld [vmem:[%s318 + $0x7c] sm:$0xff]
        %v378 = vld [vmem:[%s318 + $0x84] sm:$0xff]
        %v379 = vld [vmem:[%s318 + $0x8c] sm:$0xff]
        %v380 = vld [vmem:[%s318 + $0x94] sm:$0xf]
        %v381 = vld [vmem:[%s2] sm:$0x3]
        %v382 = vld [vmem:[%s3] sm:$0xf]
        %384 = vset.pattern.permute.xlu0 0
        %385 = vperm.xlu0 %384, %v382
        %v386 = vpop.permute.xlu0 %385
        %v408 = vunpack.c.l.b16 %v361
        %v409 = vunpack.c.h.b16 %v361
        %v410 = vunpack.c.l.b16 %v362
        %v411 = vunpack.c.h.b16 %v362
        %v412 = vunpack.c.l.b16 %v363
        %v413 = vunpack.c.h.b16 %v363
        %v414 = vunpack.c.l.b16 %v364
        %v415 = vunpack.c.h.b16 %v364
        %v416 = vunpack.c.l.b16 %v365
        %v417 = vunpack.c.h.b16 %v365
        %v418 = vunpack.c.l.b16 %v366
        %v419 = vunpack.c.h.b16 %v366
        %v420 = vunpack.c.l.b16 %v367
        %v421 = vunpack.c.h.b16 %v367
        %v422 = vunpack.c.l.b16 %v368
        %v423 = vunpack.c.h.b16 %v368
        %v424 = vunpack.c.l.b16 %v369
        %v425 = vunpack.c.h.b16 %v369
        %v426 = vunpack.c.l.b16 %v370
        %v427 = vunpack.c.l.b16 %v371
        %v428 = vunpack.c.h.b16 %v371
        %v429 = vunpack.c.l.b16 %v372
        %v430 = vunpack.c.h.b16 %v372
        %v431 = vunpack.c.l.b16 %v373
        %v432 = vunpack.c.h.b16 %v373
        %v433 = vunpack.c.l.b16 %v374
        %v434 = vunpack.c.h.b16 %v374
        %v435 = vunpack.c.l.b16 %v375
        %v436 = vunpack.c.h.b16 %v375
        %v437 = vunpack.c.l.b16 %v376
        %v438 = vunpack.c.h.b16 %v376
        %v439 = vunpack.c.l.b16 %v377
        %v440 = vunpack.c.h.b16 %v377
        %v441 = vunpack.c.l.b16 %v378
        %v442 = vunpack.c.h.b16 %v378
        %v443 = vunpack.c.l.b16 %v379
        %v444 = vunpack.c.h.b16 %v379
        %v445 = vunpack.c.l.b16 %v380
        %v446 = vpack.c.b16 %v427, %v408
        %v447 = vpack.c.b16 %v428, %v409
        %v448 = vpack.c.b16 %v429, %v410
        %v449 = vpack.c.b16 %v430, %v411
        %v450 = vpack.c.b16 %v431, %v412
        %v451 = vpack.c.b16 %v432, %v413
        %v452 = vpack.c.b16 %v433, %v414
        %v453 = vpack.c.b16 %v434, %v415
        %v454 = vpack.c.b16 %v435, %v416
        %v455 = vpack.c.b16 %v436, %v417
        %v456 = vpack.c.b16 %v437, %v418
        %v457 = vpack.c.b16 %v438, %v419
        %v458 = vpack.c.b16 %v439, %v420
        %v459 = vpack.c.b16 %v440, %v421
        %v460 = vpack.c.b16 %v441, %v422
        %v461 = vpack.c.b16 %v442, %v423
        %v462 = vpack.c.b16 %v443, %v424
        %v463 = vpack.c.b16 %v444, %v425
        %v464 = vpack.c.b16 %v445, %v426
        %vm484 = vcmask 130048
        %v486 = vsel %vm484, %v381, 0
        %488 = vmatprep.subr.bf16.mxu0 %v447
        %489 = vmatpush1.bf16.msra.mxu0 %v446
        %490 = vmatprep.subr.bf16.mxu0 0
        %491 = vmatpush1.bf16.msra.mxu0 0
        %492 = vmatprep.subr.bf16.mxu0 0
        %493 = vmatpush1.bf16.msra.mxu0 0
        %494 = vmatprep.subr.bf16.mxu0 0
        %495 = vmatpush1.bf16.msra.mxu0 0
        %496 = vmatprep.subr.bf16.mxu0 0
        %497 = vmatpush1.bf16.msra.mxu0 0
        %498 = vmatprep.subr.bf16.mxu0 0
        %499 = vmatpush1.bf16.msra.mxu0 0
        %500 = vmatprep.subr.bf16.mxu0 0
        %501 = vmatpush1.bf16.msra.mxu0 0
        %502 = vmatprep.subr.bf16.mxu0 0
        %503 = vmatpush1.bf16.msra.mxu0 0
        %504 = vmatprep.subr.bf16.mxu0 0
        %505 = vmatpush1.bf16.msra.mxu0 0
        %506 = vmatprep.subr.bf16.mxu0 0
        %507 = vmatpush1.bf16.msra.mxu0 0
        %508 = vmatprep.subr.bf16.mxu0 0
        %509 = vmatpush1.bf16.msra.mxu0 0
        %510 = vmatprep.subr.bf16.mxu0 0
        %511 = vmatpush1.bf16.msra.mxu0 0
        %512 = vmatprep.subr.bf16.mxu0 0
        %513 = vmatpush1.bf16.msra.mxu0 0
        %514 = vmatprep.subr.bf16.mxu0 0
        %515 = vmatpush1.bf16.msra.mxu0 0
        %516 = vmatprep.subr.bf16.mxu0 0
        %517 = vmatpush1.bf16.msra.mxu0 0
        %518 = vmatprep.subr.bf16.mxu0 0
        %519 = vmatpush1.bf16.msra.mxu0 0
        %520 = vmatprep.mubr.bf16.mxu0 0
        %521 = vmatmul.mubr.bf16.gmra.mrb[0].mxu0 %v486
        %v522 = vpop.f32.mrb[0].mxu0
        %v523 = vadd.f32 %v386, %v522
        %v524 = vpop.f32.mrb[0].mxu0
        %v525 = vadd.f32 %v386, %v524
        %v526 = vpop.f32.mrb[0].mxu0
        %v527 = vpop.f32.mrb[0].mxu0
        %528 = vdwg.mxu0
        %529 = vmatprep.subr.bf16.mxu0 %v449
        %530 = vmatpush1.bf16.msra.mxu0 %v448
        %531 = vmatprep.subr.bf16.mxu0 0
        %532 = vmatpush1.bf16.msra.mxu0 0
        %533 = vmatprep.subr.bf16.mxu0 0
        %534 = vmatpush1.bf16.msra.mxu0 0
        %535 = vmatprep.subr.bf16.mxu0 0
        %536 = vmatpush1.bf16.msra.mxu0 0
        %537 = vmatprep.subr.bf16.mxu0 0
        %538 = vmatpush1.bf16.msra.mxu0 0
        %539 = vmatprep.subr.bf16.mxu0 0
        %540 = vmatpush1.bf16.msra.mxu0 0
        %541 = vmatprep.subr.bf16.mxu0 0
        %542 = vmatpush1.bf16.msra.mxu0 0
        %543 = vmatprep.subr.bf16.mxu0 0
        %544 = vmatpush1.bf16.msra.mxu0 0
        %545 = vmatprep.subr.bf16.mxu0 0
        %546 = vmatpush1.bf16.msra.mxu0 0
        %547 = vmatprep.subr.bf16.mxu0 0
        %548 = vmatpush1.bf16.msra.mxu0 0
        %549 = vmatprep.subr.bf16.mxu0 0
        %550 = vmatpush1.bf16.msra.mxu0 0
        %551 = vmatprep.subr.bf16.mxu0 0
        %552 = vmatpush1.bf16.msra.mxu0 0
        %553 = vmatprep.subr.bf16.mxu0 0
        %554 = vmatpush1.bf16.msra.mxu0 0
        %555 = vmatprep.subr.bf16.mxu0 0
        %556 = vmatpush1.bf16.msra.mxu0 0
        %557 = vmatprep.subr.bf16.mxu0 0
        %558 = vmatpush1.bf16.msra.mxu0 0
        %559 = vmatprep.subr.bf16.mxu0 0
        %560 = vmatpush1.bf16.msra.mxu0 0
        %561 = vmatprep.mubr.bf16.mxu0 0
        %562 = vmatmul.mubr.bf16.gmra.mrb[0].mxu0 %v486
        %v563 = vpop.f32.mrb[0].mxu0
        %v564 = vadd.f32 %v386, %v563
        %v565 = vpop.f32.mrb[0].mxu0
        %v566 = vadd.f32 %v386, %v565
        %v567 = vpop.f32.mrb[0].mxu0
        %v568 = vpop.f32.mrb[0].mxu0
        %569 = vdwg.mxu0
        %570 = vmatprep.subr.bf16.mxu0 %v451
        %571 = vmatpush1.bf16.msra.mxu0 %v450
        %572 = vmatprep.subr.bf16.mxu0 0
        %573 = vmatpush1.bf16.msra.mxu0 0
        %574 = vmatprep.subr.bf16.mxu0 0
        %575 = vmatpush1.bf16.msra.mxu0 0
        %576 = vmatprep.subr.bf16.mxu0 0
        %577 = vmatpush1.bf16.msra.mxu0 0
        %578 = vmatprep.subr.bf16.mxu0 0
        %579 = vmatpush1.bf16.msra.mxu0 0
        %580 = vmatprep.subr.bf16.mxu0 0
        %581 = vmatpush1.bf16.msra.mxu0 0
        %582 = vmatprep.subr.bf16.mxu0 0
        %583 = vmatpush1.bf16.msra.mxu0 0
        %584 = vmatprep.subr.bf16.mxu0 0
        %585 = vmatpush1.bf16.msra.mxu0 0
        %586 = vmatprep.subr.bf16.mxu0 0
        %587 = vmatpush1.bf16.msra.mxu0 0
        %588 = vmatprep.subr.bf16.mxu0 0
        %589 = vmatpush1.bf16.msra.mxu0 0
        %590 = vmatprep.subr.bf16.mxu0 0
        %591 = vmatpush1.bf16.msra.mxu0 0
        %592 = vmatprep.subr.bf16.mxu0 0
        %593 = vmatpush1.bf16.msra.mxu0 0
        %594 = vmatprep.subr.bf16.mxu0 0
        %595 = vmatpush1.bf16.msra.mxu0 0
        %596 = vmatprep.subr.bf16.mxu0 0
        %597 = vmatpush1.bf16.msra.mxu0 0
        %598 = vmatprep.subr.bf16.mxu0 0
        %599 = vmatpush1.bf16.msra.mxu0 0
        %600 = vmatprep.subr.bf16.mxu0 0
        %601 = vmatpush1.bf16.msra.mxu0 0
        %602 = vmatprep.mubr.bf16.mxu0 0
        %603 = vmatmul.mubr.bf16.gmra.mrb[0].mxu0 %v486
        %v604 = vpop.f32.mrb[0].mxu0
        %v605 = vadd.f32 %v386, %v604
        %v606 = vpop.f32.mrb[0].mxu0
        %v607 = vadd.f32 %v386, %v606
        %v608 = vpop.f32.mrb[0].mxu0
        %v609 = vpop.f32.mrb[0].mxu0
        %610 = vdwg.mxu0
        %611 = vmatprep.subr.bf16.mxu0 %v453
        %612 = vmatpush1.bf16.msra.mxu0 %v452
        %613 = vmatprep.subr.bf16.mxu0 0
        %614 = vmatpush1.bf16.msra.mxu0 0
        %615 = vmatprep.subr.bf16.mxu0 0
        %616 = vmatpush1.bf16.msra.mxu0 0
        %617 = vmatprep.subr.bf16.mxu0 0
        %618 = vmatpush1.bf16.msra.mxu0 0
        %619 = vmatprep.subr.bf16.mxu0 0
        %620 = vmatpush1.bf16.msra.mxu0 0
        %621 = vmatprep.subr.bf16.mxu0 0
        %622 = vmatpush1.bf16.msra.mxu0 0
        %623 = vmatprep.subr.bf16.mxu0 0
        %624 = vmatpush1.bf16.msra.mxu0 0
        %625 = vmatprep.subr.bf16.mxu0 0
        %626 = vmatpush1.bf16.msra.mxu0 0
        %627 = vmatprep.subr.bf16.mxu0 0
        %628 = vmatpush1.bf16.msra.mxu0 0
        %629 = vmatprep.subr.bf16.mxu0 0
        %630 = vmatpush1.bf16.msra.mxu0 0
        %631 = vmatprep.subr.bf16.mxu0 0
        %632 = vmatpush1.bf16.msra.mxu0 0
        %633 = vmatprep.subr.bf16.mxu0 0
        %634 = vmatpush1.bf16.msra.mxu0 0
        %635 = vmatprep.subr.bf16.mxu0 0
        %636 = vmatpush1.bf16.msra.mxu0 0
        %637 = vmatprep.subr.bf16.mxu0 0
        %638 = vmatpush1.bf16.msra.mxu0 0
        %639 = vmatprep.subr.bf16.mxu0 0
        %640 = vmatpush1.bf16.msra.mxu0 0
        %641 = vmatprep.subr.bf16.mxu0 0
        %642 = vmatpush1.bf16.msra.mxu0 0
        %643 = vmatprep.mubr.bf16.mxu0 0
        %644 = vmatmul.mubr.bf16.gmra.mrb[0].mxu0 %v486
        %v645 = vpop.f32.mrb[0].mxu0
        %v646 = vadd.f32 %v386, %v645
        %v647 = vpop.f32.mrb[0].mxu0
        %v648 = vadd.f32 %v386, %v647
        %v649 = vpop.f32.mrb[0].mxu0
        %v650 = vpop.f32.mrb[0].mxu0
        %651 = vdwg.mxu0
        %652 = vmatprep.subr.bf16.mxu0 %v455
        %653 = vmatpush1.bf16.msra.mxu0 %v454
        %654 = vmatprep.subr.bf16.mxu0 0
        %655 = vmatpush1.bf16.msra.mxu0 0
        %656 = vmatprep.subr.bf16.mxu0 0
        %657 = vmatpush1.bf16.msra.mxu0 0
        %658 = vmatprep.subr.bf16.mxu0 0
        %659 = vmatpush1.bf16.msra.mxu0 0
        %660 = vmatprep.subr.bf16.mxu0 0
        %661 = vmatpush1.bf16.msra.mxu0 0
        %662 = vmatprep.subr.bf16.mxu0 0
        %663 = vmatpush1.bf16.msra.mxu0 0
        %664 = vmatprep.subr.bf16.mxu0 0
        %665 = vmatpush1.bf16.msra.mxu0 0
        %666 = vmatprep.subr.bf16.mxu0 0
        %667 = vmatpush1.bf16.msra.mxu0 0
        %668 = vmatprep.subr.bf16.mxu0 0
        %669 = vmatpush1.bf16.msra.mxu0 0
        %670 = vmatprep.subr.bf16.mxu0 0
        %671 = vmatpush1.bf16.msra.mxu0 0
        %672 = vmatprep.subr.bf16.mxu0 0
        %673 = vmatpush1.bf16.msra.mxu0 0
        %674 = vmatprep.subr.bf16.mxu0 0
        %675 = vmatpush1.bf16.msra.mxu0 0
        %676 = vmatprep.subr.bf16.mxu0 0
        %677 = vmatpush1.bf16.msra.mxu0 0
        %678 = vmatprep.subr.bf16.mxu0 0
        %679 = vmatpush1.bf16.msra.mxu0 0
        %680 = vmatprep.subr.bf16.mxu0 0
        %681 = vmatpush1.bf16.msra.mxu0 0
        %682 = vmatprep.subr.bf16.mxu0 0
        %683 = vmatpush1.bf16.msra.mxu0 0
        %684 = vmatprep.mubr.bf16.mxu0 0
        %685 = vmatmul.mubr.bf16.gmra.mrb[0].mxu0 %v486
        %v686 = vpop.f32.mrb[0].mxu0
        %v687 = vadd.f32 %v386, %v686
        %v688 = vpop.f32.mrb[0].mxu0
        %v689 = vadd.f32 %v386, %v688
        %v690 = vpop.f32.mrb[0].mxu0
        %v691 = vpop.f32.mrb[0].mxu0
        %692 = vdwg.mxu0
        %693 = vmatprep.subr.bf16.mxu0 %v457
        %694 = vmatpush1.bf16.msra.mxu0 %v456
        %695 = vmatprep.subr.bf16.mxu0 0
        %696 = vmatpush1.bf16.msra.mxu0 0
        %697 = vmatprep.subr.bf16.mxu0 0
        %698 = vmatpush1.bf16.msra.mxu0 0
        %699 = vmatprep.subr.bf16.mxu0 0
        %700 = vmatpush1.bf16.msra.mxu0 0
        %701 = vmatprep.subr.bf16.mxu0 0
        %702 = vmatpush1.bf16.msra.mxu0 0
        %703 = vmatprep.subr.bf16.mxu0 0
        %704 = vmatpush1.bf16.msra.mxu0 0
        %705 = vmatprep.subr.bf16.mxu0 0
        %706 = vmatpush1.bf16.msra.mxu0 0
        %707 = vmatprep.subr.bf16.mxu0 0
        %708 = vmatpush1.bf16.msra.mxu0 0
        %709 = vmatprep.subr.bf16.mxu0 0
        %710 = vmatpush1.bf16.msra.mxu0 0
        %711 = vmatprep.subr.bf16.mxu0 0
        %712 = vmatpush1.bf16.msra.mxu0 0
        %713 = vmatprep.subr.bf16.mxu0 0
        %714 = vmatpush1.bf16.msra.mxu0 0
        %715 = vmatprep.subr.bf16.mxu0 0
        %716 = vmatpush1.bf16.msra.mxu0 0
        %717 = vmatprep.subr.bf16.mxu0 0
        %718 = vmatpush1.bf16.msra.mxu0 0
        %719 = vmatprep.subr.bf16.mxu0 0
        %720 = vmatpush1.bf16.msra.mxu0 0
        %721 = vmatprep.subr.bf16.mxu0 0
        %722 = vmatpush1.bf16.msra.mxu0 0
        %723 = vmatprep.subr.bf16.mxu0 0
        %724 = vmatpush1.bf16.msra.mxu0 0
        %725 = vmatprep.mubr.bf16.mxu0 0
        %726 = vmatmul.mubr.bf16.gmra.mrb[0].mxu0 %v486
        %v727 = vpop.f32.mrb[0].mxu0
        %v728 = vadd.f32 %v386, %v727
        %v729 = vpop.f32.mrb[0].mxu0
        %v730 = vadd.f32 %v386, %v729
        %v731 = vpop.f32.mrb[0].mxu0
        %v732 = vpop.f32.mrb[0].mxu0
        %733 = vdwg.mxu0
        %734 = vmatprep.subr.bf16.mxu0 %v459
        %735 = vmatpush1.bf16.msra.mxu0 %v458
        %736 = vmatprep.subr.bf16.mxu0 0
        %737 = vmatpush1.bf16.msra.mxu0 0
        %738 = vmatprep.subr.bf16.mxu0 0
        %739 = vmatpush1.bf16.msra.mxu0 0
        %740 = vmatprep.subr.bf16.mxu0 0
        %741 = vmatpush1.bf16.msra.mxu0 0
        %742 = vmatprep.subr.bf16.mxu0 0
        %743 = vmatpush1.bf16.msra.mxu0 0
        %744 = vmatprep.subr.bf16.mxu0 0
        %745 = vmatpush1.bf16.msra.mxu0 0
        %746 = vmatprep.subr.bf16.mxu0 0
        %747 = vmatpush1.bf16.msra.mxu0 0
        %748 = vmatprep.subr.bf16.mxu0 0
        %749 = vmatpush1.bf16.msra.mxu0 0
        %750 = vmatprep.subr.bf16.mxu0 0
        %751 = vmatpush1.bf16.msra.mxu0 0
        %752 = vmatprep.subr.bf16.mxu0 0
        %753 = vmatpush1.bf16.msra.mxu0 0
        %754 = vmatprep.subr.bf16.mxu0 0
        %755 = vmatpush1.bf16.msra.mxu0 0
        %756 = vmatprep.subr.bf16.mxu0 0
        %757 = vmatpush1.bf16.msra.mxu0 0
        %758 = vmatprep.subr.bf16.mxu0 0
        %759 = vmatpush1.bf16.msra.mxu0 0
        %760 = vmatprep.subr.bf16.mxu0 0
        %761 = vmatpush1.bf16.msra.mxu0 0
        %762 = vmatprep.subr.bf16.mxu0 0
        %763 = vmatpush1.bf16.msra.mxu0 0
        %764 = vmatprep.subr.bf16.mxu0 0
        %765 = vmatpush1.bf16.msra.mxu0 0
        %766 = vmatprep.mubr.bf16.mxu0 0
        %767 = vmatmul.mubr.bf16.gmra.mrb[0].mxu0 %v486
        %v768 = vpop.f32.mrb[0].mxu0
        %v769 = vadd.f32 %v386, %v768
        %v770 = vpop.f32.mrb[0].mxu0
        %v771 = vadd.f32 %v386, %v770
        %v772 = vpop.f32.mrb[0].mxu0
        %v773 = vpop.f32.mrb[0].mxu0
        %774 = vdwg.mxu0
        %775 = vmatprep.subr.bf16.mxu0 %v461
        %776 = vmatpush1.bf16.msra.mxu0 %v460
        %777 = vmatprep.subr.bf16.mxu0 0
        %778 = vmatpush1.bf16.msra.mxu0 0
        %779 = vmatprep.subr.bf16.mxu0 0
        %780 = vmatpush1.bf16.msra.mxu0 0
        %781 = vmatprep.subr.bf16.mxu0 0
        %782 = vmatpush1.bf16.msra.mxu0 0
        %783 = vmatprep.subr.bf16.mxu0 0
        %784 = vmatpush1.bf16.msra.mxu0 0
        %785 = vmatprep.subr.bf16.mxu0 0
        %786 = vmatpush1.bf16.msra.mxu0 0
        %787 = vmatprep.subr.bf16.mxu0 0
        %788 = vmatpush1.bf16.msra.mxu0 0
        %789 = vmatprep.subr.bf16.mxu0 0
        %790 = vmatpush1.bf16.msra.mxu0 0
        %791 = vmatprep.subr.bf16.mxu0 0
        %792 = vmatpush1.bf16.msra.mxu0 0
        %793 = vmatprep.subr.bf16.mxu0 0
        %794 = vmatpush1.bf16.msra.mxu0 0
        %795 = vmatprep.subr.bf16.mxu0 0
        %796 = vmatpush1.bf16.msra.mxu0 0
        %797 = vmatprep.subr.bf16.mxu0 0
        %798 = vmatpush1.bf16.msra.mxu0 0
        %799 = vmatprep.subr.bf16.mxu0 0
        %800 = vmatpush1.bf16.msra.mxu0 0
        %801 = vmatprep.subr.bf16.mxu0 0
        %802 = vmatpush1.bf16.msra.mxu0 0
        %803 = vmatprep.subr.bf16.mxu0 0
        %804 = vmatpush1.bf16.msra.mxu0 0
        %805 = vmatprep.subr.bf16.mxu0 0
        %806 = vmatpush1.bf16.msra.mxu0 0
        %807 = vmatprep.mubr.bf16.mxu0 0
        %808 = vmatmul.mubr.bf16.gmra.mrb[0].mxu0 %v486
        %v809 = vpop.f32.mrb[0].mxu0
        %v810 = vadd.f32 %v386, %v809
        %v811 = vpop.f32.mrb[0].mxu0
        %v812 = vadd.f32 %v386, %v811
        %v813 = vpop.f32.mrb[0].mxu0
        %v814 = vpop.f32.mrb[0].mxu0
        %815 = vdwg.mxu0
        %816 = vmatprep.subr.bf16.mxu0 %v463
        %817 = vmatpush1.bf16.msra.mxu0 %v462
        %818 = vmatprep.subr.bf16.mxu0 0
        %819 = vmatpush1.bf16.msra.mxu0 0
        %820 = vmatprep.subr.bf16.mxu0 0
        %821 = vmatpush1.bf16.msra.mxu0 0
        %822 = vmatprep.subr.bf16.mxu0 0
        %823 = vmatpush1.bf16.msra.mxu0 0
        %824 = vmatprep.subr.bf16.mxu0 0
        %825 = vmatpush1.bf16.msra.mxu0 0
        %826 = vmatprep.subr.bf16.mxu0 0
        %827 = vmatpush1.bf16.msra.mxu0 0
        %828 = vmatprep.subr.bf16.mxu0 0
        %829 = vmatpush1.bf16.msra.mxu0 0
        %830 = vmatprep.subr.bf16.mxu0 0
        %831 = vmatpush1.bf16.msra.mxu0 0
        %832 = vmatprep.subr.bf16.mxu0 0
        %833 = vmatpush1.bf16.msra.mxu0 0
        %834 = vmatprep.subr.bf16.mxu0 0
        %835 = vmatpush1.bf16.msra.mxu0 0
        %836 = vmatprep.subr.bf16.mxu0 0
        %837 = vmatpush1.bf16.msra.mxu0 0
        %838 = vmatprep.subr.bf16.mxu0 0
        %839 = vmatpush1.bf16.msra.mxu0 0
        %840 = vmatprep.subr.bf16.mxu0 0
        %841 = vmatpush1.bf16.msra.mxu0 0
        %842 = vmatprep.subr.bf16.mxu0 0
        %843 = vmatpush1.bf16.msra.mxu0 0
        %844 = vmatprep.subr.bf16.mxu0 0
        %845 = vmatpush1.bf16.msra.mxu0 0
        %846 = vmatprep.subr.bf16.mxu0 0
        %847 = vmatpush1.bf16.msra.mxu0 0
        %848 = vmatprep.mubr.bf16.mxu0 0
        %849 = vmatmul.mubr.bf16.gmra.mrb[0].mxu0 %v486
        %v850 = vpop.f32.mrb[0].mxu0
        %v851 = vadd.f32 %v386, %v850
        %v852 = vpop.f32.mrb[0].mxu0
        %v853 = vadd.f32 %v386, %v852
        %v854 = vpop.f32.mrb[0].mxu0
        %v855 = vpop.f32.mrb[0].mxu0
        %856 = vdwg.mxu0
        %857 = vmatprep.subr.bf16.mxu0 0
        %858 = vmatpush1.bf16.msra.mxu0 %v464
        %859 = vmatprep.subr.bf16.mxu0 0
        %860 = vmatpush1.bf16.msra.mxu0 0
        %861 = vmatprep.subr.bf16.mxu0 0
        %862 = vmatpush1.bf16.msra.mxu0 0
        %863 = vmatprep.subr.bf16.mxu0 0
        %864 = vmatpush1.bf16.msra.mxu0 0
        %865 = vmatprep.subr.bf16.mxu0 0
        %866 = vmatpush1.bf16.msra.mxu0 0
        %867 = vmatprep.subr.bf16.mxu0 0
        %868 = vmatpush1.bf16.msra.mxu0 0
        %869 = vmatprep.subr.bf16.mxu0 0
        %870 = vmatpush1.bf16.msra.mxu0 0
        %871 = vmatprep.subr.bf16.mxu0 0
        %872 = vmatpush1.bf16.msra.mxu0 0
        %873 = vmatprep.subr.bf16.mxu0 0
        %874 = vmatpush1.bf16.msra.mxu0 0
        %875 = vmatprep.subr.bf16.mxu0 0
        %876 = vmatpush1.bf16.msra.mxu0 0
        %877 = vmatprep.subr.bf16.mxu0 0
        %878 = vmatpush1.bf16.msra.mxu0 0
        %879 = vmatprep.subr.bf16.mxu0 0
        %880 = vmatpush1.bf16.msra.mxu0 0
        %881 = vmatprep.subr.bf16.mxu0 0
        %882 = vmatpush1.bf16.msra.mxu0 0
        %883 = vmatprep.subr.bf16.mxu0 0
        %884 = vmatpush1.bf16.msra.mxu0 0
        %885 = vmatprep.subr.bf16.mxu0 0
        %886 = vmatpush1.bf16.msra.mxu0 0
        %887 = vmatprep.subr.bf16.mxu0 0
        %888 = vmatpush1.bf16.msra.mxu0 0
        %889 = vmatprep.mubr.bf16.mxu0 0
        %890 = vmatmul.mubr.bf16.gmra.mrb[0].mxu0 %v486
        %v891 = vpop.f32.mrb[0].mxu0
        %v892 = vadd.f32 %v386, %v891
        %v893 = vpop.f32.mrb[0].mxu0
        %v894 = vpop.f32.mrb[0].mxu0
        %v895 = vpop.f32.mrb[0].mxu0
        %896 = vdwg.mxu0
        %v897 = vmax.f32 %v523, 0.0
        %v898 = vmax.f32 %v525, 0.0
        %v899 = vmax.f32 %v564, 0.0
        %v900 = vmax.f32 %v566, 0.0
        %v901 = vmax.f32 %v605, 0.0
        %v902 = vmax.f32 %v607, 0.0
        %v903 = vmax.f32 %v646, 0.0
        %v904 = vmax.f32 %v648, 0.0
        %v905 = vmax.f32 %v687, 0.0
        %v906 = vmax.f32 %v689, 0.0
        %v907 = vmax.f32 %v728, 0.0
        %v908 = vmax.f32 %v730, 0.0
        %v909 = vmax.f32 %v769, 0.0
        %v910 = vmax.f32 %v771, 0.0
        %v911 = vmax.f32 %v810, 0.0
        %v912 = vmax.f32 %v812, 0.0
        %v913 = vmax.f32 %v851, 0.0
        %v914 = vmax.f32 %v853, 0.0
        %v915 = vmax.f32 %v892, 0.0
        %v916 = vld [vmem:[%s358] sm:$0xff]
        %v917 = vld [vmem:[%s358 + $0x8] sm:$0xff]
        %v918 = vld [vmem:[%s358 + $0x10] sm:$0x7]
        %v922 = vlaneseq
        %v923 = vshrl.u32 %v922, 7
        %v924 = vsub.s32 0, %v923
        %v925 = vrot.slane %v916, %v924
        %v926 = vlaneseq
        %v927 = vshrl.u32 %v926, 7
        %v928 = vsub.s32 1, %v927
        %v929 = vrot.slane %v916, %v928
        %v930 = vlaneseq
        %v931 = vshrl.u32 %v930, 7
        %v932 = vsub.s32 2, %v931
        %v933 = vrot.slane %v916, %v932
        %v934 = vlaneseq
        %v935 = vshrl.u32 %v934, 7
        %v936 = vsub.s32 3, %v935
        %v937 = vrot.slane %v916, %v936
        %v938 = vlaneseq
        %v939 = vshrl.u32 %v938, 7
        %v940 = vsub.s32 4, %v939
        %v941 = vrot.slane %v916, %v940
        %v942 = vlaneseq
        %v943 = vshrl.u32 %v942, 7
        %v944 = vsub.s32 5, %v943
        %v945 = vrot.slane %v916, %v944
        %v946 = vlaneseq
        %v947 = vshrl.u32 %v946, 7
        %v948 = vsub.s32 6, %v947
        %v949 = vrot.slane %v916, %v948
        %v950 = vlaneseq
        %v951 = vshrl.u32 %v950, 7
        %v952 = vsub.s32 7, %v951
        %v953 = vrot.slane %v916, %v952
        %v954 = vlaneseq
        %v955 = vshrl.u32 %v954, 7
        %v956 = vsub.s32 0, %v955
        %v957 = vrot.slane %v917, %v956
        %v958 = vlaneseq
        %v959 = vshrl.u32 %v958, 7
        %v960 = vsub.s32 1, %v959
        %v961 = vrot.slane %v917, %v960
        %v962 = vlaneseq
        %v963 = vshrl.u32 %v962, 7
        %v964 = vsub.s32 2, %v963
        %v965 = vrot.slane %v917, %v964
        %v966 = vlaneseq
        %v967 = vshrl.u32 %v966, 7
        %v968 = vsub.s32 3, %v967
        %v969 = vrot.slane %v917, %v968
        %v970 = vlaneseq
        %v971 = vshrl.u32 %v970, 7
        %v972 = vsub.s32 4, %v971
        %v973 = vrot.slane %v917, %v972
        %v974 = vlaneseq
        %v975 = vshrl.u32 %v974, 7
        %v976 = vsub.s32 5, %v975
        %v977 = vrot.slane %v917, %v976
        %v978 = vlaneseq
        %v979 = vshrl.u32 %v978, 7
        %v980 = vsub.s32 6, %v979
        %v981 = vrot.slane %v917, %v980
        %v982 = vlaneseq
        %v983 = vshrl.u32 %v982, 7
        %v984 = vsub.s32 7, %v983
        %v985 = vrot.slane %v917, %v984
        %v986 = vlaneseq
        %v987 = vshrl.u32 %v986, 7
        %v988 = vsub.s32 0, %v987
        %v989 = vrot.slane %v918, %v988
        %v990 = vlaneseq
        %v991 = vshrl.u32 %v990, 7
        %v992 = vsub.s32 1, %v991
        %v993 = vrot.slane %v918, %v992
        %v994 = vlaneseq
        %v995 = vshrl.u32 %v994, 7
        %v996 = vsub.s32 2, %v995
        %v997 = vrot.slane %v918, %v996
        %v1017 = vmul.f32 %v897, %v925
        %v1018 = vmul.f32 %v898, %v929
        %v1019 = vmul.f32 %v899, %v933
        %v1020 = vmul.f32 %v900, %v937
        %v1021 = vmul.f32 %v901, %v941
        %v1022 = vmul.f32 %v902, %v945
        %v1023 = vmul.f32 %v903, %v949
        %v1024 = vmul.f32 %v904, %v953
        %v1025 = vmul.f32 %v905, %v957
        %v1026 = vmul.f32 %v906, %v961
        %v1027 = vmul.f32 %v907, %v965
        %v1028 = vmul.f32 %v908, %v969
        %v1029 = vmul.f32 %v909, %v973
        %v1030 = vmul.f32 %v910, %v977
        %v1031 = vmul.f32 %v911, %v981
        %v1032 = vmul.f32 %v912, %v985
        %v1033 = vmul.f32 %v913, %v989
        %v1034 = vmul.f32 %v914, %v993
        %v1035 = vmul.f32 %v915, %v997
        %v1036 = vpack.c.bf16 %v1017, %v1017
        %v1037 = vpack.c.bf16 %v1018, %v1018
        %v1038 = vpack.c.bf16 %v1019, %v1019
        %v1039 = vpack.c.bf16 %v1020, %v1020
        %v1040 = vpack.c.bf16 %v1021, %v1021
        %v1041 = vpack.c.bf16 %v1022, %v1022
        %v1042 = vpack.c.bf16 %v1023, %v1023
        %v1043 = vpack.c.bf16 %v1024, %v1024
        %v1044 = vpack.c.bf16 %v1025, %v1025
        %v1045 = vpack.c.bf16 %v1026, %v1026
        %v1046 = vpack.c.bf16 %v1027, %v1027
        %v1047 = vpack.c.bf16 %v1028, %v1028
        %v1048 = vpack.c.bf16 %v1029, %v1029
        %v1049 = vpack.c.bf16 %v1030, %v1030
        %v1050 = vpack.c.bf16 %v1031, %v1031
        %v1051 = vpack.c.bf16 %v1032, %v1032
        %v1052 = vpack.c.bf16 %v1033, %v1033
        %v1053 = vpack.c.bf16 %v1034, %v1034
        %v1054 = vpack.c.bf16 %v1035, %v1035
        %v1055 = vld [vmem:[%s4] sm:$0x3]
        %s1056 = scalar_lea.vmem %s4, 2
        %v1057 = vld [vmem:[%s1056] sm:$0x3]
        %1071 = vrot.lane.b32.xlu0 %v1036, 127
        %v1072 = vpop.permute.xlu0 %1071
        %1073 = vrot.lane.b32.xlu0 %v1037, 127
        %v1074 = vpop.permute.xlu0 %1073
        %1075 = vrot.lane.b32.xlu0 %v1038, 127
        %v1076 = vpop.permute.xlu0 %1075
        %1077 = vrot.lane.b32.xlu0 %v1039, 127
        %v1078 = vpop.permute.xlu0 %1077
        %1079 = vrot.lane.b32.xlu0 %v1040, 127
        %v1080 = vpop.permute.xlu0 %1079
        %1081 = vrot.lane.b32.xlu0 %v1041, 127
        %v1082 = vpop.permute.xlu0 %1081
        %1083 = vrot.lane.b32.xlu0 %v1042, 127
        %v1084 = vpop.permute.xlu0 %1083
        %1085 = vrot.lane.b32.xlu0 %v1043, 127
        %v1086 = vpop.permute.xlu0 %1085
        %1087 = vrot.lane.b32.xlu0 %v1044, 127
        %v1088 = vpop.permute.xlu0 %1087
        %1089 = vrot.lane.b32.xlu0 %v1045, 127
        %v1090 = vpop.permute.xlu0 %1089
        %1091 = vrot.lane.b32.xlu0 %v1046, 127
        %v1092 = vpop.permute.xlu0 %1091
        %1093 = vrot.lane.b32.xlu0 %v1047, 127
        %v1094 = vpop.permute.xlu0 %1093
        %1095 = vrot.lane.b32.xlu0 %v1048, 127
        %v1096 = vpop.permute.xlu0 %1095
        %vm1097 = vcmask 1039360
        %v1098 = vsel %vm1097, %v1072, %v1074
        %v1099 = vsel %vm1097, %v1074, %v1076
        %v1100 = vsel %vm1097, %v1076, %v1078
        %v1101 = vsel %vm1097, %v1078, %v1080
        %v1102 = vsel %vm1097, %v1080, %v1082
        %v1103 = vsel %vm1097, %v1082, %v1084
        %v1104 = vsel %vm1097, %v1084, %v1086
        %v1105 = vsel %vm1097, %v1086, %v1088
        %v1106 = vsel %vm1097, %v1088, %v1090
        %v1107 = vsel %vm1097, %v1090, %v1092
        %v1108 = vsel %vm1097, %v1092, %v1094
        %v1109 = vsel %vm1097, %v1094, %v1096
        %vm1110 = vcmask 31744
        %v1112 = vsel %vm1110, %v1057, 0
        %vm1114 = vcmask 1041408
        %v1116 = vsel %vm1114, %v1098, 0
        %v1119 = vsel %vm1114, %v1099, 0
        %v1122 = vsel %vm1114, %v1100, 0
        %v1125 = vsel %vm1114, %v1101, 0
        %v1128 = vsel %vm1114, %v1102, 0
        %v1131 = vsel %vm1114, %v1103, 0
        %v1134 = vsel %vm1114, %v1104, 0
        %v1137 = vsel %vm1114, %v1105, 0
        %v1140 = vsel %vm1114, %v1106, 0
        %v1143 = vsel %vm1114, %v1107, 0
        %v1146 = vsel %vm1114, %v1108, 0
        %v1149 = vsel %vm1114, %v1109, 0
        %1151 = vmatprep.subr.bf16.mxu0 %v1119
        %1152 = vmatpush1.bf16.msra.mxu0 %v1116
        %1153 = vmatprep.subr.bf16.mxu0 0
        %1154 = vmatpush1.bf16.msra.mxu0 0
        %1155 = vmatprep.subr.bf16.mxu0 0
        %1156 = vmatpush1.bf16.msra.mxu0 0
        %1157 = vmatprep.subr.bf16.mxu0 0
        %1158 = vmatpush1.bf16.msra.mxu0 0
        %1159 = vmatprep.subr.bf16.mxu0 0
        %1160 = vmatpush1.bf16.msra.mxu0 0
        %1161 = vmatprep.subr.bf16.mxu0 0
        %1162 = vmatpush1.bf16.msra.mxu0 0
        %1163 = vmatprep.subr.bf16.mxu0 0
        %1164 = vmatpush1.bf16.msra.mxu0 0
        %1165 = vmatprep.subr.bf16.mxu0 0
        %1166 = vmatpush1.bf16.msra.mxu0 0
        %1167 = vmatprep.subr.bf16.mxu0 0
        %1168 = vmatpush1.bf16.msra.mxu0 0
        %1169 = vmatprep.subr.bf16.mxu0 0
        %1170 = vmatpush1.bf16.msra.mxu0 0
        %1171 = vmatprep.subr.bf16.mxu0 0
        %1172 = vmatpush1.bf16.msra.mxu0 0
        %1173 = vmatprep.subr.bf16.mxu0 0
        %1174 = vmatpush1.bf16.msra.mxu0 0
        %1175 = vmatprep.subr.bf16.mxu0 0
        %1176 = vmatpush1.bf16.msra.mxu0 0
        %1177 = vmatprep.subr.bf16.mxu0 0
        %1178 = vmatpush1.bf16.msra.mxu0 0
        %1179 = vmatprep.subr.bf16.mxu0 0
        %1180 = vmatpush1.bf16.msra.mxu0 0
        %1181 = vmatprep.subr.bf16.mxu0 0
        %1182 = vmatpush1.bf16.msra.mxu0 0
        %1183 = vmatprep.mubr.bf16.mxu0 0
        %1184 = vmatmul.mubr.bf16.gmra.mrb[0].mxu0 %v1112
        %v1185 = vpop.f32.mrb[0].mxu0
        %v1186 = vadd.f32 0.0, %v1185
        %v1187 = vpop.f32.mrb[0].mxu0
        %v1188 = vadd.f32 0.0, %v1187
        %v1189 = vpop.f32.mrb[0].mxu0
        %v1190 = vpop.f32.mrb[0].mxu0
        %1191 = vdwg.mxu0
        %1192 = vmatprep.subr.bf16.mxu0 %v1125
        %1193 = vmatpush1.bf16.msra.mxu0 %v1122
        %1194 = vmatprep.subr.bf16.mxu0 0
        %1195 = vmatpush1.bf16.msra.mxu0 0
        %1196 = vmatprep.subr.bf16.mxu0 0
        %1197 = vmatpush1.bf16.msra.mxu0 0
        %1198 = vmatprep.subr.bf16.mxu0 0
        %1199 = vmatpush1.bf16.msra.mxu0 0
        %1200 = vmatprep.subr.bf16.mxu0 0
        %1201 = vmatpush1.bf16.msra.mxu0 0
        %1202 = vmatprep.subr.bf16.mxu0 0
        %1203 = vmatpush1.bf16.msra.mxu0 0
        %1204 = vmatprep.subr.bf16.mxu0 0
        %1205 = vmatpush1.bf16.msra.mxu0 0
        %1206 = vmatprep.subr.bf16.mxu0 0
        %1207 = vmatpush1.bf16.msra.mxu0 0
        %1208 = vmatprep.subr.bf16.mxu0 0
        %1209 = vmatpush1.bf16.msra.mxu0 0
        %1210 = vmatprep.subr.bf16.mxu0 0
        %1211 = vmatpush1.bf16.msra.mxu0 0
        %1212 = vmatprep.subr.bf16.mxu0 0
        %1213 = vmatpush1.bf16.msra.mxu0 0
        %1214 = vmatprep.subr.bf16.mxu0 0
        %1215 = vmatpush1.bf16.msra.mxu0 0
        %1216 = vmatprep.subr.bf16.mxu0 0
        %1217 = vmatpush1.bf16.msra.mxu0 0
        %1218 = vmatprep.subr.bf16.mxu0 0
        %1219 = vmatpush1.bf16.msra.mxu0 0
        %1220 = vmatprep.subr.bf16.mxu0 0
        %1221 = vmatpush1.bf16.msra.mxu0 0
        %1222 = vmatprep.subr.bf16.mxu0 0
        %1223 = vmatpush1.bf16.msra.mxu0 0
        %1224 = vmatprep.mubr.bf16.mxu0 0
        %1225 = vmatmul.mubr.bf16.gmra.mrb[0].mxu0 %v1112
        %v1226 = vpop.f32.mrb[0].mxu0
        %v1227 = vadd.f32 0.0, %v1226
        %v1228 = vpop.f32.mrb[0].mxu0
        %v1229 = vadd.f32 0.0, %v1228
        %v1230 = vpop.f32.mrb[0].mxu0
        %v1231 = vpop.f32.mrb[0].mxu0
        %1232 = vdwg.mxu0
        %1233 = vmatprep.subr.bf16.mxu0 %v1131
        %1234 = vmatpush1.bf16.msra.mxu0 %v1128
        %1235 = vmatprep.subr.bf16.mxu0 0
        %1236 = vmatpush1.bf16.msra.mxu0 0
        %1237 = vmatprep.subr.bf16.mxu0 0
        %1238 = vmatpush1.bf16.msra.mxu0 0
        %1239 = vmatprep.subr.bf16.mxu0 0
        %1240 = vmatpush1.bf16.msra.mxu0 0
        %1241 = vmatprep.subr.bf16.mxu0 0
        %1242 = vmatpush1.bf16.msra.mxu0 0
        %1243 = vmatprep.subr.bf16.mxu0 0
        %1244 = vmatpush1.bf16.msra.mxu0 0
        %1245 = vmatprep.subr.bf16.mxu0 0
        %1246 = vmatpush1.bf16.msra.mxu0 0
        %1247 = vmatprep.subr.bf16.mxu0 0
        %1248 = vmatpush1.bf16.msra.mxu0 0
        %1249 = vmatprep.subr.bf16.mxu0 0
        %1250 = vmatpush1.bf16.msra.mxu0 0
        %1251 = vmatprep.subr.bf16.mxu0 0
        %1252 = vmatpush1.bf16.msra.mxu0 0
        %1253 = vmatprep.subr.bf16.mxu0 0
        %1254 = vmatpush1.bf16.msra.mxu0 0
        %1255 = vmatprep.subr.bf16.mxu0 0
        %1256 = vmatpush1.bf16.msra.mxu0 0
        %1257 = vmatprep.subr.bf16.mxu0 0
        %1258 = vmatpush1.bf16.msra.mxu0 0
        %1259 = vmatprep.subr.bf16.mxu0 0
        %1260 = vmatpush1.bf16.msra.mxu0 0
        %1261 = vmatprep.subr.bf16.mxu0 0
        %1262 = vmatpush1.bf16.msra.mxu0 0
        %1263 = vmatprep.subr.bf16.mxu0 0
        %1264 = vmatpush1.bf16.msra.mxu0 0
        %1265 = vmatprep.mubr.bf16.mxu0 0
        %1266 = vmatmul.mubr.bf16.gmra.mrb[0].mxu0 %v1112
        %v1267 = vpop.f32.mrb[0].mxu0
        %v1268 = vadd.f32 0.0, %v1267
        %v1269 = vpop.f32.mrb[0].mxu0
        %v1270 = vadd.f32 0.0, %v1269
        %v1271 = vpop.f32.mrb[0].mxu0
        %v1272 = vpop.f32.mrb[0].mxu0
        %1273 = vdwg.mxu0
        %1274 = vmatprep.subr.bf16.mxu0 %v1137
        %1275 = vmatpush1.bf16.msra.mxu0 %v1134
        %1276 = vmatprep.subr.bf16.mxu0 0
        %1277 = vmatpush1.bf16.msra.mxu0 0
        %1278 = vmatprep.subr.bf16.mxu0 0
        %1279 = vmatpush1.bf16.msra.mxu0 0
        %1280 = vmatprep.subr.bf16.mxu0 0
        %1281 = vmatpush1.bf16.msra.mxu0 0
        %1282 = vmatprep.subr.bf16.mxu0 0
        %1283 = vmatpush1.bf16.msra.mxu0 0
        %1284 = vmatprep.subr.bf16.mxu0 0
        %1285 = vmatpush1.bf16.msra.mxu0 0
        %1286 = vmatprep.subr.bf16.mxu0 0
        %1287 = vmatpush1.bf16.msra.mxu0 0
        %1288 = vmatprep.subr.bf16.mxu0 0
        %1289 = vmatpush1.bf16.msra.mxu0 0
        %1290 = vmatprep.subr.bf16.mxu0 0
        %1291 = vmatpush1.bf16.msra.mxu0 0
        %1292 = vmatprep.subr.bf16.mxu0 0
        %1293 = vmatpush1.bf16.msra.mxu0 0
        %1294 = vmatprep.subr.bf16.mxu0 0
        %1295 = vmatpush1.bf16.msra.mxu0 0
        %1296 = vmatprep.subr.bf16.mxu0 0
        %1297 = vmatpush1.bf16.msra.mxu0 0
        %1298 = vmatprep.subr.bf16.mxu0 0
        %1299 = vmatpush1.bf16.msra.mxu0 0
        %1300 = vmatprep.subr.bf16.mxu0 0
        %1301 = vmatpush1.bf16.msra.mxu0 0
        %1302 = vmatprep.subr.bf16.mxu0 0
        %1303 = vmatpush1.bf16.msra.mxu0 0
        %1304 = vmatprep.subr.bf16.mxu0 0
        %1305 = vmatpush1.bf16.msra.mxu0 0
        %1306 = vmatprep.mubr.bf16.mxu0 0
        %1307 = vmatmul.mubr.bf16.gmra.mrb[0].mxu0 %v1112
        %v1308 = vpop.f32.mrb[0].mxu0
        %v1309 = vadd.f32 0.0, %v1308
        %v1310 = vpop.f32.mrb[0].mxu0
        %v1311 = vadd.f32 0.0, %v1310
        %v1312 = vpop.f32.mrb[0].mxu0
        %v1313 = vpop.f32.mrb[0].mxu0
        %1314 = vdwg.mxu0
        %1315 = vmatprep.subr.bf16.mxu0 %v1143
        %1316 = vmatpush1.bf16.msra.mxu0 %v1140
        %1317 = vmatprep.subr.bf16.mxu0 0
        %1318 = vmatpush1.bf16.msra.mxu0 0
        %1319 = vmatprep.subr.bf16.mxu0 0
        %1320 = vmatpush1.bf16.msra.mxu0 0
        %1321 = vmatprep.subr.bf16.mxu0 0
        %1322 = vmatpush1.bf16.msra.mxu0 0
        %1323 = vmatprep.subr.bf16.mxu0 0
        %1324 = vmatpush1.bf16.msra.mxu0 0
        %1325 = vmatprep.subr.bf16.mxu0 0
        %1326 = vmatpush1.bf16.msra.mxu0 0
        %1327 = vmatprep.subr.bf16.mxu0 0
        %1328 = vmatpush1.bf16.msra.mxu0 0
        %1329 = vmatprep.subr.bf16.mxu0 0
        %1330 = vmatpush1.bf16.msra.mxu0 0
        %1331 = vmatprep.subr.bf16.mxu0 0
        %1332 = vmatpush1.bf16.msra.mxu0 0
        %1333 = vmatprep.subr.bf16.mxu0 0
        %1334 = vmatpush1.bf16.msra.mxu0 0
        %1335 = vmatprep.subr.bf16.mxu0 0
        %1336 = vmatpush1.bf16.msra.mxu0 0
        %1337 = vmatprep.subr.bf16.mxu0 0
        %1338 = vmatpush1.bf16.msra.mxu0 0
        %1339 = vmatprep.subr.bf16.mxu0 0
        %1340 = vmatpush1.bf16.msra.mxu0 0
        %1341 = vmatprep.subr.bf16.mxu0 0
        %1342 = vmatpush1.bf16.msra.mxu0 0
        %1343 = vmatprep.subr.bf16.mxu0 0
        %1344 = vmatpush1.bf16.msra.mxu0 0
        %1345 = vmatprep.subr.bf16.mxu0 0
        %1346 = vmatpush1.bf16.msra.mxu0 0
        %1347 = vmatprep.mubr.bf16.mxu0 0
        %1348 = vmatmul.mubr.bf16.gmra.mrb[0].mxu0 %v1112
        %v1349 = vpop.f32.mrb[0].mxu0
        %v1350 = vadd.f32 0.0, %v1349
        %v1351 = vpop.f32.mrb[0].mxu0
        %v1352 = vadd.f32 0.0, %v1351
        %v1353 = vpop.f32.mrb[0].mxu0
        %v1354 = vpop.f32.mrb[0].mxu0
        %1355 = vdwg.mxu0
        %1356 = vmatprep.subr.bf16.mxu0 %v1149
        %1357 = vmatpush1.bf16.msra.mxu0 %v1146
        %1358 = vmatprep.subr.bf16.mxu0 0
        %1359 = vmatpush1.bf16.msra.mxu0 0
        %1360 = vmatprep.subr.bf16.mxu0 0
        %1361 = vmatpush1.bf16.msra.mxu0 0
        %1362 = vmatprep.subr.bf16.mxu0 0
        %1363 = vmatpush1.bf16.msra.mxu0 0
        %1364 = vmatprep.subr.bf16.mxu0 0
        %1365 = vmatpush1.bf16.msra.mxu0 0
        %1366 = vmatprep.subr.bf16.mxu0 0
        %1367 = vmatpush1.bf16.msra.mxu0 0
        %1368 = vmatprep.subr.bf16.mxu0 0
        %1369 = vmatpush1.bf16.msra.mxu0 0
        %1370 = vmatprep.subr.bf16.mxu0 0
        %1371 = vmatpush1.bf16.msra.mxu0 0
        %1372 = vmatprep.subr.bf16.mxu0 0
        %1373 = vmatpush1.bf16.msra.mxu0 0
        %1374 = vmatprep.subr.bf16.mxu0 0
        %1375 = vmatpush1.bf16.msra.mxu0 0
        %1376 = vmatprep.subr.bf16.mxu0 0
        %1377 = vmatpush1.bf16.msra.mxu0 0
        %1378 = vmatprep.subr.bf16.mxu0 0
        %1379 = vmatpush1.bf16.msra.mxu0 0
        %1380 = vmatprep.subr.bf16.mxu0 0
        %1381 = vmatpush1.bf16.msra.mxu0 0
        %1382 = vmatprep.subr.bf16.mxu0 0
        %1383 = vmatpush1.bf16.msra.mxu0 0
        %1384 = vmatprep.subr.bf16.mxu0 0
        %1385 = vmatpush1.bf16.msra.mxu0 0
        %1386 = vmatprep.subr.bf16.mxu0 0
        %1387 = vmatpush1.bf16.msra.mxu0 0
        %1388 = vmatprep.mubr.bf16.mxu0 0
        %1389 = vmatmul.mubr.bf16.gmra.mrb[0].mxu0 %v1112
        %v1390 = vpop.f32.mrb[0].mxu0
        %v1391 = vadd.f32 0.0, %v1390
        %v1392 = vpop.f32.mrb[0].mxu0
        %v1393 = vadd.f32 0.0, %v1392
        %v1394 = vpop.f32.mrb[0].mxu0
        %v1395 = vpop.f32.mrb[0].mxu0
        %1396 = vdwg.mxu0
        %v1398 = vsel %vm1110, %v1055, 0
        %v1401 = vsel %vm1114, %v1036, 0
        %v1404 = vsel %vm1114, %v1037, 0
        %v1407 = vsel %vm1114, %v1038, 0
        %v1410 = vsel %vm1114, %v1039, 0
        %v1413 = vsel %vm1114, %v1040, 0
        %v1416 = vsel %vm1114, %v1041, 0
        %v1419 = vsel %vm1114, %v1042, 0
        %v1422 = vsel %vm1114, %v1043, 0
        %v1425 = vsel %vm1114, %v1044, 0
        %v1428 = vsel %vm1114, %v1045, 0
        %v1431 = vsel %vm1114, %v1046, 0
        %v1434 = vsel %vm1114, %v1047, 0
        %1436 = vmatprep.subr.bf16.mxu0 %v1404
        %1437 = vmatpush1.bf16.msra.mxu0 %v1401
        %1438 = vmatprep.subr.bf16.mxu0 0
        %1439 = vmatpush1.bf16.msra.mxu0 0
        %1440 = vmatprep.subr.bf16.mxu0 0
        %1441 = vmatpush1.bf16.msra.mxu0 0
        %1442 = vmatprep.subr.bf16.mxu0 0
        %1443 = vmatpush1.bf16.msra.mxu0 0
        %1444 = vmatprep.subr.bf16.mxu0 0
        %1445 = vmatpush1.bf16.msra.mxu0 0
        %1446 = vmatprep.subr.bf16.mxu0 0
        %1447 = vmatpush1.bf16.msra.mxu0 0
        %1448 = vmatprep.subr.bf16.mxu0 0
        %1449 = vmatpush1.bf16.msra.mxu0 0
        %1450 = vmatprep.subr.bf16.mxu0 0
        %1451 = vmatpush1.bf16.msra.mxu0 0
        %1452 = vmatprep.subr.bf16.mxu0 0
        %1453 = vmatpush1.bf16.msra.mxu0 0
        %1454 = vmatprep.subr.bf16.mxu0 0
        %1455 = vmatpush1.bf16.msra.mxu0 0
        %1456 = vmatprep.subr.bf16.mxu0 0
        %1457 = vmatpush1.bf16.msra.mxu0 0
        %1458 = vmatprep.subr.bf16.mxu0 0
        %1459 = vmatpush1.bf16.msra.mxu0 0
        %1460 = vmatprep.subr.bf16.mxu0 0
        %1461 = vmatpush1.bf16.msra.mxu0 0
        %1462 = vmatprep.subr.bf16.mxu0 0
        %1463 = vmatpush1.bf16.msra.mxu0 0
        %1464 = vmatprep.subr.bf16.mxu0 0
        %1465 = vmatpush1.bf16.msra.mxu0 0
        %1466 = vmatprep.subr.bf16.mxu0 0
        %1467 = vmatpush1.bf16.msra.mxu0 0
        %1468 = vmatprep.mubr.bf16.mxu0 0
        %1469 = vmatmul.mubr.bf16.gmra.mrb[0].mxu0 %v1398
        %v1470 = vpop.f32.mrb[0].mxu0
        %v1471 = vadd.f32 %v1186, %v1470
        %v1472 = vpop.f32.mrb[0].mxu0
        %v1473 = vadd.f32 %v1188, %v1472
        %v1474 = vpop.f32.mrb[0].mxu0
        %v1475 = vpop.f32.mrb[0].mxu0
        %1476 = vdwg.mxu0
        %1477 = vmatprep.subr.bf16.mxu0 %v1410
        %1478 = vmatpush1.bf16.msra.mxu0 %v1407
        %1479 = vmatprep.subr.bf16.mxu0 0
        %1480 = vmatpush1.bf16.msra.mxu0 0
        %1481 = vmatprep.subr.bf16.mxu0 0
        %1482 = vmatpush1.bf16.msra.mxu0 0
        %1483 = vmatprep.subr.bf16.mxu0 0
        %1484 = vmatpush1.bf16.msra.mxu0 0
        %1485 = vmatprep.subr.bf16.mxu0 0
        %1486 = vmatpush1.bf16.msra.mxu0 0
        %1487 = vmatprep.subr.bf16.mxu0 0
        %1488 = vmatpush1.bf16.msra.mxu0 0
        %1489 = vmatprep.subr.bf16.mxu0 0
        %1490 = vmatpush1.bf16.msra.mxu0 0
        %1491 = vmatprep.subr.bf16.mxu0 0
        %1492 = vmatpush1.bf16.msra.mxu0 0
        %1493 = vmatprep.subr.bf16.mxu0 0
        %1494 = vmatpush1.bf16.msra.mxu0 0
        %1495 = vmatprep.subr.bf16.mxu0 0
        %1496 = vmatpush1.bf16.msra.mxu0 0
        %1497 = vmatprep.subr.bf16.mxu0 0
        %1498 = vmatpush1.bf16.msra.mxu0 0
        %1499 = vmatprep.subr.bf16.mxu0 0
        %1500 = vmatpush1.bf16.msra.mxu0 0
        %1501 = vmatprep.subr.bf16.mxu0 0
        %1502 = vmatpush1.bf16.msra.mxu0 0
        %1503 = vmatprep.subr.bf16.mxu0 0
        %1504 = vmatpush1.bf16.msra.mxu0 0
        %1505 = vmatprep.subr.bf16.mxu0 0
        %1506 = vmatpush1.bf16.msra.mxu0 0
        %1507 = vmatprep.subr.bf16.mxu0 0
        %1508 = vmatpush1.bf16.msra.mxu0 0
        %1509 = vmatprep.mubr.bf16.mxu0 0
        %1510 = vmatmul.mubr.bf16.gmra.mrb[0].mxu0 %v1398
        %v1511 = vpop.f32.mrb[0].mxu0
        %v1512 = vadd.f32 %v1227, %v1511
        %v1513 = vpop.f32.mrb[0].mxu0
        %v1514 = vadd.f32 %v1229, %v1513
        %v1515 = vpop.f32.mrb[0].mxu0
        %v1516 = vpop.f32.mrb[0].mxu0
        %1517 = vdwg.mxu0
        %1518 = vmatprep.subr.bf16.mxu0 %v1416
        %1519 = vmatpush1.bf16.msra.mxu0 %v1413
        %1520 = vmatprep.subr.bf16.mxu0 0
        %1521 = vmatpush1.bf16.msra.mxu0 0
        %1522 = vmatprep.subr.bf16.mxu0 0
        %1523 = vmatpush1.bf16.msra.mxu0 0
        %1524 = vmatprep.subr.bf16.mxu0 0
        %1525 = vmatpush1.bf16.msra.mxu0 0
        %1526 = vmatprep.subr.bf16.mxu0 0
        %1527 = vmatpush1.bf16.msra.mxu0 0
        %1528 = vmatprep.subr.bf16.mxu0 0
        %1529 = vmatpush1.bf16.msra.mxu0 0
        %1530 = vmatprep.subr.bf16.mxu0 0
        %1531 = vmatpush1.bf16.msra.mxu0 0
        %1532 = vmatprep.subr.bf16.mxu0 0
        %1533 = vmatpush1.bf16.msra.mxu0 0
        %1534 = vmatprep.subr.bf16.mxu0 0
        %1535 = vmatpush1.bf16.msra.mxu0 0
        %1536 = vmatprep.subr.bf16.mxu0 0
        %1537 = vmatpush1.bf16.msra.mxu0 0
        %1538 = vmatprep.subr.bf16.mxu0 0
        %1539 = vmatpush1.bf16.msra.mxu0 0
        %1540 = vmatprep.subr.bf16.mxu0 0
        %1541 = vmatpush1.bf16.msra.mxu0 0
        %1542 = vmatprep.subr.bf16.mxu0 0
        %1543 = vmatpush1.bf16.msra.mxu0 0
        %1544 = vmatprep.subr.bf16.mxu0 0
        %1545 = vmatpush1.bf16.msra.mxu0 0
        %1546 = vmatprep.subr.bf16.mxu0 0
        %1547 = vmatpush1.bf16.msra.mxu0 0
        %1548 = vmatprep.subr.bf16.mxu0 0
        %1549 = vmatpush1.bf16.msra.mxu0 0
        %1550 = vmatprep.mubr.bf16.mxu0 0
        %1551 = vmatmul.mubr.bf16.gmra.mrb[0].mxu0 %v1398
        %v1552 = vpop.f32.mrb[0].mxu0
        %v1553 = vadd.f32 %v1268, %v1552
        %v1554 = vpop.f32.mrb[0].mxu0
        %v1555 = vadd.f32 %v1270, %v1554
        %v1556 = vpop.f32.mrb[0].mxu0
        %v1557 = vpop.f32.mrb[0].mxu0
        %1558 = vdwg.mxu0
        %1559 = vmatprep.subr.bf16.mxu0 %v1422
        %1560 = vmatpush1.bf16.msra.mxu0 %v1419
        %1561 = vmatprep.subr.bf16.mxu0 0
        %1562 = vmatpush1.bf16.msra.mxu0 0
        %1563 = vmatprep.subr.bf16.mxu0 0
        %1564 = vmatpush1.bf16.msra.mxu0 0
        %1565 = vmatprep.subr.bf16.mxu0 0
        %1566 = vmatpush1.bf16.msra.mxu0 0
        %1567 = vmatprep.subr.bf16.mxu0 0
        %1568 = vmatpush1.bf16.msra.mxu0 0
        %1569 = vmatprep.subr.bf16.mxu0 0
        %1570 = vmatpush1.bf16.msra.mxu0 0
        %1571 = vmatprep.subr.bf16.mxu0 0
        %1572 = vmatpush1.bf16.msra.mxu0 0
        %1573 = vmatprep.subr.bf16.mxu0 0
        %1574 = vmatpush1.bf16.msra.mxu0 0
        %1575 = vmatprep.subr.bf16.mxu0 0
        %1576 = vmatpush1.bf16.msra.mxu0 0
        %1577 = vmatprep.subr.bf16.mxu0 0
        %1578 = vmatpush1.bf16.msra.mxu0 0
        %1579 = vmatprep.subr.bf16.mxu0 0
        %1580 = vmatpush1.bf16.msra.mxu0 0
        %1581 = vmatprep.subr.bf16.mxu0 0
        %1582 = vmatpush1.bf16.msra.mxu0 0
        %1583 = vmatprep.subr.bf16.mxu0 0
        %1584 = vmatpush1.bf16.msra.mxu0 0
        %1585 = vmatprep.subr.bf16.mxu0 0
        %1586 = vmatpush1.bf16.msra.mxu0 0
        %1587 = vmatprep.subr.bf16.mxu0 0
        %1588 = vmatpush1.bf16.msra.mxu0 0
        %1589 = vmatprep.subr.bf16.mxu0 0
        %1590 = vmatpush1.bf16.msra.mxu0 0
        %1591 = vmatprep.mubr.bf16.mxu0 0
        %1592 = vmatmul.mubr.bf16.gmra.mrb[0].mxu0 %v1398
        %v1593 = vpop.f32.mrb[0].mxu0
        %v1594 = vadd.f32 %v1309, %v1593
        %v1595 = vpop.f32.mrb[0].mxu0
        %v1596 = vadd.f32 %v1311, %v1595
        %v1597 = vpop.f32.mrb[0].mxu0
        %v1598 = vpop.f32.mrb[0].mxu0
        %1599 = vdwg.mxu0
        %1600 = vmatprep.subr.bf16.mxu0 %v1428
        %1601 = vmatpush1.bf16.msra.mxu0 %v1425
        %1602 = vmatprep.subr.bf16.mxu0 0
        %1603 = vmatpush1.bf16.msra.mxu0 0
        %1604 = vmatprep.subr.bf16.mxu0 0
        %1605 = vmatpush1.bf16.msra.mxu0 0
        %1606 = vmatprep.subr.bf16.mxu0 0
        %1607 = vmatpush1.bf16.msra.mxu0 0
        %1608 = vmatprep.subr.bf16.mxu0 0
        %1609 = vmatpush1.bf16.msra.mxu0 0
        %1610 = vmatprep.subr.bf16.mxu0 0
        %1611 = vmatpush1.bf16.msra.mxu0 0
        %1612 = vmatprep.subr.bf16.mxu0 0
        %1613 = vmatpush1.bf16.msra.mxu0 0
        %1614 = vmatprep.subr.bf16.mxu0 0
        %1615 = vmatpush1.bf16.msra.mxu0 0
        %1616 = vmatprep.subr.bf16.mxu0 0
        %1617 = vmatpush1.bf16.msra.mxu0 0
        %1618 = vmatprep.subr.bf16.mxu0 0
        %1619 = vmatpush1.bf16.msra.mxu0 0
        %1620 = vmatprep.subr.bf16.mxu0 0
        %1621 = vmatpush1.bf16.msra.mxu0 0
        %1622 = vmatprep.subr.bf16.mxu0 0
        %1623 = vmatpush1.bf16.msra.mxu0 0
        %1624 = vmatprep.subr.bf16.mxu0 0
        %1625 = vmatpush1.bf16.msra.mxu0 0
        %1626 = vmatprep.subr.bf16.mxu0 0
        %1627 = vmatpush1.bf16.msra.mxu0 0
        %1628 = vmatprep.subr.bf16.mxu0 0
        %1629 = vmatpush1.bf16.msra.mxu0 0
        %1630 = vmatprep.subr.bf16.mxu0 0
        %1631 = vmatpush1.bf16.msra.mxu0 0
        %1632 = vmatprep.mubr.bf16.mxu0 0
        %1633 = vmatmul.mubr.bf16.gmra.mrb[0].mxu0 %v1398
        %v1634 = vpop.f32.mrb[0].mxu0
        %v1635 = vadd.f32 %v1350, %v1634
        %v1636 = vpop.f32.mrb[0].mxu0
        %v1637 = vadd.f32 %v1352, %v1636
        %v1638 = vpop.f32.mrb[0].mxu0
        %v1639 = vpop.f32.mrb[0].mxu0
        %1640 = vdwg.mxu0
        %1641 = vmatprep.subr.bf16.mxu0 %v1434
        %1642 = vmatpush1.bf16.msra.mxu0 %v1431
        %1643 = vmatprep.subr.bf16.mxu0 0
        %1644 = vmatpush1.bf16.msra.mxu0 0
        %1645 = vmatprep.subr.bf16.mxu0 0
        %1646 = vmatpush1.bf16.msra.mxu0 0
        %1647 = vmatprep.subr.bf16.mxu0 0
        %1648 = vmatpush1.bf16.msra.mxu0 0
        %1649 = vmatprep.subr.bf16.mxu0 0
        %1650 = vmatpush1.bf16.msra.mxu0 0
        %1651 = vmatprep.subr.bf16.mxu0 0
        %1652 = vmatpush1.bf16.msra.mxu0 0
        %1653 = vmatprep.subr.bf16.mxu0 0
        %1654 = vmatpush1.bf16.msra.mxu0 0
        %1655 = vmatprep.subr.bf16.mxu0 0
        %1656 = vmatpush1.bf16.msra.mxu0 0
        %1657 = vmatprep.subr.bf16.mxu0 0
        %1658 = vmatpush1.bf16.msra.mxu0 0
        %1659 = vmatprep.subr.bf16.mxu0 0
        %1660 = vmatpush1.bf16.msra.mxu0 0
        %1661 = vmatprep.subr.bf16.mxu0 0
        %1662 = vmatpush1.bf16.msra.mxu0 0
        %1663 = vmatprep.subr.bf16.mxu0 0
        %1664 = vmatpush1.bf16.msra.mxu0 0
        %1665 = vmatprep.subr.bf16.mxu0 0
        %1666 = vmatpush1.bf16.msra.mxu0 0
        %1667 = vmatprep.subr.bf16.mxu0 0
        %1668 = vmatpush1.bf16.msra.mxu0 0
        %1669 = vmatprep.subr.bf16.mxu0 0
        %1670 = vmatpush1.bf16.msra.mxu0 0
        %1671 = vmatprep.subr.bf16.mxu0 0
        %1672 = vmatpush1.bf16.msra.mxu0 0
        %1673 = vmatprep.mubr.bf16.mxu0 0
        %1674 = vmatmul.mubr.bf16.gmra.mrb[0].mxu0 %v1398
        %v1675 = vpop.f32.mrb[0].mxu0
        %v1676 = vadd.f32 %v1391, %v1675
        %v1677 = vpop.f32.mrb[0].mxu0
        %v1678 = vadd.f32 %v1393, %v1677
        %v1679 = vpop.f32.mrb[0].mxu0
        %v1680 = vpop.f32.mrb[0].mxu0
        %1681 = vdwg.mxu0
        %s1682 = scalar_lea.vmem %s4, 4
        %v1683 = vld [vmem:[%s1682] sm:$0x3]
        %1684 = vrot.lane.b32.xlu0 %v1036, 126
        %v1685 = vpop.permute.xlu0 %1684
        %1686 = vrot.lane.b32.xlu0 %v1037, 126
        %v1687 = vpop.permute.xlu0 %1686
        %1688 = vrot.lane.b32.xlu0 %v1038, 126
        %v1689 = vpop.permute.xlu0 %1688
        %1690 = vrot.lane.b32.xlu0 %v1039, 126
        %v1691 = vpop.permute.xlu0 %1690
        %1692 = vrot.lane.b32.xlu0 %v1040, 126
        %v1693 = vpop.permute.xlu0 %1692
        %1694 = vrot.lane.b32.xlu0 %v1041, 126
        %v1695 = vpop.permute.xlu0 %1694
        %1696 = vrot.lane.b32.xlu0 %v1042, 126
        %v1697 = vpop.permute.xlu0 %1696
        %1698 = vrot.lane.b32.xlu0 %v1043, 126
        %v1699 = vpop.permute.xlu0 %1698
        %1700 = vrot.lane.b32.xlu0 %v1044, 126
        %v1701 = vpop.permute.xlu0 %1700
        %1702 = vrot.lane.b32.xlu0 %v1045, 126
        %v1703 = vpop.permute.xlu0 %1702
        %1704 = vrot.lane.b32.xlu0 %v1046, 126
        %v1705 = vpop.permute.xlu0 %1704
        %1706 = vrot.lane.b32.xlu0 %v1047, 126
        %v1707 = vpop.permute.xlu0 %1706
        %1708 = vrot.lane.b32.xlu0 %v1048, 126
        %v1709 = vpop.permute.xlu0 %1708
        %vm1710 = vcmask 1031168
        %v1711 = vsel %vm1710, %v1685, %v1687
        %v1712 = vsel %vm1710, %v1687, %v1689
        %v1713 = vsel %vm1710, %v1689, %v1691
        %v1714 = vsel %vm1710, %v1691, %v1693
        %v1715 = vsel %vm1710, %v1693, %v1695
        %v1716 = vsel %vm1710, %v1695, %v1697
        %v1717 = vsel %vm1710, %v1697, %v1699
        %v1718 = vsel %vm1710, %v1699, %v1701
        %v1719 = vsel %vm1710, %v1701, %v1703
        %v1720 = vsel %vm1710, %v1703, %v1705
        %v1721 = vsel %vm1710, %v1705, %v1707
        %v1722 = vsel %vm1710, %v1707, %v1709
        %v1724 = vsel %vm1110, %v1683, 0
        %v1727 = vsel %vm1114, %v1711, 0
        %v1730 = vsel %vm1114, %v1712, 0
        %v1733 = vsel %vm1114, %v1713, 0
        %v1736 = vsel %vm1114, %v1714, 0
        %v1739 = vsel %vm1114, %v1715, 0
        %v1742 = vsel %vm1114, %v1716, 0
        %v1745 = vsel %vm1114, %v1717, 0
        %v1748 = vsel %vm1114, %v1718, 0
        %v1751 = vsel %vm1114, %v1719, 0
        %v1754 = vsel %vm1114, %v1720, 0
        %v1757 = vsel %vm1114, %v1721, 0
        %v1760 = vsel %vm1114, %v1722, 0
        %1762 = vmatprep.subr.bf16.mxu0 %v1730
        %1763 = vmatpush1.bf16.msra.mxu0 %v1727
        %1764 = vmatprep.subr.bf16.mxu0 0
        %1765 = vmatpush1.bf16.msra.mxu0 0
        %1766 = vmatprep.subr.bf16.mxu0 0
        %1767 = vmatpush1.bf16.msra.mxu0 0
        %1768 = vmatprep.subr.bf16.mxu0 0
        %1769 = vmatpush1.bf16.msra.mxu0 0
        %1770 = vmatprep.subr.bf16.mxu0 0
        %1771 = vmatpush1.bf16.msra.mxu0 0
        %1772 = vmatprep.subr.bf16.mxu0 0
        %1773 = vmatpush1.bf16.msra.mxu0 0
        %1774 = vmatprep.subr.bf16.mxu0 0
        %1775 = vmatpush1.bf16.msra.mxu0 0
        %1776 = vmatprep.subr.bf16.mxu0 0
        %1777 = vmatpush1.bf16.msra.mxu0 0
        %1778 = vmatprep.subr.bf16.mxu0 0
        %1779 = vmatpush1.bf16.msra.mxu0 0
        %1780 = vmatprep.subr.bf16.mxu0 0
        %1781 = vmatpush1.bf16.msra.mxu0 0
        %1782 = vmatprep.subr.bf16.mxu0 0
        %1783 = vmatpush1.bf16.msra.mxu0 0
        %1784 = vmatprep.subr.bf16.mxu0 0
        %1785 = vmatpush1.bf16.msra.mxu0 0
        %1786 = vmatprep.subr.bf16.mxu0 0
        %1787 = vmatpush1.bf16.msra.mxu0 0
        %1788 = vmatprep.subr.bf16.mxu0 0
        %1789 = vmatpush1.bf16.msra.mxu0 0
        %1790 = vmatprep.subr.bf16.mxu0 0
        %1791 = vmatpush1.bf16.msra.mxu0 0
        %1792 = vmatprep.subr.bf16.mxu0 0
        %1793 = vmatpush1.bf16.msra.mxu0 0
        %1794 = vmatprep.mubr.bf16.mxu0 0
        %1795 = vmatmul.mubr.bf16.gmra.mrb[0].mxu0 %v1724
        %v1796 = vpop.f32.mrb[0].mxu0
        %v1797 = vadd.f32 0.0, %v1796
        %v1798 = vpop.f32.mrb[0].mxu0
        %v1799 = vadd.f32 0.0, %v1798
        %v1800 = vpop.f32.mrb[0].mxu0
        %v1801 = vpop.f32.mrb[0].mxu0
        %1802 = vdwg.mxu0
        %1803 = vmatprep.subr.bf16.mxu0 %v1736
        %1804 = vmatpush1.bf16.msra.mxu0 %v1733
        %1805 = vmatprep.subr.bf16.mxu0 0
        %1806 = vmatpush1.bf16.msra.mxu0 0
        %1807 = vmatprep.subr.bf16.mxu0 0
        %1808 = vmatpush1.bf16.msra.mxu0 0
        %1809 = vmatprep.subr.bf16.mxu0 0
        %1810 = vmatpush1.bf16.msra.mxu0 0
        %1811 = vmatprep.subr.bf16.mxu0 0
        %1812 = vmatpush1.bf16.msra.mxu0 0
        %1813 = vmatprep.subr.bf16.mxu0 0
        %1814 = vmatpush1.bf16.msra.mxu0 0
        %1815 = vmatprep.subr.bf16.mxu0 0
        %1816 = vmatpush1.bf16.msra.mxu0 0
        %1817 = vmatprep.subr.bf16.mxu0 0
        %1818 = vmatpush1.bf16.msra.mxu0 0
        %1819 = vmatprep.subr.bf16.mxu0 0
        %1820 = vmatpush1.bf16.msra.mxu0 0
        %1821 = vmatprep.subr.bf16.mxu0 0
        %1822 = vmatpush1.bf16.msra.mxu0 0
        %1823 = vmatprep.subr.bf16.mxu0 0
        %1824 = vmatpush1.bf16.msra.mxu0 0
        %1825 = vmatprep.subr.bf16.mxu0 0
        %1826 = vmatpush1.bf16.msra.mxu0 0
        %1827 = vmatprep.subr.bf16.mxu0 0
        %1828 = vmatpush1.bf16.msra.mxu0 0
        %1829 = vmatprep.subr.bf16.mxu0 0
        %1830 = vmatpush1.bf16.msra.mxu0 0
        %1831 = vmatprep.subr.bf16.mxu0 0
        %1832 = vmatpush1.bf16.msra.mxu0 0
        %1833 = vmatprep.subr.bf16.mxu0 0
        %1834 = vmatpush1.bf16.msra.mxu0 0
        %1835 = vmatprep.mubr.bf16.mxu0 0
        %1836 = vmatmul.mubr.bf16.gmra.mrb[0].mxu0 %v1724
        %v1837 = vpop.f32.mrb[0].mxu0
        %v1838 = vadd.f32 0.0, %v1837
        %v1839 = vpop.f32.mrb[0].mxu0
        %v1840 = vadd.f32 0.0, %v1839
        %v1841 = vpop.f32.mrb[0].mxu0
        %v1842 = vpop.f32.mrb[0].mxu0
        %1843 = vdwg.mxu0
        %1844 = vmatprep.subr.bf16.mxu0 %v1742
        %1845 = vmatpush1.bf16.msra.mxu0 %v1739
        %1846 = vmatprep.subr.bf16.mxu0 0
        %1847 = vmatpush1.bf16.msra.mxu0 0
        %1848 = vmatprep.subr.bf16.mxu0 0
        %1849 = vmatpush1.bf16.msra.mxu0 0
        %1850 = vmatprep.subr.bf16.mxu0 0
        %1851 = vmatpush1.bf16.msra.mxu0 0
        %1852 = vmatprep.subr.bf16.mxu0 0
        %1853 = vmatpush1.bf16.msra.mxu0 0
        %1854 = vmatprep.subr.bf16.mxu0 0
        %1855 = vmatpush1.bf16.msra.mxu0 0
        %1856 = vmatprep.subr.bf16.mxu0 0
        %1857 = vmatpush1.bf16.msra.mxu0 0
        %1858 = vmatprep.subr.bf16.mxu0 0
        %1859 = vmatpush1.bf16.msra.mxu0 0
        %1860 = vmatprep.subr.bf16.mxu0 0
        %1861 = vmatpush1.bf16.msra.mxu0 0
        %1862 = vmatprep.subr.bf16.mxu0 0
        %1863 = vmatpush1.bf16.msra.mxu0 0
        %1864 = vmatprep.subr.bf16.mxu0 0
        %1865 = vmatpush1.bf16.msra.mxu0 0
        %1866 = vmatprep.subr.bf16.mxu0 0
        %1867 = vmatpush1.bf16.msra.mxu0 0
        %1868 = vmatprep.subr.bf16.mxu0 0
        %1869 = vmatpush1.bf16.msra.mxu0 0
        %1870 = vmatprep.subr.bf16.mxu0 0
        %1871 = vmatpush1.bf16.msra.mxu0 0
        %1872 = vmatprep.subr.bf16.mxu0 0
        %1873 = vmatpush1.bf16.msra.mxu0 0
        %1874 = vmatprep.subr.bf16.mxu0 0
        %1875 = vmatpush1.bf16.msra.mxu0 0
        %1876 = vmatprep.mubr.bf16.mxu0 0
        %1877 = vmatmul.mubr.bf16.gmra.mrb[0].mxu0 %v1724
        %v1878 = vpop.f32.mrb[0].mxu0
        %v1879 = vadd.f32 0.0, %v1878
        %v1880 = vpop.f32.mrb[0].mxu0
        %v1881 = vadd.f32 0.0, %v1880
        %v1882 = vpop.f32.mrb[0].mxu0
        %v1883 = vpop.f32.mrb[0].mxu0
        %1884 = vdwg.mxu0
        %1885 = vmatprep.subr.bf16.mxu0 %v1748
        %1886 = vmatpush1.bf16.msra.mxu0 %v1745
        %1887 = vmatprep.subr.bf16.mxu0 0
        %1888 = vmatpush1.bf16.msra.mxu0 0
        %1889 = vmatprep.subr.bf16.mxu0 0
        %1890 = vmatpush1.bf16.msra.mxu0 0
        %1891 = vmatprep.subr.bf16.mxu0 0
        %1892 = vmatpush1.bf16.msra.mxu0 0
        %1893 = vmatprep.subr.bf16.mxu0 0
        %1894 = vmatpush1.bf16.msra.mxu0 0
        %1895 = vmatprep.subr.bf16.mxu0 0
        %1896 = vmatpush1.bf16.msra.mxu0 0
        %1897 = vmatprep.subr.bf16.mxu0 0
        %1898 = vmatpush1.bf16.msra.mxu0 0
        %1899 = vmatprep.subr.bf16.mxu0 0
        %1900 = vmatpush1.bf16.msra.mxu0 0
        %1901 = vmatprep.subr.bf16.mxu0 0
        %1902 = vmatpush1.bf16.msra.mxu0 0
        %1903 = vmatprep.subr.bf16.mxu0 0
        %1904 = vmatpush1.bf16.msra.mxu0 0
        %1905 = vmatprep.subr.bf16.mxu0 0
        %1906 = vmatpush1.bf16.msra.mxu0 0
        %1907 = vmatprep.subr.bf16.mxu0 0
        %1908 = vmatpush1.bf16.msra.mxu0 0
        %1909 = vmatprep.subr.bf16.mxu0 0
        %1910 = vmatpush1.bf16.msra.mxu0 0
        %1911 = vmatprep.subr.bf16.mxu0 0
        %1912 = vmatpush1.bf16.msra.mxu0 0
        %1913 = vmatprep.subr.bf16.mxu0 0
        %1914 = vmatpush1.bf16.msra.mxu0 0
        %1915 = vmatprep.subr.bf16.mxu0 0
        %1916 = vmatpush1.bf16.msra.mxu0 0
        %1917 = vmatprep.mubr.bf16.mxu0 0
        %1918 = vmatmul.mubr.bf16.gmra.mrb[0].mxu0 %v1724
        %v1919 = vpop.f32.mrb[0].mxu0
        %v1920 = vadd.f32 0.0, %v1919
        %v1921 = vpop.f32.mrb[0].mxu0
        %v1922 = vadd.f32 0.0, %v1921
        %v1923 = vpop.f32.mrb[0].mxu0
        %v1924 = vpop.f32.mrb[0].mxu0
        %1925 = vdwg.mxu0
        %1926 = vmatprep.subr.bf16.mxu0 %v1754
        %1927 = vmatpush1.bf16.msra.mxu0 %v1751
        %1928 = vmatprep.subr.bf16.mxu0 0
        %1929 = vmatpush1.bf16.msra.mxu0 0
        %1930 = vmatprep.subr.bf16.mxu0 0
        %1931 = vmatpush1.bf16.msra.mxu0 0
        %1932 = vmatprep.subr.bf16.mxu0 0
        %1933 = vmatpush1.bf16.msra.mxu0 0
        %1934 = vmatprep.subr.bf16.mxu0 0
        %1935 = vmatpush1.bf16.msra.mxu0 0
        %1936 = vmatprep.subr.bf16.mxu0 0
        %1937 = vmatpush1.bf16.msra.mxu0 0
        %1938 = vmatprep.subr.bf16.mxu0 0
        %1939 = vmatpush1.bf16.msra.mxu0 0
        %1940 = vmatprep.subr.bf16.mxu0 0
        %1941 = vmatpush1.bf16.msra.mxu0 0
        %1942 = vmatprep.subr.bf16.mxu0 0
        %1943 = vmatpush1.bf16.msra.mxu0 0
        %1944 = vmatprep.subr.bf16.mxu0 0
        %1945 = vmatpush1.bf16.msra.mxu0 0
        %1946 = vmatprep.subr.bf16.mxu0 0
        %1947 = vmatpush1.bf16.msra.mxu0 0
        %1948 = vmatprep.subr.bf16.mxu0 0
        %1949 = vmatpush1.bf16.msra.mxu0 0
        %1950 = vmatprep.subr.bf16.mxu0 0
        %1951 = vmatpush1.bf16.msra.mxu0 0
        %1952 = vmatprep.subr.bf16.mxu0 0
        %1953 = vmatpush1.bf16.msra.mxu0 0
        %1954 = vmatprep.subr.bf16.mxu0 0
        %1955 = vmatpush1.bf16.msra.mxu0 0
        %1956 = vmatprep.subr.bf16.mxu0 0
        %1957 = vmatpush1.bf16.msra.mxu0 0
        %1958 = vmatprep.mubr.bf16.mxu0 0
        %1959 = vmatmul.mubr.bf16.gmra.mrb[0].mxu0 %v1724
        %v1960 = vpop.f32.mrb[0].mxu0
        %v1961 = vadd.f32 0.0, %v1960
        %v1962 = vpop.f32.mrb[0].mxu0
        %v1963 = vadd.f32 0.0, %v1962
        %v1964 = vpop.f32.mrb[0].mxu0
        %v1965 = vpop.f32.mrb[0].mxu0
        %1966 = vdwg.mxu0
        %1967 = vmatprep.subr.bf16.mxu0 %v1760
        %1968 = vmatpush1.bf16.msra.mxu0 %v1757
        %1969 = vmatprep.subr.bf16.mxu0 0
        %1970 = vmatpush1.bf16.msra.mxu0 0
        %1971 = vmatprep.subr.bf16.mxu0 0
        %1972 = vmatpush1.bf16.msra.mxu0 0
        %1973 = vmatprep.subr.bf16.mxu0 0
        %1974 = vmatpush1.bf16.msra.mxu0 0
        %1975 = vmatprep.subr.bf16.mxu0 0
        %1976 = vmatpush1.bf16.msra.mxu0 0
        %1977 = vmatprep.subr.bf16.mxu0 0
        %1978 = vmatpush1.bf16.msra.mxu0 0
        %1979 = vmatprep.subr.bf16.mxu0 0
        %1980 = vmatpush1.bf16.msra.mxu0 0
        %1981 = vmatprep.subr.bf16.mxu0 0
        %1982 = vmatpush1.bf16.msra.mxu0 0
        %1983 = vmatprep.subr.bf16.mxu0 0
        %1984 = vmatpush1.bf16.msra.mxu0 0
        %1985 = vmatprep.subr.bf16.mxu0 0
        %1986 = vmatpush1.bf16.msra.mxu0 0
        %1987 = vmatprep.subr.bf16.mxu0 0
        %1988 = vmatpush1.bf16.msra.mxu0 0
        %1989 = vmatprep.subr.bf16.mxu0 0
        %1990 = vmatpush1.bf16.msra.mxu0 0
        %1991 = vmatprep.subr.bf16.mxu0 0
        %1992 = vmatpush1.bf16.msra.mxu0 0
        %1993 = vmatprep.subr.bf16.mxu0 0
        %1994 = vmatpush1.bf16.msra.mxu0 0
        %1995 = vmatprep.subr.bf16.mxu0 0
        %1996 = vmatpush1.bf16.msra.mxu0 0
        %1997 = vmatprep.subr.bf16.mxu0 0
        %1998 = vmatpush1.bf16.msra.mxu0 0
        %1999 = vmatprep.mubr.bf16.mxu0 0
        %2000 = vmatmul.mubr.bf16.gmra.mrb[0].mxu0 %v1724
        %v2001 = vpop.f32.mrb[0].mxu0
        %v2002 = vadd.f32 0.0, %v2001
        %v2003 = vpop.f32.mrb[0].mxu0
        %v2004 = vadd.f32 0.0, %v2003
        %v2005 = vpop.f32.mrb[0].mxu0
        %v2006 = vpop.f32.mrb[0].mxu0
        %2007 = vdwg.mxu0
        %v2008 = vadd.f32 %v1471, %v1797
        %v2009 = vadd.f32 %v1473, %v1799
        %v2010 = vadd.f32 %v1512, %v1838
        %v2011 = vadd.f32 %v1514, %v1840
        %v2012 = vadd.f32 %v1553, %v1879
        %v2013 = vadd.f32 %v1555, %v1881
        %v2014 = vadd.f32 %v1594, %v1920
        %v2015 = vadd.f32 %v1596, %v1922
        %v2016 = vadd.f32 %v1635, %v1961
        %v2017 = vadd.f32 %v1637, %v1963
        %v2018 = vadd.f32 %v1676, %v2002
        %v2019 = vadd.f32 %v1678, %v2004
        %s2020 = scalar_lea.vmem %s4, 6
        %v2021 = vld [vmem:[%s2020] sm:$0x3]
        %2022 = vrot.lane.b32.xlu0 %v1036, 110
        %v2023 = vpop.permute.xlu0 %2022
        %2024 = vrot.lane.b32.xlu0 %v1037, 110
        %v2025 = vpop.permute.xlu0 %2024
        %2026 = vrot.lane.b32.xlu0 %v1038, 110
        %v2027 = vpop.permute.xlu0 %2026
        %2028 = vrot.lane.b32.xlu0 %v1039, 110
        %v2029 = vpop.permute.xlu0 %2028
        %2030 = vrot.lane.b32.xlu0 %v1040, 110
        %v2031 = vpop.permute.xlu0 %2030
        %2032 = vrot.lane.b32.xlu0 %v1041, 110
        %v2033 = vpop.permute.xlu0 %2032
        %2034 = vrot.lane.b32.xlu0 %v1042, 110
        %v2035 = vpop.permute.xlu0 %2034
        %2036 = vrot.lane.b32.xlu0 %v1043, 110
        %v2037 = vpop.permute.xlu0 %2036
        %2038 = vrot.lane.b32.xlu0 %v1044, 110
        %v2039 = vpop.permute.xlu0 %2038
        %2040 = vrot.lane.b32.xlu0 %v1045, 110
        %v2041 = vpop.permute.xlu0 %2040
        %2042 = vrot.lane.b32.xlu0 %v1046, 110
        %v2043 = vpop.permute.xlu0 %2042
        %2044 = vrot.lane.b32.xlu0 %v1047, 110
        %v2045 = vpop.permute.xlu0 %2044
        %2046 = vrot.lane.b32.xlu0 %v1048, 110
        %v2047 = vpop.permute.xlu0 %2046
        %vm2048 = vcmask 900096
        %v2049 = vsel %vm2048, %v2023, %v2025
        %v2050 = vsel %vm2048, %v2025, %v2027
        %v2051 = vsel %vm2048, %v2027, %v2029
        %v2052 = vsel %vm2048, %v2029, %v2031
        %v2053 = vsel %vm2048, %v2031, %v2033
        %v2054 = vsel %vm2048, %v2033, %v2035
        %v2055 = vsel %vm2048, %v2035, %v2037
        %v2056 = vsel %vm2048, %v2037, %v2039
        %v2057 = vsel %vm2048, %v2039, %v2041
        %v2058 = vsel %vm2048, %v2041, %v2043
        %v2059 = vsel %vm2048, %v2043, %v2045
        %v2060 = vsel %vm2048, %v2045, %v2047
        %v2062 = vsel %vm1110, %v2021, 0
        %v2065 = vsel %vm1114, %v2049, 0
        %v2068 = vsel %vm1114, %v2050, 0
        %v2071 = vsel %vm1114, %v2051, 0
        %v2074 = vsel %vm1114, %v2052, 0
        %v2077 = vsel %vm1114, %v2053, 0
        %v2080 = vsel %vm1114, %v2054, 0
        %v2083 = vsel %vm1114, %v2055, 0
        %v2086 = vsel %vm1114, %v2056, 0
        %v2089 = vsel %vm1114, %v2057, 0
        %v2092 = vsel %vm1114, %v2058, 0
        %v2095 = vsel %vm1114, %v2059, 0
        %v2098 = vsel %vm1114, %v2060, 0
        %2100 = vmatprep.subr.bf16.mxu0 %v2068
        %2101 = vmatpush1.bf16.msra.mxu0 %v2065
        %2102 = vmatprep.subr.bf16.mxu0 0
        %2103 = vmatpush1.bf16.msra.mxu0 0
        %2104 = vmatprep.subr.bf16.mxu0 0
        %2105 = vmatpush1.bf16.msra.mxu0 0
        %2106 = vmatprep.subr.bf16.mxu0 0
        %2107 = vmatpush1.bf16.msra.mxu0 0
        %2108 = vmatprep.subr.bf16.mxu0 0
        %2109 = vmatpush1.bf16.msra.mxu0 0
        %2110 = vmatprep.subr.bf16.mxu0 0
        %2111 = vmatpush1.bf16.msra.mxu0 0
        %2112 = vmatprep.subr.bf16.mxu0 0
        %2113 = vmatpush1.bf16.msra.mxu0 0
        %2114 = vmatprep.subr.bf16.mxu0 0
        %2115 = vmatpush1.bf16.msra.mxu0 0
        %2116 = vmatprep.subr.bf16.mxu0 0
        %2117 = vmatpush1.bf16.msra.mxu0 0
        %2118 = vmatprep.subr.bf16.mxu0 0
        %2119 = vmatpush1.bf16.msra.mxu0 0
        %2120 = vmatprep.subr.bf16.mxu0 0
        %2121 = vmatpush1.bf16.msra.mxu0 0
        %2122 = vmatprep.subr.bf16.mxu0 0
        %2123 = vmatpush1.bf16.msra.mxu0 0
        %2124 = vmatprep.subr.bf16.mxu0 0
        %2125 = vmatpush1.bf16.msra.mxu0 0
        %2126 = vmatprep.subr.bf16.mxu0 0
        %2127 = vmatpush1.bf16.msra.mxu0 0
        %2128 = vmatprep.subr.bf16.mxu0 0
        %2129 = vmatpush1.bf16.msra.mxu0 0
        %2130 = vmatprep.subr.bf16.mxu0 0
        %2131 = vmatpush1.bf16.msra.mxu0 0
        %2132 = vmatprep.mubr.bf16.mxu0 0
        %2133 = vmatmul.mubr.bf16.gmra.mrb[0].mxu0 %v2062
        %v2134 = vpop.f32.mrb[0].mxu0
        %v2135 = vadd.f32 0.0, %v2134
        %v2136 = vpop.f32.mrb[0].mxu0
        %v2137 = vadd.f32 0.0, %v2136
        %v2138 = vpop.f32.mrb[0].mxu0
        %v2139 = vpop.f32.mrb[0].mxu0
        %2140 = vdwg.mxu0
        %2141 = vmatprep.subr.bf16.mxu0 %v2074
        %2142 = vmatpush1.bf16.msra.mxu0 %v2071
        %2143 = vmatprep.subr.bf16.mxu0 0
        %2144 = vmatpush1.bf16.msra.mxu0 0
        %2145 = vmatprep.subr.bf16.mxu0 0
        %2146 = vmatpush1.bf16.msra.mxu0 0
        %2147 = vmatprep.subr.bf16.mxu0 0
        %2148 = vmatpush1.bf16.msra.mxu0 0
        %2149 = vmatprep.subr.bf16.mxu0 0
        %2150 = vmatpush1.bf16.msra.mxu0 0
        %2151 = vmatprep.subr.bf16.mxu0 0
        %2152 = vmatpush1.bf16.msra.mxu0 0
        %2153 = vmatprep.subr.bf16.mxu0 0
        %2154 = vmatpush1.bf16.msra.mxu0 0
        %2155 = vmatprep.subr.bf16.mxu0 0
        %2156 = vmatpush1.bf16.msra.mxu0 0
        %2157 = vmatprep.subr.bf16.mxu0 0
        %2158 = vmatpush1.bf16.msra.mxu0 0
        %2159 = vmatprep.subr.bf16.mxu0 0
        %2160 = vmatpush1.bf16.msra.mxu0 0
        %2161 = vmatprep.subr.bf16.mxu0 0
        %2162 = vmatpush1.bf16.msra.mxu0 0
        %2163 = vmatprep.subr.bf16.mxu0 0
        %2164 = vmatpush1.bf16.msra.mxu0 0
        %2165 = vmatprep.subr.bf16.mxu0 0
        %2166 = vmatpush1.bf16.msra.mxu0 0
        %2167 = vmatprep.subr.bf16.mxu0 0
        %2168 = vmatpush1.bf16.msra.mxu0 0
        %2169 = vmatprep.subr.bf16.mxu0 0
        %2170 = vmatpush1.bf16.msra.mxu0 0
        %2171 = vmatprep.subr.bf16.mxu0 0
        %2172 = vmatpush1.bf16.msra.mxu0 0
        %2173 = vmatprep.mubr.bf16.mxu0 0
        %2174 = vmatmul.mubr.bf16.gmra.mrb[0].mxu0 %v2062
        %v2175 = vpop.f32.mrb[0].mxu0
        %v2176 = vadd.f32 0.0, %v2175
        %v2177 = vpop.f32.mrb[0].mxu0
        %v2178 = vadd.f32 0.0, %v2177
        %v2179 = vpop.f32.mrb[0].mxu0
        %v2180 = vpop.f32.mrb[0].mxu0
        %2181 = vdwg.mxu0
        %2182 = vmatprep.subr.bf16.mxu0 %v2080
        %2183 = vmatpush1.bf16.msra.mxu0 %v2077
        %2184 = vmatprep.subr.bf16.mxu0 0
        %2185 = vmatpush1.bf16.msra.mxu0 0
        %2186 = vmatprep.subr.bf16.mxu0 0
        %2187 = vmatpush1.bf16.msra.mxu0 0
        %2188 = vmatprep.subr.bf16.mxu0 0
        %2189 = vmatpush1.bf16.msra.mxu0 0
        %2190 = vmatprep.subr.bf16.mxu0 0
        %2191 = vmatpush1.bf16.msra.mxu0 0
        %2192 = vmatprep.subr.bf16.mxu0 0
        %2193 = vmatpush1.bf16.msra.mxu0 0
        %2194 = vmatprep.subr.bf16.mxu0 0
        %2195 = vmatpush1.bf16.msra.mxu0 0
        %2196 = vmatprep.subr.bf16.mxu0 0
        %2197 = vmatpush1.bf16.msra.mxu0 0
        %2198 = vmatprep.subr.bf16.mxu0 0
        %2199 = vmatpush1.bf16.msra.mxu0 0
        %2200 = vmatprep.subr.bf16.mxu0 0
        %2201 = vmatpush1.bf16.msra.mxu0 0
        %2202 = vmatprep.subr.bf16.mxu0 0
        %2203 = vmatpush1.bf16.msra.mxu0 0
        %2204 = vmatprep.subr.bf16.mxu0 0
        %2205 = vmatpush1.bf16.msra.mxu0 0
        %2206 = vmatprep.subr.bf16.mxu0 0
        %2207 = vmatpush1.bf16.msra.mxu0 0
        %2208 = vmatprep.subr.bf16.mxu0 0
        %2209 = vmatpush1.bf16.msra.mxu0 0
        %2210 = vmatprep.subr.bf16.mxu0 0
        %2211 = vmatpush1.bf16.msra.mxu0 0
        %2212 = vmatprep.subr.bf16.mxu0 0
        %2213 = vmatpush1.bf16.msra.mxu0 0
        %2214 = vmatprep.mubr.bf16.mxu0 0
        %2215 = vmatmul.mubr.bf16.gmra.mrb[0].mxu0 %v2062
        %v2216 = vpop.f32.mrb[0].mxu0
        %v2217 = vadd.f32 0.0, %v2216
        %v2218 = vpop.f32.mrb[0].mxu0
        %v2219 = vadd.f32 0.0, %v2218
        %v2220 = vpop.f32.mrb[0].mxu0
        %v2221 = vpop.f32.mrb[0].mxu0
        %2222 = vdwg.mxu0
        %2223 = vmatprep.subr.bf16.mxu0 %v2086
        %2224 = vmatpush1.bf16.msra.mxu0 %v2083
        %2225 = vmatprep.subr.bf16.mxu0 0
        %2226 = vmatpush1.bf16.msra.mxu0 0
        %2227 = vmatprep.subr.bf16.mxu0 0
        %2228 = vmatpush1.bf16.msra.mxu0 0
        %2229 = vmatprep.subr.bf16.mxu0 0
        %2230 = vmatpush1.bf16.msra.mxu0 0
        %2231 = vmatprep.subr.bf16.mxu0 0
        %2232 = vmatpush1.bf16.msra.mxu0 0
        %2233 = vmatprep.subr.bf16.mxu0 0
        %2234 = vmatpush1.bf16.msra.mxu0 0
        %2235 = vmatprep.subr.bf16.mxu0 0
        %2236 = vmatpush1.bf16.msra.mxu0 0
        %2237 = vmatprep.subr.bf16.mxu0 0
        %2238 = vmatpush1.bf16.msra.mxu0 0
        %2239 = vmatprep.subr.bf16.mxu0 0
        %2240 = vmatpush1.bf16.msra.mxu0 0
        %2241 = vmatprep.subr.bf16.mxu0 0
        %2242 = vmatpush1.bf16.msra.mxu0 0
        %2243 = vmatprep.subr.bf16.mxu0 0
        %2244 = vmatpush1.bf16.msra.mxu0 0
        %2245 = vmatprep.subr.bf16.mxu0 0
        %2246 = vmatpush1.bf16.msra.mxu0 0
        %2247 = vmatprep.subr.bf16.mxu0 0
        %2248 = vmatpush1.bf16.msra.mxu0 0
        %2249 = vmatprep.subr.bf16.mxu0 0
        %2250 = vmatpush1.bf16.msra.mxu0 0
        %2251 = vmatprep.subr.bf16.mxu0 0
        %2252 = vmatpush1.bf16.msra.mxu0 0
        %2253 = vmatprep.subr.bf16.mxu0 0
        %2254 = vmatpush1.bf16.msra.mxu0 0
        %2255 = vmatprep.mubr.bf16.mxu0 0
        %2256 = vmatmul.mubr.bf16.gmra.mrb[0].mxu0 %v2062
        %v2257 = vpop.f32.mrb[0].mxu0
        %v2258 = vadd.f32 0.0, %v2257
        %v2259 = vpop.f32.mrb[0].mxu0
        %v2260 = vadd.f32 0.0, %v2259
        %v2261 = vpop.f32.mrb[0].mxu0
        %v2262 = vpop.f32.mrb[0].mxu0
        %2263 = vdwg.mxu0
        %2264 = vmatprep.subr.bf16.mxu0 %v2092
        %2265 = vmatpush1.bf16.msra.mxu0 %v2089
        %2266 = vmatprep.subr.bf16.mxu0 0
        %2267 = vmatpush1.bf16.msra.mxu0 0
        %2268 = vmatprep.subr.bf16.mxu0 0
        %2269 = vmatpush1.bf16.msra.mxu0 0
        %2270 = vmatprep.subr.bf16.mxu0 0
        %2271 = vmatpush1.bf16.msra.mxu0 0
        %2272 = vmatprep.subr.bf16.mxu0 0
        %2273 = vmatpush1.bf16.msra.mxu0 0
        %2274 = vmatprep.subr.bf16.mxu0 0
        %2275 = vmatpush1.bf16.msra.mxu0 0
        %2276 = vmatprep.subr.bf16.mxu0 0
        %2277 = vmatpush1.bf16.msra.mxu0 0
        %2278 = vmatprep.subr.bf16.mxu0 0
        %2279 = vmatpush1.bf16.msra.mxu0 0
        %2280 = vmatprep.subr.bf16.mxu0 0
        %2281 = vmatpush1.bf16.msra.mxu0 0
        %2282 = vmatprep.subr.bf16.mxu0 0
        %2283 = vmatpush1.bf16.msra.mxu0 0
        %2284 = vmatprep.subr.bf16.mxu0 0
        %2285 = vmatpush1.bf16.msra.mxu0 0
        %2286 = vmatprep.subr.bf16.mxu0 0
        %2287 = vmatpush1.bf16.msra.mxu0 0
        %2288 = vmatprep.subr.bf16.mxu0 0
        %2289 = vmatpush1.bf16.msra.mxu0 0
        %2290 = vmatprep.subr.bf16.mxu0 0
        %2291 = vmatpush1.bf16.msra.mxu0 0
        %2292 = vmatprep.subr.bf16.mxu0 0
        %2293 = vmatpush1.bf16.msra.mxu0 0
        %2294 = vmatprep.subr.bf16.mxu0 0
        %2295 = vmatpush1.bf16.msra.mxu0 0
        %2296 = vmatprep.mubr.bf16.mxu0 0
        %2297 = vmatmul.mubr.bf16.gmra.mrb[0].mxu0 %v2062
        %v2298 = vpop.f32.mrb[0].mxu0
        %v2299 = vadd.f32 0.0, %v2298
        %v2300 = vpop.f32.mrb[0].mxu0
        %v2301 = vadd.f32 0.0, %v2300
        %v2302 = vpop.f32.mrb[0].mxu0
        %v2303 = vpop.f32.mrb[0].mxu0
        %2304 = vdwg.mxu0
        %2305 = vmatprep.subr.bf16.mxu0 %v2098
        %2306 = vmatpush1.bf16.msra.mxu0 %v2095
        %2307 = vmatprep.subr.bf16.mxu0 0
        %2308 = vmatpush1.bf16.msra.mxu0 0
        %2309 = vmatprep.subr.bf16.mxu0 0
        %2310 = vmatpush1.bf16.msra.mxu0 0
        %2311 = vmatprep.subr.bf16.mxu0 0
        %2312 = vmatpush1.bf16.msra.mxu0 0
        %2313 = vmatprep.subr.bf16.mxu0 0
        %2314 = vmatpush1.bf16.msra.mxu0 0
        %2315 = vmatprep.subr.bf16.mxu0 0
        %2316 = vmatpush1.bf16.msra.mxu0 0
        %2317 = vmatprep.subr.bf16.mxu0 0
        %2318 = vmatpush1.bf16.msra.mxu0 0
        %2319 = vmatprep.subr.bf16.mxu0 0
        %2320 = vmatpush1.bf16.msra.mxu0 0
        %2321 = vmatprep.subr.bf16.mxu0 0
        %2322 = vmatpush1.bf16.msra.mxu0 0
        %2323 = vmatprep.subr.bf16.mxu0 0
        %2324 = vmatpush1.bf16.msra.mxu0 0
        %2325 = vmatprep.subr.bf16.mxu0 0
        %2326 = vmatpush1.bf16.msra.mxu0 0
        %2327 = vmatprep.subr.bf16.mxu0 0
        %2328 = vmatpush1.bf16.msra.mxu0 0
        %2329 = vmatprep.subr.bf16.mxu0 0
        %2330 = vmatpush1.bf16.msra.mxu0 0
        %2331 = vmatprep.subr.bf16.mxu0 0
        %2332 = vmatpush1.bf16.msra.mxu0 0
        %2333 = vmatprep.subr.bf16.mxu0 0
        %2334 = vmatpush1.bf16.msra.mxu0 0
        %2335 = vmatprep.subr.bf16.mxu0 0
        %2336 = vmatpush1.bf16.msra.mxu0 0
        %2337 = vmatprep.mubr.bf16.mxu0 0
        %2338 = vmatmul.mubr.bf16.gmra.mrb[0].mxu0 %v2062
        %v2339 = vpop.f32.mrb[0].mxu0
        %v2340 = vadd.f32 0.0, %v2339
        %v2341 = vpop.f32.mrb[0].mxu0
        %v2342 = vadd.f32 0.0, %v2341
        %v2343 = vpop.f32.mrb[0].mxu0
        %v2344 = vpop.f32.mrb[0].mxu0
        %2345 = vdwg.mxu0
        %v2346 = vadd.f32 %v2008, %v2135
        %v2347 = vadd.f32 %v2009, %v2137
        %v2348 = vadd.f32 %v2010, %v2176
        %v2349 = vadd.f32 %v2011, %v2178
        %v2350 = vadd.f32 %v2012, %v2217
        %v2351 = vadd.f32 %v2013, %v2219
        %v2352 = vadd.f32 %v2014, %v2258
        %v2353 = vadd.f32 %v2015, %v2260
        %v2354 = vadd.f32 %v2016, %v2299
        %v2355 = vadd.f32 %v2017, %v2301
        %v2356 = vadd.f32 %v2018, %v2340
        %v2357 = vadd.f32 %v2019, %v2342
        %s2358 = scalar_lea.vmem %s4, 8
        %v2359 = vld [vmem:[%s2358] sm:$0x3]
        %2360 = vrot.lane.b32.xlu0 %v1036, 109
        %v2361 = vpop.permute.xlu0 %2360
        %2362 = vrot.lane.b32.xlu0 %v1037, 109
        %v2363 = vpop.permute.xlu0 %2362
        %2364 = vrot.lane.b32.xlu0 %v1038, 109
        %v2365 = vpop.permute.xlu0 %2364
        %2366 = vrot.lane.b32.xlu0 %v1039, 109
        %v2367 = vpop.permute.xlu0 %2366
        %2368 = vrot.lane.b32.xlu0 %v1040, 109
        %v2369 = vpop.permute.xlu0 %2368
        %2370 = vrot.lane.b32.xlu0 %v1041, 109
        %v2371 = vpop.permute.xlu0 %2370
        %2372 = vrot.lane.b32.xlu0 %v1042, 109
        %v2373 = vpop.permute.xlu0 %2372
        %2374 = vrot.lane.b32.xlu0 %v1043, 109
        %v2375 = vpop.permute.xlu0 %2374
        %2376 = vrot.lane.b32.xlu0 %v1044, 109
        %v2377 = vpop.permute.xlu0 %2376
        %2378 = vrot.lane.b32.xlu0 %v1045, 109
        %v2379 = vpop.permute.xlu0 %2378
        %2380 = vrot.lane.b32.xlu0 %v1046, 109
        %v2381 = vpop.permute.xlu0 %2380
        %2382 = vrot.lane.b32.xlu0 %v1047, 109
        %v2383 = vpop.permute.xlu0 %2382
        %2384 = vrot.lane.b32.xlu0 %v1048, 109
        %v2385 = vpop.permute.xlu0 %2384
        %vm2386 = vcmask 891904
        %v2387 = vsel %vm2386, %v2361, %v2363
        %v2388 = vsel %vm2386, %v2363, %v2365
        %v2389 = vsel %vm2386, %v2365, %v2367
        %v2390 = vsel %vm2386, %v2367, %v2369
        %v2391 = vsel %vm2386, %v2369, %v2371
        %v2392 = vsel %vm2386, %v2371, %v2373
        %v2393 = vsel %vm2386, %v2373, %v2375
        %v2394 = vsel %vm2386, %v2375, %v2377
        %v2395 = vsel %vm2386, %v2377, %v2379
        %v2396 = vsel %vm2386, %v2379, %v2381
        %v2397 = vsel %vm2386, %v2381, %v2383
        %v2398 = vsel %vm2386, %v2383, %v2385
        %v2400 = vsel %vm1110, %v2359, 0
        %v2403 = vsel %vm1114, %v2387, 0
        %v2406 = vsel %vm1114, %v2388, 0
        %v2409 = vsel %vm1114, %v2389, 0
        %v2412 = vsel %vm1114, %v2390, 0
        %v2415 = vsel %vm1114, %v2391, 0
        %v2418 = vsel %vm1114, %v2392, 0
        %v2421 = vsel %vm1114, %v2393, 0
        %v2424 = vsel %vm1114, %v2394, 0
        %v2427 = vsel %vm1114, %v2395, 0
        %v2430 = vsel %vm1114, %v2396, 0
        %v2433 = vsel %vm1114, %v2397, 0
        %v2436 = vsel %vm1114, %v2398, 0
        %2438 = vmatprep.subr.bf16.mxu0 %v2406
        %2439 = vmatpush1.bf16.msra.mxu0 %v2403
        %2440 = vmatprep.subr.bf16.mxu0 0
        %2441 = vmatpush1.bf16.msra.mxu0 0
        %2442 = vmatprep.subr.bf16.mxu0 0
        %2443 = vmatpush1.bf16.msra.mxu0 0
        %2444 = vmatprep.subr.bf16.mxu0 0
        %2445 = vmatpush1.bf16.msra.mxu0 0
        %2446 = vmatprep.subr.bf16.mxu0 0
        %2447 = vmatpush1.bf16.msra.mxu0 0
        %2448 = vmatprep.subr.bf16.mxu0 0
        %2449 = vmatpush1.bf16.msra.mxu0 0
        %2450 = vmatprep.subr.bf16.mxu0 0
        %2451 = vmatpush1.bf16.msra.mxu0 0
        %2452 = vmatprep.subr.bf16.mxu0 0
        %2453 = vmatpush1.bf16.msra.mxu0 0
        %2454 = vmatprep.subr.bf16.mxu0 0
        %2455 = vmatpush1.bf16.msra.mxu0 0
        %2456 = vmatprep.subr.bf16.mxu0 0
        %2457 = vmatpush1.bf16.msra.mxu0 0
        %2458 = vmatprep.subr.bf16.mxu0 0
        %2459 = vmatpush1.bf16.msra.mxu0 0
        %2460 = vmatprep.subr.bf16.mxu0 0
        %2461 = vmatpush1.bf16.msra.mxu0 0
        %2462 = vmatprep.subr.bf16.mxu0 0
        %2463 = vmatpush1.bf16.msra.mxu0 0
        %2464 = vmatprep.subr.bf16.mxu0 0
        %2465 = vmatpush1.bf16.msra.mxu0 0
        %2466 = vmatprep.subr.bf16.mxu0 0
        %2467 = vmatpush1.bf16.msra.mxu0 0
        %2468 = vmatprep.subr.bf16.mxu0 0
        %2469 = vmatpush1.bf16.msra.mxu0 0
        %2470 = vmatprep.mubr.bf16.mxu0 0
        %2471 = vmatmul.mubr.bf16.gmra.mrb[0].mxu0 %v2400
        %v2472 = vpop.f32.mrb[0].mxu0
        %v2473 = vadd.f32 0.0, %v2472
        %v2474 = vpop.f32.mrb[0].mxu0
        %v2475 = vadd.f32 0.0, %v2474
        %v2476 = vpop.f32.mrb[0].mxu0
        %v2477 = vpop.f32.mrb[0].mxu0
        %2478 = vdwg.mxu0
        %2479 = vmatprep.subr.bf16.mxu0 %v2412
        %2480 = vmatpush1.bf16.msra.mxu0 %v2409
        %2481 = vmatprep.subr.bf16.mxu0 0
        %2482 = vmatpush1.bf16.msra.mxu0 0
        %2483 = vmatprep.subr.bf16.mxu0 0
        %2484 = vmatpush1.bf16.msra.mxu0 0
        %2485 = vmatprep.subr.bf16.mxu0 0
        %2486 = vmatpush1.bf16.msra.mxu0 0
        %2487 = vmatprep.subr.bf16.mxu0 0
        %2488 = vmatpush1.bf16.msra.mxu0 0
        %2489 = vmatprep.subr.bf16.mxu0 0
        %2490 = vmatpush1.bf16.msra.mxu0 0
        %2491 = vmatprep.subr.bf16.mxu0 0
        %2492 = vmatpush1.bf16.msra.mxu0 0
        %2493 = vmatprep.subr.bf16.mxu0 0
        %2494 = vmatpush1.bf16.msra.mxu0 0
        %2495 = vmatprep.subr.bf16.mxu0 0
        %2496 = vmatpush1.bf16.msra.mxu0 0
        %2497 = vmatprep.subr.bf16.mxu0 0
        %2498 = vmatpush1.bf16.msra.mxu0 0
        %2499 = vmatprep.subr.bf16.mxu0 0
        %2500 = vmatpush1.bf16.msra.mxu0 0
        %2501 = vmatprep.subr.bf16.mxu0 0
        %2502 = vmatpush1.bf16.msra.mxu0 0
        %2503 = vmatprep.subr.bf16.mxu0 0
        %2504 = vmatpush1.bf16.msra.mxu0 0
        %2505 = vmatprep.subr.bf16.mxu0 0
        %2506 = vmatpush1.bf16.msra.mxu0 0
        %2507 = vmatprep.subr.bf16.mxu0 0
        %2508 = vmatpush1.bf16.msra.mxu0 0
        %2509 = vmatprep.subr.bf16.mxu0 0
        %2510 = vmatpush1.bf16.msra.mxu0 0
        %2511 = vmatprep.mubr.bf16.mxu0 0
        %2512 = vmatmul.mubr.bf16.gmra.mrb[0].mxu0 %v2400
        %v2513 = vpop.f32.mrb[0].mxu0
        %v2514 = vadd.f32 0.0, %v2513
        %v2515 = vpop.f32.mrb[0].mxu0
        %v2516 = vadd.f32 0.0, %v2515
        %v2517 = vpop.f32.mrb[0].mxu0
        %v2518 = vpop.f32.mrb[0].mxu0
        %2519 = vdwg.mxu0
        %2520 = vmatprep.subr.bf16.mxu0 %v2418
        %2521 = vmatpush1.bf16.msra.mxu0 %v2415
        %2522 = vmatprep.subr.bf16.mxu0 0
        %2523 = vmatpush1.bf16.msra.mxu0 0
        %2524 = vmatprep.subr.bf16.mxu0 0
        %2525 = vmatpush1.bf16.msra.mxu0 0
        %2526 = vmatprep.subr.bf16.mxu0 0
        %2527 = vmatpush1.bf16.msra.mxu0 0
        %2528 = vmatprep.subr.bf16.mxu0 0
        %2529 = vmatpush1.bf16.msra.mxu0 0
        %2530 = vmatprep.subr.bf16.mxu0 0
        %2531 = vmatpush1.bf16.msra.mxu0 0
        %2532 = vmatprep.subr.bf16.mxu0 0
        %2533 = vmatpush1.bf16.msra.mxu0 0
        %2534 = vmatprep.subr.bf16.mxu0 0
        %2535 = vmatpush1.bf16.msra.mxu0 0
        %2536 = vmatprep.subr.bf16.mxu0 0
        %2537 = vmatpush1.bf16.msra.mxu0 0
        %2538 = vmatprep.subr.bf16.mxu0 0
        %2539 = vmatpush1.bf16.msra.mxu0 0
        %2540 = vmatprep.subr.bf16.mxu0 0
        %2541 = vmatpush1.bf16.msra.mxu0 0
        %2542 = vmatprep.subr.bf16.mxu0 0
        %2543 = vmatpush1.bf16.msra.mxu0 0
        %2544 = vmatprep.subr.bf16.mxu0 0
        %2545 = vmatpush1.bf16.msra.mxu0 0
        %2546 = vmatprep.subr.bf16.mxu0 0
        %2547 = vmatpush1.bf16.msra.mxu0 0
        %2548 = vmatprep.subr.bf16.mxu0 0
        %2549 = vmatpush1.bf16.msra.mxu0 0
        %2550 = vmatprep.subr.bf16.mxu0 0
        %2551 = vmatpush1.bf16.msra.mxu0 0
        %2552 = vmatprep.mubr.bf16.mxu0 0
        %2553 = vmatmul.mubr.bf16.gmra.mrb[0].mxu0 %v2400
        %v2554 = vpop.f32.mrb[0].mxu0
        %v2555 = vadd.f32 0.0, %v2554
        %v2556 = vpop.f32.mrb[0].mxu0
        %v2557 = vadd.f32 0.0, %v2556
        %v2558 = vpop.f32.mrb[0].mxu0
        %v2559 = vpop.f32.mrb[0].mxu0
        %2560 = vdwg.mxu0
        %2561 = vmatprep.subr.bf16.mxu0 %v2424
        %2562 = vmatpush1.bf16.msra.mxu0 %v2421
        %2563 = vmatprep.subr.bf16.mxu0 0
        %2564 = vmatpush1.bf16.msra.mxu0 0
        %2565 = vmatprep.subr.bf16.mxu0 0
        %2566 = vmatpush1.bf16.msra.mxu0 0
        %2567 = vmatprep.subr.bf16.mxu0 0
        %2568 = vmatpush1.bf16.msra.mxu0 0
        %2569 = vmatprep.subr.bf16.mxu0 0
        %2570 = vmatpush1.bf16.msra.mxu0 0
        %2571 = vmatprep.subr.bf16.mxu0 0
        %2572 = vmatpush1.bf16.msra.mxu0 0
        %2573 = vmatprep.subr.bf16.mxu0 0
        %2574 = vmatpush1.bf16.msra.mxu0 0
        %2575 = vmatprep.subr.bf16.mxu0 0
        %2576 = vmatpush1.bf16.msra.mxu0 0
        %2577 = vmatprep.subr.bf16.mxu0 0
        %2578 = vmatpush1.bf16.msra.mxu0 0
        %2579 = vmatprep.subr.bf16.mxu0 0
        %2580 = vmatpush1.bf16.msra.mxu0 0
        %2581 = vmatprep.subr.bf16.mxu0 0
        %2582 = vmatpush1.bf16.msra.mxu0 0
        %2583 = vmatprep.subr.bf16.mxu0 0
        %2584 = vmatpush1.bf16.msra.mxu0 0
        %2585 = vmatprep.subr.bf16.mxu0 0
        %2586 = vmatpush1.bf16.msra.mxu0 0
        %2587 = vmatprep.subr.bf16.mxu0 0
        %2588 = vmatpush1.bf16.msra.mxu0 0
        %2589 = vmatprep.subr.bf16.mxu0 0
        %2590 = vmatpush1.bf16.msra.mxu0 0
        %2591 = vmatprep.subr.bf16.mxu0 0
        %2592 = vmatpush1.bf16.msra.mxu0 0
        %2593 = vmatprep.mubr.bf16.mxu0 0
        %2594 = vmatmul.mubr.bf16.gmra.mrb[0].mxu0 %v2400
        %v2595 = vpop.f32.mrb[0].mxu0
        %v2596 = vadd.f32 0.0, %v2595
        %v2597 = vpop.f32.mrb[0].mxu0
        %v2598 = vadd.f32 0.0, %v2597
        %v2599 = vpop.f32.mrb[0].mxu0
        %v2600 = vpop.f32.mrb[0].mxu0
        %2601 = vdwg.mxu0
        %2602 = vmatprep.subr.bf16.mxu0 %v2430
        %2603 = vmatpush1.bf16.msra.mxu0 %v2427
        %2604 = vmatprep.subr.bf16.mxu0 0
        %2605 = vmatpush1.bf16.msra.mxu0 0
        %2606 = vmatprep.subr.bf16.mxu0 0
        %2607 = vmatpush1.bf16.msra.mxu0 0
        %2608 = vmatprep.subr.bf16.mxu0 0
        %2609 = vmatpush1.bf16.msra.mxu0 0
        %2610 = vmatprep.subr.bf16.mxu0 0
        %2611 = vmatpush1.bf16.msra.mxu0 0
        %2612 = vmatprep.subr.bf16.mxu0 0
        %2613 = vmatpush1.bf16.msra.mxu0 0
        %2614 = vmatprep.subr.bf16.mxu0 0
        %2615 = vmatpush1.bf16.msra.mxu0 0
        %2616 = vmatprep.subr.bf16.mxu0 0
        %2617 = vmatpush1.bf16.msra.mxu0 0
        %2618 = vmatprep.subr.bf16.mxu0 0
        %2619 = vmatpush1.bf16.msra.mxu0 0
        %2620 = vmatprep.subr.bf16.mxu0 0
        %2621 = vmatpush1.bf16.msra.mxu0 0
        %2622 = vmatprep.subr.bf16.mxu0 0
        %2623 = vmatpush1.bf16.msra.mxu0 0
        %2624 = vmatprep.subr.bf16.mxu0 0
        %2625 = vmatpush1.bf16.msra.mxu0 0
        %2626 = vmatprep.subr.bf16.mxu0 0
        %2627 = vmatpush1.bf16.msra.mxu0 0
        %2628 = vmatprep.subr.bf16.mxu0 0
        %2629 = vmatpush1.bf16.msra.mxu0 0
        %2630 = vmatprep.subr.bf16.mxu0 0
        %2631 = vmatpush1.bf16.msra.mxu0 0
        %2632 = vmatprep.subr.bf16.mxu0 0
        %2633 = vmatpush1.bf16.msra.mxu0 0
        %2634 = vmatprep.mubr.bf16.mxu0 0
        %2635 = vmatmul.mubr.bf16.gmra.mrb[0].mxu0 %v2400
        %v2636 = vpop.f32.mrb[0].mxu0
        %v2637 = vadd.f32 0.0, %v2636
        %v2638 = vpop.f32.mrb[0].mxu0
        %v2639 = vadd.f32 0.0, %v2638
        %v2640 = vpop.f32.mrb[0].mxu0
        %v2641 = vpop.f32.mrb[0].mxu0
        %2642 = vdwg.mxu0
        %2643 = vmatprep.subr.bf16.mxu0 %v2436
        %2644 = vmatpush1.bf16.msra.mxu0 %v2433
        %2645 = vmatprep.subr.bf16.mxu0 0
        %2646 = vmatpush1.bf16.msra.mxu0 0
        %2647 = vmatprep.subr.bf16.mxu0 0
        %2648 = vmatpush1.bf16.msra.mxu0 0
        %2649 = vmatprep.subr.bf16.mxu0 0
        %2650 = vmatpush1.bf16.msra.mxu0 0
        %2651 = vmatprep.subr.bf16.mxu0 0
        %2652 = vmatpush1.bf16.msra.mxu0 0
        %2653 = vmatprep.subr.bf16.mxu0 0
        %2654 = vmatpush1.bf16.msra.mxu0 0
        %2655 = vmatprep.subr.bf16.mxu0 0
        %2656 = vmatpush1.bf16.msra.mxu0 0
        %2657 = vmatprep.subr.bf16.mxu0 0
        %2658 = vmatpush1.bf16.msra.mxu0 0
        %2659 = vmatprep.subr.bf16.mxu0 0
        %2660 = vmatpush1.bf16.msra.mxu0 0
        %2661 = vmatprep.subr.bf16.mxu0 0
        %2662 = vmatpush1.bf16.msra.mxu0 0
        %2663 = vmatprep.subr.bf16.mxu0 0
        %2664 = vmatpush1.bf16.msra.mxu0 0
        %2665 = vmatprep.subr.bf16.mxu0 0
        %2666 = vmatpush1.bf16.msra.mxu0 0
        %2667 = vmatprep.subr.bf16.mxu0 0
        %2668 = vmatpush1.bf16.msra.mxu0 0
        %2669 = vmatprep.subr.bf16.mxu0 0
        %2670 = vmatpush1.bf16.msra.mxu0 0
        %2671 = vmatprep.subr.bf16.mxu0 0
        %2672 = vmatpush1.bf16.msra.mxu0 0
        %2673 = vmatprep.subr.bf16.mxu0 0
        %2674 = vmatpush1.bf16.msra.mxu0 0
        %2675 = vmatprep.mubr.bf16.mxu0 0
        %2676 = vmatmul.mubr.bf16.gmra.mrb[0].mxu0 %v2400
        %v2677 = vpop.f32.mrb[0].mxu0
        %v2678 = vadd.f32 0.0, %v2677
        %v2679 = vpop.f32.mrb[0].mxu0
        %v2680 = vadd.f32 0.0, %v2679
        %v2681 = vpop.f32.mrb[0].mxu0
        %v2682 = vpop.f32.mrb[0].mxu0
        %2683 = vdwg.mxu0
        %v2684 = vadd.f32 %v2346, %v2473
        %v2685 = vadd.f32 %v2347, %v2475
        %v2686 = vadd.f32 %v2348, %v2514
        %v2687 = vadd.f32 %v2349, %v2516
        %v2688 = vadd.f32 %v2350, %v2555
        %v2689 = vadd.f32 %v2351, %v2557
        %v2690 = vadd.f32 %v2352, %v2596
        %v2691 = vadd.f32 %v2353, %v2598
        %v2692 = vadd.f32 %v2354, %v2637
        %v2693 = vadd.f32 %v2355, %v2639
        %v2694 = vadd.f32 %v2356, %v2678
        %v2695 = vadd.f32 %v2357, %v2680
        %s2696 = scalar_lea.vmem %s4, 10
        %v2697 = vld [vmem:[%s2696] sm:$0x3]
        %2698 = vrot.lane.b32.xlu0 %v1036, 108
        %v2699 = vpop.permute.xlu0 %2698
        %2700 = vrot.lane.b32.xlu0 %v1037, 108
        %v2701 = vpop.permute.xlu0 %2700
        %2702 = vrot.lane.b32.xlu0 %v1038, 108
        %v2703 = vpop.permute.xlu0 %2702
        %2704 = vrot.lane.b32.xlu0 %v1039, 108
        %v2705 = vpop.permute.xlu0 %2704
        %2706 = vrot.lane.b32.xlu0 %v1040, 108
        %v2707 = vpop.permute.xlu0 %2706
        %2708 = vrot.lane.b32.xlu0 %v1041, 108
        %v2709 = vpop.permute.xlu0 %2708
        %2710 = vrot.lane.b32.xlu0 %v1042, 108
        %v2711 = vpop.permute.xlu0 %2710
        %2712 = vrot.lane.b32.xlu0 %v1043, 108
        %v2713 = vpop.permute.xlu0 %2712
        %2714 = vrot.lane.b32.xlu0 %v1044, 108
        %v2715 = vpop.permute.xlu0 %2714
        %2716 = vrot.lane.b32.xlu0 %v1045, 108
        %v2717 = vpop.permute.xlu0 %2716
        %2718 = vrot.lane.b32.xlu0 %v1046, 108
        %v2719 = vpop.permute.xlu0 %2718
        %2720 = vrot.lane.b32.xlu0 %v1047, 108
        %v2721 = vpop.permute.xlu0 %2720
        %2722 = vrot.lane.b32.xlu0 %v1048, 108
        %v2723 = vpop.permute.xlu0 %2722
        %vm2724 = vcmask 883712
        %v2725 = vsel %vm2724, %v2699, %v2701
        %v2726 = vsel %vm2724, %v2701, %v2703
        %v2727 = vsel %vm2724, %v2703, %v2705
        %v2728 = vsel %vm2724, %v2705, %v2707
        %v2729 = vsel %vm2724, %v2707, %v2709
        %v2730 = vsel %vm2724, %v2709, %v2711
        %v2731 = vsel %vm2724, %v2711, %v2713
        %v2732 = vsel %vm2724, %v2713, %v2715
        %v2733 = vsel %vm2724, %v2715, %v2717
        %v2734 = vsel %vm2724, %v2717, %v2719
        %v2735 = vsel %vm2724, %v2719, %v2721
        %v2736 = vsel %vm2724, %v2721, %v2723
        %v2738 = vsel %vm1110, %v2697, 0
        %v2741 = vsel %vm1114, %v2725, 0
        %v2744 = vsel %vm1114, %v2726, 0
        %v2747 = vsel %vm1114, %v2727, 0
        %v2750 = vsel %vm1114, %v2728, 0
        %v2753 = vsel %vm1114, %v2729, 0
        %v2756 = vsel %vm1114, %v2730, 0
        %v2759 = vsel %vm1114, %v2731, 0
        %v2762 = vsel %vm1114, %v2732, 0
        %v2765 = vsel %vm1114, %v2733, 0
        %v2768 = vsel %vm1114, %v2734, 0
        %v2771 = vsel %vm1114, %v2735, 0
        %v2774 = vsel %vm1114, %v2736, 0
        %2776 = vmatprep.subr.bf16.mxu0 %v2744
        %2777 = vmatpush1.bf16.msra.mxu0 %v2741
        %2778 = vmatprep.subr.bf16.mxu0 0
        %2779 = vmatpush1.bf16.msra.mxu0 0
        %2780 = vmatprep.subr.bf16.mxu0 0
        %2781 = vmatpush1.bf16.msra.mxu0 0
        %2782 = vmatprep.subr.bf16.mxu0 0
        %2783 = vmatpush1.bf16.msra.mxu0 0
        %2784 = vmatprep.subr.bf16.mxu0 0
        %2785 = vmatpush1.bf16.msra.mxu0 0
        %2786 = vmatprep.subr.bf16.mxu0 0
        %2787 = vmatpush1.bf16.msra.mxu0 0
        %2788 = vmatprep.subr.bf16.mxu0 0
        %2789 = vmatpush1.bf16.msra.mxu0 0
        %2790 = vmatprep.subr.bf16.mxu0 0
        %2791 = vmatpush1.bf16.msra.mxu0 0
        %2792 = vmatprep.subr.bf16.mxu0 0
        %2793 = vmatpush1.bf16.msra.mxu0 0
        %2794 = vmatprep.subr.bf16.mxu0 0
        %2795 = vmatpush1.bf16.msra.mxu0 0
        %2796 = vmatprep.subr.bf16.mxu0 0
        %2797 = vmatpush1.bf16.msra.mxu0 0
        %2798 = vmatprep.subr.bf16.mxu0 0
        %2799 = vmatpush1.bf16.msra.mxu0 0
        %2800 = vmatprep.subr.bf16.mxu0 0
        %2801 = vmatpush1.bf16.msra.mxu0 0
        %2802 = vmatprep.subr.bf16.mxu0 0
        %2803 = vmatpush1.bf16.msra.mxu0 0
        %2804 = vmatprep.subr.bf16.mxu0 0
        %2805 = vmatpush1.bf16.msra.mxu0 0
        %2806 = vmatprep.subr.bf16.mxu0 0
        %2807 = vmatpush1.bf16.msra.mxu0 0
        %2808 = vmatprep.mubr.bf16.mxu0 0
        %2809 = vmatmul.mubr.bf16.gmra.mrb[0].mxu0 %v2738
        %v2810 = vpop.f32.mrb[0].mxu0
        %v2811 = vadd.f32 0.0, %v2810
        %v2812 = vpop.f32.mrb[0].mxu0
        %v2813 = vadd.f32 0.0, %v2812
        %v2814 = vpop.f32.mrb[0].mxu0
        %v2815 = vpop.f32.mrb[0].mxu0
        %2816 = vdwg.mxu0
        %2817 = vmatprep.subr.bf16.mxu0 %v2750
        %2818 = vmatpush1.bf16.msra.mxu0 %v2747
        %2819 = vmatprep.subr.bf16.mxu0 0
        %2820 = vmatpush1.bf16.msra.mxu0 0
        %2821 = vmatprep.subr.bf16.mxu0 0
        %2822 = vmatpush1.bf16.msra.mxu0 0
        %2823 = vmatprep.subr.bf16.mxu0 0
        %2824 = vmatpush1.bf16.msra.mxu0 0
        %2825 = vmatprep.subr.bf16.mxu0 0
        %2826 = vmatpush1.bf16.msra.mxu0 0
        %2827 = vmatprep.subr.bf16.mxu0 0
        %2828 = vmatpush1.bf16.msra.mxu0 0
        %2829 = vmatprep.subr.bf16.mxu0 0
        %2830 = vmatpush1.bf16.msra.mxu0 0
        %2831 = vmatprep.subr.bf16.mxu0 0
        %2832 = vmatpush1.bf16.msra.mxu0 0
        %2833 = vmatprep.subr.bf16.mxu0 0
        %2834 = vmatpush1.bf16.msra.mxu0 0
        %2835 = vmatprep.subr.bf16.mxu0 0
        %2836 = vmatpush1.bf16.msra.mxu0 0
        %2837 = vmatprep.subr.bf16.mxu0 0
        %2838 = vmatpush1.bf16.msra.mxu0 0
        %2839 = vmatprep.subr.bf16.mxu0 0
        %2840 = vmatpush1.bf16.msra.mxu0 0
        %2841 = vmatprep.subr.bf16.mxu0 0
        %2842 = vmatpush1.bf16.msra.mxu0 0
        %2843 = vmatprep.subr.bf16.mxu0 0
        %2844 = vmatpush1.bf16.msra.mxu0 0
        %2845 = vmatprep.subr.bf16.mxu0 0
        %2846 = vmatpush1.bf16.msra.mxu0 0
        %2847 = vmatprep.subr.bf16.mxu0 0
        %2848 = vmatpush1.bf16.msra.mxu0 0
        %2849 = vmatprep.mubr.bf16.mxu0 0
        %2850 = vmatmul.mubr.bf16.gmra.mrb[0].mxu0 %v2738
        %v2851 = vpop.f32.mrb[0].mxu0
        %v2852 = vadd.f32 0.0, %v2851
        %v2853 = vpop.f32.mrb[0].mxu0
        %v2854 = vadd.f32 0.0, %v2853
        %v2855 = vpop.f32.mrb[0].mxu0
        %v2856 = vpop.f32.mrb[0].mxu0
        %2857 = vdwg.mxu0
        %2858 = vmatprep.subr.bf16.mxu0 %v2756
        %2859 = vmatpush1.bf16.msra.mxu0 %v2753
        %2860 = vmatprep.subr.bf16.mxu0 0
        %2861 = vmatpush1.bf16.msra.mxu0 0
        %2862 = vmatprep.subr.bf16.mxu0 0
        %2863 = vmatpush1.bf16.msra.mxu0 0
        %2864 = vmatprep.subr.bf16.mxu0 0
        %2865 = vmatpush1.bf16.msra.mxu0 0
        %2866 = vmatprep.subr.bf16.mxu0 0
        %2867 = vmatpush1.bf16.msra.mxu0 0
        %2868 = vmatprep.subr.bf16.mxu0 0
        %2869 = vmatpush1.bf16.msra.mxu0 0
        %2870 = vmatprep.subr.bf16.mxu0 0
        %2871 = vmatpush1.bf16.msra.mxu0 0
        %2872 = vmatprep.subr.bf16.mxu0 0
        %2873 = vmatpush1.bf16.msra.mxu0 0
        %2874 = vmatprep.subr.bf16.mxu0 0
        %2875 = vmatpush1.bf16.msra.mxu0 0
        %2876 = vmatprep.subr.bf16.mxu0 0
        %2877 = vmatpush1.bf16.msra.mxu0 0
        %2878 = vmatprep.subr.bf16.mxu0 0
        %2879 = vmatpush1.bf16.msra.mxu0 0
        %2880 = vmatprep.subr.bf16.mxu0 0
        %2881 = vmatpush1.bf16.msra.mxu0 0
        %2882 = vmatprep.subr.bf16.mxu0 0
        %2883 = vmatpush1.bf16.msra.mxu0 0
        %2884 = vmatprep.subr.bf16.mxu0 0
        %2885 = vmatpush1.bf16.msra.mxu0 0
        %2886 = vmatprep.subr.bf16.mxu0 0
        %2887 = vmatpush1.bf16.msra.mxu0 0
        %2888 = vmatprep.subr.bf16.mxu0 0
        %2889 = vmatpush1.bf16.msra.mxu0 0
        %2890 = vmatprep.mubr.bf16.mxu0 0
        %2891 = vmatmul.mubr.bf16.gmra.mrb[0].mxu0 %v2738
        %v2892 = vpop.f32.mrb[0].mxu0
        %v2893 = vadd.f32 0.0, %v2892
        %v2894 = vpop.f32.mrb[0].mxu0
        %v2895 = vadd.f32 0.0, %v2894
        %v2896 = vpop.f32.mrb[0].mxu0
        %v2897 = vpop.f32.mrb[0].mxu0
        %2898 = vdwg.mxu0
        %2899 = vmatprep.subr.bf16.mxu0 %v2762
        %2900 = vmatpush1.bf16.msra.mxu0 %v2759
        %2901 = vmatprep.subr.bf16.mxu0 0
        %2902 = vmatpush1.bf16.msra.mxu0 0
        %2903 = vmatprep.subr.bf16.mxu0 0
        %2904 = vmatpush1.bf16.msra.mxu0 0
        %2905 = vmatprep.subr.bf16.mxu0 0
        %2906 = vmatpush1.bf16.msra.mxu0 0
        %2907 = vmatprep.subr.bf16.mxu0 0
        %2908 = vmatpush1.bf16.msra.mxu0 0
        %2909 = vmatprep.subr.bf16.mxu0 0
        %2910 = vmatpush1.bf16.msra.mxu0 0
        %2911 = vmatprep.subr.bf16.mxu0 0
        %2912 = vmatpush1.bf16.msra.mxu0 0
        %2913 = vmatprep.subr.bf16.mxu0 0
        %2914 = vmatpush1.bf16.msra.mxu0 0
        %2915 = vmatprep.subr.bf16.mxu0 0
        %2916 = vmatpush1.bf16.msra.mxu0 0
        %2917 = vmatprep.subr.bf16.mxu0 0
        %2918 = vmatpush1.bf16.msra.mxu0 0
        %2919 = vmatprep.subr.bf16.mxu0 0
        %2920 = vmatpush1.bf16.msra.mxu0 0
        %2921 = vmatprep.subr.bf16.mxu0 0
        %2922 = vmatpush1.bf16.msra.mxu0 0
        %2923 = vmatprep.subr.bf16.mxu0 0
        %2924 = vmatpush1.bf16.msra.mxu0 0
        %2925 = vmatprep.subr.bf16.mxu0 0
        %2926 = vmatpush1.bf16.msra.mxu0 0
        %2927 = vmatprep.subr.bf16.mxu0 0
        %2928 = vmatpush1.bf16.msra.mxu0 0
        %2929 = vmatprep.subr.bf16.mxu0 0
        %2930 = vmatpush1.bf16.msra.mxu0 0
        %2931 = vmatprep.mubr.bf16.mxu0 0
        %2932 = vmatmul.mubr.bf16.gmra.mrb[0].mxu0 %v2738
        %v2933 = vpop.f32.mrb[0].mxu0
        %v2934 = vadd.f32 0.0, %v2933
        %v2935 = vpop.f32.mrb[0].mxu0
        %v2936 = vadd.f32 0.0, %v2935
        %v2937 = vpop.f32.mrb[0].mxu0
        %v2938 = vpop.f32.mrb[0].mxu0
        %2939 = vdwg.mxu0
        %2940 = vmatprep.subr.bf16.mxu0 %v2768
        %2941 = vmatpush1.bf16.msra.mxu0 %v2765
        %2942 = vmatprep.subr.bf16.mxu0 0
        %2943 = vmatpush1.bf16.msra.mxu0 0
        %2944 = vmatprep.subr.bf16.mxu0 0
        %2945 = vmatpush1.bf16.msra.mxu0 0
        %2946 = vmatprep.subr.bf16.mxu0 0
        %2947 = vmatpush1.bf16.msra.mxu0 0
        %2948 = vmatprep.subr.bf16.mxu0 0
        %2949 = vmatpush1.bf16.msra.mxu0 0
        %2950 = vmatprep.subr.bf16.mxu0 0
        %2951 = vmatpush1.bf16.msra.mxu0 0
        %2952 = vmatprep.subr.bf16.mxu0 0
        %2953 = vmatpush1.bf16.msra.mxu0 0
        %2954 = vmatprep.subr.bf16.mxu0 0
        %2955 = vmatpush1.bf16.msra.mxu0 0
        %2956 = vmatprep.subr.bf16.mxu0 0
        %2957 = vmatpush1.bf16.msra.mxu0 0
        %2958 = vmatprep.subr.bf16.mxu0 0
        %2959 = vmatpush1.bf16.msra.mxu0 0
        %2960 = vmatprep.subr.bf16.mxu0 0
        %2961 = vmatpush1.bf16.msra.mxu0 0
        %2962 = vmatprep.subr.bf16.mxu0 0
        %2963 = vmatpush1.bf16.msra.mxu0 0
        %2964 = vmatprep.subr.bf16.mxu0 0
        %2965 = vmatpush1.bf16.msra.mxu0 0
        %2966 = vmatprep.subr.bf16.mxu0 0
        %2967 = vmatpush1.bf16.msra.mxu0 0
        %2968 = vmatprep.subr.bf16.mxu0 0
        %2969 = vmatpush1.bf16.msra.mxu0 0
        %2970 = vmatprep.subr.bf16.mxu0 0
        %2971 = vmatpush1.bf16.msra.mxu0 0
        %2972 = vmatprep.mubr.bf16.mxu0 0
        %2973 = vmatmul.mubr.bf16.gmra.mrb[0].mxu0 %v2738
        %v2974 = vpop.f32.mrb[0].mxu0
        %v2975 = vadd.f32 0.0, %v2974
        %v2976 = vpop.f32.mrb[0].mxu0
        %v2977 = vadd.f32 0.0, %v2976
        %v2978 = vpop.f32.mrb[0].mxu0
        %v2979 = vpop.f32.mrb[0].mxu0
        %2980 = vdwg.mxu0
        %2981 = vmatprep.subr.bf16.mxu0 %v2774
        %2982 = vmatpush1.bf16.msra.mxu0 %v2771
        %2983 = vmatprep.subr.bf16.mxu0 0
        %2984 = vmatpush1.bf16.msra.mxu0 0
        %2985 = vmatprep.subr.bf16.mxu0 0
        %2986 = vmatpush1.bf16.msra.mxu0 0
        %2987 = vmatprep.subr.bf16.mxu0 0
        %2988 = vmatpush1.bf16.msra.mxu0 0
        %2989 = vmatprep.subr.bf16.mxu0 0
        %2990 = vmatpush1.bf16.msra.mxu0 0
        %2991 = vmatprep.subr.bf16.mxu0 0
        %2992 = vmatpush1.bf16.msra.mxu0 0
        %2993 = vmatprep.subr.bf16.mxu0 0
        %2994 = vmatpush1.bf16.msra.mxu0 0
        %2995 = vmatprep.subr.bf16.mxu0 0
        %2996 = vmatpush1.bf16.msra.mxu0 0
        %2997 = vmatprep.subr.bf16.mxu0 0
        %2998 = vmatpush1.bf16.msra.mxu0 0
        %2999 = vmatprep.subr.bf16.mxu0 0
        %3000 = vmatpush1.bf16.msra.mxu0 0
        %3001 = vmatprep.subr.bf16.mxu0 0
        %3002 = vmatpush1.bf16.msra.mxu0 0
        %3003 = vmatprep.subr.bf16.mxu0 0
        %3004 = vmatpush1.bf16.msra.mxu0 0
        %3005 = vmatprep.subr.bf16.mxu0 0
        %3006 = vmatpush1.bf16.msra.mxu0 0
        %3007 = vmatprep.subr.bf16.mxu0 0
        %3008 = vmatpush1.bf16.msra.mxu0 0
        %3009 = vmatprep.subr.bf16.mxu0 0
        %3010 = vmatpush1.bf16.msra.mxu0 0
        %3011 = vmatprep.subr.bf16.mxu0 0
        %3012 = vmatpush1.bf16.msra.mxu0 0
        %3013 = vmatprep.mubr.bf16.mxu0 0
        %3014 = vmatmul.mubr.bf16.gmra.mrb[0].mxu0 %v2738
        %v3015 = vpop.f32.mrb[0].mxu0
        %v3016 = vadd.f32 0.0, %v3015
        %v3017 = vpop.f32.mrb[0].mxu0
        %v3018 = vadd.f32 0.0, %v3017
        %v3019 = vpop.f32.mrb[0].mxu0
        %v3020 = vpop.f32.mrb[0].mxu0
        %3021 = vdwg.mxu0
        %v3022 = vadd.f32 %v2684, %v2811
        %v3023 = vadd.f32 %v2685, %v2813
        %v3024 = vadd.f32 %v2686, %v2852
        %v3025 = vadd.f32 %v2687, %v2854
        %v3026 = vadd.f32 %v2688, %v2893
        %v3027 = vadd.f32 %v2689, %v2895
        %v3028 = vadd.f32 %v2690, %v2934
        %v3029 = vadd.f32 %v2691, %v2936
        %v3030 = vadd.f32 %v2692, %v2975
        %v3031 = vadd.f32 %v2693, %v2977
        %v3032 = vadd.f32 %v2694, %v3016
        %v3033 = vadd.f32 %v2695, %v3018
        %s3034 = scalar_lea.vmem %s4, 12
        %v3035 = vld [vmem:[%s3034] sm:$0x3]
        %3036 = vrot.lane.b32.xlu0 %v1036, 92
        %v3037 = vpop.permute.xlu0 %3036
        %3038 = vrot.lane.b32.xlu0 %v1037, 92
        %v3039 = vpop.permute.xlu0 %3038
        %3040 = vrot.lane.b32.xlu0 %v1038, 92
        %v3041 = vpop.permute.xlu0 %3040
        %3042 = vrot.lane.b32.xlu0 %v1039, 92
        %v3043 = vpop.permute.xlu0 %3042
        %3044 = vrot.lane.b32.xlu0 %v1040, 92
        %v3045 = vpop.permute.xlu0 %3044
        %3046 = vrot.lane.b32.xlu0 %v1041, 92
        %v3047 = vpop.permute.xlu0 %3046
        %3048 = vrot.lane.b32.xlu0 %v1042, 92
        %v3049 = vpop.permute.xlu0 %3048
        %3050 = vrot.lane.b32.xlu0 %v1043, 92
        %v3051 = vpop.permute.xlu0 %3050
        %3052 = vrot.lane.b32.xlu0 %v1044, 92
        %v3053 = vpop.permute.xlu0 %3052
        %3054 = vrot.lane.b32.xlu0 %v1045, 92
        %v3055 = vpop.permute.xlu0 %3054
        %3056 = vrot.lane.b32.xlu0 %v1046, 92
        %v3057 = vpop.permute.xlu0 %3056
        %3058 = vrot.lane.b32.xlu0 %v1047, 92
        %v3059 = vpop.permute.xlu0 %3058
        %3060 = vrot.lane.b32.xlu0 %v1048, 92
        %v3061 = vpop.permute.xlu0 %3060
        %vm3062 = vcmask 752640
        %v3063 = vsel %vm3062, %v3037, %v3039
        %v3064 = vsel %vm3062, %v3039, %v3041
        %v3065 = vsel %vm3062, %v3041, %v3043
        %v3066 = vsel %vm3062, %v3043, %v3045
        %v3067 = vsel %vm3062, %v3045, %v3047
        %v3068 = vsel %vm3062, %v3047, %v3049
        %v3069 = vsel %vm3062, %v3049, %v3051
        %v3070 = vsel %vm3062, %v3051, %v3053
        %v3071 = vsel %vm3062, %v3053, %v3055
        %v3072 = vsel %vm3062, %v3055, %v3057
        %v3073 = vsel %vm3062, %v3057, %v3059
        %v3074 = vsel %vm3062, %v3059, %v3061
        %v3076 = vsel %vm1110, %v3035, 0
        %v3079 = vsel %vm1114, %v3063, 0
        %v3082 = vsel %vm1114, %v3064, 0
        %v3085 = vsel %vm1114, %v3065, 0
        %v3088 = vsel %vm1114, %v3066, 0
        %v3091 = vsel %vm1114, %v3067, 0
        %v3094 = vsel %vm1114, %v3068, 0
        %v3097 = vsel %vm1114, %v3069, 0
        %v3100 = vsel %vm1114, %v3070, 0
        %v3103 = vsel %vm1114, %v3071, 0
        %v3106 = vsel %vm1114, %v3072, 0
        %v3109 = vsel %vm1114, %v3073, 0
        %v3112 = vsel %vm1114, %v3074, 0
        %3114 = vmatprep.subr.bf16.mxu0 %v3082
        %3115 = vmatpush1.bf16.msra.mxu0 %v3079
        %3116 = vmatprep.subr.bf16.mxu0 0
        %3117 = vmatpush1.bf16.msra.mxu0 0
        %3118 = vmatprep.subr.bf16.mxu0 0
        %3119 = vmatpush1.bf16.msra.mxu0 0
        %3120 = vmatprep.subr.bf16.mxu0 0
        %3121 = vmatpush1.bf16.msra.mxu0 0
        %3122 = vmatprep.subr.bf16.mxu0 0
        %3123 = vmatpush1.bf16.msra.mxu0 0
        %3124 = vmatprep.subr.bf16.mxu0 0
        %3125 = vmatpush1.bf16.msra.mxu0 0
        %3126 = vmatprep.subr.bf16.mxu0 0
        %3127 = vmatpush1.bf16.msra.mxu0 0
        %3128 = vmatprep.subr.bf16.mxu0 0
        %3129 = vmatpush1.bf16.msra.mxu0 0
        %3130 = vmatprep.subr.bf16.mxu0 0
        %3131 = vmatpush1.bf16.msra.mxu0 0
        %3132 = vmatprep.subr.bf16.mxu0 0
        %3133 = vmatpush1.bf16.msra.mxu0 0
        %3134 = vmatprep.subr.bf16.mxu0 0
        %3135 = vmatpush1.bf16.msra.mxu0 0
        %3136 = vmatprep.subr.bf16.mxu0 0
        %3137 = vmatpush1.bf16.msra.mxu0 0
        %3138 = vmatprep.subr.bf16.mxu0 0
        %3139 = vmatpush1.bf16.msra.mxu0 0
        %3140 = vmatprep.subr.bf16.mxu0 0
        %3141 = vmatpush1.bf16.msra.mxu0 0
        %3142 = vmatprep.subr.bf16.mxu0 0
        %3143 = vmatpush1.bf16.msra.mxu0 0
        %3144 = vmatprep.subr.bf16.mxu0 0
        %3145 = vmatpush1.bf16.msra.mxu0 0
        %3146 = vmatprep.mubr.bf16.mxu0 0
        %3147 = vmatmul.mubr.bf16.gmra.mrb[0].mxu0 %v3076
        %v3148 = vpop.f32.mrb[0].mxu0
        %v3149 = vadd.f32 0.0, %v3148
        %v3150 = vpop.f32.mrb[0].mxu0
        %v3151 = vadd.f32 0.0, %v3150
        %v3152 = vpop.f32.mrb[0].mxu0
        %v3153 = vpop.f32.mrb[0].mxu0
        %3154 = vdwg.mxu0
        %3155 = vmatprep.subr.bf16.mxu0 %v3088
        %3156 = vmatpush1.bf16.msra.mxu0 %v3085
        %3157 = vmatprep.subr.bf16.mxu0 0
        %3158 = vmatpush1.bf16.msra.mxu0 0
        %3159 = vmatprep.subr.bf16.mxu0 0
        %3160 = vmatpush1.bf16.msra.mxu0 0
        %3161 = vmatprep.subr.bf16.mxu0 0
        %3162 = vmatpush1.bf16.msra.mxu0 0
        %3163 = vmatprep.subr.bf16.mxu0 0
        %3164 = vmatpush1.bf16.msra.mxu0 0
        %3165 = vmatprep.subr.bf16.mxu0 0
        %3166 = vmatpush1.bf16.msra.mxu0 0
        %3167 = vmatprep.subr.bf16.mxu0 0
        %3168 = vmatpush1.bf16.msra.mxu0 0
        %3169 = vmatprep.subr.bf16.mxu0 0
        %3170 = vmatpush1.bf16.msra.mxu0 0
        %3171 = vmatprep.subr.bf16.mxu0 0
        %3172 = vmatpush1.bf16.msra.mxu0 0
        %3173 = vmatprep.subr.bf16.mxu0 0
        %3174 = vmatpush1.bf16.msra.mxu0 0
        %3175 = vmatprep.subr.bf16.mxu0 0
        %3176 = vmatpush1.bf16.msra.mxu0 0
        %3177 = vmatprep.subr.bf16.mxu0 0
        %3178 = vmatpush1.bf16.msra.mxu0 0
        %3179 = vmatprep.subr.bf16.mxu0 0
        %3180 = vmatpush1.bf16.msra.mxu0 0
        %3181 = vmatprep.subr.bf16.mxu0 0
        %3182 = vmatpush1.bf16.msra.mxu0 0
        %3183 = vmatprep.subr.bf16.mxu0 0
        %3184 = vmatpush1.bf16.msra.mxu0 0
        %3185 = vmatprep.subr.bf16.mxu0 0
        %3186 = vmatpush1.bf16.msra.mxu0 0
        %3187 = vmatprep.mubr.bf16.mxu0 0
        %3188 = vmatmul.mubr.bf16.gmra.mrb[0].mxu0 %v3076
        %v3189 = vpop.f32.mrb[0].mxu0
        %v3190 = vadd.f32 0.0, %v3189
        %v3191 = vpop.f32.mrb[0].mxu0
        %v3192 = vadd.f32 0.0, %v3191
        %v3193 = vpop.f32.mrb[0].mxu0
        %v3194 = vpop.f32.mrb[0].mxu0
        %3195 = vdwg.mxu0
        %3196 = vmatprep.subr.bf16.mxu0 %v3094
        %3197 = vmatpush1.bf16.msra.mxu0 %v3091
        %3198 = vmatprep.subr.bf16.mxu0 0
        %3199 = vmatpush1.bf16.msra.mxu0 0
        %3200 = vmatprep.subr.bf16.mxu0 0
        %3201 = vmatpush1.bf16.msra.mxu0 0
        %3202 = vmatprep.subr.bf16.mxu0 0
        %3203 = vmatpush1.bf16.msra.mxu0 0
        %3204 = vmatprep.subr.bf16.mxu0 0
        %3205 = vmatpush1.bf16.msra.mxu0 0
        %3206 = vmatprep.subr.bf16.mxu0 0
        %3207 = vmatpush1.bf16.msra.mxu0 0
        %3208 = vmatprep.subr.bf16.mxu0 0
        %3209 = vmatpush1.bf16.msra.mxu0 0
        %3210 = vmatprep.subr.bf16.mxu0 0
        %3211 = vmatpush1.bf16.msra.mxu0 0
        %3212 = vmatprep.subr.bf16.mxu0 0
        %3213 = vmatpush1.bf16.msra.mxu0 0
        %3214 = vmatprep.subr.bf16.mxu0 0
        %3215 = vmatpush1.bf16.msra.mxu0 0
        %3216 = vmatprep.subr.bf16.mxu0 0
        %3217 = vmatpush1.bf16.msra.mxu0 0
        %3218 = vmatprep.subr.bf16.mxu0 0
        %3219 = vmatpush1.bf16.msra.mxu0 0
        %3220 = vmatprep.subr.bf16.mxu0 0
        %3221 = vmatpush1.bf16.msra.mxu0 0
        %3222 = vmatprep.subr.bf16.mxu0 0
        %3223 = vmatpush1.bf16.msra.mxu0 0
        %3224 = vmatprep.subr.bf16.mxu0 0
        %3225 = vmatpush1.bf16.msra.mxu0 0
        %3226 = vmatprep.subr.bf16.mxu0 0
        %3227 = vmatpush1.bf16.msra.mxu0 0
        %3228 = vmatprep.mubr.bf16.mxu0 0
        %3229 = vmatmul.mubr.bf16.gmra.mrb[0].mxu0 %v3076
        %v3230 = vpop.f32.mrb[0].mxu0
        %v3231 = vadd.f32 0.0, %v3230
        %v3232 = vpop.f32.mrb[0].mxu0
        %v3233 = vadd.f32 0.0, %v3232
        %v3234 = vpop.f32.mrb[0].mxu0
        %v3235 = vpop.f32.mrb[0].mxu0
        %3236 = vdwg.mxu0
        %3237 = vmatprep.subr.bf16.mxu0 %v3100
        %3238 = vmatpush1.bf16.msra.mxu0 %v3097
        %3239 = vmatprep.subr.bf16.mxu0 0
        %3240 = vmatpush1.bf16.msra.mxu0 0
        %3241 = vmatprep.subr.bf16.mxu0 0
        %3242 = vmatpush1.bf16.msra.mxu0 0
        %3243 = vmatprep.subr.bf16.mxu0 0
        %3244 = vmatpush1.bf16.msra.mxu0 0
        %3245 = vmatprep.subr.bf16.mxu0 0
        %3246 = vmatpush1.bf16.msra.mxu0 0
        %3247 = vmatprep.subr.bf16.mxu0 0
        %3248 = vmatpush1.bf16.msra.mxu0 0
        %3249 = vmatprep.subr.bf16.mxu0 0
        %3250 = vmatpush1.bf16.msra.mxu0 0
        %3251 = vmatprep.subr.bf16.mxu0 0
        %3252 = vmatpush1.bf16.msra.mxu0 0
        %3253 = vmatprep.subr.bf16.mxu0 0
        %3254 = vmatpush1.bf16.msra.mxu0 0
        %3255 = vmatprep.subr.bf16.mxu0 0
        %3256 = vmatpush1.bf16.msra.mxu0 0
        %3257 = vmatprep.subr.bf16.mxu0 0
        %3258 = vmatpush1.bf16.msra.mxu0 0
        %3259 = vmatprep.subr.bf16.mxu0 0
        %3260 = vmatpush1.bf16.msra.mxu0 0
        %3261 = vmatprep.subr.bf16.mxu0 0
        %3262 = vmatpush1.bf16.msra.mxu0 0
        %3263 = vmatprep.subr.bf16.mxu0 0
        %3264 = vmatpush1.bf16.msra.mxu0 0
        %3265 = vmatprep.subr.bf16.mxu0 0
        %3266 = vmatpush1.bf16.msra.mxu0 0
        %3267 = vmatprep.subr.bf16.mxu0 0
        %3268 = vmatpush1.bf16.msra.mxu0 0
        %3269 = vmatprep.mubr.bf16.mxu0 0
        %3270 = vmatmul.mubr.bf16.gmra.mrb[0].mxu0 %v3076
        %v3271 = vpop.f32.mrb[0].mxu0
        %v3272 = vadd.f32 0.0, %v3271
        %v3273 = vpop.f32.mrb[0].mxu0
        %v3274 = vadd.f32 0.0, %v3273
        %v3275 = vpop.f32.mrb[0].mxu0
        %v3276 = vpop.f32.mrb[0].mxu0
        %3277 = vdwg.mxu0
        %3278 = vmatprep.subr.bf16.mxu0 %v3106
        %3279 = vmatpush1.bf16.msra.mxu0 %v3103
        %3280 = vmatprep.subr.bf16.mxu0 0
        %3281 = vmatpush1.bf16.msra.mxu0 0
        %3282 = vmatprep.subr.bf16.mxu0 0
        %3283 = vmatpush1.bf16.msra.mxu0 0
        %3284 = vmatprep.subr.bf16.mxu0 0
        %3285 = vmatpush1.bf16.msra.mxu0 0
        %3286 = vmatprep.subr.bf16.mxu0 0
        %3287 = vmatpush1.bf16.msra.mxu0 0
        %3288 = vmatprep.subr.bf16.mxu0 0
        %3289 = vmatpush1.bf16.msra.mxu0 0
        %3290 = vmatprep.subr.bf16.mxu0 0
        %3291 = vmatpush1.bf16.msra.mxu0 0
        %3292 = vmatprep.subr.bf16.mxu0 0
        %3293 = vmatpush1.bf16.msra.mxu0 0
        %3294 = vmatprep.subr.bf16.mxu0 0
        %3295 = vmatpush1.bf16.msra.mxu0 0
        %3296 = vmatprep.subr.bf16.mxu0 0
        %3297 = vmatpush1.bf16.msra.mxu0 0
        %3298 = vmatprep.subr.bf16.mxu0 0
        %3299 = vmatpush1.bf16.msra.mxu0 0
        %3300 = vmatprep.subr.bf16.mxu0 0
        %3301 = vmatpush1.bf16.msra.mxu0 0
        %3302 = vmatprep.subr.bf16.mxu0 0
        %3303 = vmatpush1.bf16.msra.mxu0 0
        %3304 = vmatprep.subr.bf16.mxu0 0
        %3305 = vmatpush1.bf16.msra.mxu0 0
        %3306 = vmatprep.subr.bf16.mxu0 0
        %3307 = vmatpush1.bf16.msra.mxu0 0
        %3308 = vmatprep.subr.bf16.mxu0 0
        %3309 = vmatpush1.bf16.msra.mxu0 0
        %3310 = vmatprep.mubr.bf16.mxu0 0
        %3311 = vmatmul.mubr.bf16.gmra.mrb[0].mxu0 %v3076
        %v3312 = vpop.f32.mrb[0].mxu0
        %v3313 = vadd.f32 0.0, %v3312
        %v3314 = vpop.f32.mrb[0].mxu0
        %v3315 = vadd.f32 0.0, %v3314
        %v3316 = vpop.f32.mrb[0].mxu0
        %v3317 = vpop.f32.mrb[0].mxu0
        %3318 = vdwg.mxu0
        %3319 = vmatprep.subr.bf16.mxu0 %v3112
        %3320 = vmatpush1.bf16.msra.mxu0 %v3109
        %3321 = vmatprep.subr.bf16.mxu0 0
        %3322 = vmatpush1.bf16.msra.mxu0 0
        %3323 = vmatprep.subr.bf16.mxu0 0
        %3324 = vmatpush1.bf16.msra.mxu0 0
        %3325 = vmatprep.subr.bf16.mxu0 0
        %3326 = vmatpush1.bf16.msra.mxu0 0
        %3327 = vmatprep.subr.bf16.mxu0 0
        %3328 = vmatpush1.bf16.msra.mxu0 0
        %3329 = vmatprep.subr.bf16.mxu0 0
        %3330 = vmatpush1.bf16.msra.mxu0 0
        %3331 = vmatprep.subr.bf16.mxu0 0
        %3332 = vmatpush1.bf16.msra.mxu0 0
        %3333 = vmatprep.subr.bf16.mxu0 0
        %3334 = vmatpush1.bf16.msra.mxu0 0
        %3335 = vmatprep.subr.bf16.mxu0 0
        %3336 = vmatpush1.bf16.msra.mxu0 0
        %3337 = vmatprep.subr.bf16.mxu0 0
        %3338 = vmatpush1.bf16.msra.mxu0 0
        %3339 = vmatprep.subr.bf16.mxu0 0
        %3340 = vmatpush1.bf16.msra.mxu0 0
        %3341 = vmatprep.subr.bf16.mxu0 0
        %3342 = vmatpush1.bf16.msra.mxu0 0
        %3343 = vmatprep.subr.bf16.mxu0 0
        %3344 = vmatpush1.bf16.msra.mxu0 0
        %3345 = vmatprep.subr.bf16.mxu0 0
        %3346 = vmatpush1.bf16.msra.mxu0 0
        %3347 = vmatprep.subr.bf16.mxu0 0
        %3348 = vmatpush1.bf16.msra.mxu0 0
        %3349 = vmatprep.subr.bf16.mxu0 0
        %3350 = vmatpush1.bf16.msra.mxu0 0
        %3351 = vmatprep.mubr.bf16.mxu0 0
        %3352 = vmatmul.mubr.bf16.gmra.mrb[0].mxu0 %v3076
        %v3353 = vpop.f32.mrb[0].mxu0
        %v3354 = vadd.f32 0.0, %v3353
        %v3355 = vpop.f32.mrb[0].mxu0
        %v3356 = vadd.f32 0.0, %v3355
        %v3357 = vpop.f32.mrb[0].mxu0
        %v3358 = vpop.f32.mrb[0].mxu0
        %3359 = vdwg.mxu0
        %v3360 = vadd.f32 %v3022, %v3149
        %v3361 = vadd.f32 %v3023, %v3151
        %v3362 = vadd.f32 %v3024, %v3190
        %v3363 = vadd.f32 %v3025, %v3192
        %v3364 = vadd.f32 %v3026, %v3231
        %v3365 = vadd.f32 %v3027, %v3233
        %v3366 = vadd.f32 %v3028, %v3272
        %v3367 = vadd.f32 %v3029, %v3274
        %v3368 = vadd.f32 %v3030, %v3313
        %v3369 = vadd.f32 %v3031, %v3315
        %v3370 = vadd.f32 %v3032, %v3354
        %v3371 = vadd.f32 %v3033, %v3356
        %s3372 = scalar_lea.vmem %s4, 14
        %v3373 = vld [vmem:[%s3372] sm:$0x3]
        %3374 = vrot.lane.b32.xlu0 %v1036, 91
        %v3375 = vpop.permute.xlu0 %3374
        %3376 = vrot.lane.b32.xlu0 %v1037, 91
        %v3377 = vpop.permute.xlu0 %3376
        %3378 = vrot.lane.b32.xlu0 %v1038, 91
        %v3379 = vpop.permute.xlu0 %3378
        %3380 = vrot.lane.b32.xlu0 %v1039, 91
        %v3381 = vpop.permute.xlu0 %3380
        %3382 = vrot.lane.b32.xlu0 %v1040, 91
        %v3383 = vpop.permute.xlu0 %3382
        %3384 = vrot.lane.b32.xlu0 %v1041, 91
        %v3385 = vpop.permute.xlu0 %3384
        %3386 = vrot.lane.b32.xlu0 %v1042, 91
        %v3387 = vpop.permute.xlu0 %3386
        %3388 = vrot.lane.b32.xlu0 %v1043, 91
        %v3389 = vpop.permute.xlu0 %3388
        %3390 = vrot.lane.b32.xlu0 %v1044, 91
        %v3391 = vpop.permute.xlu0 %3390
        %3392 = vrot.lane.b32.xlu0 %v1045, 91
        %v3393 = vpop.permute.xlu0 %3392
        %3394 = vrot.lane.b32.xlu0 %v1046, 91
        %v3395 = vpop.permute.xlu0 %3394
        %3396 = vrot.lane.b32.xlu0 %v1047, 91
        %v3397 = vpop.permute.xlu0 %3396
        %3398 = vrot.lane.b32.xlu0 %v1048, 91
        %v3399 = vpop.permute.xlu0 %3398
        %vm3400 = vcmask 744448
        %v3401 = vsel %vm3400, %v3375, %v3377
        %v3402 = vsel %vm3400, %v3377, %v3379
        %v3403 = vsel %vm3400, %v3379, %v3381
        %v3404 = vsel %vm3400, %v3381, %v3383
        %v3405 = vsel %vm3400, %v3383, %v3385
        %v3406 = vsel %vm3400, %v3385, %v3387
        %v3407 = vsel %vm3400, %v3387, %v3389
        %v3408 = vsel %vm3400, %v3389, %v3391
        %v3409 = vsel %vm3400, %v3391, %v3393
        %v3410 = vsel %vm3400, %v3393, %v3395
        %v3411 = vsel %vm3400, %v3395, %v3397
        %v3412 = vsel %vm3400, %v3397, %v3399
        %v3414 = vsel %vm1110, %v3373, 0
        %v3417 = vsel %vm1114, %v3401, 0
        %v3420 = vsel %vm1114, %v3402, 0
        %v3423 = vsel %vm1114, %v3403, 0
        %v3426 = vsel %vm1114, %v3404, 0
        %v3429 = vsel %vm1114, %v3405, 0
        %v3432 = vsel %vm1114, %v3406, 0
        %v3435 = vsel %vm1114, %v3407, 0
        %v3438 = vsel %vm1114, %v3408, 0
        %v3441 = vsel %vm1114, %v3409, 0
        %v3444 = vsel %vm1114, %v3410, 0
        %v3447 = vsel %vm1114, %v3411, 0
        %v3450 = vsel %vm1114, %v3412, 0
        %3452 = vmatprep.subr.bf16.mxu0 %v3420
        %3453 = vmatpush1.bf16.msra.mxu0 %v3417
        %3454 = vmatprep.subr.bf16.mxu0 0
        %3455 = vmatpush1.bf16.msra.mxu0 0
        %3456 = vmatprep.subr.bf16.mxu0 0
        %3457 = vmatpush1.bf16.msra.mxu0 0
        %3458 = vmatprep.subr.bf16.mxu0 0
        %3459 = vmatpush1.bf16.msra.mxu0 0
        %3460 = vmatprep.subr.bf16.mxu0 0
        %3461 = vmatpush1.bf16.msra.mxu0 0
        %3462 = vmatprep.subr.bf16.mxu0 0
        %3463 = vmatpush1.bf16.msra.mxu0 0
        %3464 = vmatprep.subr.bf16.mxu0 0
        %3465 = vmatpush1.bf16.msra.mxu0 0
        %3466 = vmatprep.subr.bf16.mxu0 0
        %3467 = vmatpush1.bf16.msra.mxu0 0
        %3468 = vmatprep.subr.bf16.mxu0 0
        %3469 = vmatpush1.bf16.msra.mxu0 0
        %3470 = vmatprep.subr.bf16.mxu0 0
        %3471 = vmatpush1.bf16.msra.mxu0 0
        %3472 = vmatprep.subr.bf16.mxu0 0
        %3473 = vmatpush1.bf16.msra.mxu0 0
        %3474 = vmatprep.subr.bf16.mxu0 0
        %3475 = vmatpush1.bf16.msra.mxu0 0
        %3476 = vmatprep.subr.bf16.mxu0 0
        %3477 = vmatpush1.bf16.msra.mxu0 0
        %3478 = vmatprep.subr.bf16.mxu0 0
        %3479 = vmatpush1.bf16.msra.mxu0 0
        %3480 = vmatprep.subr.bf16.mxu0 0
        %3481 = vmatpush1.bf16.msra.mxu0 0
        %3482 = vmatprep.subr.bf16.mxu0 0
        %3483 = vmatpush1.bf16.msra.mxu0 0
        %3484 = vmatprep.mubr.bf16.mxu0 0
        %3485 = vmatmul.mubr.bf16.gmra.mrb[0].mxu0 %v3414
        %v3486 = vpop.f32.mrb[0].mxu0
        %v3487 = vadd.f32 0.0, %v3486
        %v3488 = vpop.f32.mrb[0].mxu0
        %v3489 = vadd.f32 0.0, %v3488
        %v3490 = vpop.f32.mrb[0].mxu0
        %v3491 = vpop.f32.mrb[0].mxu0
        %3492 = vdwg.mxu0
        %3493 = vmatprep.subr.bf16.mxu0 %v3426
        %3494 = vmatpush1.bf16.msra.mxu0 %v3423
        %3495 = vmatprep.subr.bf16.mxu0 0
        %3496 = vmatpush1.bf16.msra.mxu0 0
        %3497 = vmatprep.subr.bf16.mxu0 0
        %3498 = vmatpush1.bf16.msra.mxu0 0
        %3499 = vmatprep.subr.bf16.mxu0 0
        %3500 = vmatpush1.bf16.msra.mxu0 0
        %3501 = vmatprep.subr.bf16.mxu0 0
        %3502 = vmatpush1.bf16.msra.mxu0 0
        %3503 = vmatprep.subr.bf16.mxu0 0
        %3504 = vmatpush1.bf16.msra.mxu0 0
        %3505 = vmatprep.subr.bf16.mxu0 0
        %3506 = vmatpush1.bf16.msra.mxu0 0
        %3507 = vmatprep.subr.bf16.mxu0 0
        %3508 = vmatpush1.bf16.msra.mxu0 0
        %3509 = vmatprep.subr.bf16.mxu0 0
        %3510 = vmatpush1.bf16.msra.mxu0 0
        %3511 = vmatprep.subr.bf16.mxu0 0
        %3512 = vmatpush1.bf16.msra.mxu0 0
        %3513 = vmatprep.subr.bf16.mxu0 0
        %3514 = vmatpush1.bf16.msra.mxu0 0
        %3515 = vmatprep.subr.bf16.mxu0 0
        %3516 = vmatpush1.bf16.msra.mxu0 0
        %3517 = vmatprep.subr.bf16.mxu0 0
        %3518 = vmatpush1.bf16.msra.mxu0 0
        %3519 = vmatprep.subr.bf16.mxu0 0
        %3520 = vmatpush1.bf16.msra.mxu0 0
        %3521 = vmatprep.subr.bf16.mxu0 0
        %3522 = vmatpush1.bf16.msra.mxu0 0
        %3523 = vmatprep.subr.bf16.mxu0 0
        %3524 = vmatpush1.bf16.msra.mxu0 0
        %3525 = vmatprep.mubr.bf16.mxu0 0
        %3526 = vmatmul.mubr.bf16.gmra.mrb[0].mxu0 %v3414
        %v3527 = vpop.f32.mrb[0].mxu0
        %v3528 = vadd.f32 0.0, %v3527
        %v3529 = vpop.f32.mrb[0].mxu0
        %v3530 = vadd.f32 0.0, %v3529
        %v3531 = vpop.f32.mrb[0].mxu0
        %v3532 = vpop.f32.mrb[0].mxu0
        %3533 = vdwg.mxu0
        %3534 = vmatprep.subr.bf16.mxu0 %v3432
        %3535 = vmatpush1.bf16.msra.mxu0 %v3429
        %3536 = vmatprep.subr.bf16.mxu0 0
        %3537 = vmatpush1.bf16.msra.mxu0 0
        %3538 = vmatprep.subr.bf16.mxu0 0
        %3539 = vmatpush1.bf16.msra.mxu0 0
        %3540 = vmatprep.subr.bf16.mxu0 0
        %3541 = vmatpush1.bf16.msra.mxu0 0
        %3542 = vmatprep.subr.bf16.mxu0 0
        %3543 = vmatpush1.bf16.msra.mxu0 0
        %3544 = vmatprep.subr.bf16.mxu0 0
        %3545 = vmatpush1.bf16.msra.mxu0 0
        %3546 = vmatprep.subr.bf16.mxu0 0
        %3547 = vmatpush1.bf16.msra.mxu0 0
        %3548 = vmatprep.subr.bf16.mxu0 0
        %3549 = vmatpush1.bf16.msra.mxu0 0
        %3550 = vmatprep.subr.bf16.mxu0 0
        %3551 = vmatpush1.bf16.msra.mxu0 0
        %3552 = vmatprep.subr.bf16.mxu0 0
        %3553 = vmatpush1.bf16.msra.mxu0 0
        %3554 = vmatprep.subr.bf16.mxu0 0
        %3555 = vmatpush1.bf16.msra.mxu0 0
        %3556 = vmatprep.subr.bf16.mxu0 0
        %3557 = vmatpush1.bf16.msra.mxu0 0
        %3558 = vmatprep.subr.bf16.mxu0 0
        %3559 = vmatpush1.bf16.msra.mxu0 0
        %3560 = vmatprep.subr.bf16.mxu0 0
        %3561 = vmatpush1.bf16.msra.mxu0 0
        %3562 = vmatprep.subr.bf16.mxu0 0
        %3563 = vmatpush1.bf16.msra.mxu0 0
        %3564 = vmatprep.subr.bf16.mxu0 0
        %3565 = vmatpush1.bf16.msra.mxu0 0
        %3566 = vmatprep.mubr.bf16.mxu0 0
        %3567 = vmatmul.mubr.bf16.gmra.mrb[0].mxu0 %v3414
        %v3568 = vpop.f32.mrb[0].mxu0
        %v3569 = vadd.f32 0.0, %v3568
        %v3570 = vpop.f32.mrb[0].mxu0
        %v3571 = vadd.f32 0.0, %v3570
        %v3572 = vpop.f32.mrb[0].mxu0
        %v3573 = vpop.f32.mrb[0].mxu0
        %3574 = vdwg.mxu0
        %3575 = vmatprep.subr.bf16.mxu0 %v3438
        %3576 = vmatpush1.bf16.msra.mxu0 %v3435
        %3577 = vmatprep.subr.bf16.mxu0 0
        %3578 = vmatpush1.bf16.msra.mxu0 0
        %3579 = vmatprep.subr.bf16.mxu0 0
        %3580 = vmatpush1.bf16.msra.mxu0 0
        %3581 = vmatprep.subr.bf16.mxu0 0
        %3582 = vmatpush1.bf16.msra.mxu0 0
        %3583 = vmatprep.subr.bf16.mxu0 0
        %3584 = vmatpush1.bf16.msra.mxu0 0
        %3585 = vmatprep.subr.bf16.mxu0 0
        %3586 = vmatpush1.bf16.msra.mxu0 0
        %3587 = vmatprep.subr.bf16.mxu0 0
        %3588 = vmatpush1.bf16.msra.mxu0 0
        %3589 = vmatprep.subr.bf16.mxu0 0
        %3590 = vmatpush1.bf16.msra.mxu0 0
        %3591 = vmatprep.subr.bf16.mxu0 0
        %3592 = vmatpush1.bf16.msra.mxu0 0
        %3593 = vmatprep.subr.bf16.mxu0 0
        %3594 = vmatpush1.bf16.msra.mxu0 0
        %3595 = vmatprep.subr.bf16.mxu0 0
        %3596 = vmatpush1.bf16.msra.mxu0 0
        %3597 = vmatprep.subr.bf16.mxu0 0
        %3598 = vmatpush1.bf16.msra.mxu0 0
        %3599 = vmatprep.subr.bf16.mxu0 0
        %3600 = vmatpush1.bf16.msra.mxu0 0
        %3601 = vmatprep.subr.bf16.mxu0 0
        %3602 = vmatpush1.bf16.msra.mxu0 0
        %3603 = vmatprep.subr.bf16.mxu0 0
        %3604 = vmatpush1.bf16.msra.mxu0 0
        %3605 = vmatprep.subr.bf16.mxu0 0
        %3606 = vmatpush1.bf16.msra.mxu0 0
        %3607 = vmatprep.mubr.bf16.mxu0 0
        %3608 = vmatmul.mubr.bf16.gmra.mrb[0].mxu0 %v3414
        %v3609 = vpop.f32.mrb[0].mxu0
        %v3610 = vadd.f32 0.0, %v3609
        %v3611 = vpop.f32.mrb[0].mxu0
        %v3612 = vadd.f32 0.0, %v3611
        %v3613 = vpop.f32.mrb[0].mxu0
        %v3614 = vpop.f32.mrb[0].mxu0
        %3615 = vdwg.mxu0
        %3616 = vmatprep.subr.bf16.mxu0 %v3444
        %3617 = vmatpush1.bf16.msra.mxu0 %v3441
        %3618 = vmatprep.subr.bf16.mxu0 0
        %3619 = vmatpush1.bf16.msra.mxu0 0
        %3620 = vmatprep.subr.bf16.mxu0 0
        %3621 = vmatpush1.bf16.msra.mxu0 0
        %3622 = vmatprep.subr.bf16.mxu0 0
        %3623 = vmatpush1.bf16.msra.mxu0 0
        %3624 = vmatprep.subr.bf16.mxu0 0
        %3625 = vmatpush1.bf16.msra.mxu0 0
        %3626 = vmatprep.subr.bf16.mxu0 0
        %3627 = vmatpush1.bf16.msra.mxu0 0
        %3628 = vmatprep.subr.bf16.mxu0 0
        %3629 = vmatpush1.bf16.msra.mxu0 0
        %3630 = vmatprep.subr.bf16.mxu0 0
        %3631 = vmatpush1.bf16.msra.mxu0 0
        %3632 = vmatprep.subr.bf16.mxu0 0
        %3633 = vmatpush1.bf16.msra.mxu0 0
        %3634 = vmatprep.subr.bf16.mxu0 0
        %3635 = vmatpush1.bf16.msra.mxu0 0
        %3636 = vmatprep.subr.bf16.mxu0 0
        %3637 = vmatpush1.bf16.msra.mxu0 0
        %3638 = vmatprep.subr.bf16.mxu0 0
        %3639 = vmatpush1.bf16.msra.mxu0 0
        %3640 = vmatprep.subr.bf16.mxu0 0
        %3641 = vmatpush1.bf16.msra.mxu0 0
        %3642 = vmatprep.subr.bf16.mxu0 0
        %3643 = vmatpush1.bf16.msra.mxu0 0
        %3644 = vmatprep.subr.bf16.mxu0 0
        %3645 = vmatpush1.bf16.msra.mxu0 0
        %3646 = vmatprep.subr.bf16.mxu0 0
        %3647 = vmatpush1.bf16.msra.mxu0 0
        %3648 = vmatprep.mubr.bf16.mxu0 0
        %3649 = vmatmul.mubr.bf16.gmra.mrb[0].mxu0 %v3414
        %v3650 = vpop.f32.mrb[0].mxu0
        %v3651 = vadd.f32 0.0, %v3650
        %v3652 = vpop.f32.mrb[0].mxu0
        %v3653 = vadd.f32 0.0, %v3652
        %v3654 = vpop.f32.mrb[0].mxu0
        %v3655 = vpop.f32.mrb[0].mxu0
        %3656 = vdwg.mxu0
        %3657 = vmatprep.subr.bf16.mxu0 %v3450
        %3658 = vmatpush1.bf16.msra.mxu0 %v3447
        %3659 = vmatprep.subr.bf16.mxu0 0
        %3660 = vmatpush1.bf16.msra.mxu0 0
        %3661 = vmatprep.subr.bf16.mxu0 0
        %3662 = vmatpush1.bf16.msra.mxu0 0
        %3663 = vmatprep.subr.bf16.mxu0 0
        %3664 = vmatpush1.bf16.msra.mxu0 0
        %3665 = vmatprep.subr.bf16.mxu0 0
        %3666 = vmatpush1.bf16.msra.mxu0 0
        %3667 = vmatprep.subr.bf16.mxu0 0
        %3668 = vmatpush1.bf16.msra.mxu0 0
        %3669 = vmatprep.subr.bf16.mxu0 0
        %3670 = vmatpush1.bf16.msra.mxu0 0
        %3671 = vmatprep.subr.bf16.mxu0 0
        %3672 = vmatpush1.bf16.msra.mxu0 0
        %3673 = vmatprep.subr.bf16.mxu0 0
        %3674 = vmatpush1.bf16.msra.mxu0 0
        %3675 = vmatprep.subr.bf16.mxu0 0
        %3676 = vmatpush1.bf16.msra.mxu0 0
        %3677 = vmatprep.subr.bf16.mxu0 0
        %3678 = vmatpush1.bf16.msra.mxu0 0
        %3679 = vmatprep.subr.bf16.mxu0 0
        %3680 = vmatpush1.bf16.msra.mxu0 0
        %3681 = vmatprep.subr.bf16.mxu0 0
        %3682 = vmatpush1.bf16.msra.mxu0 0
        %3683 = vmatprep.subr.bf16.mxu0 0
        %3684 = vmatpush1.bf16.msra.mxu0 0
        %3685 = vmatprep.subr.bf16.mxu0 0
        %3686 = vmatpush1.bf16.msra.mxu0 0
        %3687 = vmatprep.subr.bf16.mxu0 0
        %3688 = vmatpush1.bf16.msra.mxu0 0
        %3689 = vmatprep.mubr.bf16.mxu0 0
        %3690 = vmatmul.mubr.bf16.gmra.mrb[0].mxu0 %v3414
        %v3691 = vpop.f32.mrb[0].mxu0
        %v3692 = vadd.f32 0.0, %v3691
        %v3693 = vpop.f32.mrb[0].mxu0
        %v3694 = vadd.f32 0.0, %v3693
        %v3695 = vpop.f32.mrb[0].mxu0
        %v3696 = vpop.f32.mrb[0].mxu0
        %3697 = vdwg.mxu0
        %v3698 = vadd.f32 %v3360, %v3487
        %v3699 = vadd.f32 %v3361, %v3489
        %v3700 = vadd.f32 %v3362, %v3528
        %v3701 = vadd.f32 %v3363, %v3530
        %v3702 = vadd.f32 %v3364, %v3569
        %v3703 = vadd.f32 %v3365, %v3571
        %v3704 = vadd.f32 %v3366, %v3610
        %v3705 = vadd.f32 %v3367, %v3612
        %v3706 = vadd.f32 %v3368, %v3651
        %v3707 = vadd.f32 %v3369, %v3653
        %v3708 = vadd.f32 %v3370, %v3692
        %v3709 = vadd.f32 %v3371, %v3694
        %s3710 = scalar_lea.vmem %s4, 16
        %v3711 = vld [vmem:[%s3710] sm:$0x3]
        %3712 = vrot.lane.b32.xlu0 %v1036, 90
        %v3713 = vpop.permute.xlu0 %3712
        %3714 = vrot.lane.b32.xlu0 %v1037, 90
        %v3715 = vpop.permute.xlu0 %3714
        %3716 = vrot.lane.b32.xlu0 %v1038, 90
        %v3717 = vpop.permute.xlu0 %3716
        %3718 = vrot.lane.b32.xlu0 %v1039, 90
        %v3719 = vpop.permute.xlu0 %3718
        %3720 = vrot.lane.b32.xlu0 %v1040, 90
        %v3721 = vpop.permute.xlu0 %3720
        %3722 = vrot.lane.b32.xlu0 %v1041, 90
        %v3723 = vpop.permute.xlu0 %3722
        %3724 = vrot.lane.b32.xlu0 %v1042, 90
        %v3725 = vpop.permute.xlu0 %3724
        %3726 = vrot.lane.b32.xlu0 %v1043, 90
        %v3727 = vpop.permute.xlu0 %3726
        %3728 = vrot.lane.b32.xlu0 %v1044, 90
        %v3729 = vpop.permute.xlu0 %3728
        %3730 = vrot.lane.b32.xlu0 %v1045, 90
        %v3731 = vpop.permute.xlu0 %3730
        %3732 = vrot.lane.b32.xlu0 %v1046, 90
        %v3733 = vpop.permute.xlu0 %3732
        %3734 = vrot.lane.b32.xlu0 %v1047, 90
        %v3735 = vpop.permute.xlu0 %3734
        %3736 = vrot.lane.b32.xlu0 %v1048, 90
        %v3737 = vpop.permute.xlu0 %3736
        %vm3738 = vcmask 736256
        %v3739 = vsel %vm3738, %v3713, %v3715
        %v3740 = vsel %vm3738, %v3715, %v3717
        %v3741 = vsel %vm3738, %v3717, %v3719
        %v3742 = vsel %vm3738, %v3719, %v3721
        %v3743 = vsel %vm3738, %v3721, %v3723
        %v3744 = vsel %vm3738, %v3723, %v3725
        %v3745 = vsel %vm3738, %v3725, %v3727
        %v3746 = vsel %vm3738, %v3727, %v3729
        %v3747 = vsel %vm3738, %v3729, %v3731
        %v3748 = vsel %vm3738, %v3731, %v3733
        %v3749 = vsel %vm3738, %v3733, %v3735
        %v3750 = vsel %vm3738, %v3735, %v3737
        %v3752 = vsel %vm1110, %v3711, 0
        %v3755 = vsel %vm1114, %v3739, 0
        %v3758 = vsel %vm1114, %v3740, 0
        %v3761 = vsel %vm1114, %v3741, 0
        %v3764 = vsel %vm1114, %v3742, 0
        %v3767 = vsel %vm1114, %v3743, 0
        %v3770 = vsel %vm1114, %v3744, 0
        %v3773 = vsel %vm1114, %v3745, 0
        %v3776 = vsel %vm1114, %v3746, 0
        %v3779 = vsel %vm1114, %v3747, 0
        %v3782 = vsel %vm1114, %v3748, 0
        %v3785 = vsel %vm1114, %v3749, 0
        %v3788 = vsel %vm1114, %v3750, 0
        %3790 = vmatprep.subr.bf16.mxu0 %v3758
        %3791 = vmatpush1.bf16.msra.mxu0 %v3755
        %3792 = vmatprep.subr.bf16.mxu0 0
        %3793 = vmatpush1.bf16.msra.mxu0 0
        %3794 = vmatprep.subr.bf16.mxu0 0
        %3795 = vmatpush1.bf16.msra.mxu0 0
        %3796 = vmatprep.subr.bf16.mxu0 0
        %3797 = vmatpush1.bf16.msra.mxu0 0
        %3798 = vmatprep.subr.bf16.mxu0 0
        %3799 = vmatpush1.bf16.msra.mxu0 0
        %3800 = vmatprep.subr.bf16.mxu0 0
        %3801 = vmatpush1.bf16.msra.mxu0 0
        %3802 = vmatprep.subr.bf16.mxu0 0
        %3803 = vmatpush1.bf16.msra.mxu0 0
        %3804 = vmatprep.subr.bf16.mxu0 0
        %3805 = vmatpush1.bf16.msra.mxu0 0
        %3806 = vmatprep.subr.bf16.mxu0 0
        %3807 = vmatpush1.bf16.msra.mxu0 0
        %3808 = vmatprep.subr.bf16.mxu0 0
        %3809 = vmatpush1.bf16.msra.mxu0 0
        %3810 = vmatprep.subr.bf16.mxu0 0
        %3811 = vmatpush1.bf16.msra.mxu0 0
        %3812 = vmatprep.subr.bf16.mxu0 0
        %3813 = vmatpush1.bf16.msra.mxu0 0
        %3814 = vmatprep.subr.bf16.mxu0 0
        %3815 = vmatpush1.bf16.msra.mxu0 0
        %3816 = vmatprep.subr.bf16.mxu0 0
        %3817 = vmatpush1.bf16.msra.mxu0 0
        %3818 = vmatprep.subr.bf16.mxu0 0
        %3819 = vmatpush1.bf16.msra.mxu0 0
        %3820 = vmatprep.subr.bf16.mxu0 0
        %3821 = vmatpush1.bf16.msra.mxu0 0
        %3822 = vmatprep.mubr.bf16.mxu0 0
        %3823 = vmatmul.mubr.bf16.gmra.mrb[0].mxu0 %v3752
        %v3824 = vpop.f32.mrb[0].mxu0
        %v3825 = vadd.f32 0.0, %v3824
        %v3826 = vpop.f32.mrb[0].mxu0
        %v3827 = vadd.f32 0.0, %v3826
        %v3828 = vpop.f32.mrb[0].mxu0
        %v3829 = vpop.f32.mrb[0].mxu0
        %3830 = vdwg.mxu0
        %3831 = vmatprep.subr.bf16.mxu0 %v3764
        %3832 = vmatpush1.bf16.msra.mxu0 %v3761
        %3833 = vmatprep.subr.bf16.mxu0 0
        %3834 = vmatpush1.bf16.msra.mxu0 0
        %3835 = vmatprep.subr.bf16.mxu0 0
        %3836 = vmatpush1.bf16.msra.mxu0 0
        %3837 = vmatprep.subr.bf16.mxu0 0
        %3838 = vmatpush1.bf16.msra.mxu0 0
        %3839 = vmatprep.subr.bf16.mxu0 0
        %3840 = vmatpush1.bf16.msra.mxu0 0
        %3841 = vmatprep.subr.bf16.mxu0 0
        %3842 = vmatpush1.bf16.msra.mxu0 0
        %3843 = vmatprep.subr.bf16.mxu0 0
        %3844 = vmatpush1.bf16.msra.mxu0 0
        %3845 = vmatprep.subr.bf16.mxu0 0
        %3846 = vmatpush1.bf16.msra.mxu0 0
        %3847 = vmatprep.subr.bf16.mxu0 0
        %3848 = vmatpush1.bf16.msra.mxu0 0
        %3849 = vmatprep.subr.bf16.mxu0 0
        %3850 = vmatpush1.bf16.msra.mxu0 0
        %3851 = vmatprep.subr.bf16.mxu0 0
        %3852 = vmatpush1.bf16.msra.mxu0 0
        %3853 = vmatprep.subr.bf16.mxu0 0
        %3854 = vmatpush1.bf16.msra.mxu0 0
        %3855 = vmatprep.subr.bf16.mxu0 0
        %3856 = vmatpush1.bf16.msra.mxu0 0
        %3857 = vmatprep.subr.bf16.mxu0 0
        %3858 = vmatpush1.bf16.msra.mxu0 0
        %3859 = vmatprep.subr.bf16.mxu0 0
        %3860 = vmatpush1.bf16.msra.mxu0 0
        %3861 = vmatprep.subr.bf16.mxu0 0
        %3862 = vmatpush1.bf16.msra.mxu0 0
        %3863 = vmatprep.mubr.bf16.mxu0 0
        %3864 = vmatmul.mubr.bf16.gmra.mrb[0].mxu0 %v3752
        %v3865 = vpop.f32.mrb[0].mxu0
        %v3866 = vadd.f32 0.0, %v3865
        %v3867 = vpop.f32.mrb[0].mxu0
        %v3868 = vadd.f32 0.0, %v3867
        %v3869 = vpop.f32.mrb[0].mxu0
        %v3870 = vpop.f32.mrb[0].mxu0
        %3871 = vdwg.mxu0
        %3872 = vmatprep.subr.bf16.mxu0 %v3770
        %3873 = vmatpush1.bf16.msra.mxu0 %v3767
        %3874 = vmatprep.subr.bf16.mxu0 0
        %3875 = vmatpush1.bf16.msra.mxu0 0
        %3876 = vmatprep.subr.bf16.mxu0 0
        %3877 = vmatpush1.bf16.msra.mxu0 0
        %3878 = vmatprep.subr.bf16.mxu0 0
        %3879 = vmatpush1.bf16.msra.mxu0 0
        %3880 = vmatprep.subr.bf16.mxu0 0
        %3881 = vmatpush1.bf16.msra.mxu0 0
        %3882 = vmatprep.subr.bf16.mxu0 0
        %3883 = vmatpush1.bf16.msra.mxu0 0
        %3884 = vmatprep.subr.bf16.mxu0 0
        %3885 = vmatpush1.bf16.msra.mxu0 0
        %3886 = vmatprep.subr.bf16.mxu0 0
        %3887 = vmatpush1.bf16.msra.mxu0 0
        %3888 = vmatprep.subr.bf16.mxu0 0
        %3889 = vmatpush1.bf16.msra.mxu0 0
        %3890 = vmatprep.subr.bf16.mxu0 0
        %3891 = vmatpush1.bf16.msra.mxu0 0
        %3892 = vmatprep.subr.bf16.mxu0 0
        %3893 = vmatpush1.bf16.msra.mxu0 0
        %3894 = vmatprep.subr.bf16.mxu0 0
        %3895 = vmatpush1.bf16.msra.mxu0 0
        %3896 = vmatprep.subr.bf16.mxu0 0
        %3897 = vmatpush1.bf16.msra.mxu0 0
        %3898 = vmatprep.subr.bf16.mxu0 0
        %3899 = vmatpush1.bf16.msra.mxu0 0
        %3900 = vmatprep.subr.bf16.mxu0 0
        %3901 = vmatpush1.bf16.msra.mxu0 0
        %3902 = vmatprep.subr.bf16.mxu0 0
        %3903 = vmatpush1.bf16.msra.mxu0 0
        %3904 = vmatprep.mubr.bf16.mxu0 0
        %3905 = vmatmul.mubr.bf16.gmra.mrb[0].mxu0 %v3752
        %v3906 = vpop.f32.mrb[0].mxu0
        %v3907 = vadd.f32 0.0, %v3906
        %v3908 = vpop.f32.mrb[0].mxu0
        %v3909 = vadd.f32 0.0, %v3908
        %v3910 = vpop.f32.mrb[0].mxu0
        %v3911 = vpop.f32.mrb[0].mxu0
        %3912 = vdwg.mxu0
        %3913 = vmatprep.subr.bf16.mxu0 %v3776
        %3914 = vmatpush1.bf16.msra.mxu0 %v3773
        %3915 = vmatprep.subr.bf16.mxu0 0
        %3916 = vmatpush1.bf16.msra.mxu0 0
        %3917 = vmatprep.subr.bf16.mxu0 0
        %3918 = vmatpush1.bf16.msra.mxu0 0
        %3919 = vmatprep.subr.bf16.mxu0 0
        %3920 = vmatpush1.bf16.msra.mxu0 0
        %3921 = vmatprep.subr.bf16.mxu0 0
        %3922 = vmatpush1.bf16.msra.mxu0 0
        %3923 = vmatprep.subr.bf16.mxu0 0
        %3924 = vmatpush1.bf16.msra.mxu0 0
        %3925 = vmatprep.subr.bf16.mxu0 0
        %3926 = vmatpush1.bf16.msra.mxu0 0
        %3927 = vmatprep.subr.bf16.mxu0 0
        %3928 = vmatpush1.bf16.msra.mxu0 0
        %3929 = vmatprep.subr.bf16.mxu0 0
        %3930 = vmatpush1.bf16.msra.mxu0 0
        %3931 = vmatprep.subr.bf16.mxu0 0
        %3932 = vmatpush1.bf16.msra.mxu0 0
        %3933 = vmatprep.subr.bf16.mxu0 0
        %3934 = vmatpush1.bf16.msra.mxu0 0
        %3935 = vmatprep.subr.bf16.mxu0 0
        %3936 = vmatpush1.bf16.msra.mxu0 0
        %3937 = vmatprep.subr.bf16.mxu0 0
        %3938 = vmatpush1.bf16.msra.mxu0 0
        %3939 = vmatprep.subr.bf16.mxu0 0
        %3940 = vmatpush1.bf16.msra.mxu0 0
        %3941 = vmatprep.subr.bf16.mxu0 0
        %3942 = vmatpush1.bf16.msra.mxu0 0
        %3943 = vmatprep.subr.bf16.mxu0 0
        %3944 = vmatpush1.bf16.msra.mxu0 0
        %3945 = vmatprep.mubr.bf16.mxu0 0
        %3946 = vmatmul.mubr.bf16.gmra.mrb[0].mxu0 %v3752
        %v3947 = vpop.f32.mrb[0].mxu0
        %v3948 = vadd.f32 0.0, %v3947
        %v3949 = vpop.f32.mrb[0].mxu0
        %v3950 = vadd.f32 0.0, %v3949
        %v3951 = vpop.f32.mrb[0].mxu0
        %v3952 = vpop.f32.mrb[0].mxu0
        %3953 = vdwg.mxu0
        %3954 = vmatprep.subr.bf16.mxu0 %v3782
        %3955 = vmatpush1.bf16.msra.mxu0 %v3779
        %3956 = vmatprep.subr.bf16.mxu0 0
        %3957 = vmatpush1.bf16.msra.mxu0 0
        %3958 = vmatprep.subr.bf16.mxu0 0
        %3959 = vmatpush1.bf16.msra.mxu0 0
        %3960 = vmatprep.subr.bf16.mxu0 0
        %3961 = vmatpush1.bf16.msra.mxu0 0
        %3962 = vmatprep.subr.bf16.mxu0 0
        %3963 = vmatpush1.bf16.msra.mxu0 0
        %3964 = vmatprep.subr.bf16.mxu0 0
        %3965 = vmatpush1.bf16.msra.mxu0 0
        %3966 = vmatprep.subr.bf16.mxu0 0
        %3967 = vmatpush1.bf16.msra.mxu0 0
        %3968 = vmatprep.subr.bf16.mxu0 0
        %3969 = vmatpush1.bf16.msra.mxu0 0
        %3970 = vmatprep.subr.bf16.mxu0 0
        %3971 = vmatpush1.bf16.msra.mxu0 0
        %3972 = vmatprep.subr.bf16.mxu0 0
        %3973 = vmatpush1.bf16.msra.mxu0 0
        %3974 = vmatprep.subr.bf16.mxu0 0
        %3975 = vmatpush1.bf16.msra.mxu0 0
        %3976 = vmatprep.subr.bf16.mxu0 0
        %3977 = vmatpush1.bf16.msra.mxu0 0
        %3978 = vmatprep.subr.bf16.mxu0 0
        %3979 = vmatpush1.bf16.msra.mxu0 0
        %3980 = vmatprep.subr.bf16.mxu0 0
        %3981 = vmatpush1.bf16.msra.mxu0 0
        %3982 = vmatprep.subr.bf16.mxu0 0
        %3983 = vmatpush1.bf16.msra.mxu0 0
        %3984 = vmatprep.subr.bf16.mxu0 0
        %3985 = vmatpush1.bf16.msra.mxu0 0
        %3986 = vmatprep.mubr.bf16.mxu0 0
        %3987 = vmatmul.mubr.bf16.gmra.mrb[0].mxu0 %v3752
        %v3988 = vpop.f32.mrb[0].mxu0
        %v3989 = vadd.f32 0.0, %v3988
        %v3990 = vpop.f32.mrb[0].mxu0
        %v3991 = vadd.f32 0.0, %v3990
        %v3992 = vpop.f32.mrb[0].mxu0
        %v3993 = vpop.f32.mrb[0].mxu0
        %3994 = vdwg.mxu0
        %3995 = vmatprep.subr.bf16.mxu0 %v3788
        %3996 = vmatpush1.bf16.msra.mxu0 %v3785
        %3997 = vmatprep.subr.bf16.mxu0 0
        %3998 = vmatpush1.bf16.msra.mxu0 0
        %3999 = vmatprep.subr.bf16.mxu0 0
        %4000 = vmatpush1.bf16.msra.mxu0 0
        %4001 = vmatprep.subr.bf16.mxu0 0
        %4002 = vmatpush1.bf16.msra.mxu0 0
        %4003 = vmatprep.subr.bf16.mxu0 0
        %4004 = vmatpush1.bf16.msra.mxu0 0
        %4005 = vmatprep.subr.bf16.mxu0 0
        %4006 = vmatpush1.bf16.msra.mxu0 0
        %4007 = vmatprep.subr.bf16.mxu0 0
        %4008 = vmatpush1.bf16.msra.mxu0 0
        %4009 = vmatprep.subr.bf16.mxu0 0
        %4010 = vmatpush1.bf16.msra.mxu0 0
        %4011 = vmatprep.subr.bf16.mxu0 0
        %4012 = vmatpush1.bf16.msra.mxu0 0
        %4013 = vmatprep.subr.bf16.mxu0 0
        %4014 = vmatpush1.bf16.msra.mxu0 0
        %4015 = vmatprep.subr.bf16.mxu0 0
        %4016 = vmatpush1.bf16.msra.mxu0 0
        %4017 = vmatprep.subr.bf16.mxu0 0
        %4018 = vmatpush1.bf16.msra.mxu0 0
        %4019 = vmatprep.subr.bf16.mxu0 0
        %4020 = vmatpush1.bf16.msra.mxu0 0
        %4021 = vmatprep.subr.bf16.mxu0 0
        %4022 = vmatpush1.bf16.msra.mxu0 0
        %4023 = vmatprep.subr.bf16.mxu0 0
        %4024 = vmatpush1.bf16.msra.mxu0 0
        %4025 = vmatprep.subr.bf16.mxu0 0
        %4026 = vmatpush1.bf16.msra.mxu0 0
        %4027 = vmatprep.mubr.bf16.mxu0 0
        %4028 = vmatmul.mubr.bf16.gmra.mrb[0].mxu0 %v3752
        %v4029 = vpop.f32.mrb[0].mxu0
        %v4030 = vadd.f32 0.0, %v4029
        %v4031 = vpop.f32.mrb[0].mxu0
        %v4032 = vadd.f32 0.0, %v4031
        %v4033 = vpop.f32.mrb[0].mxu0
        %v4034 = vpop.f32.mrb[0].mxu0
        %4035 = vdwg.mxu0
        %v4036 = vadd.f32 %v3698, %v3825
        %v4037 = vadd.f32 %v3699, %v3827
        %v4038 = vadd.f32 %v3700, %v3866
        %v4039 = vadd.f32 %v3701, %v3868
        %v4040 = vadd.f32 %v3702, %v3907
        %v4041 = vadd.f32 %v3703, %v3909
        %v4042 = vadd.f32 %v3704, %v3948
        %v4043 = vadd.f32 %v3705, %v3950
        %v4044 = vadd.f32 %v3706, %v3989
        %v4045 = vadd.f32 %v3707, %v3991
        %v4046 = vadd.f32 %v3708, %v4030
        %v4047 = vadd.f32 %v3709, %v4032
        %s4048 = scalar_lea.vmem %s4, 18
        %v4049 = vld [vmem:[%s4048] sm:$0x3]
        %v4051 = vsel %vm1110, %v4049, 0
        %v4054 = vsel %vm1114, %v1048, 0
        %v4057 = vsel %vm1114, %v1049, 0
        %v4060 = vsel %vm1114, %v1050, 0
        %4062 = vmatprep.subr.bf16.mxu0 %v1413
        %4063 = vmatpush1.bf16.msra.mxu0 %v1410
        %4064 = vmatprep.subr.bf16.mxu0 0
        %4065 = vmatpush1.bf16.msra.mxu0 0
        %4066 = vmatprep.subr.bf16.mxu0 0
        %4067 = vmatpush1.bf16.msra.mxu0 0
        %4068 = vmatprep.subr.bf16.mxu0 0
        %4069 = vmatpush1.bf16.msra.mxu0 0
        %4070 = vmatprep.subr.bf16.mxu0 0
        %4071 = vmatpush1.bf16.msra.mxu0 0
        %4072 = vmatprep.subr.bf16.mxu0 0
        %4073 = vmatpush1.bf16.msra.mxu0 0
        %4074 = vmatprep.subr.bf16.mxu0 0
        %4075 = vmatpush1.bf16.msra.mxu0 0
        %4076 = vmatprep.subr.bf16.mxu0 0
        %4077 = vmatpush1.bf16.msra.mxu0 0
        %4078 = vmatprep.subr.bf16.mxu0 0
        %4079 = vmatpush1.bf16.msra.mxu0 0
        %4080 = vmatprep.subr.bf16.mxu0 0
        %4081 = vmatpush1.bf16.msra.mxu0 0
        %4082 = vmatprep.subr.bf16.mxu0 0
        %4083 = vmatpush1.bf16.msra.mxu0 0
        %4084 = vmatprep.subr.bf16.mxu0 0
        %4085 = vmatpush1.bf16.msra.mxu0 0
        %4086 = vmatprep.subr.bf16.mxu0 0
        %4087 = vmatpush1.bf16.msra.mxu0 0
        %4088 = vmatprep.subr.bf16.mxu0 0
        %4089 = vmatpush1.bf16.msra.mxu0 0
        %4090 = vmatprep.subr.bf16.mxu0 0
        %4091 = vmatpush1.bf16.msra.mxu0 0
        %4092 = vmatprep.subr.bf16.mxu0 0
        %4093 = vmatpush1.bf16.msra.mxu0 0
        %4094 = vmatprep.mubr.bf16.mxu0 0
        %4095 = vmatmul.mubr.bf16.gmra.mrb[0].mxu0 %v4051
        %v4096 = vpop.f32.mrb[0].mxu0
        %v4097 = vadd.f32 0.0, %v4096
        %v4098 = vpop.f32.mrb[0].mxu0
        %v4099 = vadd.f32 0.0, %v4098
        %v4100 = vpop.f32.mrb[0].mxu0
        %v4101 = vpop.f32.mrb[0].mxu0
        %4102 = vdwg.mxu0
        %4103 = vmatprep.subr.bf16.mxu0 %v1419
        %4104 = vmatpush1.bf16.msra.mxu0 %v1416
        %4105 = vmatprep.subr.bf16.mxu0 0
        %4106 = vmatpush1.bf16.msra.mxu0 0
        %4107 = vmatprep.subr.bf16.mxu0 0
        %4108 = vmatpush1.bf16.msra.mxu0 0
        %4109 = vmatprep.subr.bf16.mxu0 0
        %4110 = vmatpush1.bf16.msra.mxu0 0
        %4111 = vmatprep.subr.bf16.mxu0 0
        %4112 = vmatpush1.bf16.msra.mxu0 0
        %4113 = vmatprep.subr.bf16.mxu0 0
        %4114 = vmatpush1.bf16.msra.mxu0 0
        %4115 = vmatprep.subr.bf16.mxu0 0
        %4116 = vmatpush1.bf16.msra.mxu0 0
        %4117 = vmatprep.subr.bf16.mxu0 0
        %4118 = vmatpush1.bf16.msra.mxu0 0
        %4119 = vmatprep.subr.bf16.mxu0 0
        %4120 = vmatpush1.bf16.msra.mxu0 0
        %4121 = vmatprep.subr.bf16.mxu0 0
        %4122 = vmatpush1.bf16.msra.mxu0 0
        %4123 = vmatprep.subr.bf16.mxu0 0
        %4124 = vmatpush1.bf16.msra.mxu0 0
        %4125 = vmatprep.subr.bf16.mxu0 0
        %4126 = vmatpush1.bf16.msra.mxu0 0
        %4127 = vmatprep.subr.bf16.mxu0 0
        %4128 = vmatpush1.bf16.msra.mxu0 0
        %4129 = vmatprep.subr.bf16.mxu0 0
        %4130 = vmatpush1.bf16.msra.mxu0 0
        %4131 = vmatprep.subr.bf16.mxu0 0
        %4132 = vmatpush1.bf16.msra.mxu0 0
        %4133 = vmatprep.subr.bf16.mxu0 0
        %4134 = vmatpush1.bf16.msra.mxu0 0
        %4135 = vmatprep.mubr.bf16.mxu0 0
        %4136 = vmatmul.mubr.bf16.gmra.mrb[0].mxu0 %v4051
        %v4137 = vpop.f32.mrb[0].mxu0
        %v4138 = vadd.f32 0.0, %v4137
        %v4139 = vpop.f32.mrb[0].mxu0
        %v4140 = vadd.f32 0.0, %v4139
        %v4141 = vpop.f32.mrb[0].mxu0
        %v4142 = vpop.f32.mrb[0].mxu0
        %4143 = vdwg.mxu0
        %4144 = vmatprep.subr.bf16.mxu0 %v1425
        %4145 = vmatpush1.bf16.msra.mxu0 %v1422
        %4146 = vmatprep.subr.bf16.mxu0 0
        %4147 = vmatpush1.bf16.msra.mxu0 0
        %4148 = vmatprep.subr.bf16.mxu0 0
        %4149 = vmatpush1.bf16.msra.mxu0 0
        %4150 = vmatprep.subr.bf16.mxu0 0
        %4151 = vmatpush1.bf16.msra.mxu0 0
        %4152 = vmatprep.subr.bf16.mxu0 0
        %4153 = vmatpush1.bf16.msra.mxu0 0
        %4154 = vmatprep.subr.bf16.mxu0 0
        %4155 = vmatpush1.bf16.msra.mxu0 0
        %4156 = vmatprep.subr.bf16.mxu0 0
        %4157 = vmatpush1.bf16.msra.mxu0 0
        %4158 = vmatprep.subr.bf16.mxu0 0
        %4159 = vmatpush1.bf16.msra.mxu0 0
        %4160 = vmatprep.subr.bf16.mxu0 0
        %4161 = vmatpush1.bf16.msra.mxu0 0
        %4162 = vmatprep.subr.bf16.mxu0 0
        %4163 = vmatpush1.bf16.msra.mxu0 0
        %4164 = vmatprep.subr.bf16.mxu0 0
        %4165 = vmatpush1.bf16.msra.mxu0 0
        %4166 = vmatprep.subr.bf16.mxu0 0
        %4167 = vmatpush1.bf16.msra.mxu0 0
        %4168 = vmatprep.subr.bf16.mxu0 0
        %4169 = vmatpush1.bf16.msra.mxu0 0
        %4170 = vmatprep.subr.bf16.mxu0 0
        %4171 = vmatpush1.bf16.msra.mxu0 0
        %4172 = vmatprep.subr.bf16.mxu0 0
        %4173 = vmatpush1.bf16.msra.mxu0 0
        %4174 = vmatprep.subr.bf16.mxu0 0
        %4175 = vmatpush1.bf16.msra.mxu0 0
        %4176 = vmatprep.mubr.bf16.mxu0 0
        %4177 = vmatmul.mubr.bf16.gmra.mrb[0].mxu0 %v4051
        %v4178 = vpop.f32.mrb[0].mxu0
        %v4179 = vadd.f32 0.0, %v4178
        %v4180 = vpop.f32.mrb[0].mxu0
        %v4181 = vadd.f32 0.0, %v4180
        %v4182 = vpop.f32.mrb[0].mxu0
        %v4183 = vpop.f32.mrb[0].mxu0
        %4184 = vdwg.mxu0
        %4185 = vmatprep.subr.bf16.mxu0 %v1431
        %4186 = vmatpush1.bf16.msra.mxu0 %v1428
        %4187 = vmatprep.subr.bf16.mxu0 0
        %4188 = vmatpush1.bf16.msra.mxu0 0
        %4189 = vmatprep.subr.bf16.mxu0 0
        %4190 = vmatpush1.bf16.msra.mxu0 0
        %4191 = vmatprep.subr.bf16.mxu0 0
        %4192 = vmatpush1.bf16.msra.mxu0 0
        %4193 = vmatprep.subr.bf16.mxu0 0
        %4194 = vmatpush1.bf16.msra.mxu0 0
        %4195 = vmatprep.subr.bf16.mxu0 0
        %4196 = vmatpush1.bf16.msra.mxu0 0
        %4197 = vmatprep.subr.bf16.mxu0 0
        %4198 = vmatpush1.bf16.msra.mxu0 0
        %4199 = vmatprep.subr.bf16.mxu0 0
        %4200 = vmatpush1.bf16.msra.mxu0 0
        %4201 = vmatprep.subr.bf16.mxu0 0
        %4202 = vmatpush1.bf16.msra.mxu0 0
        %4203 = vmatprep.subr.bf16.mxu0 0
        %4204 = vmatpush1.bf16.msra.mxu0 0
        %4205 = vmatprep.subr.bf16.mxu0 0
        %4206 = vmatpush1.bf16.msra.mxu0 0
        %4207 = vmatprep.subr.bf16.mxu0 0
        %4208 = vmatpush1.bf16.msra.mxu0 0
        %4209 = vmatprep.subr.bf16.mxu0 0
        %4210 = vmatpush1.bf16.msra.mxu0 0
        %4211 = vmatprep.subr.bf16.mxu0 0
        %4212 = vmatpush1.bf16.msra.mxu0 0
        %4213 = vmatprep.subr.bf16.mxu0 0
        %4214 = vmatpush1.bf16.msra.mxu0 0
        %4215 = vmatprep.subr.bf16.mxu0 0
        %4216 = vmatpush1.bf16.msra.mxu0 0
        %4217 = vmatprep.mubr.bf16.mxu0 0
        %4218 = vmatmul.mubr.bf16.gmra.mrb[0].mxu0 %v4051
        %v4219 = vpop.f32.mrb[0].mxu0
        %v4220 = vadd.f32 0.0, %v4219
        %v4221 = vpop.f32.mrb[0].mxu0
        %v4222 = vadd.f32 0.0, %v4221
        %v4223 = vpop.f32.mrb[0].mxu0
        %v4224 = vpop.f32.mrb[0].mxu0
        %4225 = vdwg.mxu0
        %4226 = vmatprep.subr.bf16.mxu0 %v4054
        %4227 = vmatpush1.bf16.msra.mxu0 %v1434
        %4228 = vmatprep.subr.bf16.mxu0 0
        %4229 = vmatpush1.bf16.msra.mxu0 0
        %4230 = vmatprep.subr.bf16.mxu0 0
        %4231 = vmatpush1.bf16.msra.mxu0 0
        %4232 = vmatprep.subr.bf16.mxu0 0
        %4233 = vmatpush1.bf16.msra.mxu0 0
        %4234 = vmatprep.subr.bf16.mxu0 0
        %4235 = vmatpush1.bf16.msra.mxu0 0
        %4236 = vmatprep.subr.bf16.mxu0 0
        %4237 = vmatpush1.bf16.msra.mxu0 0
        %4238 = vmatprep.subr.bf16.mxu0 0
        %4239 = vmatpush1.bf16.msra.mxu0 0
        %4240 = vmatprep.subr.bf16.mxu0 0
        %4241 = vmatpush1.bf16.msra.mxu0 0
        %4242 = vmatprep.subr.bf16.mxu0 0
        %4243 = vmatpush1.bf16.msra.mxu0 0
        %4244 = vmatprep.subr.bf16.mxu0 0
        %4245 = vmatpush1.bf16.msra.mxu0 0
        %4246 = vmatprep.subr.bf16.mxu0 0
        %4247 = vmatpush1.bf16.msra.mxu0 0
        %4248 = vmatprep.subr.bf16.mxu0 0
        %4249 = vmatpush1.bf16.msra.mxu0 0
        %4250 = vmatprep.subr.bf16.mxu0 0
        %4251 = vmatpush1.bf16.msra.mxu0 0
        %4252 = vmatprep.subr.bf16.mxu0 0
        %4253 = vmatpush1.bf16.msra.mxu0 0
        %4254 = vmatprep.subr.bf16.mxu0 0
        %4255 = vmatpush1.bf16.msra.mxu0 0
        %4256 = vmatprep.subr.bf16.mxu0 0
        %4257 = vmatpush1.bf16.msra.mxu0 0
        %4258 = vmatprep.mubr.bf16.mxu0 0
        %4259 = vmatmul.mubr.bf16.gmra.mrb[0].mxu0 %v4051
        %v4260 = vpop.f32.mrb[0].mxu0
        %v4261 = vadd.f32 0.0, %v4260
        %v4262 = vpop.f32.mrb[0].mxu0
        %v4263 = vadd.f32 0.0, %v4262
        %v4264 = vpop.f32.mrb[0].mxu0
        %v4265 = vpop.f32.mrb[0].mxu0
        %4266 = vdwg.mxu0
        %4267 = vmatprep.subr.bf16.mxu0 %v4060
        %4268 = vmatpush1.bf16.msra.mxu0 %v4057
        %4269 = vmatprep.subr.bf16.mxu0 0
        %4270 = vmatpush1.bf16.msra.mxu0 0
        %4271 = vmatprep.subr.bf16.mxu0 0
        %4272 = vmatpush1.bf16.msra.mxu0 0
        %4273 = vmatprep.subr.bf16.mxu0 0
        %4274 = vmatpush1.bf16.msra.mxu0 0
        %4275 = vmatprep.subr.bf16.mxu0 0
        %4276 = vmatpush1.bf16.msra.mxu0 0
        %4277 = vmatprep.subr.bf16.mxu0 0
        %4278 = vmatpush1.bf16.msra.mxu0 0
        %4279 = vmatprep.subr.bf16.mxu0 0
        %4280 = vmatpush1.bf16.msra.mxu0 0
        %4281 = vmatprep.subr.bf16.mxu0 0
        %4282 = vmatpush1.bf16.msra.mxu0 0
        %4283 = vmatprep.subr.bf16.mxu0 0
        %4284 = vmatpush1.bf16.msra.mxu0 0
        %4285 = vmatprep.subr.bf16.mxu0 0
        %4286 = vmatpush1.bf16.msra.mxu0 0
        %4287 = vmatprep.subr.bf16.mxu0 0
        %4288 = vmatpush1.bf16.msra.mxu0 0
        %4289 = vmatprep.subr.bf16.mxu0 0
        %4290 = vmatpush1.bf16.msra.mxu0 0
        %4291 = vmatprep.subr.bf16.mxu0 0
        %4292 = vmatpush1.bf16.msra.mxu0 0
        %4293 = vmatprep.subr.bf16.mxu0 0
        %4294 = vmatpush1.bf16.msra.mxu0 0
        %4295 = vmatprep.subr.bf16.mxu0 0
        %4296 = vmatpush1.bf16.msra.mxu0 0
        %4297 = vmatprep.subr.bf16.mxu0 0
        %4298 = vmatpush1.bf16.msra.mxu0 0
        %4299 = vmatprep.mubr.bf16.mxu0 0
        %4300 = vmatmul.mubr.bf16.gmra.mrb[0].mxu0 %v4051
        %v4301 = vpop.f32.mrb[0].mxu0
        %v4302 = vadd.f32 0.0, %v4301
        %v4303 = vpop.f32.mrb[0].mxu0
        %v4304 = vadd.f32 0.0, %v4303
        %v4305 = vpop.f32.mrb[0].mxu0
        %v4306 = vpop.f32.mrb[0].mxu0
        %4307 = vdwg.mxu0
        %v4308 = vadd.f32 %v4036, %v4097
        %v4309 = vadd.f32 %v4037, %v4099
        %v4310 = vadd.f32 %v4038, %v4138
        %v4311 = vadd.f32 %v4039, %v4140
        %v4312 = vadd.f32 %v4040, %v4179
        %v4313 = vadd.f32 %v4041, %v4181
        %v4314 = vadd.f32 %v4042, %v4220
        %v4315 = vadd.f32 %v4043, %v4222
        %v4316 = vadd.f32 %v4044, %v4261
        %v4317 = vadd.f32 %v4045, %v4263
        %v4318 = vadd.f32 %v4046, %v4302
        %v4319 = vadd.f32 %v4047, %v4304
        %s4320 = scalar_lea.vmem %s4, 20
        %v4321 = vld [vmem:[%s4320] sm:$0x3]
        %4325 = vrot.lane.b32.xlu0 %v1049, 127
        %v4326 = vpop.permute.xlu0 %4325
        %4327 = vrot.lane.b32.xlu0 %v1050, 127
        %v4328 = vpop.permute.xlu0 %4327
        %4329 = vrot.lane.b32.xlu0 %v1051, 127
        %v4330 = vpop.permute.xlu0 %4329
        %v4331 = vsel %vm1097, %v1096, %v4326
        %v4332 = vsel %vm1097, %v4326, %v4328
        %v4333 = vsel %vm1097, %v4328, %v4330
        %v4335 = vsel %vm1110, %v4321, 0
        %v4338 = vsel %vm1114, %v4331, 0
        %v4341 = vsel %vm1114, %v4332, 0
        %v4344 = vsel %vm1114, %v4333, 0
        %4346 = vmatprep.subr.bf16.mxu0 %v1128
        %4347 = vmatpush1.bf16.msra.mxu0 %v1125
        %4348 = vmatprep.subr.bf16.mxu0 0
        %4349 = vmatpush1.bf16.msra.mxu0 0
        %4350 = vmatprep.subr.bf16.mxu0 0
        %4351 = vmatpush1.bf16.msra.mxu0 0
        %4352 = vmatprep.subr.bf16.mxu0 0
        %4353 = vmatpush1.bf16.msra.mxu0 0
        %4354 = vmatprep.subr.bf16.mxu0 0
        %4355 = vmatpush1.bf16.msra.mxu0 0
        %4356 = vmatprep.subr.bf16.mxu0 0
        %4357 = vmatpush1.bf16.msra.mxu0 0
        %4358 = vmatprep.subr.bf16.mxu0 0
        %4359 = vmatpush1.bf16.msra.mxu0 0
        %4360 = vmatprep.subr.bf16.mxu0 0
        %4361 = vmatpush1.bf16.msra.mxu0 0
        %4362 = vmatprep.subr.bf16.mxu0 0
        %4363 = vmatpush1.bf16.msra.mxu0 0
        %4364 = vmatprep.subr.bf16.mxu0 0
        %4365 = vmatpush1.bf16.msra.mxu0 0
        %4366 = vmatprep.subr.bf16.mxu0 0
        %4367 = vmatpush1.bf16.msra.mxu0 0
        %4368 = vmatprep.subr.bf16.mxu0 0
        %4369 = vmatpush1.bf16.msra.mxu0 0
        %4370 = vmatprep.subr.bf16.mxu0 0
        %4371 = vmatpush1.bf16.msra.mxu0 0
        %4372 = vmatprep.subr.bf16.mxu0 0
        %4373 = vmatpush1.bf16.msra.mxu0 0
        %4374 = vmatprep.subr.bf16.mxu0 0
        %4375 = vmatpush1.bf16.msra.mxu0 0
        %4376 = vmatprep.subr.bf16.mxu0 0
        %4377 = vmatpush1.bf16.msra.mxu0 0
        %4378 = vmatprep.mubr.bf16.mxu0 0
        %4379 = vmatmul.mubr.bf16.gmra.mrb[0].mxu0 %v4335
        %v4380 = vpop.f32.mrb[0].mxu0
        %v4381 = vadd.f32 0.0, %v4380
        %v4382 = vpop.f32.mrb[0].mxu0
        %v4383 = vadd.f32 0.0, %v4382
        %v4384 = vpop.f32.mrb[0].mxu0
        %v4385 = vpop.f32.mrb[0].mxu0
        %4386 = vdwg.mxu0
        %4387 = vmatprep.subr.bf16.mxu0 %v1134
        %4388 = vmatpush1.bf16.msra.mxu0 %v1131
        %4389 = vmatprep.subr.bf16.mxu0 0
        %4390 = vmatpush1.bf16.msra.mxu0 0
        %4391 = vmatprep.subr.bf16.mxu0 0
        %4392 = vmatpush1.bf16.msra.mxu0 0
        %4393 = vmatprep.subr.bf16.mxu0 0
        %4394 = vmatpush1.bf16.msra.mxu0 0
        %4395 = vmatprep.subr.bf16.mxu0 0
        %4396 = vmatpush1.bf16.msra.mxu0 0
        %4397 = vmatprep.subr.bf16.mxu0 0
        %4398 = vmatpush1.bf16.msra.mxu0 0
        %4399 = vmatprep.subr.bf16.mxu0 0
        %4400 = vmatpush1.bf16.msra.mxu0 0
        %4401 = vmatprep.subr.bf16.mxu0 0
        %4402 = vmatpush1.bf16.msra.mxu0 0
        %4403 = vmatprep.subr.bf16.mxu0 0
        %4404 = vmatpush1.bf16.msra.mxu0 0
        %4405 = vmatprep.subr.bf16.mxu0 0
        %4406 = vmatpush1.bf16.msra.mxu0 0
        %4407 = vmatprep.subr.bf16.mxu0 0
        %4408 = vmatpush1.bf16.msra.mxu0 0
        %4409 = vmatprep.subr.bf16.mxu0 0
        %4410 = vmatpush1.bf16.msra.mxu0 0
        %4411 = vmatprep.subr.bf16.mxu0 0
        %4412 = vmatpush1.bf16.msra.mxu0 0
        %4413 = vmatprep.subr.bf16.mxu0 0
        %4414 = vmatpush1.bf16.msra.mxu0 0
        %4415 = vmatprep.subr.bf16.mxu0 0
        %4416 = vmatpush1.bf16.msra.mxu0 0
        %4417 = vmatprep.subr.bf16.mxu0 0
        %4418 = vmatpush1.bf16.msra.mxu0 0
        %4419 = vmatprep.mubr.bf16.mxu0 0
        %4420 = vmatmul.mubr.bf16.gmra.mrb[0].mxu0 %v4335
        %v4421 = vpop.f32.mrb[0].mxu0
        %v4422 = vadd.f32 0.0, %v4421
        %v4423 = vpop.f32.mrb[0].mxu0
        %v4424 = vadd.f32 0.0, %v4423
        %v4425 = vpop.f32.mrb[0].mxu0
        %v4426 = vpop.f32.mrb[0].mxu0
        %4427 = vdwg.mxu0
        %4428 = vmatprep.subr.bf16.mxu0 %v1140
        %4429 = vmatpush1.bf16.msra.mxu0 %v1137
        %4430 = vmatprep.subr.bf16.mxu0 0
        %4431 = vmatpush1.bf16.msra.mxu0 0
        %4432 = vmatprep.subr.bf16.mxu0 0
        %4433 = vmatpush1.bf16.msra.mxu0 0
        %4434 = vmatprep.subr.bf16.mxu0 0
        %4435 = vmatpush1.bf16.msra.mxu0 0
        %4436 = vmatprep.subr.bf16.mxu0 0
        %4437 = vmatpush1.bf16.msra.mxu0 0
        %4438 = vmatprep.subr.bf16.mxu0 0
        %4439 = vmatpush1.bf16.msra.mxu0 0
        %4440 = vmatprep.subr.bf16.mxu0 0
        %4441 = vmatpush1.bf16.msra.mxu0 0
        %4442 = vmatprep.subr.bf16.mxu0 0
        %4443 = vmatpush1.bf16.msra.mxu0 0
        %4444 = vmatprep.subr.bf16.mxu0 0
        %4445 = vmatpush1.bf16.msra.mxu0 0
        %4446 = vmatprep.subr.bf16.mxu0 0
        %4447 = vmatpush1.bf16.msra.mxu0 0
        %4448 = vmatprep.subr.bf16.mxu0 0
        %4449 = vmatpush1.bf16.msra.mxu0 0
        %4450 = vmatprep.subr.bf16.mxu0 0
        %4451 = vmatpush1.bf16.msra.mxu0 0
        %4452 = vmatprep.subr.bf16.mxu0 0
        %4453 = vmatpush1.bf16.msra.mxu0 0
        %4454 = vmatprep.subr.bf16.mxu0 0
        %4455 = vmatpush1.bf16.msra.mxu0 0
        %4456 = vmatprep.subr.bf16.mxu0 0
        %4457 = vmatpush1.bf16.msra.mxu0 0
        %4458 = vmatprep.subr.bf16.mxu0 0
        %4459 = vmatpush1.bf16.msra.mxu0 0
        %4460 = vmatprep.mubr.bf16.mxu0 0
        %4461 = vmatmul.mubr.bf16.gmra.mrb[0].mxu0 %v4335
        %v4462 = vpop.f32.mrb[0].mxu0
        %v4463 = vadd.f32 0.0, %v4462
        %v4464 = vpop.f32.mrb[0].mxu0
        %v4465 = vadd.f32 0.0, %v4464
        %v4466 = vpop.f32.mrb[0].mxu0
        %v4467 = vpop.f32.mrb[0].mxu0
        %4468 = vdwg.mxu0
        %4469 = vmatprep.subr.bf16.mxu0 %v1146
        %4470 = vmatpush1.bf16.msra.mxu0 %v1143
        %4471 = vmatprep.subr.bf16.mxu0 0
        %4472 = vmatpush1.bf16.msra.mxu0 0
        %4473 = vmatprep.subr.bf16.mxu0 0
        %4474 = vmatpush1.bf16.msra.mxu0 0
        %4475 = vmatprep.subr.bf16.mxu0 0
        %4476 = vmatpush1.bf16.msra.mxu0 0
        %4477 = vmatprep.subr.bf16.mxu0 0
        %4478 = vmatpush1.bf16.msra.mxu0 0
        %4479 = vmatprep.subr.bf16.mxu0 0
        %4480 = vmatpush1.bf16.msra.mxu0 0
        %4481 = vmatprep.subr.bf16.mxu0 0
        %4482 = vmatpush1.bf16.msra.mxu0 0
        %4483 = vmatprep.subr.bf16.mxu0 0
        %4484 = vmatpush1.bf16.msra.mxu0 0
        %4485 = vmatprep.subr.bf16.mxu0 0
        %4486 = vmatpush1.bf16.msra.mxu0 0
        %4487 = vmatprep.subr.bf16.mxu0 0
        %4488 = vmatpush1.bf16.msra.mxu0 0
        %4489 = vmatprep.subr.bf16.mxu0 0
        %4490 = vmatpush1.bf16.msra.mxu0 0
        %4491 = vmatprep.subr.bf16.mxu0 0
        %4492 = vmatpush1.bf16.msra.mxu0 0
        %4493 = vmatprep.subr.bf16.mxu0 0
        %4494 = vmatpush1.bf16.msra.mxu0 0
        %4495 = vmatprep.subr.bf16.mxu0 0
        %4496 = vmatpush1.bf16.msra.mxu0 0
        %4497 = vmatprep.subr.bf16.mxu0 0
        %4498 = vmatpush1.bf16.msra.mxu0 0
        %4499 = vmatprep.subr.bf16.mxu0 0
        %4500 = vmatpush1.bf16.msra.mxu0 0
        %4501 = vmatprep.mubr.bf16.mxu0 0
        %4502 = vmatmul.mubr.bf16.gmra.mrb[0].mxu0 %v4335
        %v4503 = vpop.f32.mrb[0].mxu0
        %v4504 = vadd.f32 0.0, %v4503
        %v4505 = vpop.f32.mrb[0].mxu0
        %v4506 = vadd.f32 0.0, %v4505
        %v4507 = vpop.f32.mrb[0].mxu0
        %v4508 = vpop.f32.mrb[0].mxu0
        %4509 = vdwg.mxu0
        %4510 = vmatprep.subr.bf16.mxu0 %v4338
        %4511 = vmatpush1.bf16.msra.mxu0 %v1149
        %4512 = vmatprep.subr.bf16.mxu0 0
        %4513 = vmatpush1.bf16.msra.mxu0 0
        %4514 = vmatprep.subr.bf16.mxu0 0
        %4515 = vmatpush1.bf16.msra.mxu0 0
        %4516 = vmatprep.subr.bf16.mxu0 0
        %4517 = vmatpush1.bf16.msra.mxu0 0
        %4518 = vmatprep.subr.bf16.mxu0 0
        %4519 = vmatpush1.bf16.msra.mxu0 0
        %4520 = vmatprep.subr.bf16.mxu0 0
        %4521 = vmatpush1.bf16.msra.mxu0 0
        %4522 = vmatprep.subr.bf16.mxu0 0
        %4523 = vmatpush1.bf16.msra.mxu0 0
        %4524 = vmatprep.subr.bf16.mxu0 0
        %4525 = vmatpush1.bf16.msra.mxu0 0
        %4526 = vmatprep.subr.bf16.mxu0 0
        %4527 = vmatpush1.bf16.msra.mxu0 0
        %4528 = vmatprep.subr.bf16.mxu0 0
        %4529 = vmatpush1.bf16.msra.mxu0 0
        %4530 = vmatprep.subr.bf16.mxu0 0
        %4531 = vmatpush1.bf16.msra.mxu0 0
        %4532 = vmatprep.subr.bf16.mxu0 0
        %4533 = vmatpush1.bf16.msra.mxu0 0
        %4534 = vmatprep.subr.bf16.mxu0 0
        %4535 = vmatpush1.bf16.msra.mxu0 0
        %4536 = vmatprep.subr.bf16.mxu0 0
        %4537 = vmatpush1.bf16.msra.mxu0 0
        %4538 = vmatprep.subr.bf16.mxu0 0
        %4539 = vmatpush1.bf16.msra.mxu0 0
        %4540 = vmatprep.subr.bf16.mxu0 0
        %4541 = vmatpush1.bf16.msra.mxu0 0
        %4542 = vmatprep.mubr.bf16.mxu0 0
        %4543 = vmatmul.mubr.bf16.gmra.mrb[0].mxu0 %v4335
        %v4544 = vpop.f32.mrb[0].mxu0
        %v4545 = vadd.f32 0.0, %v4544
        %v4546 = vpop.f32.mrb[0].mxu0
        %v4547 = vadd.f32 0.0, %v4546
        %v4548 = vpop.f32.mrb[0].mxu0
        %v4549 = vpop.f32.mrb[0].mxu0
        %4550 = vdwg.mxu0
        %4551 = vmatprep.subr.bf16.mxu0 %v4344
        %4552 = vmatpush1.bf16.msra.mxu0 %v4341
        %4553 = vmatprep.subr.bf16.mxu0 0
        %4554 = vmatpush1.bf16.msra.mxu0 0
        %4555 = vmatprep.subr.bf16.mxu0 0
        %4556 = vmatpush1.bf16.msra.mxu0 0
        %4557 = vmatprep.subr.bf16.mxu0 0
        %4558 = vmatpush1.bf16.msra.mxu0 0
        %4559 = vmatprep.subr.bf16.mxu0 0
        %4560 = vmatpush1.bf16.msra.mxu0 0
        %4561 = vmatprep.subr.bf16.mxu0 0
        %4562 = vmatpush1.bf16.msra.mxu0 0
        %4563 = vmatprep.subr.bf16.mxu0 0
        %4564 = vmatpush1.bf16.msra.mxu0 0
        %4565 = vmatprep.subr.bf16.mxu0 0
        %4566 = vmatpush1.bf16.msra.mxu0 0
        %4567 = vmatprep.subr.bf16.mxu0 0
        %4568 = vmatpush1.bf16.msra.mxu0 0
        %4569 = vmatprep.subr.bf16.mxu0 0
        %4570 = vmatpush1.bf16.msra.mxu0 0
        %4571 = vmatprep.subr.bf16.mxu0 0
        %4572 = vmatpush1.bf16.msra.mxu0 0
        %4573 = vmatprep.subr.bf16.mxu0 0
        %4574 = vmatpush1.bf16.msra.mxu0 0
        %4575 = vmatprep.subr.bf16.mxu0 0
        %4576 = vmatpush1.bf16.msra.mxu0 0
        %4577 = vmatprep.subr.bf16.mxu0 0
        %4578 = vmatpush1.bf16.msra.mxu0 0
        %4579 = vmatprep.subr.bf16.mxu0 0
        %4580 = vmatpush1.bf16.msra.mxu0 0
        %4581 = vmatprep.subr.bf16.mxu0 0
        %4582 = vmatpush1.bf16.msra.mxu0 0
        %4583 = vmatprep.mubr.bf16.mxu0 0
        %4584 = vmatmul.mubr.bf16.gmra.mrb[0].mxu0 %v4335
        %v4585 = vpop.f32.mrb[0].mxu0
        %v4586 = vadd.f32 0.0, %v4585
        %v4587 = vpop.f32.mrb[0].mxu0
        %v4588 = vadd.f32 0.0, %v4587
        %v4589 = vpop.f32.mrb[0].mxu0
        %v4590 = vpop.f32.mrb[0].mxu0
        %4591 = vdwg.mxu0
        %v4592 = vadd.f32 %v4308, %v4381
        %v4593 = vadd.f32 %v4309, %v4383
        %v4594 = vadd.f32 %v4310, %v4422
        %v4595 = vadd.f32 %v4311, %v4424
        %v4596 = vadd.f32 %v4312, %v4463
        %v4597 = vadd.f32 %v4313, %v4465
        %v4598 = vadd.f32 %v4314, %v4504
        %v4599 = vadd.f32 %v4315, %v4506
        %v4600 = vadd.f32 %v4316, %v4545
        %v4601 = vadd.f32 %v4317, %v4547
        %v4602 = vadd.f32 %v4318, %v4586
        %v4603 = vadd.f32 %v4319, %v4588
        %s4604 = scalar_lea.vmem %s4, 22
        %v4605 = vld [vmem:[%s4604] sm:$0x3]
        %4606 = vrot.lane.b32.xlu0 %v1049, 126
        %v4607 = vpop.permute.xlu0 %4606
        %4608 = vrot.lane.b32.xlu0 %v1050, 126
        %v4609 = vpop.permute.xlu0 %4608
        %4610 = vrot.lane.b32.xlu0 %v1051, 126
        %v4611 = vpop.permute.xlu0 %4610
        %v4612 = vsel %vm1710, %v1709, %v4607
        %v4613 = vsel %vm1710, %v4607, %v4609
        %v4614 = vsel %vm1710, %v4609, %v4611
        %v4616 = vsel %vm1110, %v4605, 0
        %v4619 = vsel %vm1114, %v4612, 0
        %v4622 = vsel %vm1114, %v4613, 0
        %v4625 = vsel %vm1114, %v4614, 0
        %4627 = vmatprep.subr.bf16.mxu0 %v1739
        %4628 = vmatpush1.bf16.msra.mxu0 %v1736
        %4629 = vmatprep.subr.bf16.mxu0 0
        %4630 = vmatpush1.bf16.msra.mxu0 0
        %4631 = vmatprep.subr.bf16.mxu0 0
        %4632 = vmatpush1.bf16.msra.mxu0 0
        %4633 = vmatprep.subr.bf16.mxu0 0
        %4634 = vmatpush1.bf16.msra.mxu0 0
        %4635 = vmatprep.subr.bf16.mxu0 0
        %4636 = vmatpush1.bf16.msra.mxu0 0
        %4637 = vmatprep.subr.bf16.mxu0 0
        %4638 = vmatpush1.bf16.msra.mxu0 0
        %4639 = vmatprep.subr.bf16.mxu0 0
        %4640 = vmatpush1.bf16.msra.mxu0 0
        %4641 = vmatprep.subr.bf16.mxu0 0
        %4642 = vmatpush1.bf16.msra.mxu0 0
        %4643 = vmatprep.subr.bf16.mxu0 0
        %4644 = vmatpush1.bf16.msra.mxu0 0
        %4645 = vmatprep.subr.bf16.mxu0 0
        %4646 = vmatpush1.bf16.msra.mxu0 0
        %4647 = vmatprep.subr.bf16.mxu0 0
        %4648 = vmatpush1.bf16.msra.mxu0 0
        %4649 = vmatprep.subr.bf16.mxu0 0
        %4650 = vmatpush1.bf16.msra.mxu0 0
        %4651 = vmatprep.subr.bf16.mxu0 0
        %4652 = vmatpush1.bf16.msra.mxu0 0
        %4653 = vmatprep.subr.bf16.mxu0 0
        %4654 = vmatpush1.bf16.msra.mxu0 0
        %4655 = vmatprep.subr.bf16.mxu0 0
        %4656 = vmatpush1.bf16.msra.mxu0 0
        %4657 = vmatprep.subr.bf16.mxu0 0
        %4658 = vmatpush1.bf16.msra.mxu0 0
        %4659 = vmatprep.mubr.bf16.mxu0 0
        %4660 = vmatmul.mubr.bf16.gmra.mrb[0].mxu0 %v4616
        %v4661 = vpop.f32.mrb[0].mxu0
        %v4662 = vadd.f32 0.0, %v4661
        %v4663 = vpop.f32.mrb[0].mxu0
        %v4664 = vadd.f32 0.0, %v4663
        %v4665 = vpop.f32.mrb[0].mxu0
        %v4666 = vpop.f32.mrb[0].mxu0
        %4667 = vdwg.mxu0
        %4668 = vmatprep.subr.bf16.mxu0 %v1745
        %4669 = vmatpush1.bf16.msra.mxu0 %v1742
        %4670 = vmatprep.subr.bf16.mxu0 0
        %4671 = vmatpush1.bf16.msra.mxu0 0
        %4672 = vmatprep.subr.bf16.mxu0 0
        %4673 = vmatpush1.bf16.msra.mxu0 0
        %4674 = vmatprep.subr.bf16.mxu0 0
        %4675 = vmatpush1.bf16.msra.mxu0 0
        %4676 = vmatprep.subr.bf16.mxu0 0
        %4677 = vmatpush1.bf16.msra.mxu0 0
        %4678 = vmatprep.subr.bf16.mxu0 0
        %4679 = vmatpush1.bf16.msra.mxu0 0
        %4680 = vmatprep.subr.bf16.mxu0 0
        %4681 = vmatpush1.bf16.msra.mxu0 0
        %4682 = vmatprep.subr.bf16.mxu0 0
        %4683 = vmatpush1.bf16.msra.mxu0 0
        %4684 = vmatprep.subr.bf16.mxu0 0
        %4685 = vmatpush1.bf16.msra.mxu0 0
        %4686 = vmatprep.subr.bf16.mxu0 0
        %4687 = vmatpush1.bf16.msra.mxu0 0
        %4688 = vmatprep.subr.bf16.mxu0 0
        %4689 = vmatpush1.bf16.msra.mxu0 0
        %4690 = vmatprep.subr.bf16.mxu0 0
        %4691 = vmatpush1.bf16.msra.mxu0 0
        %4692 = vmatprep.subr.bf16.mxu0 0
        %4693 = vmatpush1.bf16.msra.mxu0 0
        %4694 = vmatprep.subr.bf16.mxu0 0
        %4695 = vmatpush1.bf16.msra.mxu0 0
        %4696 = vmatprep.subr.bf16.mxu0 0
        %4697 = vmatpush1.bf16.msra.mxu0 0
        %4698 = vmatprep.subr.bf16.mxu0 0
        %4699 = vmatpush1.bf16.msra.mxu0 0
        %4700 = vmatprep.mubr.bf16.mxu0 0
        %4701 = vmatmul.mubr.bf16.gmra.mrb[0].mxu0 %v4616
        %v4702 = vpop.f32.mrb[0].mxu0
        %v4703 = vadd.f32 0.0, %v4702
        %v4704 = vpop.f32.mrb[0].mxu0
        %v4705 = vadd.f32 0.0, %v4704
        %v4706 = vpop.f32.mrb[0].mxu0
        %v4707 = vpop.f32.mrb[0].mxu0
        %4708 = vdwg.mxu0
        %4709 = vmatprep.subr.bf16.mxu0 %v1751
        %4710 = vmatpush1.bf16.msra.mxu0 %v1748
        %4711 = vmatprep.subr.bf16.mxu0 0
        %4712 = vmatpush1.bf16.msra.mxu0 0
        %4713 = vmatprep.subr.bf16.mxu0 0
        %4714 = vmatpush1.bf16.msra.mxu0 0
        %4715 = vmatprep.subr.bf16.mxu0 0
        %4716 = vmatpush1.bf16.msra.mxu0 0
        %4717 = vmatprep.subr.bf16.mxu0 0
        %4718 = vmatpush1.bf16.msra.mxu0 0
        %4719 = vmatprep.subr.bf16.mxu0 0
        %4720 = vmatpush1.bf16.msra.mxu0 0
        %4721 = vmatprep.subr.bf16.mxu0 0
        %4722 = vmatpush1.bf16.msra.mxu0 0
        %4723 = vmatprep.subr.bf16.mxu0 0
        %4724 = vmatpush1.bf16.msra.mxu0 0
        %4725 = vmatprep.subr.bf16.mxu0 0
        %4726 = vmatpush1.bf16.msra.mxu0 0
        %4727 = vmatprep.subr.bf16.mxu0 0
        %4728 = vmatpush1.bf16.msra.mxu0 0
        %4729 = vmatprep.subr.bf16.mxu0 0
        %4730 = vmatpush1.bf16.msra.mxu0 0
        %4731 = vmatprep.subr.bf16.mxu0 0
        %4732 = vmatpush1.bf16.msra.mxu0 0
        %4733 = vmatprep.subr.bf16.mxu0 0
        %4734 = vmatpush1.bf16.msra.mxu0 0
        %4735 = vmatprep.subr.bf16.mxu0 0
        %4736 = vmatpush1.bf16.msra.mxu0 0
        %4737 = vmatprep.subr.bf16.mxu0 0
        %4738 = vmatpush1.bf16.msra.mxu0 0
        %4739 = vmatprep.subr.bf16.mxu0 0
        %4740 = vmatpush1.bf16.msra.mxu0 0
        %4741 = vmatprep.mubr.bf16.mxu0 0
        %4742 = vmatmul.mubr.bf16.gmra.mrb[0].mxu0 %v4616
        %v4743 = vpop.f32.mrb[0].mxu0
        %v4744 = vadd.f32 0.0, %v4743
        %v4745 = vpop.f32.mrb[0].mxu0
        %v4746 = vadd.f32 0.0, %v4745
        %v4747 = vpop.f32.mrb[0].mxu0
        %v4748 = vpop.f32.mrb[0].mxu0
        %4749 = vdwg.mxu0
        %4750 = vmatprep.subr.bf16.mxu0 %v1757
        %4751 = vmatpush1.bf16.msra.mxu0 %v1754
        %4752 = vmatprep.subr.bf16.mxu0 0
        %4753 = vmatpush1.bf16.msra.mxu0 0
        %4754 = vmatprep.subr.bf16.mxu0 0
        %4755 = vmatpush1.bf16.msra.mxu0 0
        %4756 = vmatprep.subr.bf16.mxu0 0
        %4757 = vmatpush1.bf16.msra.mxu0 0
        %4758 = vmatprep.subr.bf16.mxu0 0
        %4759 = vmatpush1.bf16.msra.mxu0 0
        %4760 = vmatprep.subr.bf16.mxu0 0
        %4761 = vmatpush1.bf16.msra.mxu0 0
        %4762 = vmatprep.subr.bf16.mxu0 0
        %4763 = vmatpush1.bf16.msra.mxu0 0
        %4764 = vmatprep.subr.bf16.mxu0 0
        %4765 = vmatpush1.bf16.msra.mxu0 0
        %4766 = vmatprep.subr.bf16.mxu0 0
        %4767 = vmatpush1.bf16.msra.mxu0 0
        %4768 = vmatprep.subr.bf16.mxu0 0
        %4769 = vmatpush1.bf16.msra.mxu0 0
        %4770 = vmatprep.subr.bf16.mxu0 0
        %4771 = vmatpush1.bf16.msra.mxu0 0
        %4772 = vmatprep.subr.bf16.mxu0 0
        %4773 = vmatpush1.bf16.msra.mxu0 0
        %4774 = vmatprep.subr.bf16.mxu0 0
        %4775 = vmatpush1.bf16.msra.mxu0 0
        %4776 = vmatprep.subr.bf16.mxu0 0
        %4777 = vmatpush1.bf16.msra.mxu0 0
        %4778 = vmatprep.subr.bf16.mxu0 0
        %4779 = vmatpush1.bf16.msra.mxu0 0
        %4780 = vmatprep.subr.bf16.mxu0 0
        %4781 = vmatpush1.bf16.msra.mxu0 0
        %4782 = vmatprep.mubr.bf16.mxu0 0
        %4783 = vmatmul.mubr.bf16.gmra.mrb[0].mxu0 %v4616
        %v4784 = vpop.f32.mrb[0].mxu0
        %v4785 = vadd.f32 0.0, %v4784
        %v4786 = vpop.f32.mrb[0].mxu0
        %v4787 = vadd.f32 0.0, %v4786
        %v4788 = vpop.f32.mrb[0].mxu0
        %v4789 = vpop.f32.mrb[0].mxu0
        %4790 = vdwg.mxu0
        %4791 = vmatprep.subr.bf16.mxu0 %v4619
        %4792 = vmatpush1.bf16.msra.mxu0 %v1760
        %4793 = vmatprep.subr.bf16.mxu0 0
        %4794 = vmatpush1.bf16.msra.mxu0 0
        %4795 = vmatprep.subr.bf16.mxu0 0
        %4796 = vmatpush1.bf16.msra.mxu0 0
        %4797 = vmatprep.subr.bf16.mxu0 0
        %4798 = vmatpush1.bf16.msra.mxu0 0
        %4799 = vmatprep.subr.bf16.mxu0 0
        %4800 = vmatpush1.bf16.msra.mxu0 0
        %4801 = vmatprep.subr.bf16.mxu0 0
        %4802 = vmatpush1.bf16.msra.mxu0 0
        %4803 = vmatprep.subr.bf16.mxu0 0
        %4804 = vmatpush1.bf16.msra.mxu0 0
        %4805 = vmatprep.subr.bf16.mxu0 0
        %4806 = vmatpush1.bf16.msra.mxu0 0
        %4807 = vmatprep.subr.bf16.mxu0 0
        %4808 = vmatpush1.bf16.msra.mxu0 0
        %4809 = vmatprep.subr.bf16.mxu0 0
        %4810 = vmatpush1.bf16.msra.mxu0 0
        %4811 = vmatprep.subr.bf16.mxu0 0
        %4812 = vmatpush1.bf16.msra.mxu0 0
        %4813 = vmatprep.subr.bf16.mxu0 0
        %4814 = vmatpush1.bf16.msra.mxu0 0
        %4815 = vmatprep.subr.bf16.mxu0 0
        %4816 = vmatpush1.bf16.msra.mxu0 0
        %4817 = vmatprep.subr.bf16.mxu0 0
        %4818 = vmatpush1.bf16.msra.mxu0 0
        %4819 = vmatprep.subr.bf16.mxu0 0
        %4820 = vmatpush1.bf16.msra.mxu0 0
        %4821 = vmatprep.subr.bf16.mxu0 0
        %4822 = vmatpush1.bf16.msra.mxu0 0
        %4823 = vmatprep.mubr.bf16.mxu0 0
        %4824 = vmatmul.mubr.bf16.gmra.mrb[0].mxu0 %v4616
        %v4825 = vpop.f32.mrb[0].mxu0
        %v4826 = vadd.f32 0.0, %v4825
        %v4827 = vpop.f32.mrb[0].mxu0
        %v4828 = vadd.f32 0.0, %v4827
        %v4829 = vpop.f32.mrb[0].mxu0
        %v4830 = vpop.f32.mrb[0].mxu0
        %4831 = vdwg.mxu0
        %4832 = vmatprep.subr.bf16.mxu0 %v4625
        %4833 = vmatpush1.bf16.msra.mxu0 %v4622
        %4834 = vmatprep.subr.bf16.mxu0 0
        %4835 = vmatpush1.bf16.msra.mxu0 0
        %4836 = vmatprep.subr.bf16.mxu0 0
        %4837 = vmatpush1.bf16.msra.mxu0 0
        %4838 = vmatprep.subr.bf16.mxu0 0
        %4839 = vmatpush1.bf16.msra.mxu0 0
        %4840 = vmatprep.subr.bf16.mxu0 0
        %4841 = vmatpush1.bf16.msra.mxu0 0
        %4842 = vmatprep.subr.bf16.mxu0 0
        %4843 = vmatpush1.bf16.msra.mxu0 0
        %4844 = vmatprep.subr.bf16.mxu0 0
        %4845 = vmatpush1.bf16.msra.mxu0 0
        %4846 = vmatprep.subr.bf16.mxu0 0
        %4847 = vmatpush1.bf16.msra.mxu0 0
        %4848 = vmatprep.subr.bf16.mxu0 0
        %4849 = vmatpush1.bf16.msra.mxu0 0
        %4850 = vmatprep.subr.bf16.mxu0 0
        %4851 = vmatpush1.bf16.msra.mxu0 0
        %4852 = vmatprep.subr.bf16.mxu0 0
        %4853 = vmatpush1.bf16.msra.mxu0 0
        %4854 = vmatprep.subr.bf16.mxu0 0
        %4855 = vmatpush1.bf16.msra.mxu0 0
        %4856 = vmatprep.subr.bf16.mxu0 0
        %4857 = vmatpush1.bf16.msra.mxu0 0
        %4858 = vmatprep.subr.bf16.mxu0 0
        %4859 = vmatpush1.bf16.msra.mxu0 0
        %4860 = vmatprep.subr.bf16.mxu0 0
        %4861 = vmatpush1.bf16.msra.mxu0 0
        %4862 = vmatprep.subr.bf16.mxu0 0
        %4863 = vmatpush1.bf16.msra.mxu0 0
        %4864 = vmatprep.mubr.bf16.mxu0 0
        %4865 = vmatmul.mubr.bf16.gmra.mrb[0].mxu0 %v4616
        %v4866 = vpop.f32.mrb[0].mxu0
        %v4867 = vadd.f32 0.0, %v4866
        %v4868 = vpop.f32.mrb[0].mxu0
        %v4869 = vadd.f32 0.0, %v4868
        %v4870 = vpop.f32.mrb[0].mxu0
        %v4871 = vpop.f32.mrb[0].mxu0
        %4872 = vdwg.mxu0
        %v4873 = vadd.f32 %v4592, %v4662
        %v4874 = vadd.f32 %v4593, %v4664
        %v4875 = vadd.f32 %v4594, %v4703
        %v4876 = vadd.f32 %v4595, %v4705
        %v4877 = vadd.f32 %v4596, %v4744
        %v4878 = vadd.f32 %v4597, %v4746
        %v4879 = vadd.f32 %v4598, %v4785
        %v4880 = vadd.f32 %v4599, %v4787
        %v4881 = vadd.f32 %v4600, %v4826
        %v4882 = vadd.f32 %v4601, %v4828
        %v4883 = vadd.f32 %v4602, %v4867
        %v4884 = vadd.f32 %v4603, %v4869
        %s4885 = scalar_lea.vmem %s4, 24
        %v4886 = vld [vmem:[%s4885] sm:$0x3]
        %4887 = vrot.lane.b32.xlu0 %v1049, 110
        %v4888 = vpop.permute.xlu0 %4887
        %4889 = vrot.lane.b32.xlu0 %v1050, 110
        %v4890 = vpop.permute.xlu0 %4889
        %4891 = vrot.lane.b32.xlu0 %v1051, 110
        %v4892 = vpop.permute.xlu0 %4891
        %v4893 = vsel %vm2048, %v2047, %v4888
        %v4894 = vsel %vm2048, %v4888, %v4890
        %v4895 = vsel %vm2048, %v4890, %v4892
        %v4897 = vsel %vm1110, %v4886, 0
        %v4900 = vsel %vm1114, %v4893, 0
        %v4903 = vsel %vm1114, %v4894, 0
        %v4906 = vsel %vm1114, %v4895, 0
        %4908 = vmatprep.subr.bf16.mxu0 %v2077
        %4909 = vmatpush1.bf16.msra.mxu0 %v2074
        %4910 = vmatprep.subr.bf16.mxu0 0
        %4911 = vmatpush1.bf16.msra.mxu0 0
        %4912 = vmatprep.subr.bf16.mxu0 0
        %4913 = vmatpush1.bf16.msra.mxu0 0
        %4914 = vmatprep.subr.bf16.mxu0 0
        %4915 = vmatpush1.bf16.msra.mxu0 0
        %4916 = vmatprep.subr.bf16.mxu0 0
        %4917 = vmatpush1.bf16.msra.mxu0 0
        %4918 = vmatprep.subr.bf16.mxu0 0
        %4919 = vmatpush1.bf16.msra.mxu0 0
        %4920 = vmatprep.subr.bf16.mxu0 0
        %4921 = vmatpush1.bf16.msra.mxu0 0
        %4922 = vmatprep.subr.bf16.mxu0 0
        %4923 = vmatpush1.bf16.msra.mxu0 0
        %4924 = vmatprep.subr.bf16.mxu0 0
        %4925 = vmatpush1.bf16.msra.mxu0 0
        %4926 = vmatprep.subr.bf16.mxu0 0
        %4927 = vmatpush1.bf16.msra.mxu0 0
        %4928 = vmatprep.subr.bf16.mxu0 0
        %4929 = vmatpush1.bf16.msra.mxu0 0
        %4930 = vmatprep.subr.bf16.mxu0 0
        %4931 = vmatpush1.bf16.msra.mxu0 0
        %4932 = vmatprep.subr.bf16.mxu0 0
        %4933 = vmatpush1.bf16.msra.mxu0 0
        %4934 = vmatprep.subr.bf16.mxu0 0
        %4935 = vmatpush1.bf16.msra.mxu0 0
        %4936 = vmatprep.subr.bf16.mxu0 0
        %4937 = vmatpush1.bf16.msra.mxu0 0
        %4938 = vmatprep.subr.bf16.mxu0 0
        %4939 = vmatpush1.bf16.msra.mxu0 0
        %4940 = vmatprep.mubr.bf16.mxu0 0
        %4941 = vmatmul.mubr.bf16.gmra.mrb[0].mxu0 %v4897
        %v4942 = vpop.f32.mrb[0].mxu0
        %v4943 = vadd.f32 0.0, %v4942
        %v4944 = vpop.f32.mrb[0].mxu0
        %v4945 = vadd.f32 0.0, %v4944
        %v4946 = vpop.f32.mrb[0].mxu0
        %v4947 = vpop.f32.mrb[0].mxu0
        %4948 = vdwg.mxu0
        %4949 = vmatprep.subr.bf16.mxu0 %v2083
        %4950 = vmatpush1.bf16.msra.mxu0 %v2080
        %4951 = vmatprep.subr.bf16.mxu0 0
        %4952 = vmatpush1.bf16.msra.mxu0 0
        %4953 = vmatprep.subr.bf16.mxu0 0
        %4954 = vmatpush1.bf16.msra.mxu0 0
        %4955 = vmatprep.subr.bf16.mxu0 0
        %4956 = vmatpush1.bf16.msra.mxu0 0
        %4957 = vmatprep.subr.bf16.mxu0 0
        %4958 = vmatpush1.bf16.msra.mxu0 0
        %4959 = vmatprep.subr.bf16.mxu0 0
        %4960 = vmatpush1.bf16.msra.mxu0 0
        %4961 = vmatprep.subr.bf16.mxu0 0
        %4962 = vmatpush1.bf16.msra.mxu0 0
        %4963 = vmatprep.subr.bf16.mxu0 0
        %4964 = vmatpush1.bf16.msra.mxu0 0
        %4965 = vmatprep.subr.bf16.mxu0 0
        %4966 = vmatpush1.bf16.msra.mxu0 0
        %4967 = vmatprep.subr.bf16.mxu0 0
        %4968 = vmatpush1.bf16.msra.mxu0 0
        %4969 = vmatprep.subr.bf16.mxu0 0
        %4970 = vmatpush1.bf16.msra.mxu0 0
        %4971 = vmatprep.subr.bf16.mxu0 0
        %4972 = vmatpush1.bf16.msra.mxu0 0
        %4973 = vmatprep.subr.bf16.mxu0 0
        %4974 = vmatpush1.bf16.msra.mxu0 0
        %4975 = vmatprep.subr.bf16.mxu0 0
        %4976 = vmatpush1.bf16.msra.mxu0 0
        %4977 = vmatprep.subr.bf16.mxu0 0
        %4978 = vmatpush1.bf16.msra.mxu0 0
        %4979 = vmatprep.subr.bf16.mxu0 0
        %4980 = vmatpush1.bf16.msra.mxu0 0
        %4981 = vmatprep.mubr.bf16.mxu0 0
        %4982 = vmatmul.mubr.bf16.gmra.mrb[0].mxu0 %v4897
        %v4983 = vpop.f32.mrb[0].mxu0
        %v4984 = vadd.f32 0.0, %v4983
        %v4985 = vpop.f32.mrb[0].mxu0
        %v4986 = vadd.f32 0.0, %v4985
        %v4987 = vpop.f32.mrb[0].mxu0
        %v4988 = vpop.f32.mrb[0].mxu0
        %4989 = vdwg.mxu0
        %4990 = vmatprep.subr.bf16.mxu0 %v2089
        %4991 = vmatpush1.bf16.msra.mxu0 %v2086
        %4992 = vmatprep.subr.bf16.mxu0 0
        %4993 = vmatpush1.bf16.msra.mxu0 0
        %4994 = vmatprep.subr.bf16.mxu0 0
        %4995 = vmatpush1.bf16.msra.mxu0 0
        %4996 = vmatprep.subr.bf16.mxu0 0
        %4997 = vmatpush1.bf16.msra.mxu0 0
        %4998 = vmatprep.subr.bf16.mxu0 0
        %4999 = vmatpush1.bf16.msra.mxu0 0
        %5000 = vmatprep.subr.bf16.mxu0 0
        %5001 = vmatpush1.bf16.msra.mxu0 0
        %5002 = vmatprep.subr.bf16.mxu0 0
        %5003 = vmatpush1.bf16.msra.mxu0 0
        %5004 = vmatprep.subr.bf16.mxu0 0
        %5005 = vmatpush1.bf16.msra.mxu0 0
        %5006 = vmatprep.subr.bf16.mxu0 0
        %5007 = vmatpush1.bf16.msra.mxu0 0
        %5008 = vmatprep.subr.bf16.mxu0 0
        %5009 = vmatpush1.bf16.msra.mxu0 0
        %5010 = vmatprep.subr.bf16.mxu0 0
        %5011 = vmatpush1.bf16.msra.mxu0 0
        %5012 = vmatprep.subr.bf16.mxu0 0
        %5013 = vmatpush1.bf16.msra.mxu0 0
        %5014 = vmatprep.subr.bf16.mxu0 0
        %5015 = vmatpush1.bf16.msra.mxu0 0
        %5016 = vmatprep.subr.bf16.mxu0 0
        %5017 = vmatpush1.bf16.msra.mxu0 0
        %5018 = vmatprep.subr.bf16.mxu0 0
        %5019 = vmatpush1.bf16.msra.mxu0 0
        %5020 = vmatprep.subr.bf16.mxu0 0
        %5021 = vmatpush1.bf16.msra.mxu0 0
        %5022 = vmatprep.mubr.bf16.mxu0 0
        %5023 = vmatmul.mubr.bf16.gmra.mrb[0].mxu0 %v4897
        %v5024 = vpop.f32.mrb[0].mxu0
        %v5025 = vadd.f32 0.0, %v5024
        %v5026 = vpop.f32.mrb[0].mxu0
        %v5027 = vadd.f32 0.0, %v5026
        %v5028 = vpop.f32.mrb[0].mxu0
        %v5029 = vpop.f32.mrb[0].mxu0
        %5030 = vdwg.mxu0
        %5031 = vmatprep.subr.bf16.mxu0 %v2095
        %5032 = vmatpush1.bf16.msra.mxu0 %v2092
        %5033 = vmatprep.subr.bf16.mxu0 0
        %5034 = vmatpush1.bf16.msra.mxu0 0
        %5035 = vmatprep.subr.bf16.mxu0 0
        %5036 = vmatpush1.bf16.msra.mxu0 0
        %5037 = vmatprep.subr.bf16.mxu0 0
        %5038 = vmatpush1.bf16.msra.mxu0 0
        %5039 = vmatprep.subr.bf16.mxu0 0
        %5040 = vmatpush1.bf16.msra.mxu0 0
        %5041 = vmatprep.subr.bf16.mxu0 0
        %5042 = vmatpush1.bf16.msra.mxu0 0
        %5043 = vmatprep.subr.bf16.mxu0 0
        %5044 = vmatpush1.bf16.msra.mxu0 0
        %5045 = vmatprep.subr.bf16.mxu0 0
        %5046 = vmatpush1.bf16.msra.mxu0 0
        %5047 = vmatprep.subr.bf16.mxu0 0
        %5048 = vmatpush1.bf16.msra.mxu0 0
        %5049 = vmatprep.subr.bf16.mxu0 0
        %5050 = vmatpush1.bf16.msra.mxu0 0
        %5051 = vmatprep.subr.bf16.mxu0 0
        %5052 = vmatpush1.bf16.msra.mxu0 0
        %5053 = vmatprep.subr.bf16.mxu0 0
        %5054 = vmatpush1.bf16.msra.mxu0 0
        %5055 = vmatprep.subr.bf16.mxu0 0
        %5056 = vmatpush1.bf16.msra.mxu0 0
        %5057 = vmatprep.subr.bf16.mxu0 0
        %5058 = vmatpush1.bf16.msra.mxu0 0
        %5059 = vmatprep.subr.bf16.mxu0 0
        %5060 = vmatpush1.bf16.msra.mxu0 0
        %5061 = vmatprep.subr.bf16.mxu0 0
        %5062 = vmatpush1.bf16.msra.mxu0 0
        %5063 = vmatprep.mubr.bf16.mxu0 0
        %5064 = vmatmul.mubr.bf16.gmra.mrb[0].mxu0 %v4897
        %v5065 = vpop.f32.mrb[0].mxu0
        %v5066 = vadd.f32 0.0, %v5065
        %v5067 = vpop.f32.mrb[0].mxu0
        %v5068 = vadd.f32 0.0, %v5067
        %v5069 = vpop.f32.mrb[0].mxu0
        %v5070 = vpop.f32.mrb[0].mxu0
        %5071 = vdwg.mxu0
        %5072 = vmatprep.subr.bf16.mxu0 %v4900
        %5073 = vmatpush1.bf16.msra.mxu0 %v2098
        %5074 = vmatprep.subr.bf16.mxu0 0
        %5075 = vmatpush1.bf16.msra.mxu0 0
        %5076 = vmatprep.subr.bf16.mxu0 0
        %5077 = vmatpush1.bf16.msra.mxu0 0
        %5078 = vmatprep.subr.bf16.mxu0 0
        %5079 = vmatpush1.bf16.msra.mxu0 0
        %5080 = vmatprep.subr.bf16.mxu0 0
        %5081 = vmatpush1.bf16.msra.mxu0 0
        %5082 = vmatprep.subr.bf16.mxu0 0
        %5083 = vmatpush1.bf16.msra.mxu0 0
        %5084 = vmatprep.subr.bf16.mxu0 0
        %5085 = vmatpush1.bf16.msra.mxu0 0
        %5086 = vmatprep.subr.bf16.mxu0 0
        %5087 = vmatpush1.bf16.msra.mxu0 0
        %5088 = vmatprep.subr.bf16.mxu0 0
        %5089 = vmatpush1.bf16.msra.mxu0 0
        %5090 = vmatprep.subr.bf16.mxu0 0
        %5091 = vmatpush1.bf16.msra.mxu0 0
        %5092 = vmatprep.subr.bf16.mxu0 0
        %5093 = vmatpush1.bf16.msra.mxu0 0
        %5094 = vmatprep.subr.bf16.mxu0 0
        %5095 = vmatpush1.bf16.msra.mxu0 0
        %5096 = vmatprep.subr.bf16.mxu0 0
        %5097 = vmatpush1.bf16.msra.mxu0 0
        %5098 = vmatprep.subr.bf16.mxu0 0
        %5099 = vmatpush1.bf16.msra.mxu0 0
        %5100 = vmatprep.subr.bf16.mxu0 0
        %5101 = vmatpush1.bf16.msra.mxu0 0
        %5102 = vmatprep.subr.bf16.mxu0 0
        %5103 = vmatpush1.bf16.msra.mxu0 0
        %5104 = vmatprep.mubr.bf16.mxu0 0
        %5105 = vmatmul.mubr.bf16.gmra.mrb[0].mxu0 %v4897
        %v5106 = vpop.f32.mrb[0].mxu0
        %v5107 = vadd.f32 0.0, %v5106
        %v5108 = vpop.f32.mrb[0].mxu0
        %v5109 = vadd.f32 0.0, %v5108
        %v5110 = vpop.f32.mrb[0].mxu0
        %v5111 = vpop.f32.mrb[0].mxu0
        %5112 = vdwg.mxu0
        %5113 = vmatprep.subr.bf16.mxu0 %v4906
        %5114 = vmatpush1.bf16.msra.mxu0 %v4903
        %5115 = vmatprep.subr.bf16.mxu0 0
        %5116 = vmatpush1.bf16.msra.mxu0 0
        %5117 = vmatprep.subr.bf16.mxu0 0
        %5118 = vmatpush1.bf16.msra.mxu0 0
        %5119 = vmatprep.subr.bf16.mxu0 0
        %5120 = vmatpush1.bf16.msra.mxu0 0
        %5121 = vmatprep.subr.bf16.mxu0 0
        %5122 = vmatpush1.bf16.msra.mxu0 0
        %5123 = vmatprep.subr.bf16.mxu0 0
        %5124 = vmatpush1.bf16.msra.mxu0 0
        %5125 = vmatprep.subr.bf16.mxu0 0
        %5126 = vmatpush1.bf16.msra.mxu0 0
        %5127 = vmatprep.subr.bf16.mxu0 0
        %5128 = vmatpush1.bf16.msra.mxu0 0
        %5129 = vmatprep.subr.bf16.mxu0 0
        %5130 = vmatpush1.bf16.msra.mxu0 0
        %5131 = vmatprep.subr.bf16.mxu0 0
        %5132 = vmatpush1.bf16.msra.mxu0 0
        %5133 = vmatprep.subr.bf16.mxu0 0
        %5134 = vmatpush1.bf16.msra.mxu0 0
        %5135 = vmatprep.subr.bf16.mxu0 0
        %5136 = vmatpush1.bf16.msra.mxu0 0
        %5137 = vmatprep.subr.bf16.mxu0 0
        %5138 = vmatpush1.bf16.msra.mxu0 0
        %5139 = vmatprep.subr.bf16.mxu0 0
        %5140 = vmatpush1.bf16.msra.mxu0 0
        %5141 = vmatprep.subr.bf16.mxu0 0
        %5142 = vmatpush1.bf16.msra.mxu0 0
        %5143 = vmatprep.subr.bf16.mxu0 0
        %5144 = vmatpush1.bf16.msra.mxu0 0
        %5145 = vmatprep.mubr.bf16.mxu0 0
        %5146 = vmatmul.mubr.bf16.gmra.mrb[0].mxu0 %v4897
        %v5147 = vpop.f32.mrb[0].mxu0
        %v5148 = vadd.f32 0.0, %v5147
        %v5149 = vpop.f32.mrb[0].mxu0
        %v5150 = vadd.f32 0.0, %v5149
        %v5151 = vpop.f32.mrb[0].mxu0
        %v5152 = vpop.f32.mrb[0].mxu0
        %5153 = vdwg.mxu0
        %v5154 = vadd.f32 %v4873, %v4943
        %v5155 = vadd.f32 %v4874, %v4945
        %v5156 = vadd.f32 %v4875, %v4984
        %v5157 = vadd.f32 %v4876, %v4986
        %v5158 = vadd.f32 %v4877, %v5025
        %v5159 = vadd.f32 %v4878, %v5027
        %v5160 = vadd.f32 %v4879, %v5066
        %v5161 = vadd.f32 %v4880, %v5068
        %v5162 = vadd.f32 %v4881, %v5107
        %v5163 = vadd.f32 %v4882, %v5109
        %v5164 = vadd.f32 %v4883, %v5148
        %v5165 = vadd.f32 %v4884, %v5150
        %s5166 = scalar_lea.vmem %s4, 26
        %v5167 = vld [vmem:[%s5166] sm:$0x3]
        %5168 = vrot.lane.b32.xlu0 %v1049, 109
        %v5169 = vpop.permute.xlu0 %5168
        %5170 = vrot.lane.b32.xlu0 %v1050, 109
        %v5171 = vpop.permute.xlu0 %5170
        %5172 = vrot.lane.b32.xlu0 %v1051, 109
        %v5173 = vpop.permute.xlu0 %5172
        %v5174 = vsel %vm2386, %v2385, %v5169
        %v5175 = vsel %vm2386, %v5169, %v5171
        %v5176 = vsel %vm2386, %v5171, %v5173
        %v5178 = vsel %vm1110, %v5167, 0
        %v5181 = vsel %vm1114, %v5174, 0
        %v5184 = vsel %vm1114, %v5175, 0
        %v5187 = vsel %vm1114, %v5176, 0
        %5189 = vmatprep.subr.bf16.mxu0 %v2415
        %5190 = vmatpush1.bf16.msra.mxu0 %v2412
        %5191 = vmatprep.subr.bf16.mxu0 0
        %5192 = vmatpush1.bf16.msra.mxu0 0
        %5193 = vmatprep.subr.bf16.mxu0 0
        %5194 = vmatpush1.bf16.msra.mxu0 0
        %5195 = vmatprep.subr.bf16.mxu0 0
        %5196 = vmatpush1.bf16.msra.mxu0 0
        %5197 = vmatprep.subr.bf16.mxu0 0
        %5198 = vmatpush1.bf16.msra.mxu0 0
        %5199 = vmatprep.subr.bf16.mxu0 0
        %5200 = vmatpush1.bf16.msra.mxu0 0
        %5201 = vmatprep.subr.bf16.mxu0 0
        %5202 = vmatpush1.bf16.msra.mxu0 0
        %5203 = vmatprep.subr.bf16.mxu0 0
        %5204 = vmatpush1.bf16.msra.mxu0 0
        %5205 = vmatprep.subr.bf16.mxu0 0
        %5206 = vmatpush1.bf16.msra.mxu0 0
        %5207 = vmatprep.subr.bf16.mxu0 0
        %5208 = vmatpush1.bf16.msra.mxu0 0
        %5209 = vmatprep.subr.bf16.mxu0 0
        %5210 = vmatpush1.bf16.msra.mxu0 0
        %5211 = vmatprep.subr.bf16.mxu0 0
        %5212 = vmatpush1.bf16.msra.mxu0 0
        %5213 = vmatprep.subr.bf16.mxu0 0
        %5214 = vmatpush1.bf16.msra.mxu0 0
        %5215 = vmatprep.subr.bf16.mxu0 0
        %5216 = vmatpush1.bf16.msra.mxu0 0
        %5217 = vmatprep.subr.bf16.mxu0 0
        %5218 = vmatpush1.bf16.msra.mxu0 0
        %5219 = vmatprep.subr.bf16.mxu0 0
        %5220 = vmatpush1.bf16.msra.mxu0 0
        %5221 = vmatprep.mubr.bf16.mxu0 0
        %5222 = vmatmul.mubr.bf16.gmra.mrb[0].mxu0 %v5178
        %v5223 = vpop.f32.mrb[0].mxu0
        %v5224 = vadd.f32 0.0, %v5223
        %v5225 = vpop.f32.mrb[0].mxu0
        %v5226 = vadd.f32 0.0, %v5225
        %v5227 = vpop.f32.mrb[0].mxu0
        %v5228 = vpop.f32.mrb[0].mxu0
        %5229 = vdwg.mxu0
        %5230 = vmatprep.subr.bf16.mxu0 %v2421
        %5231 = vmatpush1.bf16.msra.mxu0 %v2418
        %5232 = vmatprep.subr.bf16.mxu0 0
        %5233 = vmatpush1.bf16.msra.mxu0 0
        %5234 = vmatprep.subr.bf16.mxu0 0
        %5235 = vmatpush1.bf16.msra.mxu0 0
        %5236 = vmatprep.subr.bf16.mxu0 0
        %5237 = vmatpush1.bf16.msra.mxu0 0
        %5238 = vmatprep.subr.bf16.mxu0 0
        %5239 = vmatpush1.bf16.msra.mxu0 0
        %5240 = vmatprep.subr.bf16.mxu0 0
        %5241 = vmatpush1.bf16.msra.mxu0 0
        %5242 = vmatprep.subr.bf16.mxu0 0
        %5243 = vmatpush1.bf16.msra.mxu0 0
        %5244 = vmatprep.subr.bf16.mxu0 0
        %5245 = vmatpush1.bf16.msra.mxu0 0
        %5246 = vmatprep.subr.bf16.mxu0 0
        %5247 = vmatpush1.bf16.msra.mxu0 0
        %5248 = vmatprep.subr.bf16.mxu0 0
        %5249 = vmatpush1.bf16.msra.mxu0 0
        %5250 = vmatprep.subr.bf16.mxu0 0
        %5251 = vmatpush1.bf16.msra.mxu0 0
        %5252 = vmatprep.subr.bf16.mxu0 0
        %5253 = vmatpush1.bf16.msra.mxu0 0
        %5254 = vmatprep.subr.bf16.mxu0 0
        %5255 = vmatpush1.bf16.msra.mxu0 0
        %5256 = vmatprep.subr.bf16.mxu0 0
        %5257 = vmatpush1.bf16.msra.mxu0 0
        %5258 = vmatprep.subr.bf16.mxu0 0
        %5259 = vmatpush1.bf16.msra.mxu0 0
        %5260 = vmatprep.subr.bf16.mxu0 0
        %5261 = vmatpush1.bf16.msra.mxu0 0
        %5262 = vmatprep.mubr.bf16.mxu0 0
        %5263 = vmatmul.mubr.bf16.gmra.mrb[0].mxu0 %v5178
        %v5264 = vpop.f32.mrb[0].mxu0
        %v5265 = vadd.f32 0.0, %v5264
        %v5266 = vpop.f32.mrb[0].mxu0
        %v5267 = vadd.f32 0.0, %v5266
        %v5268 = vpop.f32.mrb[0].mxu0
        %v5269 = vpop.f32.mrb[0].mxu0
        %5270 = vdwg.mxu0
        %5271 = vmatprep.subr.bf16.mxu0 %v2427
        %5272 = vmatpush1.bf16.msra.mxu0 %v2424
        %5273 = vmatprep.subr.bf16.mxu0 0
        %5274 = vmatpush1.bf16.msra.mxu0 0
        %5275 = vmatprep.subr.bf16.mxu0 0
        %5276 = vmatpush1.bf16.msra.mxu0 0
        %5277 = vmatprep.subr.bf16.mxu0 0
        %5278 = vmatpush1.bf16.msra.mxu0 0
        %5279 = vmatprep.subr.bf16.mxu0 0
        %5280 = vmatpush1.bf16.msra.mxu0 0
        %5281 = vmatprep.subr.bf16.mxu0 0
        %5282 = vmatpush1.bf16.msra.mxu0 0
        %5283 = vmatprep.subr.bf16.mxu0 0
        %5284 = vmatpush1.bf16.msra.mxu0 0
        %5285 = vmatprep.subr.bf16.mxu0 0
        %5286 = vmatpush1.bf16.msra.mxu0 0
        %5287 = vmatprep.subr.bf16.mxu0 0
        %5288 = vmatpush1.bf16.msra.mxu0 0
        %5289 = vmatprep.subr.bf16.mxu0 0
        %5290 = vmatpush1.bf16.msra.mxu0 0
        %5291 = vmatprep.subr.bf16.mxu0 0
        %5292 = vmatpush1.bf16.msra.mxu0 0
        %5293 = vmatprep.subr.bf16.mxu0 0
        %5294 = vmatpush1.bf16.msra.mxu0 0
        %5295 = vmatprep.subr.bf16.mxu0 0
        %5296 = vmatpush1.bf16.msra.mxu0 0
        %5297 = vmatprep.subr.bf16.mxu0 0
        %5298 = vmatpush1.bf16.msra.mxu0 0
        %5299 = vmatprep.subr.bf16.mxu0 0
        %5300 = vmatpush1.bf16.msra.mxu0 0
        %5301 = vmatprep.subr.bf16.mxu0 0
        %5302 = vmatpush1.bf16.msra.mxu0 0
        %5303 = vmatprep.mubr.bf16.mxu0 0
        %5304 = vmatmul.mubr.bf16.gmra.mrb[0].mxu0 %v5178
        %v5305 = vpop.f32.mrb[0].mxu0
        %v5306 = vadd.f32 0.0, %v5305
        %v5307 = vpop.f32.mrb[0].mxu0
        %v5308 = vadd.f32 0.0, %v5307
        %v5309 = vpop.f32.mrb[0].mxu0
        %v5310 = vpop.f32.mrb[0].mxu0
        %5311 = vdwg.mxu0
        %5312 = vmatprep.subr.bf16.mxu0 %v2433
        %5313 = vmatpush1.bf16.msra.mxu0 %v2430
        %5314 = vmatprep.subr.bf16.mxu0 0
        %5315 = vmatpush1.bf16.msra.mxu0 0
        %5316 = vmatprep.subr.bf16.mxu0 0
        %5317 = vmatpush1.bf16.msra.mxu0 0
        %5318 = vmatprep.subr.bf16.mxu0 0
        %5319 = vmatpush1.bf16.msra.mxu0 0
        %5320 = vmatprep.subr.bf16.mxu0 0
        %5321 = vmatpush1.bf16.msra.mxu0 0
        %5322 = vmatprep.subr.bf16.mxu0 0
        %5323 = vmatpush1.bf16.msra.mxu0 0
        %5324 = vmatprep.subr.bf16.mxu0 0
        %5325 = vmatpush1.bf16.msra.mxu0 0
        %5326 = vmatprep.subr.bf16.mxu0 0
        %5327 = vmatpush1.bf16.msra.mxu0 0
        %5328 = vmatprep.subr.bf16.mxu0 0
        %5329 = vmatpush1.bf16.msra.mxu0 0
        %5330 = vmatprep.subr.bf16.mxu0 0
        %5331 = vmatpush1.bf16.msra.mxu0 0
        %5332 = vmatprep.subr.bf16.mxu0 0
        %5333 = vmatpush1.bf16.msra.mxu0 0
        %5334 = vmatprep.subr.bf16.mxu0 0
        %5335 = vmatpush1.bf16.msra.mxu0 0
        %5336 = vmatprep.subr.bf16.mxu0 0
        %5337 = vmatpush1.bf16.msra.mxu0 0
        %5338 = vmatprep.subr.bf16.mxu0 0
        %5339 = vmatpush1.bf16.msra.mxu0 0
        %5340 = vmatprep.subr.bf16.mxu0 0
        %5341 = vmatpush1.bf16.msra.mxu0 0
        %5342 = vmatprep.subr.bf16.mxu0 0
        %5343 = vmatpush1.bf16.msra.mxu0 0
        %5344 = vmatprep.mubr.bf16.mxu0 0
        %5345 = vmatmul.mubr.bf16.gmra.mrb[0].mxu0 %v5178
        %v5346 = vpop.f32.mrb[0].mxu0
        %v5347 = vadd.f32 0.0, %v5346
        %v5348 = vpop.f32.mrb[0].mxu0
        %v5349 = vadd.f32 0.0, %v5348
        %v5350 = vpop.f32.mrb[0].mxu0
        %v5351 = vpop.f32.mrb[0].mxu0
        %5352 = vdwg.mxu0
        %5353 = vmatprep.subr.bf16.mxu0 %v5181
        %5354 = vmatpush1.bf16.msra.mxu0 %v2436
        %5355 = vmatprep.subr.bf16.mxu0 0
        %5356 = vmatpush1.bf16.msra.mxu0 0
        %5357 = vmatprep.subr.bf16.mxu0 0
        %5358 = vmatpush1.bf16.msra.mxu0 0
        %5359 = vmatprep.subr.bf16.mxu0 0
        %5360 = vmatpush1.bf16.msra.mxu0 0
        %5361 = vmatprep.subr.bf16.mxu0 0
        %5362 = vmatpush1.bf16.msra.mxu0 0
        %5363 = vmatprep.subr.bf16.mxu0 0
        %5364 = vmatpush1.bf16.msra.mxu0 0
        %5365 = vmatprep.subr.bf16.mxu0 0
        %5366 = vmatpush1.bf16.msra.mxu0 0
        %5367 = vmatprep.subr.bf16.mxu0 0
        %5368 = vmatpush1.bf16.msra.mxu0 0
        %5369 = vmatprep.subr.bf16.mxu0 0
        %5370 = vmatpush1.bf16.msra.mxu0 0
        %5371 = vmatprep.subr.bf16.mxu0 0
        %5372 = vmatpush1.bf16.msra.mxu0 0
        %5373 = vmatprep.subr.bf16.mxu0 0
        %5374 = vmatpush1.bf16.msra.mxu0 0
        %5375 = vmatprep.subr.bf16.mxu0 0
        %5376 = vmatpush1.bf16.msra.mxu0 0
        %5377 = vmatprep.subr.bf16.mxu0 0
        %5378 = vmatpush1.bf16.msra.mxu0 0
        %5379 = vmatprep.subr.bf16.mxu0 0
        %5380 = vmatpush1.bf16.msra.mxu0 0
        %5381 = vmatprep.subr.bf16.mxu0 0
        %5382 = vmatpush1.bf16.msra.mxu0 0
        %5383 = vmatprep.subr.bf16.mxu0 0
        %5384 = vmatpush1.bf16.msra.mxu0 0
        %5385 = vmatprep.mubr.bf16.mxu0 0
        %5386 = vmatmul.mubr.bf16.gmra.mrb[0].mxu0 %v5178
        %v5387 = vpop.f32.mrb[0].mxu0
        %v5388 = vadd.f32 0.0, %v5387
        %v5389 = vpop.f32.mrb[0].mxu0
        %v5390 = vadd.f32 0.0, %v5389
        %v5391 = vpop.f32.mrb[0].mxu0
        %v5392 = vpop.f32.mrb[0].mxu0
        %5393 = vdwg.mxu0
        %5394 = vmatprep.subr.bf16.mxu0 %v5187
        %5395 = vmatpush1.bf16.msra.mxu0 %v5184
        %5396 = vmatprep.subr.bf16.mxu0 0
        %5397 = vmatpush1.bf16.msra.mxu0 0
        %5398 = vmatprep.subr.bf16.mxu0 0
        %5399 = vmatpush1.bf16.msra.mxu0 0
        %5400 = vmatprep.subr.bf16.mxu0 0
        %5401 = vmatpush1.bf16.msra.mxu0 0
        %5402 = vmatprep.subr.bf16.mxu0 0
        %5403 = vmatpush1.bf16.msra.mxu0 0
        %5404 = vmatprep.subr.bf16.mxu0 0
        %5405 = vmatpush1.bf16.msra.mxu0 0
        %5406 = vmatprep.subr.bf16.mxu0 0
        %5407 = vmatpush1.bf16.msra.mxu0 0
        %5408 = vmatprep.subr.bf16.mxu0 0
        %5409 = vmatpush1.bf16.msra.mxu0 0
        %5410 = vmatprep.subr.bf16.mxu0 0
        %5411 = vmatpush1.bf16.msra.mxu0 0
        %5412 = vmatprep.subr.bf16.mxu0 0
        %5413 = vmatpush1.bf16.msra.mxu0 0
        %5414 = vmatprep.subr.bf16.mxu0 0
        %5415 = vmatpush1.bf16.msra.mxu0 0
        %5416 = vmatprep.subr.bf16.mxu0 0
        %5417 = vmatpush1.bf16.msra.mxu0 0
        %5418 = vmatprep.subr.bf16.mxu0 0
        %5419 = vmatpush1.bf16.msra.mxu0 0
        %5420 = vmatprep.subr.bf16.mxu0 0
        %5421 = vmatpush1.bf16.msra.mxu0 0
        %5422 = vmatprep.subr.bf16.mxu0 0
        %5423 = vmatpush1.bf16.msra.mxu0 0
        %5424 = vmatprep.subr.bf16.mxu0 0
        %5425 = vmatpush1.bf16.msra.mxu0 0
        %5426 = vmatprep.mubr.bf16.mxu0 0
        %5427 = vmatmul.mubr.bf16.gmra.mrb[0].mxu0 %v5178
        %v5428 = vpop.f32.mrb[0].mxu0
        %v5429 = vadd.f32 0.0, %v5428
        %v5430 = vpop.f32.mrb[0].mxu0
        %v5431 = vadd.f32 0.0, %v5430
        %v5432 = vpop.f32.mrb[0].mxu0
        %v5433 = vpop.f32.mrb[0].mxu0
        %5434 = vdwg.mxu0
        %v5435 = vadd.f32 %v5154, %v5224
        %v5436 = vadd.f32 %v5155, %v5226
        %v5437 = vadd.f32 %v5156, %v5265
        %v5438 = vadd.f32 %v5157, %v5267
        %v5439 = vadd.f32 %v5158, %v5306
        %v5440 = vadd.f32 %v5159, %v5308
        %v5441 = vadd.f32 %v5160, %v5347
        %v5442 = vadd.f32 %v5161, %v5349
        %v5443 = vadd.f32 %v5162, %v5388
        %v5444 = vadd.f32 %v5163, %v5390
        %v5445 = vadd.f32 %v5164, %v5429
        %v5446 = vadd.f32 %v5165, %v5431
        %s5447 = scalar_lea.vmem %s4, 28
        %v5448 = vld [vmem:[%s5447] sm:$0x3]
        %5449 = vrot.lane.b32.xlu0 %v1049, 108
        %v5450 = vpop.permute.xlu0 %5449
        %5451 = vrot.lane.b32.xlu0 %v1050, 108
        %v5452 = vpop.permute.xlu0 %5451
        %5453 = vrot.lane.b32.xlu0 %v1051, 108
        %v5454 = vpop.permute.xlu0 %5453
        %v5455 = vsel %vm2724, %v2723, %v5450
        %v5456 = vsel %vm2724, %v5450, %v5452
        %v5457 = vsel %vm2724, %v5452, %v5454
        %v5459 = vsel %vm1110, %v5448, 0
        %v5462 = vsel %vm1114, %v5455, 0
        %v5465 = vsel %vm1114, %v5456, 0
        %v5468 = vsel %vm1114, %v5457, 0
        %5470 = vmatprep.subr.bf16.mxu0 %v2753
        %5471 = vmatpush1.bf16.msra.mxu0 %v2750
        %5472 = vmatprep.subr.bf16.mxu0 0
        %5473 = vmatpush1.bf16.msra.mxu0 0
        %5474 = vmatprep.subr.bf16.mxu0 0
        %5475 = vmatpush1.bf16.msra.mxu0 0
        %5476 = vmatprep.subr.bf16.mxu0 0
        %5477 = vmatpush1.bf16.msra.mxu0 0
        %5478 = vmatprep.subr.bf16.mxu0 0
        %5479 = vmatpush1.bf16.msra.mxu0 0
        %5480 = vmatprep.subr.bf16.mxu0 0
        %5481 = vmatpush1.bf16.msra.mxu0 0
        %5482 = vmatprep.subr.bf16.mxu0 0
        %5483 = vmatpush1.bf16.msra.mxu0 0
        %5484 = vmatprep.subr.bf16.mxu0 0
        %5485 = vmatpush1.bf16.msra.mxu0 0
        %5486 = vmatprep.subr.bf16.mxu0 0
        %5487 = vmatpush1.bf16.msra.mxu0 0
        %5488 = vmatprep.subr.bf16.mxu0 0
        %5489 = vmatpush1.bf16.msra.mxu0 0
        %5490 = vmatprep.subr.bf16.mxu0 0
        %5491 = vmatpush1.bf16.msra.mxu0 0
        %5492 = vmatprep.subr.bf16.mxu0 0
        %5493 = vmatpush1.bf16.msra.mxu0 0
        %5494 = vmatprep.subr.bf16.mxu0 0
        %5495 = vmatpush1.bf16.msra.mxu0 0
        %5496 = vmatprep.subr.bf16.mxu0 0
        %5497 = vmatpush1.bf16.msra.mxu0 0
        %5498 = vmatprep.subr.bf16.mxu0 0
        %5499 = vmatpush1.bf16.msra.mxu0 0
        %5500 = vmatprep.subr.bf16.mxu0 0
        %5501 = vmatpush1.bf16.msra.mxu0 0
        %5502 = vmatprep.mubr.bf16.mxu0 0
        %5503 = vmatmul.mubr.bf16.gmra.mrb[0].mxu0 %v5459
        %v5504 = vpop.f32.mrb[0].mxu0
        %v5505 = vadd.f32 0.0, %v5504
        %v5506 = vpop.f32.mrb[0].mxu0
        %v5507 = vadd.f32 0.0, %v5506
        %v5508 = vpop.f32.mrb[0].mxu0
        %v5509 = vpop.f32.mrb[0].mxu0
        %5510 = vdwg.mxu0
        %5511 = vmatprep.subr.bf16.mxu0 %v2759
        %5512 = vmatpush1.bf16.msra.mxu0 %v2756
        %5513 = vmatprep.subr.bf16.mxu0 0
        %5514 = vmatpush1.bf16.msra.mxu0 0
        %5515 = vmatprep.subr.bf16.mxu0 0
        %5516 = vmatpush1.bf16.msra.mxu0 0
        %5517 = vmatprep.subr.bf16.mxu0 0
        %5518 = vmatpush1.bf16.msra.mxu0 0
        %5519 = vmatprep.subr.bf16.mxu0 0
        %5520 = vmatpush1.bf16.msra.mxu0 0
        %5521 = vmatprep.subr.bf16.mxu0 0
        %5522 = vmatpush1.bf16.msra.mxu0 0
        %5523 = vmatprep.subr.bf16.mxu0 0
        %5524 = vmatpush1.bf16.msra.mxu0 0
        %5525 = vmatprep.subr.bf16.mxu0 0
        %5526 = vmatpush1.bf16.msra.mxu0 0
        %5527 = vmatprep.subr.bf16.mxu0 0
        %5528 = vmatpush1.bf16.msra.mxu0 0
        %5529 = vmatprep.subr.bf16.mxu0 0
        %5530 = vmatpush1.bf16.msra.mxu0 0
        %5531 = vmatprep.subr.bf16.mxu0 0
        %5532 = vmatpush1.bf16.msra.mxu0 0
        %5533 = vmatprep.subr.bf16.mxu0 0
        %5534 = vmatpush1.bf16.msra.mxu0 0
        %5535 = vmatprep.subr.bf16.mxu0 0
        %5536 = vmatpush1.bf16.msra.mxu0 0
        %5537 = vmatprep.subr.bf16.mxu0 0
        %5538 = vmatpush1.bf16.msra.mxu0 0
        %5539 = vmatprep.subr.bf16.mxu0 0
        %5540 = vmatpush1.bf16.msra.mxu0 0
        %5541 = vmatprep.subr.bf16.mxu0 0
        %5542 = vmatpush1.bf16.msra.mxu0 0
        %5543 = vmatprep.mubr.bf16.mxu0 0
        %5544 = vmatmul.mubr.bf16.gmra.mrb[0].mxu0 %v5459
        %v5545 = vpop.f32.mrb[0].mxu0
        %v5546 = vadd.f32 0.0, %v5545
        %v5547 = vpop.f32.mrb[0].mxu0
        %v5548 = vadd.f32 0.0, %v5547
        %v5549 = vpop.f32.mrb[0].mxu0
        %v5550 = vpop.f32.mrb[0].mxu0
        %5551 = vdwg.mxu0
        %5552 = vmatprep.subr.bf16.mxu0 %v2765
        %5553 = vmatpush1.bf16.msra.mxu0 %v2762
        %5554 = vmatprep.subr.bf16.mxu0 0
        %5555 = vmatpush1.bf16.msra.mxu0 0
        %5556 = vmatprep.subr.bf16.mxu0 0
        %5557 = vmatpush1.bf16.msra.mxu0 0
        %5558 = vmatprep.subr.bf16.mxu0 0
        %5559 = vmatpush1.bf16.msra.mxu0 0
        %5560 = vmatprep.subr.bf16.mxu0 0
        %5561 = vmatpush1.bf16.msra.mxu0 0
        %5562 = vmatprep.subr.bf16.mxu0 0
        %5563 = vmatpush1.bf16.msra.mxu0 0
        %5564 = vmatprep.subr.bf16.mxu0 0
        %5565 = vmatpush1.bf16.msra.mxu0 0
        %5566 = vmatprep.subr.bf16.mxu0 0
        %5567 = vmatpush1.bf16.msra.mxu0 0
        %5568 = vmatprep.subr.bf16.mxu0 0
        %5569 = vmatpush1.bf16.msra.mxu0 0
        %5570 = vmatprep.subr.bf16.mxu0 0
        %5571 = vmatpush1.bf16.msra.mxu0 0
        %5572 = vmatprep.subr.bf16.mxu0 0
        %5573 = vmatpush1.bf16.msra.mxu0 0
        %5574 = vmatprep.subr.bf16.mxu0 0
        %5575 = vmatpush1.bf16.msra.mxu0 0
        %5576 = vmatprep.subr.bf16.mxu0 0
        %5577 = vmatpush1.bf16.msra.mxu0 0
        %5578 = vmatprep.subr.bf16.mxu0 0
        %5579 = vmatpush1.bf16.msra.mxu0 0
        %5580 = vmatprep.subr.bf16.mxu0 0
        %5581 = vmatpush1.bf16.msra.mxu0 0
        %5582 = vmatprep.subr.bf16.mxu0 0
        %5583 = vmatpush1.bf16.msra.mxu0 0
        %5584 = vmatprep.mubr.bf16.mxu0 0
        %5585 = vmatmul.mubr.bf16.gmra.mrb[0].mxu0 %v5459
        %v5586 = vpop.f32.mrb[0].mxu0
        %v5587 = vadd.f32 0.0, %v5586
        %v5588 = vpop.f32.mrb[0].mxu0
        %v5589 = vadd.f32 0.0, %v5588
        %v5590 = vpop.f32.mrb[0].mxu0
        %v5591 = vpop.f32.mrb[0].mxu0
        %5592 = vdwg.mxu0
        %5593 = vmatprep.subr.bf16.mxu0 %v2771
        %5594 = vmatpush1.bf16.msra.mxu0 %v2768
        %5595 = vmatprep.subr.bf16.mxu0 0
        %5596 = vmatpush1.bf16.msra.mxu0 0
        %5597 = vmatprep.subr.bf16.mxu0 0
        %5598 = vmatpush1.bf16.msra.mxu0 0
        %5599 = vmatprep.subr.bf16.mxu0 0
        %5600 = vmatpush1.bf16.msra.mxu0 0
        %5601 = vmatprep.subr.bf16.mxu0 0
        %5602 = vmatpush1.bf16.msra.mxu0 0
        %5603 = vmatprep.subr.bf16.mxu0 0
        %5604 = vmatpush1.bf16.msra.mxu0 0
        %5605 = vmatprep.subr.bf16.mxu0 0
        %5606 = vmatpush1.bf16.msra.mxu0 0
        %5607 = vmatprep.subr.bf16.mxu0 0
        %5608 = vmatpush1.bf16.msra.mxu0 0
        %5609 = vmatprep.subr.bf16.mxu0 0
        %5610 = vmatpush1.bf16.msra.mxu0 0
        %5611 = vmatprep.subr.bf16.mxu0 0
        %5612 = vmatpush1.bf16.msra.mxu0 0
        %5613 = vmatprep.subr.bf16.mxu0 0
        %5614 = vmatpush1.bf16.msra.mxu0 0
        %5615 = vmatprep.subr.bf16.mxu0 0
        %5616 = vmatpush1.bf16.msra.mxu0 0
        %5617 = vmatprep.subr.bf16.mxu0 0
        %5618 = vmatpush1.bf16.msra.mxu0 0
        %5619 = vmatprep.subr.bf16.mxu0 0
        %5620 = vmatpush1.bf16.msra.mxu0 0
        %5621 = vmatprep.subr.bf16.mxu0 0
        %5622 = vmatpush1.bf16.msra.mxu0 0
        %5623 = vmatprep.subr.bf16.mxu0 0
        %5624 = vmatpush1.bf16.msra.mxu0 0
        %5625 = vmatprep.mubr.bf16.mxu0 0
        %5626 = vmatmul.mubr.bf16.gmra.mrb[0].mxu0 %v5459
        %v5627 = vpop.f32.mrb[0].mxu0
        %v5628 = vadd.f32 0.0, %v5627
        %v5629 = vpop.f32.mrb[0].mxu0
        %v5630 = vadd.f32 0.0, %v5629
        %v5631 = vpop.f32.mrb[0].mxu0
        %v5632 = vpop.f32.mrb[0].mxu0
        %5633 = vdwg.mxu0
        %5634 = vmatprep.subr.bf16.mxu0 %v5462
        %5635 = vmatpush1.bf16.msra.mxu0 %v2774
        %5636 = vmatprep.subr.bf16.mxu0 0
        %5637 = vmatpush1.bf16.msra.mxu0 0
        %5638 = vmatprep.subr.bf16.mxu0 0
        %5639 = vmatpush1.bf16.msra.mxu0 0
        %5640 = vmatprep.subr.bf16.mxu0 0
        %5641 = vmatpush1.bf16.msra.mxu0 0
        %5642 = vmatprep.subr.bf16.mxu0 0
        %5643 = vmatpush1.bf16.msra.mxu0 0
        %5644 = vmatprep.subr.bf16.mxu0 0
        %5645 = vmatpush1.bf16.msra.mxu0 0
        %5646 = vmatprep.subr.bf16.mxu0 0
        %5647 = vmatpush1.bf16.msra.mxu0 0
        %5648 = vmatprep.subr.bf16.mxu0 0
        %5649 = vmatpush1.bf16.msra.mxu0 0
        %5650 = vmatprep.subr.bf16.mxu0 0
        %5651 = vmatpush1.bf16.msra.mxu0 0
        %5652 = vmatprep.subr.bf16.mxu0 0
        %5653 = vmatpush1.bf16.msra.mxu0 0
        %5654 = vmatprep.subr.bf16.mxu0 0
        %5655 = vmatpush1.bf16.msra.mxu0 0
        %5656 = vmatprep.subr.bf16.mxu0 0
        %5657 = vmatpush1.bf16.msra.mxu0 0
        %5658 = vmatprep.subr.bf16.mxu0 0
        %5659 = vmatpush1.bf16.msra.mxu0 0
        %5660 = vmatprep.subr.bf16.mxu0 0
        %5661 = vmatpush1.bf16.msra.mxu0 0
        %5662 = vmatprep.subr.bf16.mxu0 0
        %5663 = vmatpush1.bf16.msra.mxu0 0
        %5664 = vmatprep.subr.bf16.mxu0 0
        %5665 = vmatpush1.bf16.msra.mxu0 0
        %5666 = vmatprep.mubr.bf16.mxu0 0
        %5667 = vmatmul.mubr.bf16.gmra.mrb[0].mxu0 %v5459
        %v5668 = vpop.f32.mrb[0].mxu0
        %v5669 = vadd.f32 0.0, %v5668
        %v5670 = vpop.f32.mrb[0].mxu0
        %v5671 = vadd.f32 0.0, %v5670
        %v5672 = vpop.f32.mrb[0].mxu0
        %v5673 = vpop.f32.mrb[0].mxu0
        %5674 = vdwg.mxu0
        %5675 = vmatprep.subr.bf16.mxu0 %v5468
        %5676 = vmatpush1.bf16.msra.mxu0 %v5465
        %5677 = vmatprep.subr.bf16.mxu0 0
        %5678 = vmatpush1.bf16.msra.mxu0 0
        %5679 = vmatprep.subr.bf16.mxu0 0
        %5680 = vmatpush1.bf16.msra.mxu0 0
        %5681 = vmatprep.subr.bf16.mxu0 0
        %5682 = vmatpush1.bf16.msra.mxu0 0
        %5683 = vmatprep.subr.bf16.mxu0 0
        %5684 = vmatpush1.bf16.msra.mxu0 0
        %5685 = vmatprep.subr.bf16.mxu0 0
        %5686 = vmatpush1.bf16.msra.mxu0 0
        %5687 = vmatprep.subr.bf16.mxu0 0
        %5688 = vmatpush1.bf16.msra.mxu0 0
        %5689 = vmatprep.subr.bf16.mxu0 0
        %5690 = vmatpush1.bf16.msra.mxu0 0
        %5691 = vmatprep.subr.bf16.mxu0 0
        %5692 = vmatpush1.bf16.msra.mxu0 0
        %5693 = vmatprep.subr.bf16.mxu0 0
        %5694 = vmatpush1.bf16.msra.mxu0 0
        %5695 = vmatprep.subr.bf16.mxu0 0
        %5696 = vmatpush1.bf16.msra.mxu0 0
        %5697 = vmatprep.subr.bf16.mxu0 0
        %5698 = vmatpush1.bf16.msra.mxu0 0
        %5699 = vmatprep.subr.bf16.mxu0 0
        %5700 = vmatpush1.bf16.msra.mxu0 0
        %5701 = vmatprep.subr.bf16.mxu0 0
        %5702 = vmatpush1.bf16.msra.mxu0 0
        %5703 = vmatprep.subr.bf16.mxu0 0
        %5704 = vmatpush1.bf16.msra.mxu0 0
        %5705 = vmatprep.subr.bf16.mxu0 0
        %5706 = vmatpush1.bf16.msra.mxu0 0
        %5707 = vmatprep.mubr.bf16.mxu0 0
        %5708 = vmatmul.mubr.bf16.gmra.mrb[0].mxu0 %v5459
        %v5709 = vpop.f32.mrb[0].mxu0
        %v5710 = vadd.f32 0.0, %v5709
        %v5711 = vpop.f32.mrb[0].mxu0
        %v5712 = vadd.f32 0.0, %v5711
        %v5713 = vpop.f32.mrb[0].mxu0
        %v5714 = vpop.f32.mrb[0].mxu0
        %5715 = vdwg.mxu0
        %v5716 = vadd.f32 %v5435, %v5505
        %v5717 = vadd.f32 %v5436, %v5507
        %v5718 = vadd.f32 %v5437, %v5546
        %v5719 = vadd.f32 %v5438, %v5548
        %v5720 = vadd.f32 %v5439, %v5587
        %v5721 = vadd.f32 %v5440, %v5589
        %v5722 = vadd.f32 %v5441, %v5628
        %v5723 = vadd.f32 %v5442, %v5630
        %v5724 = vadd.f32 %v5443, %v5669
        %v5725 = vadd.f32 %v5444, %v5671
        %v5726 = vadd.f32 %v5445, %v5710
        %v5727 = vadd.f32 %v5446, %v5712
        %s5728 = scalar_lea.vmem %s4, 30
        %v5729 = vld [vmem:[%s5728] sm:$0x3]
        %5730 = vrot.lane.b32.xlu0 %v1049, 92
        %v5731 = vpop.permute.xlu0 %5730
        %5732 = vrot.lane.b32.xlu0 %v1050, 92
        %v5733 = vpop.permute.xlu0 %5732
        %5734 = vrot.lane.b32.xlu0 %v1051, 92
        %v5735 = vpop.permute.xlu0 %5734
        %v5736 = vsel %vm3062, %v3061, %v5731
        %v5737 = vsel %vm3062, %v5731, %v5733
        %v5738 = vsel %vm3062, %v5733, %v5735
        %v5740 = vsel %vm1110, %v5729, 0
        %v5743 = vsel %vm1114, %v5736, 0
        %v5746 = vsel %vm1114, %v5737, 0
        %v5749 = vsel %vm1114, %v5738, 0
        %5751 = vmatprep.subr.bf16.mxu0 %v3091
        %5752 = vmatpush1.bf16.msra.mxu0 %v3088
        %5753 = vmatprep.subr.bf16.mxu0 0
        %5754 = vmatpush1.bf16.msra.mxu0 0
        %5755 = vmatprep.subr.bf16.mxu0 0
        %5756 = vmatpush1.bf16.msra.mxu0 0
        %5757 = vmatprep.subr.bf16.mxu0 0
        %5758 = vmatpush1.bf16.msra.mxu0 0
        %5759 = vmatprep.subr.bf16.mxu0 0
        %5760 = vmatpush1.bf16.msra.mxu0 0
        %5761 = vmatprep.subr.bf16.mxu0 0
        %5762 = vmatpush1.bf16.msra.mxu0 0
        %5763 = vmatprep.subr.bf16.mxu0 0
        %5764 = vmatpush1.bf16.msra.mxu0 0
        %5765 = vmatprep.subr.bf16.mxu0 0
        %5766 = vmatpush1.bf16.msra.mxu0 0
        %5767 = vmatprep.subr.bf16.mxu0 0
        %5768 = vmatpush1.bf16.msra.mxu0 0
        %5769 = vmatprep.subr.bf16.mxu0 0
        %5770 = vmatpush1.bf16.msra.mxu0 0
        %5771 = vmatprep.subr.bf16.mxu0 0
        %5772 = vmatpush1.bf16.msra.mxu0 0
        %5773 = vmatprep.subr.bf16.mxu0 0
        %5774 = vmatpush1.bf16.msra.mxu0 0
        %5775 = vmatprep.subr.bf16.mxu0 0
        %5776 = vmatpush1.bf16.msra.mxu0 0
        %5777 = vmatprep.subr.bf16.mxu0 0
        %5778 = vmatpush1.bf16.msra.mxu0 0
        %5779 = vmatprep.subr.bf16.mxu0 0
        %5780 = vmatpush1.bf16.msra.mxu0 0
        %5781 = vmatprep.subr.bf16.mxu0 0
        %5782 = vmatpush1.bf16.msra.mxu0 0
        %5783 = vmatprep.mubr.bf16.mxu0 0
        %5784 = vmatmul.mubr.bf16.gmra.mrb[0].mxu0 %v5740
        %v5785 = vpop.f32.mrb[0].mxu0
        %v5786 = vadd.f32 0.0, %v5785
        %v5787 = vpop.f32.mrb[0].mxu0
        %v5788 = vadd.f32 0.0, %v5787
        %v5789 = vpop.f32.mrb[0].mxu0
        %v5790 = vpop.f32.mrb[0].mxu0
        %5791 = vdwg.mxu0
        %5792 = vmatprep.subr.bf16.mxu0 %v3097
        %5793 = vmatpush1.bf16.msra.mxu0 %v3094
        %5794 = vmatprep.subr.bf16.mxu0 0
        %5795 = vmatpush1.bf16.msra.mxu0 0
        %5796 = vmatprep.subr.bf16.mxu0 0
        %5797 = vmatpush1.bf16.msra.mxu0 0
        %5798 = vmatprep.subr.bf16.mxu0 0
        %5799 = vmatpush1.bf16.msra.mxu0 0
        %5800 = vmatprep.subr.bf16.mxu0 0
        %5801 = vmatpush1.bf16.msra.mxu0 0
        %5802 = vmatprep.subr.bf16.mxu0 0
        %5803 = vmatpush1.bf16.msra.mxu0 0
        %5804 = vmatprep.subr.bf16.mxu0 0
        %5805 = vmatpush1.bf16.msra.mxu0 0
        %5806 = vmatprep.subr.bf16.mxu0 0
        %5807 = vmatpush1.bf16.msra.mxu0 0
        %5808 = vmatprep.subr.bf16.mxu0 0
        %5809 = vmatpush1.bf16.msra.mxu0 0
        %5810 = vmatprep.subr.bf16.mxu0 0
        %5811 = vmatpush1.bf16.msra.mxu0 0
        %5812 = vmatprep.subr.bf16.mxu0 0
        %5813 = vmatpush1.bf16.msra.mxu0 0
        %5814 = vmatprep.subr.bf16.mxu0 0
        %5815 = vmatpush1.bf16.msra.mxu0 0
        %5816 = vmatprep.subr.bf16.mxu0 0
        %5817 = vmatpush1.bf16.msra.mxu0 0
        %5818 = vmatprep.subr.bf16.mxu0 0
        %5819 = vmatpush1.bf16.msra.mxu0 0
        %5820 = vmatprep.subr.bf16.mxu0 0
        %5821 = vmatpush1.bf16.msra.mxu0 0
        %5822 = vmatprep.subr.bf16.mxu0 0
        %5823 = vmatpush1.bf16.msra.mxu0 0
        %5824 = vmatprep.mubr.bf16.mxu0 0
        %5825 = vmatmul.mubr.bf16.gmra.mrb[0].mxu0 %v5740
        %v5826 = vpop.f32.mrb[0].mxu0
        %v5827 = vadd.f32 0.0, %v5826
        %v5828 = vpop.f32.mrb[0].mxu0
        %v5829 = vadd.f32 0.0, %v5828
        %v5830 = vpop.f32.mrb[0].mxu0
        %v5831 = vpop.f32.mrb[0].mxu0
        %5832 = vdwg.mxu0
        %5833 = vmatprep.subr.bf16.mxu0 %v3103
        %5834 = vmatpush1.bf16.msra.mxu0 %v3100
        %5835 = vmatprep.subr.bf16.mxu0 0
        %5836 = vmatpush1.bf16.msra.mxu0 0
        %5837 = vmatprep.subr.bf16.mxu0 0
        %5838 = vmatpush1.bf16.msra.mxu0 0
        %5839 = vmatprep.subr.bf16.mxu0 0
        %5840 = vmatpush1.bf16.msra.mxu0 0
        %5841 = vmatprep.subr.bf16.mxu0 0
        %5842 = vmatpush1.bf16.msra.mxu0 0
        %5843 = vmatprep.subr.bf16.mxu0 0
        %5844 = vmatpush1.bf16.msra.mxu0 0
        %5845 = vmatprep.subr.bf16.mxu0 0
        %5846 = vmatpush1.bf16.msra.mxu0 0
        %5847 = vmatprep.subr.bf16.mxu0 0
        %5848 = vmatpush1.bf16.msra.mxu0 0
        %5849 = vmatprep.subr.bf16.mxu0 0
        %5850 = vmatpush1.bf16.msra.mxu0 0
        %5851 = vmatprep.subr.bf16.mxu0 0
        %5852 = vmatpush1.bf16.msra.mxu0 0
        %5853 = vmatprep.subr.bf16.mxu0 0
        %5854 = vmatpush1.bf16.msra.mxu0 0
        %5855 = vmatprep.subr.bf16.mxu0 0
        %5856 = vmatpush1.bf16.msra.mxu0 0
        %5857 = vmatprep.subr.bf16.mxu0 0
        %5858 = vmatpush1.bf16.msra.mxu0 0
        %5859 = vmatprep.subr.bf16.mxu0 0
        %5860 = vmatpush1.bf16.msra.mxu0 0
        %5861 = vmatprep.subr.bf16.mxu0 0
        %5862 = vmatpush1.bf16.msra.mxu0 0
        %5863 = vmatprep.subr.bf16.mxu0 0
        %5864 = vmatpush1.bf16.msra.mxu0 0
        %5865 = vmatprep.mubr.bf16.mxu0 0
        %5866 = vmatmul.mubr.bf16.gmra.mrb[0].mxu0 %v5740
        %v5867 = vpop.f32.mrb[0].mxu0
        %v5868 = vadd.f32 0.0, %v5867
        %v5869 = vpop.f32.mrb[0].mxu0
        %v5870 = vadd.f32 0.0, %v5869
        %v5871 = vpop.f32.mrb[0].mxu0
        %v5872 = vpop.f32.mrb[0].mxu0
        %5873 = vdwg.mxu0
        %5874 = vmatprep.subr.bf16.mxu0 %v3109
        %5875 = vmatpush1.bf16.msra.mxu0 %v3106
        %5876 = vmatprep.subr.bf16.mxu0 0
        %5877 = vmatpush1.bf16.msra.mxu0 0
        %5878 = vmatprep.subr.bf16.mxu0 0
        %5879 = vmatpush1.bf16.msra.mxu0 0
        %5880 = vmatprep.subr.bf16.mxu0 0
        %5881 = vmatpush1.bf16.msra.mxu0 0
        %5882 = vmatprep.subr.bf16.mxu0 0
        %5883 = vmatpush1.bf16.msra.mxu0 0
        %5884 = vmatprep.subr.bf16.mxu0 0
        %5885 = vmatpush1.bf16.msra.mxu0 0
        %5886 = vmatprep.subr.bf16.mxu0 0
        %5887 = vmatpush1.bf16.msra.mxu0 0
        %5888 = vmatprep.subr.bf16.mxu0 0
        %5889 = vmatpush1.bf16.msra.mxu0 0
        %5890 = vmatprep.subr.bf16.mxu0 0
        %5891 = vmatpush1.bf16.msra.mxu0 0
        %5892 = vmatprep.subr.bf16.mxu0 0
        %5893 = vmatpush1.bf16.msra.mxu0 0
        %5894 = vmatprep.subr.bf16.mxu0 0
        %5895 = vmatpush1.bf16.msra.mxu0 0
        %5896 = vmatprep.subr.bf16.mxu0 0
        %5897 = vmatpush1.bf16.msra.mxu0 0
        %5898 = vmatprep.subr.bf16.mxu0 0
        %5899 = vmatpush1.bf16.msra.mxu0 0
        %5900 = vmatprep.subr.bf16.mxu0 0
        %5901 = vmatpush1.bf16.msra.mxu0 0
        %5902 = vmatprep.subr.bf16.mxu0 0
        %5903 = vmatpush1.bf16.msra.mxu0 0
        %5904 = vmatprep.subr.bf16.mxu0 0
        %5905 = vmatpush1.bf16.msra.mxu0 0
        %5906 = vmatprep.mubr.bf16.mxu0 0
        %5907 = vmatmul.mubr.bf16.gmra.mrb[0].mxu0 %v5740
        %v5908 = vpop.f32.mrb[0].mxu0
        %v5909 = vadd.f32 0.0, %v5908
        %v5910 = vpop.f32.mrb[0].mxu0
        %v5911 = vadd.f32 0.0, %v5910
        %v5912 = vpop.f32.mrb[0].mxu0
        %v5913 = vpop.f32.mrb[0].mxu0
        %5914 = vdwg.mxu0
        %5915 = vmatprep.subr.bf16.mxu0 %v5743
        %5916 = vmatpush1.bf16.msra.mxu0 %v3112
        %5917 = vmatprep.subr.bf16.mxu0 0
        %5918 = vmatpush1.bf16.msra.mxu0 0
        %5919 = vmatprep.subr.bf16.mxu0 0
        %5920 = vmatpush1.bf16.msra.mxu0 0
        %5921 = vmatprep.subr.bf16.mxu0 0
        %5922 = vmatpush1.bf16.msra.mxu0 0
        %5923 = vmatprep.subr.bf16.mxu0 0
        %5924 = vmatpush1.bf16.msra.mxu0 0
        %5925 = vmatprep.subr.bf16.mxu0 0
        %5926 = vmatpush1.bf16.msra.mxu0 0
        %5927 = vmatprep.subr.bf16.mxu0 0
        %5928 = vmatpush1.bf16.msra.mxu0 0
        %5929 = vmatprep.subr.bf16.mxu0 0
        %5930 = vmatpush1.bf16.msra.mxu0 0
        %5931 = vmatprep.subr.bf16.mxu0 0
        %5932 = vmatpush1.bf16.msra.mxu0 0
        %5933 = vmatprep.subr.bf16.mxu0 0
        %5934 = vmatpush1.bf16.msra.mxu0 0
        %5935 = vmatprep.subr.bf16.mxu0 0
        %5936 = vmatpush1.bf16.msra.mxu0 0
        %5937 = vmatprep.subr.bf16.mxu0 0
        %5938 = vmatpush1.bf16.msra.mxu0 0
        %5939 = vmatprep.subr.bf16.mxu0 0
        %5940 = vmatpush1.bf16.msra.mxu0 0
        %5941 = vmatprep.subr.bf16.mxu0 0
        %5942 = vmatpush1.bf16.msra.mxu0 0
        %5943 = vmatprep.subr.bf16.mxu0 0
        %5944 = vmatpush1.bf16.msra.mxu0 0
        %5945 = vmatprep.subr.bf16.mxu0 0
        %5946 = vmatpush1.bf16.msra.mxu0 0
        %5947 = vmatprep.mubr.bf16.mxu0 0
        %5948 = vmatmul.mubr.bf16.gmra.mrb[0].mxu0 %v5740
        %v5949 = vpop.f32.mrb[0].mxu0
        %v5950 = vadd.f32 0.0, %v5949
        %v5951 = vpop.f32.mrb[0].mxu0
        %v5952 = vadd.f32 0.0, %v5951
        %v5953 = vpop.f32.mrb[0].mxu0
        %v5954 = vpop.f32.mrb[0].mxu0
        %5955 = vdwg.mxu0
        %5956 = vmatprep.subr.bf16.mxu0 %v5749
        %5957 = vmatpush1.bf16.msra.mxu0 %v5746
        %5958 = vmatprep.subr.bf16.mxu0 0
        %5959 = vmatpush1.bf16.msra.mxu0 0
        %5960 = vmatprep.subr.bf16.mxu0 0
        %5961 = vmatpush1.bf16.msra.mxu0 0
        %5962 = vmatprep.subr.bf16.mxu0 0
        %5963 = vmatpush1.bf16.msra.mxu0 0
        %5964 = vmatprep.subr.bf16.mxu0 0
        %5965 = vmatpush1.bf16.msra.mxu0 0
        %5966 = vmatprep.subr.bf16.mxu0 0
        %5967 = vmatpush1.bf16.msra.mxu0 0
        %5968 = vmatprep.subr.bf16.mxu0 0
        %5969 = vmatpush1.bf16.msra.mxu0 0
        %5970 = vmatprep.subr.bf16.mxu0 0
        %5971 = vmatpush1.bf16.msra.mxu0 0
        %5972 = vmatprep.subr.bf16.mxu0 0
        %5973 = vmatpush1.bf16.msra.mxu0 0
        %5974 = vmatprep.subr.bf16.mxu0 0
        %5975 = vmatpush1.bf16.msra.mxu0 0
        %5976 = vmatprep.subr.bf16.mxu0 0
        %5977 = vmatpush1.bf16.msra.mxu0 0
        %5978 = vmatprep.subr.bf16.mxu0 0
        %5979 = vmatpush1.bf16.msra.mxu0 0
        %5980 = vmatprep.subr.bf16.mxu0 0
        %5981 = vmatpush1.bf16.msra.mxu0 0
        %5982 = vmatprep.subr.bf16.mxu0 0
        %5983 = vmatpush1.bf16.msra.mxu0 0
        %5984 = vmatprep.subr.bf16.mxu0 0
        %5985 = vmatpush1.bf16.msra.mxu0 0
        %5986 = vmatprep.subr.bf16.mxu0 0
        %5987 = vmatpush1.bf16.msra.mxu0 0
        %5988 = vmatprep.mubr.bf16.mxu0 0
        %5989 = vmatmul.mubr.bf16.gmra.mrb[0].mxu0 %v5740
        %v5990 = vpop.f32.mrb[0].mxu0
        %v5991 = vadd.f32 0.0, %v5990
        %v5992 = vpop.f32.mrb[0].mxu0
        %v5993 = vadd.f32 0.0, %v5992
        %v5994 = vpop.f32.mrb[0].mxu0
        %v5995 = vpop.f32.mrb[0].mxu0
        %5996 = vdwg.mxu0
        %v5997 = vadd.f32 %v5716, %v5786
        %v5998 = vadd.f32 %v5717, %v5788
        %v5999 = vadd.f32 %v5718, %v5827
        %v6000 = vadd.f32 %v5719, %v5829
        %v6001 = vadd.f32 %v5720, %v5868
        %v6002 = vadd.f32 %v5721, %v5870
        %v6003 = vadd.f32 %v5722, %v5909
        %v6004 = vadd.f32 %v5723, %v5911
        %v6005 = vadd.f32 %v5724, %v5950
        %v6006 = vadd.f32 %v5725, %v5952
        %v6007 = vadd.f32 %v5726, %v5991
        %v6008 = vadd.f32 %v5727, %v5993
        %s6009 = scalar_lea.vmem %s4, 32
        %v6010 = vld [vmem:[%s6009] sm:$0x3]
        %6011 = vrot.lane.b32.xlu0 %v1049, 91
        %v6012 = vpop.permute.xlu0 %6011
        %6013 = vrot.lane.b32.xlu0 %v1050, 91
        %v6014 = vpop.permute.xlu0 %6013
        %6015 = vrot.lane.b32.xlu0 %v1051, 91
        %v6016 = vpop.permute.xlu0 %6015
        %v6017 = vsel %vm3400, %v3399, %v6012
        %v6018 = vsel %vm3400, %v6012, %v6014
        %v6019 = vsel %vm3400, %v6014, %v6016
        %v6021 = vsel %vm1110, %v6010, 0
        %v6024 = vsel %vm1114, %v6017, 0
        %v6027 = vsel %vm1114, %v6018, 0
        %v6030 = vsel %vm1114, %v6019, 0
        %6032 = vmatprep.subr.bf16.mxu0 %v3429
        %6033 = vmatpush1.bf16.msra.mxu0 %v3426
        %6034 = vmatprep.subr.bf16.mxu0 0
        %6035 = vmatpush1.bf16.msra.mxu0 0
        %6036 = vmatprep.subr.bf16.mxu0 0
        %6037 = vmatpush1.bf16.msra.mxu0 0
        %6038 = vmatprep.subr.bf16.mxu0 0
        %6039 = vmatpush1.bf16.msra.mxu0 0
        %6040 = vmatprep.subr.bf16.mxu0 0
        %6041 = vmatpush1.bf16.msra.mxu0 0
        %6042 = vmatprep.subr.bf16.mxu0 0
        %6043 = vmatpush1.bf16.msra.mxu0 0
        %6044 = vmatprep.subr.bf16.mxu0 0
        %6045 = vmatpush1.bf16.msra.mxu0 0
        %6046 = vmatprep.subr.bf16.mxu0 0
        %6047 = vmatpush1.bf16.msra.mxu0 0
        %6048 = vmatprep.subr.bf16.mxu0 0
        %6049 = vmatpush1.bf16.msra.mxu0 0
        %6050 = vmatprep.subr.bf16.mxu0 0
        %6051 = vmatpush1.bf16.msra.mxu0 0
        %6052 = vmatprep.subr.bf16.mxu0 0
        %6053 = vmatpush1.bf16.msra.mxu0 0
        %6054 = vmatprep.subr.bf16.mxu0 0
        %6055 = vmatpush1.bf16.msra.mxu0 0
        %6056 = vmatprep.subr.bf16.mxu0 0
        %6057 = vmatpush1.bf16.msra.mxu0 0
        %6058 = vmatprep.subr.bf16.mxu0 0
        %6059 = vmatpush1.bf16.msra.mxu0 0
        %6060 = vmatprep.subr.bf16.mxu0 0
        %6061 = vmatpush1.bf16.msra.mxu0 0
        %6062 = vmatprep.subr.bf16.mxu0 0
        %6063 = vmatpush1.bf16.msra.mxu0 0
        %6064 = vmatprep.mubr.bf16.mxu0 0
        %6065 = vmatmul.mubr.bf16.gmra.mrb[0].mxu0 %v6021
        %v6066 = vpop.f32.mrb[0].mxu0
        %v6067 = vadd.f32 0.0, %v6066
        %v6068 = vpop.f32.mrb[0].mxu0
        %v6069 = vadd.f32 0.0, %v6068
        %v6070 = vpop.f32.mrb[0].mxu0
        %v6071 = vpop.f32.mrb[0].mxu0
        %6072 = vdwg.mxu0
        %6073 = vmatprep.subr.bf16.mxu0 %v3435
        %6074 = vmatpush1.bf16.msra.mxu0 %v3432
        %6075 = vmatprep.subr.bf16.mxu0 0
        %6076 = vmatpush1.bf16.msra.mxu0 0
        %6077 = vmatprep.subr.bf16.mxu0 0
        %6078 = vmatpush1.bf16.msra.mxu0 0
        %6079 = vmatprep.subr.bf16.mxu0 0
        %6080 = vmatpush1.bf16.msra.mxu0 0
        %6081 = vmatprep.subr.bf16.mxu0 0
        %6082 = vmatpush1.bf16.msra.mxu0 0
        %6083 = vmatprep.subr.bf16.mxu0 0
        %6084 = vmatpush1.bf16.msra.mxu0 0
        %6085 = vmatprep.subr.bf16.mxu0 0
        %6086 = vmatpush1.bf16.msra.mxu0 0
        %6087 = vmatprep.subr.bf16.mxu0 0
        %6088 = vmatpush1.bf16.msra.mxu0 0
        %6089 = vmatprep.subr.bf16.mxu0 0
        %6090 = vmatpush1.bf16.msra.mxu0 0
        %6091 = vmatprep.subr.bf16.mxu0 0
        %6092 = vmatpush1.bf16.msra.mxu0 0
        %6093 = vmatprep.subr.bf16.mxu0 0
        %6094 = vmatpush1.bf16.msra.mxu0 0
        %6095 = vmatprep.subr.bf16.mxu0 0
        %6096 = vmatpush1.bf16.msra.mxu0 0
        %6097 = vmatprep.subr.bf16.mxu0 0
        %6098 = vmatpush1.bf16.msra.mxu0 0
        %6099 = vmatprep.subr.bf16.mxu0 0
        %6100 = vmatpush1.bf16.msra.mxu0 0
        %6101 = vmatprep.subr.bf16.mxu0 0
        %6102 = vmatpush1.bf16.msra.mxu0 0
        %6103 = vmatprep.subr.bf16.mxu0 0
        %6104 = vmatpush1.bf16.msra.mxu0 0
        %6105 = vmatprep.mubr.bf16.mxu0 0
        %6106 = vmatmul.mubr.bf16.gmra.mrb[0].mxu0 %v6021
        %v6107 = vpop.f32.mrb[0].mxu0
        %v6108 = vadd.f32 0.0, %v6107
        %v6109 = vpop.f32.mrb[0].mxu0
        %v6110 = vadd.f32 0.0, %v6109
        %v6111 = vpop.f32.mrb[0].mxu0
        %v6112 = vpop.f32.mrb[0].mxu0
        %6113 = vdwg.mxu0
        %6114 = vmatprep.subr.bf16.mxu0 %v3441
        %6115 = vmatpush1.bf16.msra.mxu0 %v3438
        %6116 = vmatprep.subr.bf16.mxu0 0
        %6117 = vmatpush1.bf16.msra.mxu0 0
        %6118 = vmatprep.subr.bf16.mxu0 0
        %6119 = vmatpush1.bf16.msra.mxu0 0
        %6120 = vmatprep.subr.bf16.mxu0 0
        %6121 = vmatpush1.bf16.msra.mxu0 0
        %6122 = vmatprep.subr.bf16.mxu0 0
        %6123 = vmatpush1.bf16.msra.mxu0 0
        %6124 = vmatprep.subr.bf16.mxu0 0
        %6125 = vmatpush1.bf16.msra.mxu0 0
        %6126 = vmatprep.subr.bf16.mxu0 0
        %6127 = vmatpush1.bf16.msra.mxu0 0
        %6128 = vmatprep.subr.bf16.mxu0 0
        %6129 = vmatpush1.bf16.msra.mxu0 0
        %6130 = vmatprep.subr.bf16.mxu0 0
        %6131 = vmatpush1.bf16.msra.mxu0 0
        %6132 = vmatprep.subr.bf16.mxu0 0
        %6133 = vmatpush1.bf16.msra.mxu0 0
        %6134 = vmatprep.subr.bf16.mxu0 0
        %6135 = vmatpush1.bf16.msra.mxu0 0
        %6136 = vmatprep.subr.bf16.mxu0 0
        %6137 = vmatpush1.bf16.msra.mxu0 0
        %6138 = vmatprep.subr.bf16.mxu0 0
        %6139 = vmatpush1.bf16.msra.mxu0 0
        %6140 = vmatprep.subr.bf16.mxu0 0
        %6141 = vmatpush1.bf16.msra.mxu0 0
        %6142 = vmatprep.subr.bf16.mxu0 0
        %6143 = vmatpush1.bf16.msra.mxu0 0
        %6144 = vmatprep.subr.bf16.mxu0 0
        %6145 = vmatpush1.bf16.msra.mxu0 0
        %6146 = vmatprep.mubr.bf16.mxu0 0
        %6147 = vmatmul.mubr.bf16.gmra.mrb[0].mxu0 %v6021
        %v6148 = vpop.f32.mrb[0].mxu0
        %v6149 = vadd.f32 0.0, %v6148
        %v6150 = vpop.f32.mrb[0].mxu0
        %v6151 = vadd.f32 0.0, %v6150
        %v6152 = vpop.f32.mrb[0].mxu0
        %v6153 = vpop.f32.mrb[0].mxu0
        %6154 = vdwg.mxu0
        %6155 = vmatprep.subr.bf16.mxu0 %v3447
        %6156 = vmatpush1.bf16.msra.mxu0 %v3444
        %6157 = vmatprep.subr.bf16.mxu0 0
        %6158 = vmatpush1.bf16.msra.mxu0 0
        %6159 = vmatprep.subr.bf16.mxu0 0
        %6160 = vmatpush1.bf16.msra.mxu0 0
        %6161 = vmatprep.subr.bf16.mxu0 0
        %6162 = vmatpush1.bf16.msra.mxu0 0
        %6163 = vmatprep.subr.bf16.mxu0 0
        %6164 = vmatpush1.bf16.msra.mxu0 0
        %6165 = vmatprep.subr.bf16.mxu0 0
        %6166 = vmatpush1.bf16.msra.mxu0 0
        %6167 = vmatprep.subr.bf16.mxu0 0
        %6168 = vmatpush1.bf16.msra.mxu0 0
        %6169 = vmatprep.subr.bf16.mxu0 0
        %6170 = vmatpush1.bf16.msra.mxu0 0
        %6171 = vmatprep.subr.bf16.mxu0 0
        %6172 = vmatpush1.bf16.msra.mxu0 0
        %6173 = vmatprep.subr.bf16.mxu0 0
        %6174 = vmatpush1.bf16.msra.mxu0 0
        %6175 = vmatprep.subr.bf16.mxu0 0
        %6176 = vmatpush1.bf16.msra.mxu0 0
        %6177 = vmatprep.subr.bf16.mxu0 0
        %6178 = vmatpush1.bf16.msra.mxu0 0
        %6179 = vmatprep.subr.bf16.mxu0 0
        %6180 = vmatpush1.bf16.msra.mxu0 0
        %6181 = vmatprep.subr.bf16.mxu0 0
        %6182 = vmatpush1.bf16.msra.mxu0 0
        %6183 = vmatprep.subr.bf16.mxu0 0
        %6184 = vmatpush1.bf16.msra.mxu0 0
        %6185 = vmatprep.subr.bf16.mxu0 0
        %6186 = vmatpush1.bf16.msra.mxu0 0
        %6187 = vmatprep.mubr.bf16.mxu0 0
        %6188 = vmatmul.mubr.bf16.gmra.mrb[0].mxu0 %v6021
        %v6189 = vpop.f32.mrb[0].mxu0
        %v6190 = vadd.f32 0.0, %v6189
        %v6191 = vpop.f32.mrb[0].mxu0
        %v6192 = vadd.f32 0.0, %v6191
        %v6193 = vpop.f32.mrb[0].mxu0
        %v6194 = vpop.f32.mrb[0].mxu0
        %6195 = vdwg.mxu0
        %6196 = vmatprep.subr.bf16.mxu0 %v6024
        %6197 = vmatpush1.bf16.msra.mxu0 %v3450
        %6198 = vmatprep.subr.bf16.mxu0 0
        %6199 = vmatpush1.bf16.msra.mxu0 0
        %6200 = vmatprep.subr.bf16.mxu0 0
        %6201 = vmatpush1.bf16.msra.mxu0 0
        %6202 = vmatprep.subr.bf16.mxu0 0
        %6203 = vmatpush1.bf16.msra.mxu0 0
        %6204 = vmatprep.subr.bf16.mxu0 0
        %6205 = vmatpush1.bf16.msra.mxu0 0
        %6206 = vmatprep.subr.bf16.mxu0 0
        %6207 = vmatpush1.bf16.msra.mxu0 0
        %6208 = vmatprep.subr.bf16.mxu0 0
        %6209 = vmatpush1.bf16.msra.mxu0 0
        %6210 = vmatprep.subr.bf16.mxu0 0
        %6211 = vmatpush1.bf16.msra.mxu0 0
        %6212 = vmatprep.subr.bf16.mxu0 0
        %6213 = vmatpush1.bf16.msra.mxu0 0
        %6214 = vmatprep.subr.bf16.mxu0 0
        %6215 = vmatpush1.bf16.msra.mxu0 0
        %6216 = vmatprep.subr.bf16.mxu0 0
        %6217 = vmatpush1.bf16.msra.mxu0 0
        %6218 = vmatprep.subr.bf16.mxu0 0
        %6219 = vmatpush1.bf16.msra.mxu0 0
        %6220 = vmatprep.subr.bf16.mxu0 0
        %6221 = vmatpush1.bf16.msra.mxu0 0
        %6222 = vmatprep.subr.bf16.mxu0 0
        %6223 = vmatpush1.bf16.msra.mxu0 0
        %6224 = vmatprep.subr.bf16.mxu0 0
        %6225 = vmatpush1.bf16.msra.mxu0 0
        %6226 = vmatprep.subr.bf16.mxu0 0
        %6227 = vmatpush1.bf16.msra.mxu0 0
        %6228 = vmatprep.mubr.bf16.mxu0 0
        %6229 = vmatmul.mubr.bf16.gmra.mrb[0].mxu0 %v6021
        %v6230 = vpop.f32.mrb[0].mxu0
        %v6231 = vadd.f32 0.0, %v6230
        %v6232 = vpop.f32.mrb[0].mxu0
        %v6233 = vadd.f32 0.0, %v6232
        %v6234 = vpop.f32.mrb[0].mxu0
        %v6235 = vpop.f32.mrb[0].mxu0
        %6236 = vdwg.mxu0
        %6237 = vmatprep.subr.bf16.mxu0 %v6030
        %6238 = vmatpush1.bf16.msra.mxu0 %v6027
        %6239 = vmatprep.subr.bf16.mxu0 0
        %6240 = vmatpush1.bf16.msra.mxu0 0
        %6241 = vmatprep.subr.bf16.mxu0 0
        %6242 = vmatpush1.bf16.msra.mxu0 0
        %6243 = vmatprep.subr.bf16.mxu0 0
        %6244 = vmatpush1.bf16.msra.mxu0 0
        %6245 = vmatprep.subr.bf16.mxu0 0
        %6246 = vmatpush1.bf16.msra.mxu0 0
        %6247 = vmatprep.subr.bf16.mxu0 0
        %6248 = vmatpush1.bf16.msra.mxu0 0
        %6249 = vmatprep.subr.bf16.mxu0 0
        %6250 = vmatpush1.bf16.msra.mxu0 0
        %6251 = vmatprep.subr.bf16.mxu0 0
        %6252 = vmatpush1.bf16.msra.mxu0 0
        %6253 = vmatprep.subr.bf16.mxu0 0
        %6254 = vmatpush1.bf16.msra.mxu0 0
        %6255 = vmatprep.subr.bf16.mxu0 0
        %6256 = vmatpush1.bf16.msra.mxu0 0
        %6257 = vmatprep.subr.bf16.mxu0 0
        %6258 = vmatpush1.bf16.msra.mxu0 0
        %6259 = vmatprep.subr.bf16.mxu0 0
        %6260 = vmatpush1.bf16.msra.mxu0 0
        %6261 = vmatprep.subr.bf16.mxu0 0
        %6262 = vmatpush1.bf16.msra.mxu0 0
        %6263 = vmatprep.subr.bf16.mxu0 0
        %6264 = vmatpush1.bf16.msra.mxu0 0
        %6265 = vmatprep.subr.bf16.mxu0 0
        %6266 = vmatpush1.bf16.msra.mxu0 0
        %6267 = vmatprep.subr.bf16.mxu0 0
        %6268 = vmatpush1.bf16.msra.mxu0 0
        %6269 = vmatprep.mubr.bf16.mxu0 0
        %6270 = vmatmul.mubr.bf16.gmra.mrb[0].mxu0 %v6021
        %v6271 = vpop.f32.mrb[0].mxu0
        %v6272 = vadd.f32 0.0, %v6271
        %v6273 = vpop.f32.mrb[0].mxu0
        %v6274 = vadd.f32 0.0, %v6273
        %v6275 = vpop.f32.mrb[0].mxu0
        %v6276 = vpop.f32.mrb[0].mxu0
        %6277 = vdwg.mxu0
        %v6278 = vadd.f32 %v5997, %v6067
        %v6279 = vadd.f32 %v5998, %v6069
        %v6280 = vadd.f32 %v5999, %v6108
        %v6281 = vadd.f32 %v6000, %v6110
        %v6282 = vadd.f32 %v6001, %v6149
        %v6283 = vadd.f32 %v6002, %v6151
        %v6284 = vadd.f32 %v6003, %v6190
        %v6285 = vadd.f32 %v6004, %v6192
        %v6286 = vadd.f32 %v6005, %v6231
        %v6287 = vadd.f32 %v6006, %v6233
        %v6288 = vadd.f32 %v6007, %v6272
        %v6289 = vadd.f32 %v6008, %v6274
        %s6290 = scalar_lea.vmem %s4, 34
        %v6291 = vld [vmem:[%s6290] sm:$0x3]
        %6292 = vrot.lane.b32.xlu0 %v1049, 90
        %v6293 = vpop.permute.xlu0 %6292
        %6294 = vrot.lane.b32.xlu0 %v1050, 90
        %v6295 = vpop.permute.xlu0 %6294
        %6296 = vrot.lane.b32.xlu0 %v1051, 90
        %v6297 = vpop.permute.xlu0 %6296
        %v6298 = vsel %vm3738, %v3737, %v6293
        %v6299 = vsel %vm3738, %v6293, %v6295
        %v6300 = vsel %vm3738, %v6295, %v6297
        %v6302 = vsel %vm1110, %v6291, 0
        %v6305 = vsel %vm1114, %v6298, 0
        %v6308 = vsel %vm1114, %v6299, 0
        %v6311 = vsel %vm1114, %v6300, 0
        %6313 = vmatprep.subr.bf16.mxu0 %v3767
        %6314 = vmatpush1.bf16.msra.mxu0 %v3764
        %6315 = vmatprep.subr.bf16.mxu0 0
        %6316 = vmatpush1.bf16.msra.mxu0 0
        %6317 = vmatprep.subr.bf16.mxu0 0
        %6318 = vmatpush1.bf16.msra.mxu0 0
        %6319 = vmatprep.subr.bf16.mxu0 0
        %6320 = vmatpush1.bf16.msra.mxu0 0
        %6321 = vmatprep.subr.bf16.mxu0 0
        %6322 = vmatpush1.bf16.msra.mxu0 0
        %6323 = vmatprep.subr.bf16.mxu0 0
        %6324 = vmatpush1.bf16.msra.mxu0 0
        %6325 = vmatprep.subr.bf16.mxu0 0
        %6326 = vmatpush1.bf16.msra.mxu0 0
        %6327 = vmatprep.subr.bf16.mxu0 0
        %6328 = vmatpush1.bf16.msra.mxu0 0
        %6329 = vmatprep.subr.bf16.mxu0 0
        %6330 = vmatpush1.bf16.msra.mxu0 0
        %6331 = vmatprep.subr.bf16.mxu0 0
        %6332 = vmatpush1.bf16.msra.mxu0 0
        %6333 = vmatprep.subr.bf16.mxu0 0
        %6334 = vmatpush1.bf16.msra.mxu0 0
        %6335 = vmatprep.subr.bf16.mxu0 0
        %6336 = vmatpush1.bf16.msra.mxu0 0
        %6337 = vmatprep.subr.bf16.mxu0 0
        %6338 = vmatpush1.bf16.msra.mxu0 0
        %6339 = vmatprep.subr.bf16.mxu0 0
        %6340 = vmatpush1.bf16.msra.mxu0 0
        %6341 = vmatprep.subr.bf16.mxu0 0
        %6342 = vmatpush1.bf16.msra.mxu0 0
        %6343 = vmatprep.subr.bf16.mxu0 0
        %6344 = vmatpush1.bf16.msra.mxu0 0
        %6345 = vmatprep.mubr.bf16.mxu0 0
        %6346 = vmatmul.mubr.bf16.gmra.mrb[0].mxu0 %v6302
        %v6347 = vpop.f32.mrb[0].mxu0
        %v6348 = vadd.f32 0.0, %v6347
        %v6349 = vpop.f32.mrb[0].mxu0
        %v6350 = vadd.f32 0.0, %v6349
        %v6351 = vpop.f32.mrb[0].mxu0
        %v6352 = vpop.f32.mrb[0].mxu0
        %6353 = vdwg.mxu0
        %6354 = vmatprep.subr.bf16.mxu0 %v3773
        %6355 = vmatpush1.bf16.msra.mxu0 %v3770
        %6356 = vmatprep.subr.bf16.mxu0 0
        %6357 = vmatpush1.bf16.msra.mxu0 0
        %6358 = vmatprep.subr.bf16.mxu0 0
        %6359 = vmatpush1.bf16.msra.mxu0 0
        %6360 = vmatprep.subr.bf16.mxu0 0
        %6361 = vmatpush1.bf16.msra.mxu0 0
        %6362 = vmatprep.subr.bf16.mxu0 0
        %6363 = vmatpush1.bf16.msra.mxu0 0
        %6364 = vmatprep.subr.bf16.mxu0 0
        %6365 = vmatpush1.bf16.msra.mxu0 0
        %6366 = vmatprep.subr.bf16.mxu0 0
        %6367 = vmatpush1.bf16.msra.mxu0 0
        %6368 = vmatprep.subr.bf16.mxu0 0
        %6369 = vmatpush1.bf16.msra.mxu0 0
        %6370 = vmatprep.subr.bf16.mxu0 0
        %6371 = vmatpush1.bf16.msra.mxu0 0
        %6372 = vmatprep.subr.bf16.mxu0 0
        %6373 = vmatpush1.bf16.msra.mxu0 0
        %6374 = vmatprep.subr.bf16.mxu0 0
        %6375 = vmatpush1.bf16.msra.mxu0 0
        %6376 = vmatprep.subr.bf16.mxu0 0
        %6377 = vmatpush1.bf16.msra.mxu0 0
        %6378 = vmatprep.subr.bf16.mxu0 0
        %6379 = vmatpush1.bf16.msra.mxu0 0
        %6380 = vmatprep.subr.bf16.mxu0 0
        %6381 = vmatpush1.bf16.msra.mxu0 0
        %6382 = vmatprep.subr.bf16.mxu0 0
        %6383 = vmatpush1.bf16.msra.mxu0 0
        %6384 = vmatprep.subr.bf16.mxu0 0
        %6385 = vmatpush1.bf16.msra.mxu0 0
        %6386 = vmatprep.mubr.bf16.mxu0 0
        %6387 = vmatmul.mubr.bf16.gmra.mrb[0].mxu0 %v6302
        %v6388 = vpop.f32.mrb[0].mxu0
        %v6389 = vadd.f32 0.0, %v6388
        %v6390 = vpop.f32.mrb[0].mxu0
        %v6391 = vadd.f32 0.0, %v6390
        %v6392 = vpop.f32.mrb[0].mxu0
        %v6393 = vpop.f32.mrb[0].mxu0
        %6394 = vdwg.mxu0
        %6395 = vmatprep.subr.bf16.mxu0 %v3779
        %6396 = vmatpush1.bf16.msra.mxu0 %v3776
        %6397 = vmatprep.subr.bf16.mxu0 0
        %6398 = vmatpush1.bf16.msra.mxu0 0
        %6399 = vmatprep.subr.bf16.mxu0 0
        %6400 = vmatpush1.bf16.msra.mxu0 0
        %6401 = vmatprep.subr.bf16.mxu0 0
        %6402 = vmatpush1.bf16.msra.mxu0 0
        %6403 = vmatprep.subr.bf16.mxu0 0
        %6404 = vmatpush1.bf16.msra.mxu0 0
        %6405 = vmatprep.subr.bf16.mxu0 0
        %6406 = vmatpush1.bf16.msra.mxu0 0
        %6407 = vmatprep.subr.bf16.mxu0 0
        %6408 = vmatpush1.bf16.msra.mxu0 0
        %6409 = vmatprep.subr.bf16.mxu0 0
        %6410 = vmatpush1.bf16.msra.mxu0 0
        %6411 = vmatprep.subr.bf16.mxu0 0
        %6412 = vmatpush1.bf16.msra.mxu0 0
        %6413 = vmatprep.subr.bf16.mxu0 0
        %6414 = vmatpush1.bf16.msra.mxu0 0
        %6415 = vmatprep.subr.bf16.mxu0 0
        %6416 = vmatpush1.bf16.msra.mxu0 0
        %6417 = vmatprep.subr.bf16.mxu0 0
        %6418 = vmatpush1.bf16.msra.mxu0 0
        %6419 = vmatprep.subr.bf16.mxu0 0
        %6420 = vmatpush1.bf16.msra.mxu0 0
        %6421 = vmatprep.subr.bf16.mxu0 0
        %6422 = vmatpush1.bf16.msra.mxu0 0
        %6423 = vmatprep.subr.bf16.mxu0 0
        %6424 = vmatpush1.bf16.msra.mxu0 0
        %6425 = vmatprep.subr.bf16.mxu0 0
        %6426 = vmatpush1.bf16.msra.mxu0 0
        %6427 = vmatprep.mubr.bf16.mxu0 0
        %6428 = vmatmul.mubr.bf16.gmra.mrb[0].mxu0 %v6302
        %v6429 = vpop.f32.mrb[0].mxu0
        %v6430 = vadd.f32 0.0, %v6429
        %v6431 = vpop.f32.mrb[0].mxu0
        %v6432 = vadd.f32 0.0, %v6431
        %v6433 = vpop.f32.mrb[0].mxu0
        %v6434 = vpop.f32.mrb[0].mxu0
        %6435 = vdwg.mxu0
        %6436 = vmatprep.subr.bf16.mxu0 %v3785
        %6437 = vmatpush1.bf16.msra.mxu0 %v3782
        %6438 = vmatprep.subr.bf16.mxu0 0
        %6439 = vmatpush1.bf16.msra.mxu0 0
        %6440 = vmatprep.subr.bf16.mxu0 0
        %6441 = vmatpush1.bf16.msra.mxu0 0
        %6442 = vmatprep.subr.bf16.mxu0 0
        %6443 = vmatpush1.bf16.msra.mxu0 0
        %6444 = vmatprep.subr.bf16.mxu0 0
        %6445 = vmatpush1.bf16.msra.mxu0 0
        %6446 = vmatprep.subr.bf16.mxu0 0
        %6447 = vmatpush1.bf16.msra.mxu0 0
        %6448 = vmatprep.subr.bf16.mxu0 0
        %6449 = vmatpush1.bf16.msra.mxu0 0
        %6450 = vmatprep.subr.bf16.mxu0 0
        %6451 = vmatpush1.bf16.msra.mxu0 0
        %6452 = vmatprep.subr.bf16.mxu0 0
        %6453 = vmatpush1.bf16.msra.mxu0 0
        %6454 = vmatprep.subr.bf16.mxu0 0
        %6455 = vmatpush1.bf16.msra.mxu0 0
        %6456 = vmatprep.subr.bf16.mxu0 0
        %6457 = vmatpush1.bf16.msra.mxu0 0
        %6458 = vmatprep.subr.bf16.mxu0 0
        %6459 = vmatpush1.bf16.msra.mxu0 0
        %6460 = vmatprep.subr.bf16.mxu0 0
        %6461 = vmatpush1.bf16.msra.mxu0 0
        %6462 = vmatprep.subr.bf16.mxu0 0
        %6463 = vmatpush1.bf16.msra.mxu0 0
        %6464 = vmatprep.subr.bf16.mxu0 0
        %6465 = vmatpush1.bf16.msra.mxu0 0
        %6466 = vmatprep.subr.bf16.mxu0 0
        %6467 = vmatpush1.bf16.msra.mxu0 0
        %6468 = vmatprep.mubr.bf16.mxu0 0
        %6469 = vmatmul.mubr.bf16.gmra.mrb[0].mxu0 %v6302
        %v6470 = vpop.f32.mrb[0].mxu0
        %v6471 = vadd.f32 0.0, %v6470
        %v6472 = vpop.f32.mrb[0].mxu0
        %v6473 = vadd.f32 0.0, %v6472
        %v6474 = vpop.f32.mrb[0].mxu0
        %v6475 = vpop.f32.mrb[0].mxu0
        %6476 = vdwg.mxu0
        %6477 = vmatprep.subr.bf16.mxu0 %v6305
        %6478 = vmatpush1.bf16.msra.mxu0 %v3788
        %6479 = vmatprep.subr.bf16.mxu0 0
        %6480 = vmatpush1.bf16.msra.mxu0 0
        %6481 = vmatprep.subr.bf16.mxu0 0
        %6482 = vmatpush1.bf16.msra.mxu0 0
        %6483 = vmatprep.subr.bf16.mxu0 0
        %6484 = vmatpush1.bf16.msra.mxu0 0
        %6485 = vmatprep.subr.bf16.mxu0 0
        %6486 = vmatpush1.bf16.msra.mxu0 0
        %6487 = vmatprep.subr.bf16.mxu0 0
        %6488 = vmatpush1.bf16.msra.mxu0 0
        %6489 = vmatprep.subr.bf16.mxu0 0
        %6490 = vmatpush1.bf16.msra.mxu0 0
        %6491 = vmatprep.subr.bf16.mxu0 0
        %6492 = vmatpush1.bf16.msra.mxu0 0
        %6493 = vmatprep.subr.bf16.mxu0 0
        %6494 = vmatpush1.bf16.msra.mxu0 0
        %6495 = vmatprep.subr.bf16.mxu0 0
        %6496 = vmatpush1.bf16.msra.mxu0 0
        %6497 = vmatprep.subr.bf16.mxu0 0
        %6498 = vmatpush1.bf16.msra.mxu0 0
        %6499 = vmatprep.subr.bf16.mxu0 0
        %6500 = vmatpush1.bf16.msra.mxu0 0
        %6501 = vmatprep.subr.bf16.mxu0 0
        %6502 = vmatpush1.bf16.msra.mxu0 0
        %6503 = vmatprep.subr.bf16.mxu0 0
        %6504 = vmatpush1.bf16.msra.mxu0 0
        %6505 = vmatprep.subr.bf16.mxu0 0
        %6506 = vmatpush1.bf16.msra.mxu0 0
        %6507 = vmatprep.subr.bf16.mxu0 0
        %6508 = vmatpush1.bf16.msra.mxu0 0
        %6509 = vmatprep.mubr.bf16.mxu0 0
        %6510 = vmatmul.mubr.bf16.gmra.mrb[0].mxu0 %v6302
        %v6511 = vpop.f32.mrb[0].mxu0
        %v6512 = vadd.f32 0.0, %v6511
        %v6513 = vpop.f32.mrb[0].mxu0
        %v6514 = vadd.f32 0.0, %v6513
        %v6515 = vpop.f32.mrb[0].mxu0
        %v6516 = vpop.f32.mrb[0].mxu0
        %6517 = vdwg.mxu0
        %6518 = vmatprep.subr.bf16.mxu0 %v6311
        %6519 = vmatpush1.bf16.msra.mxu0 %v6308
        %6520 = vmatprep.subr.bf16.mxu0 0
        %6521 = vmatpush1.bf16.msra.mxu0 0
        %6522 = vmatprep.subr.bf16.mxu0 0
        %6523 = vmatpush1.bf16.msra.mxu0 0
        %6524 = vmatprep.subr.bf16.mxu0 0
        %6525 = vmatpush1.bf16.msra.mxu0 0
        %6526 = vmatprep.subr.bf16.mxu0 0
        %6527 = vmatpush1.bf16.msra.mxu0 0
        %6528 = vmatprep.subr.bf16.mxu0 0
        %6529 = vmatpush1.bf16.msra.mxu0 0
        %6530 = vmatprep.subr.bf16.mxu0 0
        %6531 = vmatpush1.bf16.msra.mxu0 0
        %6532 = vmatprep.subr.bf16.mxu0 0
        %6533 = vmatpush1.bf16.msra.mxu0 0
        %6534 = vmatprep.subr.bf16.mxu0 0
        %6535 = vmatpush1.bf16.msra.mxu0 0
        %6536 = vmatprep.subr.bf16.mxu0 0
        %6537 = vmatpush1.bf16.msra.mxu0 0
        %6538 = vmatprep.subr.bf16.mxu0 0
        %6539 = vmatpush1.bf16.msra.mxu0 0
        %6540 = vmatprep.subr.bf16.mxu0 0
        %6541 = vmatpush1.bf16.msra.mxu0 0
        %6542 = vmatprep.subr.bf16.mxu0 0
        %6543 = vmatpush1.bf16.msra.mxu0 0
        %6544 = vmatprep.subr.bf16.mxu0 0
        %6545 = vmatpush1.bf16.msra.mxu0 0
        %6546 = vmatprep.subr.bf16.mxu0 0
        %6547 = vmatpush1.bf16.msra.mxu0 0
        %6548 = vmatprep.subr.bf16.mxu0 0
        %6549 = vmatpush1.bf16.msra.mxu0 0
        %6550 = vmatprep.mubr.bf16.mxu0 0
        %6551 = vmatmul.mubr.bf16.gmra.mrb[0].mxu0 %v6302
        %v6552 = vpop.f32.mrb[0].mxu0
        %v6553 = vadd.f32 0.0, %v6552
        %v6554 = vpop.f32.mrb[0].mxu0
        %v6555 = vadd.f32 0.0, %v6554
        %v6556 = vpop.f32.mrb[0].mxu0
        %v6557 = vpop.f32.mrb[0].mxu0
        %6558 = vdwg.mxu0
        %v6559 = vadd.f32 %v6278, %v6348
        %v6560 = vadd.f32 %v6279, %v6350
        %v6561 = vadd.f32 %v6280, %v6389
        %v6562 = vadd.f32 %v6281, %v6391
        %v6563 = vadd.f32 %v6282, %v6430
        %v6564 = vadd.f32 %v6283, %v6432
        %v6565 = vadd.f32 %v6284, %v6471
        %v6566 = vadd.f32 %v6285, %v6473
        %v6567 = vadd.f32 %v6286, %v6512
        %v6568 = vadd.f32 %v6287, %v6514
        %v6569 = vadd.f32 %v6288, %v6553
        %v6570 = vadd.f32 %v6289, %v6555
        %s6571 = scalar_lea.vmem %s4, 36
        %v6572 = vld [vmem:[%s6571] sm:$0x3]
        %v6574 = vsel %vm1110, %v6572, 0
        %v6577 = vsel %vm1114, %v1051, 0
        %v6580 = vsel %vm1114, %v1052, 0
        %v6583 = vsel %vm1114, %v1053, 0
        %6585 = vmatprep.subr.bf16.mxu0 %v1422
        %6586 = vmatpush1.bf16.msra.mxu0 %v1419
        %6587 = vmatprep.subr.bf16.mxu0 0
        %6588 = vmatpush1.bf16.msra.mxu0 0
        %6589 = vmatprep.subr.bf16.mxu0 0
        %6590 = vmatpush1.bf16.msra.mxu0 0
        %6591 = vmatprep.subr.bf16.mxu0 0
        %6592 = vmatpush1.bf16.msra.mxu0 0
        %6593 = vmatprep.subr.bf16.mxu0 0
        %6594 = vmatpush1.bf16.msra.mxu0 0
        %6595 = vmatprep.subr.bf16.mxu0 0
        %6596 = vmatpush1.bf16.msra.mxu0 0
        %6597 = vmatprep.subr.bf16.mxu0 0
        %6598 = vmatpush1.bf16.msra.mxu0 0
        %6599 = vmatprep.subr.bf16.mxu0 0
        %6600 = vmatpush1.bf16.msra.mxu0 0
        %6601 = vmatprep.subr.bf16.mxu0 0
        %6602 = vmatpush1.bf16.msra.mxu0 0
        %6603 = vmatprep.subr.bf16.mxu0 0
        %6604 = vmatpush1.bf16.msra.mxu0 0
        %6605 = vmatprep.subr.bf16.mxu0 0
        %6606 = vmatpush1.bf16.msra.mxu0 0
        %6607 = vmatprep.subr.bf16.mxu0 0
        %6608 = vmatpush1.bf16.msra.mxu0 0
        %6609 = vmatprep.subr.bf16.mxu0 0
        %6610 = vmatpush1.bf16.msra.mxu0 0
        %6611 = vmatprep.subr.bf16.mxu0 0
        %6612 = vmatpush1.bf16.msra.mxu0 0
        %6613 = vmatprep.subr.bf16.mxu0 0
        %6614 = vmatpush1.bf16.msra.mxu0 0
        %6615 = vmatprep.subr.bf16.mxu0 0
        %6616 = vmatpush1.bf16.msra.mxu0 0
        %6617 = vmatprep.mubr.bf16.mxu0 0
        %6618 = vmatmul.mubr.bf16.gmra.mrb[0].mxu0 %v6574
        %v6619 = vpop.f32.mrb[0].mxu0
        %v6620 = vadd.f32 0.0, %v6619
        %v6621 = vpop.f32.mrb[0].mxu0
        %v6622 = vadd.f32 0.0, %v6621
        %v6623 = vpop.f32.mrb[0].mxu0
        %v6624 = vpop.f32.mrb[0].mxu0
        %6625 = vdwg.mxu0
        %6626 = vmatprep.subr.bf16.mxu0 %v1428
        %6627 = vmatpush1.bf16.msra.mxu0 %v1425
        %6628 = vmatprep.subr.bf16.mxu0 0
        %6629 = vmatpush1.bf16.msra.mxu0 0
        %6630 = vmatprep.subr.bf16.mxu0 0
        %6631 = vmatpush1.bf16.msra.mxu0 0
        %6632 = vmatprep.subr.bf16.mxu0 0
        %6633 = vmatpush1.bf16.msra.mxu0 0
        %6634 = vmatprep.subr.bf16.mxu0 0
        %6635 = vmatpush1.bf16.msra.mxu0 0
        %6636 = vmatprep.subr.bf16.mxu0 0
        %6637 = vmatpush1.bf16.msra.mxu0 0
        %6638 = vmatprep.subr.bf16.mxu0 0
        %6639 = vmatpush1.bf16.msra.mxu0 0
        %6640 = vmatprep.subr.bf16.mxu0 0
        %6641 = vmatpush1.bf16.msra.mxu0 0
        %6642 = vmatprep.subr.bf16.mxu0 0
        %6643 = vmatpush1.bf16.msra.mxu0 0
        %6644 = vmatprep.subr.bf16.mxu0 0
        %6645 = vmatpush1.bf16.msra.mxu0 0
        %6646 = vmatprep.subr.bf16.mxu0 0
        %6647 = vmatpush1.bf16.msra.mxu0 0
        %6648 = vmatprep.subr.bf16.mxu0 0
        %6649 = vmatpush1.bf16.msra.mxu0 0
        %6650 = vmatprep.subr.bf16.mxu0 0
        %6651 = vmatpush1.bf16.msra.mxu0 0
        %6652 = vmatprep.subr.bf16.mxu0 0
        %6653 = vmatpush1.bf16.msra.mxu0 0
        %6654 = vmatprep.subr.bf16.mxu0 0
        %6655 = vmatpush1.bf16.msra.mxu0 0
        %6656 = vmatprep.subr.bf16.mxu0 0
        %6657 = vmatpush1.bf16.msra.mxu0 0
        %6658 = vmatprep.mubr.bf16.mxu0 0
        %6659 = vmatmul.mubr.bf16.gmra.mrb[0].mxu0 %v6574
        %v6660 = vpop.f32.mrb[0].mxu0
        %v6661 = vadd.f32 0.0, %v6660
        %v6662 = vpop.f32.mrb[0].mxu0
        %v6663 = vadd.f32 0.0, %v6662
        %v6664 = vpop.f32.mrb[0].mxu0
        %v6665 = vpop.f32.mrb[0].mxu0
        %6666 = vdwg.mxu0
        %6667 = vmatprep.subr.bf16.mxu0 %v1434
        %6668 = vmatpush1.bf16.msra.mxu0 %v1431
        %6669 = vmatprep.subr.bf16.mxu0 0
        %6670 = vmatpush1.bf16.msra.mxu0 0
        %6671 = vmatprep.subr.bf16.mxu0 0
        %6672 = vmatpush1.bf16.msra.mxu0 0
        %6673 = vmatprep.subr.bf16.mxu0 0
        %6674 = vmatpush1.bf16.msra.mxu0 0
        %6675 = vmatprep.subr.bf16.mxu0 0
        %6676 = vmatpush1.bf16.msra.mxu0 0
        %6677 = vmatprep.subr.bf16.mxu0 0
        %6678 = vmatpush1.bf16.msra.mxu0 0
        %6679 = vmatprep.subr.bf16.mxu0 0
        %6680 = vmatpush1.bf16.msra.mxu0 0
        %6681 = vmatprep.subr.bf16.mxu0 0
        %6682 = vmatpush1.bf16.msra.mxu0 0
        %6683 = vmatprep.subr.bf16.mxu0 0
        %6684 = vmatpush1.bf16.msra.mxu0 0
        %6685 = vmatprep.subr.bf16.mxu0 0
        %6686 = vmatpush1.bf16.msra.mxu0 0
        %6687 = vmatprep.subr.bf16.mxu0 0
        %6688 = vmatpush1.bf16.msra.mxu0 0
        %6689 = vmatprep.subr.bf16.mxu0 0
        %6690 = vmatpush1.bf16.msra.mxu0 0
        %6691 = vmatprep.subr.bf16.mxu0 0
        %6692 = vmatpush1.bf16.msra.mxu0 0
        %6693 = vmatprep.subr.bf16.mxu0 0
        %6694 = vmatpush1.bf16.msra.mxu0 0
        %6695 = vmatprep.subr.bf16.mxu0 0
        %6696 = vmatpush1.bf16.msra.mxu0 0
        %6697 = vmatprep.subr.bf16.mxu0 0
        %6698 = vmatpush1.bf16.msra.mxu0 0
        %6699 = vmatprep.mubr.bf16.mxu0 0
        %6700 = vmatmul.mubr.bf16.gmra.mrb[0].mxu0 %v6574
        %v6701 = vpop.f32.mrb[0].mxu0
        %v6702 = vadd.f32 0.0, %v6701
        %v6703 = vpop.f32.mrb[0].mxu0
        %v6704 = vadd.f32 0.0, %v6703
        %v6705 = vpop.f32.mrb[0].mxu0
        %v6706 = vpop.f32.mrb[0].mxu0
        %6707 = vdwg.mxu0
        %6708 = vmatprep.subr.bf16.mxu0 %v4057
        %6709 = vmatpush1.bf16.msra.mxu0 %v4054
        %6710 = vmatprep.subr.bf16.mxu0 0
        %6711 = vmatpush1.bf16.msra.mxu0 0
        %6712 = vmatprep.subr.bf16.mxu0 0
        %6713 = vmatpush1.bf16.msra.mxu0 0
        %6714 = vmatprep.subr.bf16.mxu0 0
        %6715 = vmatpush1.bf16.msra.mxu0 0
        %6716 = vmatprep.subr.bf16.mxu0 0
        %6717 = vmatpush1.bf16.msra.mxu0 0
        %6718 = vmatprep.subr.bf16.mxu0 0
        %6719 = vmatpush1.bf16.msra.mxu0 0
        %6720 = vmatprep.subr.bf16.mxu0 0
        %6721 = vmatpush1.bf16.msra.mxu0 0
        %6722 = vmatprep.subr.bf16.mxu0 0
        %6723 = vmatpush1.bf16.msra.mxu0 0
        %6724 = vmatprep.subr.bf16.mxu0 0
        %6725 = vmatpush1.bf16.msra.mxu0 0
        %6726 = vmatprep.subr.bf16.mxu0 0
        %6727 = vmatpush1.bf16.msra.mxu0 0
        %6728 = vmatprep.subr.bf16.mxu0 0
        %6729 = vmatpush1.bf16.msra.mxu0 0
        %6730 = vmatprep.subr.bf16.mxu0 0
        %6731 = vmatpush1.bf16.msra.mxu0 0
        %6732 = vmatprep.subr.bf16.mxu0 0
        %6733 = vmatpush1.bf16.msra.mxu0 0
        %6734 = vmatprep.subr.bf16.mxu0 0
        %6735 = vmatpush1.bf16.msra.mxu0 0
        %6736 = vmatprep.subr.bf16.mxu0 0
        %6737 = vmatpush1.bf16.msra.mxu0 0
        %6738 = vmatprep.subr.bf16.mxu0 0
        %6739 = vmatpush1.bf16.msra.mxu0 0
        %6740 = vmatprep.mubr.bf16.mxu0 0
        %6741 = vmatmul.mubr.bf16.gmra.mrb[0].mxu0 %v6574
        %v6742 = vpop.f32.mrb[0].mxu0
        %v6743 = vadd.f32 0.0, %v6742
        %v6744 = vpop.f32.mrb[0].mxu0
        %v6745 = vadd.f32 0.0, %v6744
        %v6746 = vpop.f32.mrb[0].mxu0
        %v6747 = vpop.f32.mrb[0].mxu0
        %6748 = vdwg.mxu0
        %6749 = vmatprep.subr.bf16.mxu0 %v6577
        %6750 = vmatpush1.bf16.msra.mxu0 %v4060
        %6751 = vmatprep.subr.bf16.mxu0 0
        %6752 = vmatpush1.bf16.msra.mxu0 0
        %6753 = vmatprep.subr.bf16.mxu0 0
        %6754 = vmatpush1.bf16.msra.mxu0 0
        %6755 = vmatprep.subr.bf16.mxu0 0
        %6756 = vmatpush1.bf16.msra.mxu0 0
        %6757 = vmatprep.subr.bf16.mxu0 0
        %6758 = vmatpush1.bf16.msra.mxu0 0
        %6759 = vmatprep.subr.bf16.mxu0 0
        %6760 = vmatpush1.bf16.msra.mxu0 0
        %6761 = vmatprep.subr.bf16.mxu0 0
        %6762 = vmatpush1.bf16.msra.mxu0 0
        %6763 = vmatprep.subr.bf16.mxu0 0
        %6764 = vmatpush1.bf16.msra.mxu0 0
        %6765 = vmatprep.subr.bf16.mxu0 0
        %6766 = vmatpush1.bf16.msra.mxu0 0
        %6767 = vmatprep.subr.bf16.mxu0 0
        %6768 = vmatpush1.bf16.msra.mxu0 0
        %6769 = vmatprep.subr.bf16.mxu0 0
        %6770 = vmatpush1.bf16.msra.mxu0 0
        %6771 = vmatprep.subr.bf16.mxu0 0
        %6772 = vmatpush1.bf16.msra.mxu0 0
        %6773 = vmatprep.subr.bf16.mxu0 0
        %6774 = vmatpush1.bf16.msra.mxu0 0
        %6775 = vmatprep.subr.bf16.mxu0 0
        %6776 = vmatpush1.bf16.msra.mxu0 0
        %6777 = vmatprep.subr.bf16.mxu0 0
        %6778 = vmatpush1.bf16.msra.mxu0 0
        %6779 = vmatprep.subr.bf16.mxu0 0
        %6780 = vmatpush1.bf16.msra.mxu0 0
        %6781 = vmatprep.mubr.bf16.mxu0 0
        %6782 = vmatmul.mubr.bf16.gmra.mrb[0].mxu0 %v6574
        %v6783 = vpop.f32.mrb[0].mxu0
        %v6784 = vadd.f32 0.0, %v6783
        %v6785 = vpop.f32.mrb[0].mxu0
        %v6786 = vadd.f32 0.0, %v6785
        %v6787 = vpop.f32.mrb[0].mxu0
        %v6788 = vpop.f32.mrb[0].mxu0
        %6789 = vdwg.mxu0
        %6790 = vmatprep.subr.bf16.mxu0 %v6583
        %6791 = vmatpush1.bf16.msra.mxu0 %v6580
        %6792 = vmatprep.subr.bf16.mxu0 0
        %6793 = vmatpush1.bf16.msra.mxu0 0
        %6794 = vmatprep.subr.bf16.mxu0 0
        %6795 = vmatpush1.bf16.msra.mxu0 0
        %6796 = vmatprep.subr.bf16.mxu0 0
        %6797 = vmatpush1.bf16.msra.mxu0 0
        %6798 = vmatprep.subr.bf16.mxu0 0
        %6799 = vmatpush1.bf16.msra.mxu0 0
        %6800 = vmatprep.subr.bf16.mxu0 0
        %6801 = vmatpush1.bf16.msra.mxu0 0
        %6802 = vmatprep.subr.bf16.mxu0 0
        %6803 = vmatpush1.bf16.msra.mxu0 0
        %6804 = vmatprep.subr.bf16.mxu0 0
        %6805 = vmatpush1.bf16.msra.mxu0 0
        %6806 = vmatprep.subr.bf16.mxu0 0
        %6807 = vmatpush1.bf16.msra.mxu0 0
        %6808 = vmatprep.subr.bf16.mxu0 0
        %6809 = vmatpush1.bf16.msra.mxu0 0
        %6810 = vmatprep.subr.bf16.mxu0 0
        %6811 = vmatpush1.bf16.msra.mxu0 0
        %6812 = vmatprep.subr.bf16.mxu0 0
        %6813 = vmatpush1.bf16.msra.mxu0 0
        %6814 = vmatprep.subr.bf16.mxu0 0
        %6815 = vmatpush1.bf16.msra.mxu0 0
        %6816 = vmatprep.subr.bf16.mxu0 0
        %6817 = vmatpush1.bf16.msra.mxu0 0
        %6818 = vmatprep.subr.bf16.mxu0 0
        %6819 = vmatpush1.bf16.msra.mxu0 0
        %6820 = vmatprep.subr.bf16.mxu0 0
        %6821 = vmatpush1.bf16.msra.mxu0 0
        %6822 = vmatprep.mubr.bf16.mxu0 0
        %6823 = vmatmul.mubr.bf16.gmra.mrb[0].mxu0 %v6574
        %v6824 = vpop.f32.mrb[0].mxu0
        %v6825 = vadd.f32 0.0, %v6824
        %v6826 = vpop.f32.mrb[0].mxu0
        %v6827 = vadd.f32 0.0, %v6826
        %v6828 = vpop.f32.mrb[0].mxu0
        %v6829 = vpop.f32.mrb[0].mxu0
        %6830 = vdwg.mxu0
        %v6831 = vadd.f32 %v6559, %v6620
        %v6832 = vadd.f32 %v6560, %v6622
        %v6833 = vadd.f32 %v6561, %v6661
        %v6834 = vadd.f32 %v6562, %v6663
        %v6835 = vadd.f32 %v6563, %v6702
        %v6836 = vadd.f32 %v6564, %v6704
        %v6837 = vadd.f32 %v6565, %v6743
        %v6838 = vadd.f32 %v6566, %v6745
        %v6839 = vadd.f32 %v6567, %v6784
        %v6840 = vadd.f32 %v6568, %v6786
        %v6841 = vadd.f32 %v6569, %v6825
        %v6842 = vadd.f32 %v6570, %v6827
        %s6843 = scalar_lea.vmem %s4, 38
        %v6844 = vld [vmem:[%s6843] sm:$0x3]
        %6848 = vrot.lane.b32.xlu0 %v1052, 127
        %v6849 = vpop.permute.xlu0 %6848
        %6850 = vrot.lane.b32.xlu0 %v1053, 127
        %v6851 = vpop.permute.xlu0 %6850
        %6852 = vrot.lane.b32.xlu0 %v1054, 127
        %v6853 = vpop.permute.xlu0 %6852
        %v6854 = vsel %vm1097, %v4330, %v6849
        %v6855 = vsel %vm1097, %v6849, %v6851
        %v6856 = vsel %vm1097, %v6851, %v6853
        %v6858 = vsel %vm1110, %v6844, 0
        %v6861 = vsel %vm1114, %v6854, 0
        %v6864 = vsel %vm1114, %v6855, 0
        %v6867 = vsel %vm1114, %v6856, 0
        %6869 = vmatprep.subr.bf16.mxu0 %v1137
        %6870 = vmatpush1.bf16.msra.mxu0 %v1134
        %6871 = vmatprep.subr.bf16.mxu0 0
        %6872 = vmatpush1.bf16.msra.mxu0 0
        %6873 = vmatprep.subr.bf16.mxu0 0
        %6874 = vmatpush1.bf16.msra.mxu0 0
        %6875 = vmatprep.subr.bf16.mxu0 0
        %6876 = vmatpush1.bf16.msra.mxu0 0
        %6877 = vmatprep.subr.bf16.mxu0 0
        %6878 = vmatpush1.bf16.msra.mxu0 0
        %6879 = vmatprep.subr.bf16.mxu0 0
        %6880 = vmatpush1.bf16.msra.mxu0 0
        %6881 = vmatprep.subr.bf16.mxu0 0
        %6882 = vmatpush1.bf16.msra.mxu0 0
        %6883 = vmatprep.subr.bf16.mxu0 0
        %6884 = vmatpush1.bf16.msra.mxu0 0
        %6885 = vmatprep.subr.bf16.mxu0 0
        %6886 = vmatpush1.bf16.msra.mxu0 0
        %6887 = vmatprep.subr.bf16.mxu0 0
        %6888 = vmatpush1.bf16.msra.mxu0 0
        %6889 = vmatprep.subr.bf16.mxu0 0
        %6890 = vmatpush1.bf16.msra.mxu0 0
        %6891 = vmatprep.subr.bf16.mxu0 0
        %6892 = vmatpush1.bf16.msra.mxu0 0
        %6893 = vmatprep.subr.bf16.mxu0 0
        %6894 = vmatpush1.bf16.msra.mxu0 0
        %6895 = vmatprep.subr.bf16.mxu0 0
        %6896 = vmatpush1.bf16.msra.mxu0 0
        %6897 = vmatprep.subr.bf16.mxu0 0
        %6898 = vmatpush1.bf16.msra.mxu0 0
        %6899 = vmatprep.subr.bf16.mxu0 0
        %6900 = vmatpush1.bf16.msra.mxu0 0
        %6901 = vmatprep.mubr.bf16.mxu0 0
        %6902 = vmatmul.mubr.bf16.gmra.mrb[0].mxu0 %v6858
        %v6903 = vpop.f32.mrb[0].mxu0
        %v6904 = vadd.f32 0.0, %v6903
        %v6905 = vpop.f32.mrb[0].mxu0
        %v6906 = vadd.f32 0.0, %v6905
        %v6907 = vpop.f32.mrb[0].mxu0
        %v6908 = vpop.f32.mrb[0].mxu0
        %6909 = vdwg.mxu0
        %6910 = vmatprep.subr.bf16.mxu0 %v1143
        %6911 = vmatpush1.bf16.msra.mxu0 %v1140
        %6912 = vmatprep.subr.bf16.mxu0 0
        %6913 = vmatpush1.bf16.msra.mxu0 0
        %6914 = vmatprep.subr.bf16.mxu0 0
        %6915 = vmatpush1.bf16.msra.mxu0 0
        %6916 = vmatprep.subr.bf16.mxu0 0
        %6917 = vmatpush1.bf16.msra.mxu0 0
        %6918 = vmatprep.subr.bf16.mxu0 0
        %6919 = vmatpush1.bf16.msra.mxu0 0
        %6920 = vmatprep.subr.bf16.mxu0 0
        %6921 = vmatpush1.bf16.msra.mxu0 0
        %6922 = vmatprep.subr.bf16.mxu0 0
        %6923 = vmatpush1.bf16.msra.mxu0 0
        %6924 = vmatprep.subr.bf16.mxu0 0
        %6925 = vmatpush1.bf16.msra.mxu0 0
        %6926 = vmatprep.subr.bf16.mxu0 0
        %6927 = vmatpush1.bf16.msra.mxu0 0
        %6928 = vmatprep.subr.bf16.mxu0 0
        %6929 = vmatpush1.bf16.msra.mxu0 0
        %6930 = vmatprep.subr.bf16.mxu0 0
        %6931 = vmatpush1.bf16.msra.mxu0 0
        %6932 = vmatprep.subr.bf16.mxu0 0
        %6933 = vmatpush1.bf16.msra.mxu0 0
        %6934 = vmatprep.subr.bf16.mxu0 0
        %6935 = vmatpush1.bf16.msra.mxu0 0
        %6936 = vmatprep.subr.bf16.mxu0 0
        %6937 = vmatpush1.bf16.msra.mxu0 0
        %6938 = vmatprep.subr.bf16.mxu0 0
        %6939 = vmatpush1.bf16.msra.mxu0 0
        %6940 = vmatprep.subr.bf16.mxu0 0
        %6941 = vmatpush1.bf16.msra.mxu0 0
        %6942 = vmatprep.mubr.bf16.mxu0 0
        %6943 = vmatmul.mubr.bf16.gmra.mrb[0].mxu0 %v6858
        %v6944 = vpop.f32.mrb[0].mxu0
        %v6945 = vadd.f32 0.0, %v6944
        %v6946 = vpop.f32.mrb[0].mxu0
        %v6947 = vadd.f32 0.0, %v6946
        %v6948 = vpop.f32.mrb[0].mxu0
        %v6949 = vpop.f32.mrb[0].mxu0
        %6950 = vdwg.mxu0
        %6951 = vmatprep.subr.bf16.mxu0 %v1149
        %6952 = vmatpush1.bf16.msra.mxu0 %v1146
        %6953 = vmatprep.subr.bf16.mxu0 0
        %6954 = vmatpush1.bf16.msra.mxu0 0
        %6955 = vmatprep.subr.bf16.mxu0 0
        %6956 = vmatpush1.bf16.msra.mxu0 0
        %6957 = vmatprep.subr.bf16.mxu0 0
        %6958 = vmatpush1.bf16.msra.mxu0 0
        %6959 = vmatprep.subr.bf16.mxu0 0
        %6960 = vmatpush1.bf16.msra.mxu0 0
        %6961 = vmatprep.subr.bf16.mxu0 0
        %6962 = vmatpush1.bf16.msra.mxu0 0
        %6963 = vmatprep.subr.bf16.mxu0 0
        %6964 = vmatpush1.bf16.msra.mxu0 0
        %6965 = vmatprep.subr.bf16.mxu0 0
        %6966 = vmatpush1.bf16.msra.mxu0 0
        %6967 = vmatprep.subr.bf16.mxu0 0
        %6968 = vmatpush1.bf16.msra.mxu0 0
        %6969 = vmatprep.subr.bf16.mxu0 0
        %6970 = vmatpush1.bf16.msra.mxu0 0
        %6971 = vmatprep.subr.bf16.mxu0 0
        %6972 = vmatpush1.bf16.msra.mxu0 0
        %6973 = vmatprep.subr.bf16.mxu0 0
        %6974 = vmatpush1.bf16.msra.mxu0 0
        %6975 = vmatprep.subr.bf16.mxu0 0
        %6976 = vmatpush1.bf16.msra.mxu0 0
        %6977 = vmatprep.subr.bf16.mxu0 0
        %6978 = vmatpush1.bf16.msra.mxu0 0
        %6979 = vmatprep.subr.bf16.mxu0 0
        %6980 = vmatpush1.bf16.msra.mxu0 0
        %6981 = vmatprep.subr.bf16.mxu0 0
        %6982 = vmatpush1.bf16.msra.mxu0 0
        %6983 = vmatprep.mubr.bf16.mxu0 0
        %6984 = vmatmul.mubr.bf16.gmra.mrb[0].mxu0 %v6858
        %v6985 = vpop.f32.mrb[0].mxu0
        %v6986 = vadd.f32 0.0, %v6985
        %v6987 = vpop.f32.mrb[0].mxu0
        %v6988 = vadd.f32 0.0, %v6987
        %v6989 = vpop.f32.mrb[0].mxu0
        %v6990 = vpop.f32.mrb[0].mxu0
        %6991 = vdwg.mxu0
        %6992 = vmatprep.subr.bf16.mxu0 %v4341
        %6993 = vmatpush1.bf16.msra.mxu0 %v4338
        %6994 = vmatprep.subr.bf16.mxu0 0
        %6995 = vmatpush1.bf16.msra.mxu0 0
        %6996 = vmatprep.subr.bf16.mxu0 0
        %6997 = vmatpush1.bf16.msra.mxu0 0
        %6998 = vmatprep.subr.bf16.mxu0 0
        %6999 = vmatpush1.bf16.msra.mxu0 0
        %7000 = vmatprep.subr.bf16.mxu0 0
        %7001 = vmatpush1.bf16.msra.mxu0 0
        %7002 = vmatprep.subr.bf16.mxu0 0
        %7003 = vmatpush1.bf16.msra.mxu0 0
        %7004 = vmatprep.subr.bf16.mxu0 0
        %7005 = vmatpush1.bf16.msra.mxu0 0
        %7006 = vmatprep.subr.bf16.mxu0 0
        %7007 = vmatpush1.bf16.msra.mxu0 0
        %7008 = vmatprep.subr.bf16.mxu0 0
        %7009 = vmatpush1.bf16.msra.mxu0 0
        %7010 = vmatprep.subr.bf16.mxu0 0
        %7011 = vmatpush1.bf16.msra.mxu0 0
        %7012 = vmatprep.subr.bf16.mxu0 0
        %7013 = vmatpush1.bf16.msra.mxu0 0
        %7014 = vmatprep.subr.bf16.mxu0 0
        %7015 = vmatpush1.bf16.msra.mxu0 0
        %7016 = vmatprep.subr.bf16.mxu0 0
        %7017 = vmatpush1.bf16.msra.mxu0 0
        %7018 = vmatprep.subr.bf16.mxu0 0
        %7019 = vmatpush1.bf16.msra.mxu0 0
        %7020 = vmatprep.subr.bf16.mxu0 0
        %7021 = vmatpush1.bf16.msra.mxu0 0
        %7022 = vmatprep.subr.bf16.mxu0 0
        %7023 = vmatpush1.bf16.msra.mxu0 0
        %7024 = vmatprep.mubr.bf16.mxu0 0
        %7025 = vmatmul.mubr.bf16.gmra.mrb[0].mxu0 %v6858
        %v7026 = vpop.f32.mrb[0].mxu0
        %v7027 = vadd.f32 0.0, %v7026
        %v7028 = vpop.f32.mrb[0].mxu0
        %v7029 = vadd.f32 0.0, %v7028
        %v7030 = vpop.f32.mrb[0].mxu0
        %v7031 = vpop.f32.mrb[0].mxu0
        %7032 = vdwg.mxu0
        %7033 = vmatprep.subr.bf16.mxu0 %v6861
        %7034 = vmatpush1.bf16.msra.mxu0 %v4344
        %7035 = vmatprep.subr.bf16.mxu0 0
        %7036 = vmatpush1.bf16.msra.mxu0 0
        %7037 = vmatprep.subr.bf16.mxu0 0
        %7038 = vmatpush1.bf16.msra.mxu0 0
        %7039 = vmatprep.subr.bf16.mxu0 0
        %7040 = vmatpush1.bf16.msra.mxu0 0
        %7041 = vmatprep.subr.bf16.mxu0 0
        %7042 = vmatpush1.bf16.msra.mxu0 0
        %7043 = vmatprep.subr.bf16.mxu0 0
        %7044 = vmatpush1.bf16.msra.mxu0 0
        %7045 = vmatprep.subr.bf16.mxu0 0
        %7046 = vmatpush1.bf16.msra.mxu0 0
        %7047 = vmatprep.subr.bf16.mxu0 0
        %7048 = vmatpush1.bf16.msra.mxu0 0
        %7049 = vmatprep.subr.bf16.mxu0 0
        %7050 = vmatpush1.bf16.msra.mxu0 0
        %7051 = vmatprep.subr.bf16.mxu0 0
        %7052 = vmatpush1.bf16.msra.mxu0 0
        %7053 = vmatprep.subr.bf16.mxu0 0
        %7054 = vmatpush1.bf16.msra.mxu0 0
        %7055 = vmatprep.subr.bf16.mxu0 0
        %7056 = vmatpush1.bf16.msra.mxu0 0
        %7057 = vmatprep.subr.bf16.mxu0 0
        %7058 = vmatpush1.bf16.msra.mxu0 0
        %7059 = vmatprep.subr.bf16.mxu0 0
        %7060 = vmatpush1.bf16.msra.mxu0 0
        %7061 = vmatprep.subr.bf16.mxu0 0
        %7062 = vmatpush1.bf16.msra.mxu0 0
        %7063 = vmatprep.subr.bf16.mxu0 0
        %7064 = vmatpush1.bf16.msra.mxu0 0
        %7065 = vmatprep.mubr.bf16.mxu0 0
        %7066 = vmatmul.mubr.bf16.gmra.mrb[0].mxu0 %v6858
        %v7067 = vpop.f32.mrb[0].mxu0
        %v7068 = vadd.f32 0.0, %v7067
        %v7069 = vpop.f32.mrb[0].mxu0
        %v7070 = vadd.f32 0.0, %v7069
        %v7071 = vpop.f32.mrb[0].mxu0
        %v7072 = vpop.f32.mrb[0].mxu0
        %7073 = vdwg.mxu0
        %7074 = vmatprep.subr.bf16.mxu0 %v6867
        %7075 = vmatpush1.bf16.msra.mxu0 %v6864
        %7076 = vmatprep.subr.bf16.mxu0 0
        %7077 = vmatpush1.bf16.msra.mxu0 0
        %7078 = vmatprep.subr.bf16.mxu0 0
        %7079 = vmatpush1.bf16.msra.mxu0 0
        %7080 = vmatprep.subr.bf16.mxu0 0
        %7081 = vmatpush1.bf16.msra.mxu0 0
        %7082 = vmatprep.subr.bf16.mxu0 0
        %7083 = vmatpush1.bf16.msra.mxu0 0
        %7084 = vmatprep.subr.bf16.mxu0 0
        %7085 = vmatpush1.bf16.msra.mxu0 0
        %7086 = vmatprep.subr.bf16.mxu0 0
        %7087 = vmatpush1.bf16.msra.mxu0 0
        %7088 = vmatprep.subr.bf16.mxu0 0
        %7089 = vmatpush1.bf16.msra.mxu0 0
        %7090 = vmatprep.subr.bf16.mxu0 0
        %7091 = vmatpush1.bf16.msra.mxu0 0
        %7092 = vmatprep.subr.bf16.mxu0 0
        %7093 = vmatpush1.bf16.msra.mxu0 0
        %7094 = vmatprep.subr.bf16.mxu0 0
        %7095 = vmatpush1.bf16.msra.mxu0 0
        %7096 = vmatprep.subr.bf16.mxu0 0
        %7097 = vmatpush1.bf16.msra.mxu0 0
        %7098 = vmatprep.subr.bf16.mxu0 0
        %7099 = vmatpush1.bf16.msra.mxu0 0
        %7100 = vmatprep.subr.bf16.mxu0 0
        %7101 = vmatpush1.bf16.msra.mxu0 0
        %7102 = vmatprep.subr.bf16.mxu0 0
        %7103 = vmatpush1.bf16.msra.mxu0 0
        %7104 = vmatprep.subr.bf16.mxu0 0
        %7105 = vmatpush1.bf16.msra.mxu0 0
        %7106 = vmatprep.mubr.bf16.mxu0 0
        %7107 = vmatmul.mubr.bf16.gmra.mrb[0].mxu0 %v6858
        %v7108 = vpop.f32.mrb[0].mxu0
        %v7109 = vadd.f32 0.0, %v7108
        %v7110 = vpop.f32.mrb[0].mxu0
        %v7111 = vadd.f32 0.0, %v7110
        %v7112 = vpop.f32.mrb[0].mxu0
        %v7113 = vpop.f32.mrb[0].mxu0
        %7114 = vdwg.mxu0
        %v7115 = vadd.f32 %v6831, %v6904
        %v7116 = vadd.f32 %v6832, %v6906
        %v7117 = vadd.f32 %v6833, %v6945
        %v7118 = vadd.f32 %v6834, %v6947
        %v7119 = vadd.f32 %v6835, %v6986
        %v7120 = vadd.f32 %v6836, %v6988
        %v7121 = vadd.f32 %v6837, %v7027
        %v7122 = vadd.f32 %v6838, %v7029
        %v7123 = vadd.f32 %v6839, %v7068
        %v7124 = vadd.f32 %v6840, %v7070
        %v7125 = vadd.f32 %v6841, %v7109
        %v7126 = vadd.f32 %v6842, %v7111
        %s7127 = scalar_lea.vmem %s4, 40
        %v7128 = vld [vmem:[%s7127] sm:$0x3]
        %7129 = vrot.lane.b32.xlu0 %v1052, 126
        %v7130 = vpop.permute.xlu0 %7129
        %7131 = vrot.lane.b32.xlu0 %v1053, 126
        %v7132 = vpop.permute.xlu0 %7131
        %7133 = vrot.lane.b32.xlu0 %v1054, 126
        %v7134 = vpop.permute.xlu0 %7133
        %v7135 = vsel %vm1710, %v4611, %v7130
        %v7136 = vsel %vm1710, %v7130, %v7132
        %v7137 = vsel %vm1710, %v7132, %v7134
        %v7139 = vsel %vm1110, %v7128, 0
        %v7142 = vsel %vm1114, %v7135, 0
        %v7145 = vsel %vm1114, %v7136, 0
        %v7148 = vsel %vm1114, %v7137, 0
        %7150 = vmatprep.subr.bf16.mxu0 %v1748
        %7151 = vmatpush1.bf16.msra.mxu0 %v1745
        %7152 = vmatprep.subr.bf16.mxu0 0
        %7153 = vmatpush1.bf16.msra.mxu0 0
        %7154 = vmatprep.subr.bf16.mxu0 0
        %7155 = vmatpush1.bf16.msra.mxu0 0
        %7156 = vmatprep.subr.bf16.mxu0 0
        %7157 = vmatpush1.bf16.msra.mxu0 0
        %7158 = vmatprep.subr.bf16.mxu0 0
        %7159 = vmatpush1.bf16.msra.mxu0 0
        %7160 = vmatprep.subr.bf16.mxu0 0
        %7161 = vmatpush1.bf16.msra.mxu0 0
        %7162 = vmatprep.subr.bf16.mxu0 0
        %7163 = vmatpush1.bf16.msra.mxu0 0
        %7164 = vmatprep.subr.bf16.mxu0 0
        %7165 = vmatpush1.bf16.msra.mxu0 0
        %7166 = vmatprep.subr.bf16.mxu0 0
        %7167 = vmatpush1.bf16.msra.mxu0 0
        %7168 = vmatprep.subr.bf16.mxu0 0
        %7169 = vmatpush1.bf16.msra.mxu0 0
        %7170 = vmatprep.subr.bf16.mxu0 0
        %7171 = vmatpush1.bf16.msra.mxu0 0
        %7172 = vmatprep.subr.bf16.mxu0 0
        %7173 = vmatpush1.bf16.msra.mxu0 0
        %7174 = vmatprep.subr.bf16.mxu0 0
        %7175 = vmatpush1.bf16.msra.mxu0 0
        %7176 = vmatprep.subr.bf16.mxu0 0
        %7177 = vmatpush1.bf16.msra.mxu0 0
        %7178 = vmatprep.subr.bf16.mxu0 0
        %7179 = vmatpush1.bf16.msra.mxu0 0
        %7180 = vmatprep.subr.bf16.mxu0 0
        %7181 = vmatpush1.bf16.msra.mxu0 0
        %7182 = vmatprep.mubr.bf16.mxu0 0
        %7183 = vmatmul.mubr.bf16.gmra.mrb[0].mxu0 %v7139
        %v7184 = vpop.f32.mrb[0].mxu0
        %v7185 = vadd.f32 0.0, %v7184
        %v7186 = vpop.f32.mrb[0].mxu0
        %v7187 = vadd.f32 0.0, %v7186
        %v7188 = vpop.f32.mrb[0].mxu0
        %v7189 = vpop.f32.mrb[0].mxu0
        %7190 = vdwg.mxu0
        %7191 = vmatprep.subr.bf16.mxu0 %v1754
        %7192 = vmatpush1.bf16.msra.mxu0 %v1751
        %7193 = vmatprep.subr.bf16.mxu0 0
        %7194 = vmatpush1.bf16.msra.mxu0 0
        %7195 = vmatprep.subr.bf16.mxu0 0
        %7196 = vmatpush1.bf16.msra.mxu0 0
        %7197 = vmatprep.subr.bf16.mxu0 0
        %7198 = vmatpush1.bf16.msra.mxu0 0
        %7199 = vmatprep.subr.bf16.mxu0 0
        %7200 = vmatpush1.bf16.msra.mxu0 0
        %7201 = vmatprep.subr.bf16.mxu0 0
        %7202 = vmatpush1.bf16.msra.mxu0 0
        %7203 = vmatprep.subr.bf16.mxu0 0
        %7204 = vmatpush1.bf16.msra.mxu0 0
        %7205 = vmatprep.subr.bf16.mxu0 0
        %7206 = vmatpush1.bf16.msra.mxu0 0
        %7207 = vmatprep.subr.bf16.mxu0 0
        %7208 = vmatpush1.bf16.msra.mxu0 0
        %7209 = vmatprep.subr.bf16.mxu0 0
        %7210 = vmatpush1.bf16.msra.mxu0 0
        %7211 = vmatprep.subr.bf16.mxu0 0
        %7212 = vmatpush1.bf16.msra.mxu0 0
        %7213 = vmatprep.subr.bf16.mxu0 0
        %7214 = vmatpush1.bf16.msra.mxu0 0
        %7215 = vmatprep.subr.bf16.mxu0 0
        %7216 = vmatpush1.bf16.msra.mxu0 0
        %7217 = vmatprep.subr.bf16.mxu0 0
        %7218 = vmatpush1.bf16.msra.mxu0 0
        %7219 = vmatprep.subr.bf16.mxu0 0
        %7220 = vmatpush1.bf16.msra.mxu0 0
        %7221 = vmatprep.subr.bf16.mxu0 0
        %7222 = vmatpush1.bf16.msra.mxu0 0
        %7223 = vmatprep.mubr.bf16.mxu0 0
        %7224 = vmatmul.mubr.bf16.gmra.mrb[0].mxu0 %v7139
        %v7225 = vpop.f32.mrb[0].mxu0
        %v7226 = vadd.f32 0.0, %v7225
        %v7227 = vpop.f32.mrb[0].mxu0
        %v7228 = vadd.f32 0.0, %v7227
        %v7229 = vpop.f32.mrb[0].mxu0
        %v7230 = vpop.f32.mrb[0].mxu0
        %7231 = vdwg.mxu0
        %7232 = vmatprep.subr.bf16.mxu0 %v1760
        %7233 = vmatpush1.bf16.msra.mxu0 %v1757
        %7234 = vmatprep.subr.bf16.mxu0 0
        %7235 = vmatpush1.bf16.msra.mxu0 0
        %7236 = vmatprep.subr.bf16.mxu0 0
        %7237 = vmatpush1.bf16.msra.mxu0 0
        %7238 = vmatprep.subr.bf16.mxu0 0
        %7239 = vmatpush1.bf16.msra.mxu0 0
        %7240 = vmatprep.subr.bf16.mxu0 0
        %7241 = vmatpush1.bf16.msra.mxu0 0
        %7242 = vmatprep.subr.bf16.mxu0 0
        %7243 = vmatpush1.bf16.msra.mxu0 0
        %7244 = vmatprep.subr.bf16.mxu0 0
        %7245 = vmatpush1.bf16.msra.mxu0 0
        %7246 = vmatprep.subr.bf16.mxu0 0
        %7247 = vmatpush1.bf16.msra.mxu0 0
        %7248 = vmatprep.subr.bf16.mxu0 0
        %7249 = vmatpush1.bf16.msra.mxu0 0
        %7250 = vmatprep.subr.bf16.mxu0 0
        %7251 = vmatpush1.bf16.msra.mxu0 0
        %7252 = vmatprep.subr.bf16.mxu0 0
        %7253 = vmatpush1.bf16.msra.mxu0 0
        %7254 = vmatprep.subr.bf16.mxu0 0
        %7255 = vmatpush1.bf16.msra.mxu0 0
        %7256 = vmatprep.subr.bf16.mxu0 0
        %7257 = vmatpush1.bf16.msra.mxu0 0
        %7258 = vmatprep.subr.bf16.mxu0 0
        %7259 = vmatpush1.bf16.msra.mxu0 0
        %7260 = vmatprep.subr.bf16.mxu0 0
        %7261 = vmatpush1.bf16.msra.mxu0 0
        %7262 = vmatprep.subr.bf16.mxu0 0
        %7263 = vmatpush1.bf16.msra.mxu0 0
        %7264 = vmatprep.mubr.bf16.mxu0 0
        %7265 = vmatmul.mubr.bf16.gmra.mrb[0].mxu0 %v7139
        %v7266 = vpop.f32.mrb[0].mxu0
        %v7267 = vadd.f32 0.0, %v7266
        %v7268 = vpop.f32.mrb[0].mxu0
        %v7269 = vadd.f32 0.0, %v7268
        %v7270 = vpop.f32.mrb[0].mxu0
        %v7271 = vpop.f32.mrb[0].mxu0
        %7272 = vdwg.mxu0
        %7273 = vmatprep.subr.bf16.mxu0 %v4622
        %7274 = vmatpush1.bf16.msra.mxu0 %v4619
        %7275 = vmatprep.subr.bf16.mxu0 0
        %7276 = vmatpush1.bf16.msra.mxu0 0
        %7277 = vmatprep.subr.bf16.mxu0 0
        %7278 = vmatpush1.bf16.msra.mxu0 0
        %7279 = vmatprep.subr.bf16.mxu0 0
        %7280 = vmatpush1.bf16.msra.mxu0 0
        %7281 = vmatprep.subr.bf16.mxu0 0
        %7282 = vmatpush1.bf16.msra.mxu0 0
        %7283 = vmatprep.subr.bf16.mxu0 0
        %7284 = vmatpush1.bf16.msra.mxu0 0
        %7285 = vmatprep.subr.bf16.mxu0 0
        %7286 = vmatpush1.bf16.msra.mxu0 0
        %7287 = vmatprep.subr.bf16.mxu0 0
        %7288 = vmatpush1.bf16.msra.mxu0 0
        %7289 = vmatprep.subr.bf16.mxu0 0
        %7290 = vmatpush1.bf16.msra.mxu0 0
        %7291 = vmatprep.subr.bf16.mxu0 0
        %7292 = vmatpush1.bf16.msra.mxu0 0
        %7293 = vmatprep.subr.bf16.mxu0 0
        %7294 = vmatpush1.bf16.msra.mxu0 0
        %7295 = vmatprep.subr.bf16.mxu0 0
        %7296 = vmatpush1.bf16.msra.mxu0 0
        %7297 = vmatprep.subr.bf16.mxu0 0
        %7298 = vmatpush1.bf16.msra.mxu0 0
        %7299 = vmatprep.subr.bf16.mxu0 0
        %7300 = vmatpush1.bf16.msra.mxu0 0
        %7301 = vmatprep.subr.bf16.mxu0 0
        %7302 = vmatpush1.bf16.msra.mxu0 0
        %7303 = vmatprep.subr.bf16.mxu0 0
        %7304 = vmatpush1.bf16.msra.mxu0 0
        %7305 = vmatprep.mubr.bf16.mxu0 0
        %7306 = vmatmul.mubr.bf16.gmra.mrb[0].mxu0 %v7139
        %v7307 = vpop.f32.mrb[0].mxu0
        %v7308 = vadd.f32 0.0, %v7307
        %v7309 = vpop.f32.mrb[0].mxu0
        %v7310 = vadd.f32 0.0, %v7309
        %v7311 = vpop.f32.mrb[0].mxu0
        %v7312 = vpop.f32.mrb[0].mxu0
        %7313 = vdwg.mxu0
        %7314 = vmatprep.subr.bf16.mxu0 %v7142
        %7315 = vmatpush1.bf16.msra.mxu0 %v4625
        %7316 = vmatprep.subr.bf16.mxu0 0
        %7317 = vmatpush1.bf16.msra.mxu0 0
        %7318 = vmatprep.subr.bf16.mxu0 0
        %7319 = vmatpush1.bf16.msra.mxu0 0
        %7320 = vmatprep.subr.bf16.mxu0 0
        %7321 = vmatpush1.bf16.msra.mxu0 0
        %7322 = vmatprep.subr.bf16.mxu0 0
        %7323 = vmatpush1.bf16.msra.mxu0 0
        %7324 = vmatprep.subr.bf16.mxu0 0
        %7325 = vmatpush1.bf16.msra.mxu0 0
        %7326 = vmatprep.subr.bf16.mxu0 0
        %7327 = vmatpush1.bf16.msra.mxu0 0
        %7328 = vmatprep.subr.bf16.mxu0 0
        %7329 = vmatpush1.bf16.msra.mxu0 0
        %7330 = vmatprep.subr.bf16.mxu0 0
        %7331 = vmatpush1.bf16.msra.mxu0 0
        %7332 = vmatprep.subr.bf16.mxu0 0
        %7333 = vmatpush1.bf16.msra.mxu0 0
        %7334 = vmatprep.subr.bf16.mxu0 0
        %7335 = vmatpush1.bf16.msra.mxu0 0
        %7336 = vmatprep.subr.bf16.mxu0 0
        %7337 = vmatpush1.bf16.msra.mxu0 0
        %7338 = vmatprep.subr.bf16.mxu0 0
        %7339 = vmatpush1.bf16.msra.mxu0 0
        %7340 = vmatprep.subr.bf16.mxu0 0
        %7341 = vmatpush1.bf16.msra.mxu0 0
        %7342 = vmatprep.subr.bf16.mxu0 0
        %7343 = vmatpush1.bf16.msra.mxu0 0
        %7344 = vmatprep.subr.bf16.mxu0 0
        %7345 = vmatpush1.bf16.msra.mxu0 0
        %7346 = vmatprep.mubr.bf16.mxu0 0
        %7347 = vmatmul.mubr.bf16.gmra.mrb[0].mxu0 %v7139
        %v7348 = vpop.f32.mrb[0].mxu0
        %v7349 = vadd.f32 0.0, %v7348
        %v7350 = vpop.f32.mrb[0].mxu0
        %v7351 = vadd.f32 0.0, %v7350
        %v7352 = vpop.f32.mrb[0].mxu0
        %v7353 = vpop.f32.mrb[0].mxu0
        %7354 = vdwg.mxu0
        %7355 = vmatprep.subr.bf16.mxu0 %v7148
        %7356 = vmatpush1.bf16.msra.mxu0 %v7145
        %7357 = vmatprep.subr.bf16.mxu0 0
        %7358 = vmatpush1.bf16.msra.mxu0 0
        %7359 = vmatprep.subr.bf16.mxu0 0
        %7360 = vmatpush1.bf16.msra.mxu0 0
        %7361 = vmatprep.subr.bf16.mxu0 0
        %7362 = vmatpush1.bf16.msra.mxu0 0
        %7363 = vmatprep.subr.bf16.mxu0 0
        %7364 = vmatpush1.bf16.msra.mxu0 0
        %7365 = vmatprep.subr.bf16.mxu0 0
        %7366 = vmatpush1.bf16.msra.mxu0 0
        %7367 = vmatprep.subr.bf16.mxu0 0
        %7368 = vmatpush1.bf16.msra.mxu0 0
        %7369 = vmatprep.subr.bf16.mxu0 0
        %7370 = vmatpush1.bf16.msra.mxu0 0
        %7371 = vmatprep.subr.bf16.mxu0 0
        %7372 = vmatpush1.bf16.msra.mxu0 0
        %7373 = vmatprep.subr.bf16.mxu0 0
        %7374 = vmatpush1.bf16.msra.mxu0 0
        %7375 = vmatprep.subr.bf16.mxu0 0
        %7376 = vmatpush1.bf16.msra.mxu0 0
        %7377 = vmatprep.subr.bf16.mxu0 0
        %7378 = vmatpush1.bf16.msra.mxu0 0
        %7379 = vmatprep.subr.bf16.mxu0 0
        %7380 = vmatpush1.bf16.msra.mxu0 0
        %7381 = vmatprep.subr.bf16.mxu0 0
        %7382 = vmatpush1.bf16.msra.mxu0 0
        %7383 = vmatprep.subr.bf16.mxu0 0
        %7384 = vmatpush1.bf16.msra.mxu0 0
        %7385 = vmatprep.subr.bf16.mxu0 0
        %7386 = vmatpush1.bf16.msra.mxu0 0
        %7387 = vmatprep.mubr.bf16.mxu0 0
        %7388 = vmatmul.mubr.bf16.gmra.mrb[0].mxu0 %v7139
        %v7389 = vpop.f32.mrb[0].mxu0
        %v7390 = vadd.f32 0.0, %v7389
        %v7391 = vpop.f32.mrb[0].mxu0
        %v7392 = vadd.f32 0.0, %v7391
        %v7393 = vpop.f32.mrb[0].mxu0
        %v7394 = vpop.f32.mrb[0].mxu0
        %7395 = vdwg.mxu0
        %v7396 = vadd.f32 %v7115, %v7185
        %v7397 = vadd.f32 %v7116, %v7187
        %v7398 = vadd.f32 %v7117, %v7226
        %v7399 = vadd.f32 %v7118, %v7228
        %v7400 = vadd.f32 %v7119, %v7267
        %v7401 = vadd.f32 %v7120, %v7269
        %v7402 = vadd.f32 %v7121, %v7308
        %v7403 = vadd.f32 %v7122, %v7310
        %v7404 = vadd.f32 %v7123, %v7349
        %v7405 = vadd.f32 %v7124, %v7351
        %v7406 = vadd.f32 %v7125, %v7390
        %v7407 = vadd.f32 %v7126, %v7392
        %s7408 = scalar_lea.vmem %s4, 42
        %v7409 = vld [vmem:[%s7408] sm:$0x3]
        %7410 = vrot.lane.b32.xlu0 %v1052, 110
        %v7411 = vpop.permute.xlu0 %7410
        %7412 = vrot.lane.b32.xlu0 %v1053, 110
        %v7413 = vpop.permute.xlu0 %7412
        %7414 = vrot.lane.b32.xlu0 %v1054, 110
        %v7415 = vpop.permute.xlu0 %7414
        %v7416 = vsel %vm2048, %v4892, %v7411
        %v7417 = vsel %vm2048, %v7411, %v7413
        %v7418 = vsel %vm2048, %v7413, %v7415
        %v7420 = vsel %vm1110, %v7409, 0
        %v7423 = vsel %vm1114, %v7416, 0
        %v7426 = vsel %vm1114, %v7417, 0
        %v7429 = vsel %vm1114, %v7418, 0
        %7431 = vmatprep.subr.bf16.mxu0 %v2086
        %7432 = vmatpush1.bf16.msra.mxu0 %v2083
        %7433 = vmatprep.subr.bf16.mxu0 0
        %7434 = vmatpush1.bf16.msra.mxu0 0
        %7435 = vmatprep.subr.bf16.mxu0 0
        %7436 = vmatpush1.bf16.msra.mxu0 0
        %7437 = vmatprep.subr.bf16.mxu0 0
        %7438 = vmatpush1.bf16.msra.mxu0 0
        %7439 = vmatprep.subr.bf16.mxu0 0
        %7440 = vmatpush1.bf16.msra.mxu0 0
        %7441 = vmatprep.subr.bf16.mxu0 0
        %7442 = vmatpush1.bf16.msra.mxu0 0
        %7443 = vmatprep.subr.bf16.mxu0 0
        %7444 = vmatpush1.bf16.msra.mxu0 0
        %7445 = vmatprep.subr.bf16.mxu0 0
        %7446 = vmatpush1.bf16.msra.mxu0 0
        %7447 = vmatprep.subr.bf16.mxu0 0
        %7448 = vmatpush1.bf16.msra.mxu0 0
        %7449 = vmatprep.subr.bf16.mxu0 0
        %7450 = vmatpush1.bf16.msra.mxu0 0
        %7451 = vmatprep.subr.bf16.mxu0 0
        %7452 = vmatpush1.bf16.msra.mxu0 0
        %7453 = vmatprep.subr.bf16.mxu0 0
        %7454 = vmatpush1.bf16.msra.mxu0 0
        %7455 = vmatprep.subr.bf16.mxu0 0
        %7456 = vmatpush1.bf16.msra.mxu0 0
        %7457 = vmatprep.subr.bf16.mxu0 0
        %7458 = vmatpush1.bf16.msra.mxu0 0
        %7459 = vmatprep.subr.bf16.mxu0 0
        %7460 = vmatpush1.bf16.msra.mxu0 0
        %7461 = vmatprep.subr.bf16.mxu0 0
        %7462 = vmatpush1.bf16.msra.mxu0 0
        %7463 = vmatprep.mubr.bf16.mxu0 0
        %7464 = vmatmul.mubr.bf16.gmra.mrb[0].mxu0 %v7420
        %v7465 = vpop.f32.mrb[0].mxu0
        %v7466 = vadd.f32 0.0, %v7465
        %v7467 = vpop.f32.mrb[0].mxu0
        %v7468 = vadd.f32 0.0, %v7467
        %v7469 = vpop.f32.mrb[0].mxu0
        %v7470 = vpop.f32.mrb[0].mxu0
        %7471 = vdwg.mxu0
        %7472 = vmatprep.subr.bf16.mxu0 %v2092
        %7473 = vmatpush1.bf16.msra.mxu0 %v2089
        %7474 = vmatprep.subr.bf16.mxu0 0
        %7475 = vmatpush1.bf16.msra.mxu0 0
        %7476 = vmatprep.subr.bf16.mxu0 0
        %7477 = vmatpush1.bf16.msra.mxu0 0
        %7478 = vmatprep.subr.bf16.mxu0 0
        %7479 = vmatpush1.bf16.msra.mxu0 0
        %7480 = vmatprep.subr.bf16.mxu0 0
        %7481 = vmatpush1.bf16.msra.mxu0 0
        %7482 = vmatprep.subr.bf16.mxu0 0
        %7483 = vmatpush1.bf16.msra.mxu0 0
        %7484 = vmatprep.subr.bf16.mxu0 0
        %7485 = vmatpush1.bf16.msra.mxu0 0
        %7486 = vmatprep.subr.bf16.mxu0 0
        %7487 = vmatpush1.bf16.msra.mxu0 0
        %7488 = vmatprep.subr.bf16.mxu0 0
        %7489 = vmatpush1.bf16.msra.mxu0 0
        %7490 = vmatprep.subr.bf16.mxu0 0
        %7491 = vmatpush1.bf16.msra.mxu0 0
        %7492 = vmatprep.subr.bf16.mxu0 0
        %7493 = vmatpush1.bf16.msra.mxu0 0
        %7494 = vmatprep.subr.bf16.mxu0 0
        %7495 = vmatpush1.bf16.msra.mxu0 0
        %7496 = vmatprep.subr.bf16.mxu0 0
        %7497 = vmatpush1.bf16.msra.mxu0 0
        %7498 = vmatprep.subr.bf16.mxu0 0
        %7499 = vmatpush1.bf16.msra.mxu0 0
        %7500 = vmatprep.subr.bf16.mxu0 0
        %7501 = vmatpush1.bf16.msra.mxu0 0
        %7502 = vmatprep.subr.bf16.mxu0 0
        %7503 = vmatpush1.bf16.msra.mxu0 0
        %7504 = vmatprep.mubr.bf16.mxu0 0
        %7505 = vmatmul.mubr.bf16.gmra.mrb[0].mxu0 %v7420
        %v7506 = vpop.f32.mrb[0].mxu0
        %v7507 = vadd.f32 0.0, %v7506
        %v7508 = vpop.f32.mrb[0].mxu0
        %v7509 = vadd.f32 0.0, %v7508
        %v7510 = vpop.f32.mrb[0].mxu0
        %v7511 = vpop.f32.mrb[0].mxu0
        %7512 = vdwg.mxu0
        %7513 = vmatprep.subr.bf16.mxu0 %v2098
        %7514 = vmatpush1.bf16.msra.mxu0 %v2095
        %7515 = vmatprep.subr.bf16.mxu0 0
        %7516 = vmatpush1.bf16.msra.mxu0 0
        %7517 = vmatprep.subr.bf16.mxu0 0
        %7518 = vmatpush1.bf16.msra.mxu0 0
        %7519 = vmatprep.subr.bf16.mxu0 0
        %7520 = vmatpush1.bf16.msra.mxu0 0
        %7521 = vmatprep.subr.bf16.mxu0 0
        %7522 = vmatpush1.bf16.msra.mxu0 0
        %7523 = vmatprep.subr.bf16.mxu0 0
        %7524 = vmatpush1.bf16.msra.mxu0 0
        %7525 = vmatprep.subr.bf16.mxu0 0
        %7526 = vmatpush1.bf16.msra.mxu0 0
        %7527 = vmatprep.subr.bf16.mxu0 0
        %7528 = vmatpush1.bf16.msra.mxu0 0
        %7529 = vmatprep.subr.bf16.mxu0 0
        %7530 = vmatpush1.bf16.msra.mxu0 0
        %7531 = vmatprep.subr.bf16.mxu0 0
        %7532 = vmatpush1.bf16.msra.mxu0 0
        %7533 = vmatprep.subr.bf16.mxu0 0
        %7534 = vmatpush1.bf16.msra.mxu0 0
        %7535 = vmatprep.subr.bf16.mxu0 0
        %7536 = vmatpush1.bf16.msra.mxu0 0
        %7537 = vmatprep.subr.bf16.mxu0 0
        %7538 = vmatpush1.bf16.msra.mxu0 0
        %7539 = vmatprep.subr.bf16.mxu0 0
        %7540 = vmatpush1.bf16.msra.mxu0 0
        %7541 = vmatprep.subr.bf16.mxu0 0
        %7542 = vmatpush1.bf16.msra.mxu0 0
        %7543 = vmatprep.subr.bf16.mxu0 0
        %7544 = vmatpush1.bf16.msra.mxu0 0
        %7545 = vmatprep.mubr.bf16.mxu0 0
        %7546 = vmatmul.mubr.bf16.gmra.mrb[0].mxu0 %v7420
        %v7547 = vpop.f32.mrb[0].mxu0
        %v7548 = vadd.f32 0.0, %v7547
        %v7549 = vpop.f32.mrb[0].mxu0
        %v7550 = vadd.f32 0.0, %v7549
        %v7551 = vpop.f32.mrb[0].mxu0
        %v7552 = vpop.f32.mrb[0].mxu0
        %7553 = vdwg.mxu0
        %7554 = vmatprep.subr.bf16.mxu0 %v4903
        %7555 = vmatpush1.bf16.msra.mxu0 %v4900
        %7556 = vmatprep.subr.bf16.mxu0 0
        %7557 = vmatpush1.bf16.msra.mxu0 0
        %7558 = vmatprep.subr.bf16.mxu0 0
        %7559 = vmatpush1.bf16.msra.mxu0 0
        %7560 = vmatprep.subr.bf16.mxu0 0
        %7561 = vmatpush1.bf16.msra.mxu0 0
        %7562 = vmatprep.subr.bf16.mxu0 0
        %7563 = vmatpush1.bf16.msra.mxu0 0
        %7564 = vmatprep.subr.bf16.mxu0 0
        %7565 = vmatpush1.bf16.msra.mxu0 0
        %7566 = vmatprep.subr.bf16.mxu0 0
        %7567 = vmatpush1.bf16.msra.mxu0 0
        %7568 = vmatprep.subr.bf16.mxu0 0
        %7569 = vmatpush1.bf16.msra.mxu0 0
        %7570 = vmatprep.subr.bf16.mxu0 0
        %7571 = vmatpush1.bf16.msra.mxu0 0
        %7572 = vmatprep.subr.bf16.mxu0 0
        %7573 = vmatpush1.bf16.msra.mxu0 0
        %7574 = vmatprep.subr.bf16.mxu0 0
        %7575 = vmatpush1.bf16.msra.mxu0 0
        %7576 = vmatprep.subr.bf16.mxu0 0
        %7577 = vmatpush1.bf16.msra.mxu0 0
        %7578 = vmatprep.subr.bf16.mxu0 0
        %7579 = vmatpush1.bf16.msra.mxu0 0
        %7580 = vmatprep.subr.bf16.mxu0 0
        %7581 = vmatpush1.bf16.msra.mxu0 0
        %7582 = vmatprep.subr.bf16.mxu0 0
        %7583 = vmatpush1.bf16.msra.mxu0 0
        %7584 = vmatprep.subr.bf16.mxu0 0
        %7585 = vmatpush1.bf16.msra.mxu0 0
        %7586 = vmatprep.mubr.bf16.mxu0 0
        %7587 = vmatmul.mubr.bf16.gmra.mrb[0].mxu0 %v7420
        %v7588 = vpop.f32.mrb[0].mxu0
        %v7589 = vadd.f32 0.0, %v7588
        %v7590 = vpop.f32.mrb[0].mxu0
        %v7591 = vadd.f32 0.0, %v7590
        %v7592 = vpop.f32.mrb[0].mxu0
        %v7593 = vpop.f32.mrb[0].mxu0
        %7594 = vdwg.mxu0
        %7595 = vmatprep.subr.bf16.mxu0 %v7423
        %7596 = vmatpush1.bf16.msra.mxu0 %v4906
        %7597 = vmatprep.subr.bf16.mxu0 0
        %7598 = vmatpush1.bf16.msra.mxu0 0
        %7599 = vmatprep.subr.bf16.mxu0 0
        %7600 = vmatpush1.bf16.msra.mxu0 0
        %7601 = vmatprep.subr.bf16.mxu0 0
        %7602 = vmatpush1.bf16.msra.mxu0 0
        %7603 = vmatprep.subr.bf16.mxu0 0
        %7604 = vmatpush1.bf16.msra.mxu0 0
        %7605 = vmatprep.subr.bf16.mxu0 0
        %7606 = vmatpush1.bf16.msra.mxu0 0
        %7607 = vmatprep.subr.bf16.mxu0 0
        %7608 = vmatpush1.bf16.msra.mxu0 0
        %7609 = vmatprep.subr.bf16.mxu0 0
        %7610 = vmatpush1.bf16.msra.mxu0 0
        %7611 = vmatprep.subr.bf16.mxu0 0
        %7612 = vmatpush1.bf16.msra.mxu0 0
        %7613 = vmatprep.subr.bf16.mxu0 0
        %7614 = vmatpush1.bf16.msra.mxu0 0
        %7615 = vmatprep.subr.bf16.mxu0 0
        %7616 = vmatpush1.bf16.msra.mxu0 0
        %7617 = vmatprep.subr.bf16.mxu0 0
        %7618 = vmatpush1.bf16.msra.mxu0 0
        %7619 = vmatprep.subr.bf16.mxu0 0
        %7620 = vmatpush1.bf16.msra.mxu0 0
        %7621 = vmatprep.subr.bf16.mxu0 0
        %7622 = vmatpush1.bf16.msra.mxu0 0
        %7623 = vmatprep.subr.bf16.mxu0 0
        %7624 = vmatpush1.bf16.msra.mxu0 0
        %7625 = vmatprep.subr.bf16.mxu0 0
        %7626 = vmatpush1.bf16.msra.mxu0 0
        %7627 = vmatprep.mubr.bf16.mxu0 0
        %7628 = vmatmul.mubr.bf16.gmra.mrb[0].mxu0 %v7420
        %v7629 = vpop.f32.mrb[0].mxu0
        %v7630 = vadd.f32 0.0, %v7629
        %v7631 = vpop.f32.mrb[0].mxu0
        %v7632 = vadd.f32 0.0, %v7631
        %v7633 = vpop.f32.mrb[0].mxu0
        %v7634 = vpop.f32.mrb[0].mxu0
        %7635 = vdwg.mxu0
        %7636 = vmatprep.subr.bf16.mxu0 %v7429
        %7637 = vmatpush1.bf16.msra.mxu0 %v7426
        %7638 = vmatprep.subr.bf16.mxu0 0
        %7639 = vmatpush1.bf16.msra.mxu0 0
        %7640 = vmatprep.subr.bf16.mxu0 0
        %7641 = vmatpush1.bf16.msra.mxu0 0
        %7642 = vmatprep.subr.bf16.mxu0 0
        %7643 = vmatpush1.bf16.msra.mxu0 0
        %7644 = vmatprep.subr.bf16.mxu0 0
        %7645 = vmatpush1.bf16.msra.mxu0 0
        %7646 = vmatprep.subr.bf16.mxu0 0
        %7647 = vmatpush1.bf16.msra.mxu0 0
        %7648 = vmatprep.subr.bf16.mxu0 0
        %7649 = vmatpush1.bf16.msra.mxu0 0
        %7650 = vmatprep.subr.bf16.mxu0 0
        %7651 = vmatpush1.bf16.msra.mxu0 0
        %7652 = vmatprep.subr.bf16.mxu0 0
        %7653 = vmatpush1.bf16.msra.mxu0 0
        %7654 = vmatprep.subr.bf16.mxu0 0
        %7655 = vmatpush1.bf16.msra.mxu0 0
        %7656 = vmatprep.subr.bf16.mxu0 0
        %7657 = vmatpush1.bf16.msra.mxu0 0
        %7658 = vmatprep.subr.bf16.mxu0 0
        %7659 = vmatpush1.bf16.msra.mxu0 0
        %7660 = vmatprep.subr.bf16.mxu0 0
        %7661 = vmatpush1.bf16.msra.mxu0 0
        %7662 = vmatprep.subr.bf16.mxu0 0
        %7663 = vmatpush1.bf16.msra.mxu0 0
        %7664 = vmatprep.subr.bf16.mxu0 0
        %7665 = vmatpush1.bf16.msra.mxu0 0
        %7666 = vmatprep.subr.bf16.mxu0 0
        %7667 = vmatpush1.bf16.msra.mxu0 0
        %7668 = vmatprep.mubr.bf16.mxu0 0
        %7669 = vmatmul.mubr.bf16.gmra.mrb[0].mxu0 %v7420
        %v7670 = vpop.f32.mrb[0].mxu0
        %v7671 = vadd.f32 0.0, %v7670
        %v7672 = vpop.f32.mrb[0].mxu0
        %v7673 = vadd.f32 0.0, %v7672
        %v7674 = vpop.f32.mrb[0].mxu0
        %v7675 = vpop.f32.mrb[0].mxu0
        %7676 = vdwg.mxu0
        %v7677 = vadd.f32 %v7396, %v7466
        %v7678 = vadd.f32 %v7397, %v7468
        %v7679 = vadd.f32 %v7398, %v7507
        %v7680 = vadd.f32 %v7399, %v7509
        %v7681 = vadd.f32 %v7400, %v7548
        %v7682 = vadd.f32 %v7401, %v7550
        %v7683 = vadd.f32 %v7402, %v7589
        %v7684 = vadd.f32 %v7403, %v7591
        %v7685 = vadd.f32 %v7404, %v7630
        %v7686 = vadd.f32 %v7405, %v7632
        %v7687 = vadd.f32 %v7406, %v7671
        %v7688 = vadd.f32 %v7407, %v7673
        %s7689 = scalar_lea.vmem %s4, 44
        %v7690 = vld [vmem:[%s7689] sm:$0x3]
        %7691 = vrot.lane.b32.xlu0 %v1052, 109
        %v7692 = vpop.permute.xlu0 %7691
        %7693 = vrot.lane.b32.xlu0 %v1053, 109
        %v7694 = vpop.permute.xlu0 %7693
        %7695 = vrot.lane.b32.xlu0 %v1054, 109
        %v7696 = vpop.permute.xlu0 %7695
        %v7697 = vsel %vm2386, %v5173, %v7692
        %v7698 = vsel %vm2386, %v7692, %v7694
        %v7699 = vsel %vm2386, %v7694, %v7696
        %v7701 = vsel %vm1110, %v7690, 0
        %v7704 = vsel %vm1114, %v7697, 0
        %v7707 = vsel %vm1114, %v7698, 0
        %v7710 = vsel %vm1114, %v7699, 0
        %7712 = vmatprep.subr.bf16.mxu0 %v2424
        %7713 = vmatpush1.bf16.msra.mxu0 %v2421
        %7714 = vmatprep.subr.bf16.mxu0 0
        %7715 = vmatpush1.bf16.msra.mxu0 0
        %7716 = vmatprep.subr.bf16.mxu0 0
        %7717 = vmatpush1.bf16.msra.mxu0 0
        %7718 = vmatprep.subr.bf16.mxu0 0
        %7719 = vmatpush1.bf16.msra.mxu0 0
        %7720 = vmatprep.subr.bf16.mxu0 0
        %7721 = vmatpush1.bf16.msra.mxu0 0
        %7722 = vmatprep.subr.bf16.mxu0 0
        %7723 = vmatpush1.bf16.msra.mxu0 0
        %7724 = vmatprep.subr.bf16.mxu0 0
        %7725 = vmatpush1.bf16.msra.mxu0 0
        %7726 = vmatprep.subr.bf16.mxu0 0
        %7727 = vmatpush1.bf16.msra.mxu0 0
        %7728 = vmatprep.subr.bf16.mxu0 0
        %7729 = vmatpush1.bf16.msra.mxu0 0
        %7730 = vmatprep.subr.bf16.mxu0 0
        %7731 = vmatpush1.bf16.msra.mxu0 0
        %7732 = vmatprep.subr.bf16.mxu0 0
        %7733 = vmatpush1.bf16.msra.mxu0 0
        %7734 = vmatprep.subr.bf16.mxu0 0
        %7735 = vmatpush1.bf16.msra.mxu0 0
        %7736 = vmatprep.subr.bf16.mxu0 0
        %7737 = vmatpush1.bf16.msra.mxu0 0
        %7738 = vmatprep.subr.bf16.mxu0 0
        %7739 = vmatpush1.bf16.msra.mxu0 0
        %7740 = vmatprep.subr.bf16.mxu0 0
        %7741 = vmatpush1.bf16.msra.mxu0 0
        %7742 = vmatprep.subr.bf16.mxu0 0
        %7743 = vmatpush1.bf16.msra.mxu0 0
        %7744 = vmatprep.mubr.bf16.mxu0 0
        %7745 = vmatmul.mubr.bf16.gmra.mrb[0].mxu0 %v7701
        %v7746 = vpop.f32.mrb[0].mxu0
        %v7747 = vadd.f32 0.0, %v7746
        %v7748 = vpop.f32.mrb[0].mxu0
        %v7749 = vadd.f32 0.0, %v7748
        %v7750 = vpop.f32.mrb[0].mxu0
        %v7751 = vpop.f32.mrb[0].mxu0
        %7752 = vdwg.mxu0
        %7753 = vmatprep.subr.bf16.mxu0 %v2430
        %7754 = vmatpush1.bf16.msra.mxu0 %v2427
        %7755 = vmatprep.subr.bf16.mxu0 0
        %7756 = vmatpush1.bf16.msra.mxu0 0
        %7757 = vmatprep.subr.bf16.mxu0 0
        %7758 = vmatpush1.bf16.msra.mxu0 0
        %7759 = vmatprep.subr.bf16.mxu0 0
        %7760 = vmatpush1.bf16.msra.mxu0 0
        %7761 = vmatprep.subr.bf16.mxu0 0
        %7762 = vmatpush1.bf16.msra.mxu0 0
        %7763 = vmatprep.subr.bf16.mxu0 0
        %7764 = vmatpush1.bf16.msra.mxu0 0
        %7765 = vmatprep.subr.bf16.mxu0 0
        %7766 = vmatpush1.bf16.msra.mxu0 0
        %7767 = vmatprep.subr.bf16.mxu0 0
        %7768 = vmatpush1.bf16.msra.mxu0 0
        %7769 = vmatprep.subr.bf16.mxu0 0
        %7770 = vmatpush1.bf16.msra.mxu0 0
        %7771 = vmatprep.subr.bf16.mxu0 0
        %7772 = vmatpush1.bf16.msra.mxu0 0
        %7773 = vmatprep.subr.bf16.mxu0 0
        %7774 = vmatpush1.bf16.msra.mxu0 0
        %7775 = vmatprep.subr.bf16.mxu0 0
        %7776 = vmatpush1.bf16.msra.mxu0 0
        %7777 = vmatprep.subr.bf16.mxu0 0
        %7778 = vmatpush1.bf16.msra.mxu0 0
        %7779 = vmatprep.subr.bf16.mxu0 0
        %7780 = vmatpush1.bf16.msra.mxu0 0
        %7781 = vmatprep.subr.bf16.mxu0 0
        %7782 = vmatpush1.bf16.msra.mxu0 0
        %7783 = vmatprep.subr.bf16.mxu0 0
        %7784 = vmatpush1.bf16.msra.mxu0 0
        %7785 = vmatprep.mubr.bf16.mxu0 0
        %7786 = vmatmul.mubr.bf16.gmra.mrb[0].mxu0 %v7701
        %v7787 = vpop.f32.mrb[0].mxu0
        %v7788 = vadd.f32 0.0, %v7787
        %v7789 = vpop.f32.mrb[0].mxu0
        %v7790 = vadd.f32 0.0, %v7789
        %v7791 = vpop.f32.mrb[0].mxu0
        %v7792 = vpop.f32.mrb[0].mxu0
        %7793 = vdwg.mxu0
        %7794 = vmatprep.subr.bf16.mxu0 %v2436
        %7795 = vmatpush1.bf16.msra.mxu0 %v2433
        %7796 = vmatprep.subr.bf16.mxu0 0
        %7797 = vmatpush1.bf16.msra.mxu0 0
        %7798 = vmatprep.subr.bf16.mxu0 0
        %7799 = vmatpush1.bf16.msra.mxu0 0
        %7800 = vmatprep.subr.bf16.mxu0 0
        %7801 = vmatpush1.bf16.msra.mxu0 0
        %7802 = vmatprep.subr.bf16.mxu0 0
        %7803 = vmatpush1.bf16.msra.mxu0 0
        %7804 = vmatprep.subr.bf16.mxu0 0
        %7805 = vmatpush1.bf16.msra.mxu0 0
        %7806 = vmatprep.subr.bf16.mxu0 0
        %7807 = vmatpush1.bf16.msra.mxu0 0
        %7808 = vmatprep.subr.bf16.mxu0 0
        %7809 = vmatpush1.bf16.msra.mxu0 0
        %7810 = vmatprep.subr.bf16.mxu0 0
        %7811 = vmatpush1.bf16.msra.mxu0 0
        %7812 = vmatprep.subr.bf16.mxu0 0
        %7813 = vmatpush1.bf16.msra.mxu0 0
        %7814 = vmatprep.subr.bf16.mxu0 0
        %7815 = vmatpush1.bf16.msra.mxu0 0
        %7816 = vmatprep.subr.bf16.mxu0 0
        %7817 = vmatpush1.bf16.msra.mxu0 0
        %7818 = vmatprep.subr.bf16.mxu0 0
        %7819 = vmatpush1.bf16.msra.mxu0 0
        %7820 = vmatprep.subr.bf16.mxu0 0
        %7821 = vmatpush1.bf16.msra.mxu0 0
        %7822 = vmatprep.subr.bf16.mxu0 0
        %7823 = vmatpush1.bf16.msra.mxu0 0
        %7824 = vmatprep.subr.bf16.mxu0 0
        %7825 = vmatpush1.bf16.msra.mxu0 0
        %7826 = vmatprep.mubr.bf16.mxu0 0
        %7827 = vmatmul.mubr.bf16.gmra.mrb[0].mxu0 %v7701
        %v7828 = vpop.f32.mrb[0].mxu0
        %v7829 = vadd.f32 0.0, %v7828
        %v7830 = vpop.f32.mrb[0].mxu0
        %v7831 = vadd.f32 0.0, %v7830
        %v7832 = vpop.f32.mrb[0].mxu0
        %v7833 = vpop.f32.mrb[0].mxu0
        %7834 = vdwg.mxu0
        %7835 = vmatprep.subr.bf16.mxu0 %v5184
        %7836 = vmatpush1.bf16.msra.mxu0 %v5181
        %7837 = vmatprep.subr.bf16.mxu0 0
        %7838 = vmatpush1.bf16.msra.mxu0 0
        %7839 = vmatprep.subr.bf16.mxu0 0
        %7840 = vmatpush1.bf16.msra.mxu0 0
        %7841 = vmatprep.subr.bf16.mxu0 0
        %7842 = vmatpush1.bf16.msra.mxu0 0
        %7843 = vmatprep.subr.bf16.mxu0 0
        %7844 = vmatpush1.bf16.msra.mxu0 0
        %7845 = vmatprep.subr.bf16.mxu0 0
        %7846 = vmatpush1.bf16.msra.mxu0 0
        %7847 = vmatprep.subr.bf16.mxu0 0
        %7848 = vmatpush1.bf16.msra.mxu0 0
        %7849 = vmatprep.subr.bf16.mxu0 0
        %7850 = vmatpush1.bf16.msra.mxu0 0
        %7851 = vmatprep.subr.bf16.mxu0 0
        %7852 = vmatpush1.bf16.msra.mxu0 0
        %7853 = vmatprep.subr.bf16.mxu0 0
        %7854 = vmatpush1.bf16.msra.mxu0 0
        %7855 = vmatprep.subr.bf16.mxu0 0
        %7856 = vmatpush1.bf16.msra.mxu0 0
        %7857 = vmatprep.subr.bf16.mxu0 0
        %7858 = vmatpush1.bf16.msra.mxu0 0
        %7859 = vmatprep.subr.bf16.mxu0 0
        %7860 = vmatpush1.bf16.msra.mxu0 0
        %7861 = vmatprep.subr.bf16.mxu0 0
        %7862 = vmatpush1.bf16.msra.mxu0 0
        %7863 = vmatprep.subr.bf16.mxu0 0
        %7864 = vmatpush1.bf16.msra.mxu0 0
        %7865 = vmatprep.subr.bf16.mxu0 0
        %7866 = vmatpush1.bf16.msra.mxu0 0
        %7867 = vmatprep.mubr.bf16.mxu0 0
        %7868 = vmatmul.mubr.bf16.gmra.mrb[0].mxu0 %v7701
        %v7869 = vpop.f32.mrb[0].mxu0
        %v7870 = vadd.f32 0.0, %v7869
        %v7871 = vpop.f32.mrb[0].mxu0
        %v7872 = vadd.f32 0.0, %v7871
        %v7873 = vpop.f32.mrb[0].mxu0
        %v7874 = vpop.f32.mrb[0].mxu0
        %7875 = vdwg.mxu0
        %7876 = vmatprep.subr.bf16.mxu0 %v7704
        %7877 = vmatpush1.bf16.msra.mxu0 %v5187
        %7878 = vmatprep.subr.bf16.mxu0 0
        %7879 = vmatpush1.bf16.msra.mxu0 0
        %7880 = vmatprep.subr.bf16.mxu0 0
        %7881 = vmatpush1.bf16.msra.mxu0 0
        %7882 = vmatprep.subr.bf16.mxu0 0
        %7883 = vmatpush1.bf16.msra.mxu0 0
        %7884 = vmatprep.subr.bf16.mxu0 0
        %7885 = vmatpush1.bf16.msra.mxu0 0
        %7886 = vmatprep.subr.bf16.mxu0 0
        %7887 = vmatpush1.bf16.msra.mxu0 0
        %7888 = vmatprep.subr.bf16.mxu0 0
        %7889 = vmatpush1.bf16.msra.mxu0 0
        %7890 = vmatprep.subr.bf16.mxu0 0
        %7891 = vmatpush1.bf16.msra.mxu0 0
        %7892 = vmatprep.subr.bf16.mxu0 0
        %7893 = vmatpush1.bf16.msra.mxu0 0
        %7894 = vmatprep.subr.bf16.mxu0 0
        %7895 = vmatpush1.bf16.msra.mxu0 0
        %7896 = vmatprep.subr.bf16.mxu0 0
        %7897 = vmatpush1.bf16.msra.mxu0 0
        %7898 = vmatprep.subr.bf16.mxu0 0
        %7899 = vmatpush1.bf16.msra.mxu0 0
        %7900 = vmatprep.subr.bf16.mxu0 0
        %7901 = vmatpush1.bf16.msra.mxu0 0
        %7902 = vmatprep.subr.bf16.mxu0 0
        %7903 = vmatpush1.bf16.msra.mxu0 0
        %7904 = vmatprep.subr.bf16.mxu0 0
        %7905 = vmatpush1.bf16.msra.mxu0 0
        %7906 = vmatprep.subr.bf16.mxu0 0
        %7907 = vmatpush1.bf16.msra.mxu0 0
        %7908 = vmatprep.mubr.bf16.mxu0 0
        %7909 = vmatmul.mubr.bf16.gmra.mrb[0].mxu0 %v7701
        %v7910 = vpop.f32.mrb[0].mxu0
        %v7911 = vadd.f32 0.0, %v7910
        %v7912 = vpop.f32.mrb[0].mxu0
        %v7913 = vadd.f32 0.0, %v7912
        %v7914 = vpop.f32.mrb[0].mxu0
        %v7915 = vpop.f32.mrb[0].mxu0
        %7916 = vdwg.mxu0
        %7917 = vmatprep.subr.bf16.mxu0 %v7710
        %7918 = vmatpush1.bf16.msra.mxu0 %v7707
        %7919 = vmatprep.subr.bf16.mxu0 0
        %7920 = vmatpush1.bf16.msra.mxu0 0
        %7921 = vmatprep.subr.bf16.mxu0 0
        %7922 = vmatpush1.bf16.msra.mxu0 0
        %7923 = vmatprep.subr.bf16.mxu0 0
        %7924 = vmatpush1.bf16.msra.mxu0 0
        %7925 = vmatprep.subr.bf16.mxu0 0
        %7926 = vmatpush1.bf16.msra.mxu0 0
        %7927 = vmatprep.subr.bf16.mxu0 0
        %7928 = vmatpush1.bf16.msra.mxu0 0
        %7929 = vmatprep.subr.bf16.mxu0 0
        %7930 = vmatpush1.bf16.msra.mxu0 0
        %7931 = vmatprep.subr.bf16.mxu0 0
        %7932 = vmatpush1.bf16.msra.mxu0 0
        %7933 = vmatprep.subr.bf16.mxu0 0
        %7934 = vmatpush1.bf16.msra.mxu0 0
        %7935 = vmatprep.subr.bf16.mxu0 0
        %7936 = vmatpush1.bf16.msra.mxu0 0
        %7937 = vmatprep.subr.bf16.mxu0 0
        %7938 = vmatpush1.bf16.msra.mxu0 0
        %7939 = vmatprep.subr.bf16.mxu0 0
        %7940 = vmatpush1.bf16.msra.mxu0 0
        %7941 = vmatprep.subr.bf16.mxu0 0
        %7942 = vmatpush1.bf16.msra.mxu0 0
        %7943 = vmatprep.subr.bf16.mxu0 0
        %7944 = vmatpush1.bf16.msra.mxu0 0
        %7945 = vmatprep.subr.bf16.mxu0 0
        %7946 = vmatpush1.bf16.msra.mxu0 0
        %7947 = vmatprep.subr.bf16.mxu0 0
        %7948 = vmatpush1.bf16.msra.mxu0 0
        %7949 = vmatprep.mubr.bf16.mxu0 0
        %7950 = vmatmul.mubr.bf16.gmra.mrb[0].mxu0 %v7701
        %v7951 = vpop.f32.mrb[0].mxu0
        %v7952 = vadd.f32 0.0, %v7951
        %v7953 = vpop.f32.mrb[0].mxu0
        %v7954 = vadd.f32 0.0, %v7953
        %v7955 = vpop.f32.mrb[0].mxu0
        %v7956 = vpop.f32.mrb[0].mxu0
        %7957 = vdwg.mxu0
        %v7958 = vadd.f32 %v7677, %v7747
        %v7959 = vadd.f32 %v7678, %v7749
        %v7960 = vadd.f32 %v7679, %v7788
        %v7961 = vadd.f32 %v7680, %v7790
        %v7962 = vadd.f32 %v7681, %v7829
        %v7963 = vadd.f32 %v7682, %v7831
        %v7964 = vadd.f32 %v7683, %v7870
        %v7965 = vadd.f32 %v7684, %v7872
        %v7966 = vadd.f32 %v7685, %v7911
        %v7967 = vadd.f32 %v7686, %v7913
        %v7968 = vadd.f32 %v7687, %v7952
        %v7969 = vadd.f32 %v7688, %v7954
        %s7970 = scalar_lea.vmem %s4, 46
        %v7971 = vld [vmem:[%s7970] sm:$0x3]
        %7972 = vrot.lane.b32.xlu0 %v1052, 108
        %v7973 = vpop.permute.xlu0 %7972
        %7974 = vrot.lane.b32.xlu0 %v1053, 108
        %v7975 = vpop.permute.xlu0 %7974
        %7976 = vrot.lane.b32.xlu0 %v1054, 108
        %v7977 = vpop.permute.xlu0 %7976
        %v7978 = vsel %vm2724, %v5454, %v7973
        %v7979 = vsel %vm2724, %v7973, %v7975
        %v7980 = vsel %vm2724, %v7975, %v7977
        %v7982 = vsel %vm1110, %v7971, 0
        %v7985 = vsel %vm1114, %v7978, 0
        %v7988 = vsel %vm1114, %v7979, 0
        %v7991 = vsel %vm1114, %v7980, 0
        %7993 = vmatprep.subr.bf16.mxu0 %v2762
        %7994 = vmatpush1.bf16.msra.mxu0 %v2759
        %7995 = vmatprep.subr.bf16.mxu0 0
        %7996 = vmatpush1.bf16.msra.mxu0 0
        %7997 = vmatprep.subr.bf16.mxu0 0
        %7998 = vmatpush1.bf16.msra.mxu0 0
        %7999 = vmatprep.subr.bf16.mxu0 0
        %8000 = vmatpush1.bf16.msra.mxu0 0
        %8001 = vmatprep.subr.bf16.mxu0 0
        %8002 = vmatpush1.bf16.msra.mxu0 0
        %8003 = vmatprep.subr.bf16.mxu0 0
        %8004 = vmatpush1.bf16.msra.mxu0 0
        %8005 = vmatprep.subr.bf16.mxu0 0
        %8006 = vmatpush1.bf16.msra.mxu0 0
        %8007 = vmatprep.subr.bf16.mxu0 0
        %8008 = vmatpush1.bf16.msra.mxu0 0
        %8009 = vmatprep.subr.bf16.mxu0 0
        %8010 = vmatpush1.bf16.msra.mxu0 0
        %8011 = vmatprep.subr.bf16.mxu0 0
        %8012 = vmatpush1.bf16.msra.mxu0 0
        %8013 = vmatprep.subr.bf16.mxu0 0
        %8014 = vmatpush1.bf16.msra.mxu0 0
        %8015 = vmatprep.subr.bf16.mxu0 0
        %8016 = vmatpush1.bf16.msra.mxu0 0
        %8017 = vmatprep.subr.bf16.mxu0 0
        %8018 = vmatpush1.bf16.msra.mxu0 0
        %8019 = vmatprep.subr.bf16.mxu0 0
        %8020 = vmatpush1.bf16.msra.mxu0 0
        %8021 = vmatprep.subr.bf16.mxu0 0
        %8022 = vmatpush1.bf16.msra.mxu0 0
        %8023 = vmatprep.subr.bf16.mxu0 0
        %8024 = vmatpush1.bf16.msra.mxu0 0
        %8025 = vmatprep.mubr.bf16.mxu0 0
        %8026 = vmatmul.mubr.bf16.gmra.mrb[0].mxu0 %v7982
        %v8027 = vpop.f32.mrb[0].mxu0
        %v8028 = vadd.f32 0.0, %v8027
        %v8029 = vpop.f32.mrb[0].mxu0
        %v8030 = vadd.f32 0.0, %v8029
        %v8031 = vpop.f32.mrb[0].mxu0
        %v8032 = vpop.f32.mrb[0].mxu0
        %8033 = vdwg.mxu0
        %8034 = vmatprep.subr.bf16.mxu0 %v2768
        %8035 = vmatpush1.bf16.msra.mxu0 %v2765
        %8036 = vmatprep.subr.bf16.mxu0 0
        %8037 = vmatpush1.bf16.msra.mxu0 0
        %8038 = vmatprep.subr.bf16.mxu0 0
        %8039 = vmatpush1.bf16.msra.mxu0 0
        %8040 = vmatprep.subr.bf16.mxu0 0
        %8041 = vmatpush1.bf16.msra.mxu0 0
        %8042 = vmatprep.subr.bf16.mxu0 0
        %8043 = vmatpush1.bf16.msra.mxu0 0
        %8044 = vmatprep.subr.bf16.mxu0 0
        %8045 = vmatpush1.bf16.msra.mxu0 0
        %8046 = vmatprep.subr.bf16.mxu0 0
        %8047 = vmatpush1.bf16.msra.mxu0 0
        %8048 = vmatprep.subr.bf16.mxu0 0
        %8049 = vmatpush1.bf16.msra.mxu0 0
        %8050 = vmatprep.subr.bf16.mxu0 0
        %8051 = vmatpush1.bf16.msra.mxu0 0
        %8052 = vmatprep.subr.bf16.mxu0 0
        %8053 = vmatpush1.bf16.msra.mxu0 0
        %8054 = vmatprep.subr.bf16.mxu0 0
        %8055 = vmatpush1.bf16.msra.mxu0 0
        %8056 = vmatprep.subr.bf16.mxu0 0
        %8057 = vmatpush1.bf16.msra.mxu0 0
        %8058 = vmatprep.subr.bf16.mxu0 0
        %8059 = vmatpush1.bf16.msra.mxu0 0
        %8060 = vmatprep.subr.bf16.mxu0 0
        %8061 = vmatpush1.bf16.msra.mxu0 0
        %8062 = vmatprep.subr.bf16.mxu0 0
        %8063 = vmatpush1.bf16.msra.mxu0 0
        %8064 = vmatprep.subr.bf16.mxu0 0
        %8065 = vmatpush1.bf16.msra.mxu0 0
        %8066 = vmatprep.mubr.bf16.mxu0 0
        %8067 = vmatmul.mubr.bf16.gmra.mrb[0].mxu0 %v7982
        %v8068 = vpop.f32.mrb[0].mxu0
        %v8069 = vadd.f32 0.0, %v8068
        %v8070 = vpop.f32.mrb[0].mxu0
        %v8071 = vadd.f32 0.0, %v8070
        %v8072 = vpop.f32.mrb[0].mxu0
        %v8073 = vpop.f32.mrb[0].mxu0
        %8074 = vdwg.mxu0
        %8075 = vmatprep.subr.bf16.mxu0 %v2774
        %8076 = vmatpush1.bf16.msra.mxu0 %v2771
        %8077 = vmatprep.subr.bf16.mxu0 0
        %8078 = vmatpush1.bf16.msra.mxu0 0
        %8079 = vmatprep.subr.bf16.mxu0 0
        %8080 = vmatpush1.bf16.msra.mxu0 0
        %8081 = vmatprep.subr.bf16.mxu0 0
        %8082 = vmatpush1.bf16.msra.mxu0 0
        %8083 = vmatprep.subr.bf16.mxu0 0
        %8084 = vmatpush1.bf16.msra.mxu0 0
        %8085 = vmatprep.subr.bf16.mxu0 0
        %8086 = vmatpush1.bf16.msra.mxu0 0
        %8087 = vmatprep.subr.bf16.mxu0 0
        %8088 = vmatpush1.bf16.msra.mxu0 0
        %8089 = vmatprep.subr.bf16.mxu0 0
        %8090 = vmatpush1.bf16.msra.mxu0 0
        %8091 = vmatprep.subr.bf16.mxu0 0
        %8092 = vmatpush1.bf16.msra.mxu0 0
        %8093 = vmatprep.subr.bf16.mxu0 0
        %8094 = vmatpush1.bf16.msra.mxu0 0
        %8095 = vmatprep.subr.bf16.mxu0 0
        %8096 = vmatpush1.bf16.msra.mxu0 0
        %8097 = vmatprep.subr.bf16.mxu0 0
        %8098 = vmatpush1.bf16.msra.mxu0 0
        %8099 = vmatprep.subr.bf16.mxu0 0
        %8100 = vmatpush1.bf16.msra.mxu0 0
        %8101 = vmatprep.subr.bf16.mxu0 0
        %8102 = vmatpush1.bf16.msra.mxu0 0
        %8103 = vmatprep.subr.bf16.mxu0 0
        %8104 = vmatpush1.bf16.msra.mxu0 0
        %8105 = vmatprep.subr.bf16.mxu0 0
        %8106 = vmatpush1.bf16.msra.mxu0 0
        %8107 = vmatprep.mubr.bf16.mxu0 0
        %8108 = vmatmul.mubr.bf16.gmra.mrb[0].mxu0 %v7982
        %v8109 = vpop.f32.mrb[0].mxu0
        %v8110 = vadd.f32 0.0, %v8109
        %v8111 = vpop.f32.mrb[0].mxu0
        %v8112 = vadd.f32 0.0, %v8111
        %v8113 = vpop.f32.mrb[0].mxu0
        %v8114 = vpop.f32.mrb[0].mxu0
        %8115 = vdwg.mxu0
        %8116 = vmatprep.subr.bf16.mxu0 %v5465
        %8117 = vmatpush1.bf16.msra.mxu0 %v5462
        %8118 = vmatprep.subr.bf16.mxu0 0
        %8119 = vmatpush1.bf16.msra.mxu0 0
        %8120 = vmatprep.subr.bf16.mxu0 0
        %8121 = vmatpush1.bf16.msra.mxu0 0
        %8122 = vmatprep.subr.bf16.mxu0 0
        %8123 = vmatpush1.bf16.msra.mxu0 0
        %8124 = vmatprep.subr.bf16.mxu0 0
        %8125 = vmatpush1.bf16.msra.mxu0 0
        %8126 = vmatprep.subr.bf16.mxu0 0
        %8127 = vmatpush1.bf16.msra.mxu0 0
        %8128 = vmatprep.subr.bf16.mxu0 0
        %8129 = vmatpush1.bf16.msra.mxu0 0
        %8130 = vmatprep.subr.bf16.mxu0 0
        %8131 = vmatpush1.bf16.msra.mxu0 0
        %8132 = vmatprep.subr.bf16.mxu0 0
        %8133 = vmatpush1.bf16.msra.mxu0 0
        %8134 = vmatprep.subr.bf16.mxu0 0
        %8135 = vmatpush1.bf16.msra.mxu0 0
        %8136 = vmatprep.subr.bf16.mxu0 0
        %8137 = vmatpush1.bf16.msra.mxu0 0
        %8138 = vmatprep.subr.bf16.mxu0 0
        %8139 = vmatpush1.bf16.msra.mxu0 0
        %8140 = vmatprep.subr.bf16.mxu0 0
        %8141 = vmatpush1.bf16.msra.mxu0 0
        %8142 = vmatprep.subr.bf16.mxu0 0
        %8143 = vmatpush1.bf16.msra.mxu0 0
        %8144 = vmatprep.subr.bf16.mxu0 0
        %8145 = vmatpush1.bf16.msra.mxu0 0
        %8146 = vmatprep.subr.bf16.mxu0 0
        %8147 = vmatpush1.bf16.msra.mxu0 0
        %8148 = vmatprep.mubr.bf16.mxu0 0
        %8149 = vmatmul.mubr.bf16.gmra.mrb[0].mxu0 %v7982
        %v8150 = vpop.f32.mrb[0].mxu0
        %v8151 = vadd.f32 0.0, %v8150
        %v8152 = vpop.f32.mrb[0].mxu0
        %v8153 = vadd.f32 0.0, %v8152
        %v8154 = vpop.f32.mrb[0].mxu0
        %v8155 = vpop.f32.mrb[0].mxu0
        %8156 = vdwg.mxu0
        %8157 = vmatprep.subr.bf16.mxu0 %v7985
        %8158 = vmatpush1.bf16.msra.mxu0 %v5468
        %8159 = vmatprep.subr.bf16.mxu0 0
        %8160 = vmatpush1.bf16.msra.mxu0 0
        %8161 = vmatprep.subr.bf16.mxu0 0
        %8162 = vmatpush1.bf16.msra.mxu0 0
        %8163 = vmatprep.subr.bf16.mxu0 0
        %8164 = vmatpush1.bf16.msra.mxu0 0
        %8165 = vmatprep.subr.bf16.mxu0 0
        %8166 = vmatpush1.bf16.msra.mxu0 0
        %8167 = vmatprep.subr.bf16.mxu0 0
        %8168 = vmatpush1.bf16.msra.mxu0 0
        %8169 = vmatprep.subr.bf16.mxu0 0
        %8170 = vmatpush1.bf16.msra.mxu0 0
        %8171 = vmatprep.subr.bf16.mxu0 0
        %8172 = vmatpush1.bf16.msra.mxu0 0
        %8173 = vmatprep.subr.bf16.mxu0 0
        %8174 = vmatpush1.bf16.msra.mxu0 0
        %8175 = vmatprep.subr.bf16.mxu0 0
        %8176 = vmatpush1.bf16.msra.mxu0 0
        %8177 = vmatprep.subr.bf16.mxu0 0
        %8178 = vmatpush1.bf16.msra.mxu0 0
        %8179 = vmatprep.subr.bf16.mxu0 0
        %8180 = vmatpush1.bf16.msra.mxu0 0
        %8181 = vmatprep.subr.bf16.mxu0 0
        %8182 = vmatpush1.bf16.msra.mxu0 0
        %8183 = vmatprep.subr.bf16.mxu0 0
        %8184 = vmatpush1.bf16.msra.mxu0 0
        %8185 = vmatprep.subr.bf16.mxu0 0
        %8186 = vmatpush1.bf16.msra.mxu0 0
        %8187 = vmatprep.subr.bf16.mxu0 0
        %8188 = vmatpush1.bf16.msra.mxu0 0
        %8189 = vmatprep.mubr.bf16.mxu0 0
        %8190 = vmatmul.mubr.bf16.gmra.mrb[0].mxu0 %v7982
        %v8191 = vpop.f32.mrb[0].mxu0
        %v8192 = vadd.f32 0.0, %v8191
        %v8193 = vpop.f32.mrb[0].mxu0
        %v8194 = vadd.f32 0.0, %v8193
        %v8195 = vpop.f32.mrb[0].mxu0
        %v8196 = vpop.f32.mrb[0].mxu0
        %8197 = vdwg.mxu0
        %8198 = vmatprep.subr.bf16.mxu0 %v7991
        %8199 = vmatpush1.bf16.msra.mxu0 %v7988
        %8200 = vmatprep.subr.bf16.mxu0 0
        %8201 = vmatpush1.bf16.msra.mxu0 0
        %8202 = vmatprep.subr.bf16.mxu0 0
        %8203 = vmatpush1.bf16.msra.mxu0 0
        %8204 = vmatprep.subr.bf16.mxu0 0
        %8205 = vmatpush1.bf16.msra.mxu0 0
        %8206 = vmatprep.subr.bf16.mxu0 0
        %8207 = vmatpush1.bf16.msra.mxu0 0
        %8208 = vmatprep.subr.bf16.mxu0 0
        %8209 = vmatpush1.bf16.msra.mxu0 0
        %8210 = vmatprep.subr.bf16.mxu0 0
        %8211 = vmatpush1.bf16.msra.mxu0 0
        %8212 = vmatprep.subr.bf16.mxu0 0
        %8213 = vmatpush1.bf16.msra.mxu0 0
        %8214 = vmatprep.subr.bf16.mxu0 0
        %8215 = vmatpush1.bf16.msra.mxu0 0
        %8216 = vmatprep.subr.bf16.mxu0 0
        %8217 = vmatpush1.bf16.msra.mxu0 0
        %8218 = vmatprep.subr.bf16.mxu0 0
        %8219 = vmatpush1.bf16.msra.mxu0 0
        %8220 = vmatprep.subr.bf16.mxu0 0
        %8221 = vmatpush1.bf16.msra.mxu0 0
        %8222 = vmatprep.subr.bf16.mxu0 0
        %8223 = vmatpush1.bf16.msra.mxu0 0
        %8224 = vmatprep.subr.bf16.mxu0 0
        %8225 = vmatpush1.bf16.msra.mxu0 0
        %8226 = vmatprep.subr.bf16.mxu0 0
        %8227 = vmatpush1.bf16.msra.mxu0 0
        %8228 = vmatprep.subr.bf16.mxu0 0
        %8229 = vmatpush1.bf16.msra.mxu0 0
        %8230 = vmatprep.mubr.bf16.mxu0 0
        %8231 = vmatmul.mubr.bf16.gmra.mrb[0].mxu0 %v7982
        %v8232 = vpop.f32.mrb[0].mxu0
        %v8233 = vadd.f32 0.0, %v8232
        %v8234 = vpop.f32.mrb[0].mxu0
        %v8235 = vadd.f32 0.0, %v8234
        %v8236 = vpop.f32.mrb[0].mxu0
        %v8237 = vpop.f32.mrb[0].mxu0
        %8238 = vdwg.mxu0
        %v8239 = vadd.f32 %v7958, %v8028
        %v8240 = vadd.f32 %v7959, %v8030
        %v8241 = vadd.f32 %v7960, %v8069
        %v8242 = vadd.f32 %v7961, %v8071
        %v8243 = vadd.f32 %v7962, %v8110
        %v8244 = vadd.f32 %v7963, %v8112
        %v8245 = vadd.f32 %v7964, %v8151
        %v8246 = vadd.f32 %v7965, %v8153
        %v8247 = vadd.f32 %v7966, %v8192
        %v8248 = vadd.f32 %v7967, %v8194
        %v8249 = vadd.f32 %v7968, %v8233
        %v8250 = vadd.f32 %v7969, %v8235
        %s8251 = scalar_lea.vmem %s4, 48
        %v8252 = vld [vmem:[%s8251] sm:$0x3]
        %8253 = vrot.lane.b32.xlu0 %v1052, 92
        %v8254 = vpop.permute.xlu0 %8253
        %8255 = vrot.lane.b32.xlu0 %v1053, 92
        %v8256 = vpop.permute.xlu0 %8255
        %8257 = vrot.lane.b32.xlu0 %v1054, 92
        %v8258 = vpop.permute.xlu0 %8257
        %v8259 = vsel %vm3062, %v5735, %v8254
        %v8260 = vsel %vm3062, %v8254, %v8256
        %v8261 = vsel %vm3062, %v8256, %v8258
        %v8263 = vsel %vm1110, %v8252, 0
        %v8266 = vsel %vm1114, %v8259, 0
        %v8269 = vsel %vm1114, %v8260, 0
        %v8272 = vsel %vm1114, %v8261, 0
        %8274 = vmatprep.subr.bf16.mxu0 %v3100
        %8275 = vmatpush1.bf16.msra.mxu0 %v3097
        %8276 = vmatprep.subr.bf16.mxu0 0
        %8277 = vmatpush1.bf16.msra.mxu0 0
        %8278 = vmatprep.subr.bf16.mxu0 0
        %8279 = vmatpush1.bf16.msra.mxu0 0
        %8280 = vmatprep.subr.bf16.mxu0 0
        %8281 = vmatpush1.bf16.msra.mxu0 0
        %8282 = vmatprep.subr.bf16.mxu0 0
        %8283 = vmatpush1.bf16.msra.mxu0 0
        %8284 = vmatprep.subr.bf16.mxu0 0
        %8285 = vmatpush1.bf16.msra.mxu0 0
        %8286 = vmatprep.subr.bf16.mxu0 0
        %8287 = vmatpush1.bf16.msra.mxu0 0
        %8288 = vmatprep.subr.bf16.mxu0 0
        %8289 = vmatpush1.bf16.msra.mxu0 0
        %8290 = vmatprep.subr.bf16.mxu0 0
        %8291 = vmatpush1.bf16.msra.mxu0 0
        %8292 = vmatprep.subr.bf16.mxu0 0
        %8293 = vmatpush1.bf16.msra.mxu0 0
        %8294 = vmatprep.subr.bf16.mxu0 0
        %8295 = vmatpush1.bf16.msra.mxu0 0
        %8296 = vmatprep.subr.bf16.mxu0 0
        %8297 = vmatpush1.bf16.msra.mxu0 0
        %8298 = vmatprep.subr.bf16.mxu0 0
        %8299 = vmatpush1.bf16.msra.mxu0 0
        %8300 = vmatprep.subr.bf16.mxu0 0
        %8301 = vmatpush1.bf16.msra.mxu0 0
        %8302 = vmatprep.subr.bf16.mxu0 0
        %8303 = vmatpush1.bf16.msra.mxu0 0
        %8304 = vmatprep.subr.bf16.mxu0 0
        %8305 = vmatpush1.bf16.msra.mxu0 0
        %8306 = vmatprep.mubr.bf16.mxu0 0
        %8307 = vmatmul.mubr.bf16.gmra.mrb[0].mxu0 %v8263
        %v8308 = vpop.f32.mrb[0].mxu0
        %v8309 = vadd.f32 0.0, %v8308
        %v8310 = vpop.f32.mrb[0].mxu0
        %v8311 = vadd.f32 0.0, %v8310
        %v8312 = vpop.f32.mrb[0].mxu0
        %v8313 = vpop.f32.mrb[0].mxu0
        %8314 = vdwg.mxu0
        %8315 = vmatprep.subr.bf16.mxu0 %v3106
        %8316 = vmatpush1.bf16.msra.mxu0 %v3103
        %8317 = vmatprep.subr.bf16.mxu0 0
        %8318 = vmatpush1.bf16.msra.mxu0 0
        %8319 = vmatprep.subr.bf16.mxu0 0
        %8320 = vmatpush1.bf16.msra.mxu0 0
        %8321 = vmatprep.subr.bf16.mxu0 0
        %8322 = vmatpush1.bf16.msra.mxu0 0
        %8323 = vmatprep.subr.bf16.mxu0 0
        %8324 = vmatpush1.bf16.msra.mxu0 0
        %8325 = vmatprep.subr.bf16.mxu0 0
        %8326 = vmatpush1.bf16.msra.mxu0 0
        %8327 = vmatprep.subr.bf16.mxu0 0
        %8328 = vmatpush1.bf16.msra.mxu0 0
        %8329 = vmatprep.subr.bf16.mxu0 0
        %8330 = vmatpush1.bf16.msra.mxu0 0
        %8331 = vmatprep.subr.bf16.mxu0 0
        %8332 = vmatpush1.bf16.msra.mxu0 0
        %8333 = vmatprep.subr.bf16.mxu0 0
        %8334 = vmatpush1.bf16.msra.mxu0 0
        %8335 = vmatprep.subr.bf16.mxu0 0
        %8336 = vmatpush1.bf16.msra.mxu0 0
        %8337 = vmatprep.subr.bf16.mxu0 0
        %8338 = vmatpush1.bf16.msra.mxu0 0
        %8339 = vmatprep.subr.bf16.mxu0 0
        %8340 = vmatpush1.bf16.msra.mxu0 0
        %8341 = vmatprep.subr.bf16.mxu0 0
        %8342 = vmatpush1.bf16.msra.mxu0 0
        %8343 = vmatprep.subr.bf16.mxu0 0
        %8344 = vmatpush1.bf16.msra.mxu0 0
        %8345 = vmatprep.subr.bf16.mxu0 0
        %8346 = vmatpush1.bf16.msra.mxu0 0
        %8347 = vmatprep.mubr.bf16.mxu0 0
        %8348 = vmatmul.mubr.bf16.gmra.mrb[0].mxu0 %v8263
        %v8349 = vpop.f32.mrb[0].mxu0
        %v8350 = vadd.f32 0.0, %v8349
        %v8351 = vpop.f32.mrb[0].mxu0
        %v8352 = vadd.f32 0.0, %v8351
        %v8353 = vpop.f32.mrb[0].mxu0
        %v8354 = vpop.f32.mrb[0].mxu0
        %8355 = vdwg.mxu0
        %8356 = vmatprep.subr.bf16.mxu0 %v3112
        %8357 = vmatpush1.bf16.msra.mxu0 %v3109
        %8358 = vmatprep.subr.bf16.mxu0 0
        %8359 = vmatpush1.bf16.msra.mxu0 0
        %8360 = vmatprep.subr.bf16.mxu0 0
        %8361 = vmatpush1.bf16.msra.mxu0 0
        %8362 = vmatprep.subr.bf16.mxu0 0
        %8363 = vmatpush1.bf16.msra.mxu0 0
        %8364 = vmatprep.subr.bf16.mxu0 0
        %8365 = vmatpush1.bf16.msra.mxu0 0
        %8366 = vmatprep.subr.bf16.mxu0 0
        %8367 = vmatpush1.bf16.msra.mxu0 0
        %8368 = vmatprep.subr.bf16.mxu0 0
        %8369 = vmatpush1.bf16.msra.mxu0 0
        %8370 = vmatprep.subr.bf16.mxu0 0
        %8371 = vmatpush1.bf16.msra.mxu0 0
        %8372 = vmatprep.subr.bf16.mxu0 0
        %8373 = vmatpush1.bf16.msra.mxu0 0
        %8374 = vmatprep.subr.bf16.mxu0 0
        %8375 = vmatpush1.bf16.msra.mxu0 0
        %8376 = vmatprep.subr.bf16.mxu0 0
        %8377 = vmatpush1.bf16.msra.mxu0 0
        %8378 = vmatprep.subr.bf16.mxu0 0
        %8379 = vmatpush1.bf16.msra.mxu0 0
        %8380 = vmatprep.subr.bf16.mxu0 0
        %8381 = vmatpush1.bf16.msra.mxu0 0
        %8382 = vmatprep.subr.bf16.mxu0 0
        %8383 = vmatpush1.bf16.msra.mxu0 0
        %8384 = vmatprep.subr.bf16.mxu0 0
        %8385 = vmatpush1.bf16.msra.mxu0 0
        %8386 = vmatprep.subr.bf16.mxu0 0
        %8387 = vmatpush1.bf16.msra.mxu0 0
        %8388 = vmatprep.mubr.bf16.mxu0 0
        %8389 = vmatmul.mubr.bf16.gmra.mrb[0].mxu0 %v8263
        %v8390 = vpop.f32.mrb[0].mxu0
        %v8391 = vadd.f32 0.0, %v8390
        %v8392 = vpop.f32.mrb[0].mxu0
        %v8393 = vadd.f32 0.0, %v8392
        %v8394 = vpop.f32.mrb[0].mxu0
        %v8395 = vpop.f32.mrb[0].mxu0
        %8396 = vdwg.mxu0
        %8397 = vmatprep.subr.bf16.mxu0 %v5746
        %8398 = vmatpush1.bf16.msra.mxu0 %v5743
        %8399 = vmatprep.subr.bf16.mxu0 0
        %8400 = vmatpush1.bf16.msra.mxu0 0
        %8401 = vmatprep.subr.bf16.mxu0 0
        %8402 = vmatpush1.bf16.msra.mxu0 0
        %8403 = vmatprep.subr.bf16.mxu0 0
        %8404 = vmatpush1.bf16.msra.mxu0 0
        %8405 = vmatprep.subr.bf16.mxu0 0
        %8406 = vmatpush1.bf16.msra.mxu0 0
        %8407 = vmatprep.subr.bf16.mxu0 0
        %8408 = vmatpush1.bf16.msra.mxu0 0
        %8409 = vmatprep.subr.bf16.mxu0 0
        %8410 = vmatpush1.bf16.msra.mxu0 0
        %8411 = vmatprep.subr.bf16.mxu0 0
        %8412 = vmatpush1.bf16.msra.mxu0 0
        %8413 = vmatprep.subr.bf16.mxu0 0
        %8414 = vmatpush1.bf16.msra.mxu0 0
        %8415 = vmatprep.subr.bf16.mxu0 0
        %8416 = vmatpush1.bf16.msra.mxu0 0
        %8417 = vmatprep.subr.bf16.mxu0 0
        %8418 = vmatpush1.bf16.msra.mxu0 0
        %8419 = vmatprep.subr.bf16.mxu0 0
        %8420 = vmatpush1.bf16.msra.mxu0 0
        %8421 = vmatprep.subr.bf16.mxu0 0
        %8422 = vmatpush1.bf16.msra.mxu0 0
        %8423 = vmatprep.subr.bf16.mxu0 0
        %8424 = vmatpush1.bf16.msra.mxu0 0
        %8425 = vmatprep.subr.bf16.mxu0 0
        %8426 = vmatpush1.bf16.msra.mxu0 0
        %8427 = vmatprep.subr.bf16.mxu0 0
        %8428 = vmatpush1.bf16.msra.mxu0 0
        %8429 = vmatprep.mubr.bf16.mxu0 0
        %8430 = vmatmul.mubr.bf16.gmra.mrb[0].mxu0 %v8263
        %v8431 = vpop.f32.mrb[0].mxu0
        %v8432 = vadd.f32 0.0, %v8431
        %v8433 = vpop.f32.mrb[0].mxu0
        %v8434 = vadd.f32 0.0, %v8433
        %v8435 = vpop.f32.mrb[0].mxu0
        %v8436 = vpop.f32.mrb[0].mxu0
        %8437 = vdwg.mxu0
        %8438 = vmatprep.subr.bf16.mxu0 %v8266
        %8439 = vmatpush1.bf16.msra.mxu0 %v5749
        %8440 = vmatprep.subr.bf16.mxu0 0
        %8441 = vmatpush1.bf16.msra.mxu0 0
        %8442 = vmatprep.subr.bf16.mxu0 0
        %8443 = vmatpush1.bf16.msra.mxu0 0
        %8444 = vmatprep.subr.bf16.mxu0 0
        %8445 = vmatpush1.bf16.msra.mxu0 0
        %8446 = vmatprep.subr.bf16.mxu0 0
        %8447 = vmatpush1.bf16.msra.mxu0 0
        %8448 = vmatprep.subr.bf16.mxu0 0
        %8449 = vmatpush1.bf16.msra.mxu0 0
        %8450 = vmatprep.subr.bf16.mxu0 0
        %8451 = vmatpush1.bf16.msra.mxu0 0
        %8452 = vmatprep.subr.bf16.mxu0 0
        %8453 = vmatpush1.bf16.msra.mxu0 0
        %8454 = vmatprep.subr.bf16.mxu0 0
        %8455 = vmatpush1.bf16.msra.mxu0 0
        %8456 = vmatprep.subr.bf16.mxu0 0
        %8457 = vmatpush1.bf16.msra.mxu0 0
        %8458 = vmatprep.subr.bf16.mxu0 0
        %8459 = vmatpush1.bf16.msra.mxu0 0
        %8460 = vmatprep.subr.bf16.mxu0 0
        %8461 = vmatpush1.bf16.msra.mxu0 0
        %8462 = vmatprep.subr.bf16.mxu0 0
        %8463 = vmatpush1.bf16.msra.mxu0 0
        %8464 = vmatprep.subr.bf16.mxu0 0
        %8465 = vmatpush1.bf16.msra.mxu0 0
        %8466 = vmatprep.subr.bf16.mxu0 0
        %8467 = vmatpush1.bf16.msra.mxu0 0
        %8468 = vmatprep.subr.bf16.mxu0 0
        %8469 = vmatpush1.bf16.msra.mxu0 0
        %8470 = vmatprep.mubr.bf16.mxu0 0
        %8471 = vmatmul.mubr.bf16.gmra.mrb[0].mxu0 %v8263
        %v8472 = vpop.f32.mrb[0].mxu0
        %v8473 = vadd.f32 0.0, %v8472
        %v8474 = vpop.f32.mrb[0].mxu0
        %v8475 = vadd.f32 0.0, %v8474
        %v8476 = vpop.f32.mrb[0].mxu0
        %v8477 = vpop.f32.mrb[0].mxu0
        %8478 = vdwg.mxu0
        %8479 = vmatprep.subr.bf16.mxu0 %v8272
        %8480 = vmatpush1.bf16.msra.mxu0 %v8269
        %8481 = vmatprep.subr.bf16.mxu0 0
        %8482 = vmatpush1.bf16.msra.mxu0 0
        %8483 = vmatprep.subr.bf16.mxu0 0
        %8484 = vmatpush1.bf16.msra.mxu0 0
        %8485 = vmatprep.subr.bf16.mxu0 0
        %8486 = vmatpush1.bf16.msra.mxu0 0
        %8487 = vmatprep.subr.bf16.mxu0 0
        %8488 = vmatpush1.bf16.msra.mxu0 0
        %8489 = vmatprep.subr.bf16.mxu0 0
        %8490 = vmatpush1.bf16.msra.mxu0 0
        %8491 = vmatprep.subr.bf16.mxu0 0
        %8492 = vmatpush1.bf16.msra.mxu0 0
        %8493 = vmatprep.subr.bf16.mxu0 0
        %8494 = vmatpush1.bf16.msra.mxu0 0
        %8495 = vmatprep.subr.bf16.mxu0 0
        %8496 = vmatpush1.bf16.msra.mxu0 0
        %8497 = vmatprep.subr.bf16.mxu0 0
        %8498 = vmatpush1.bf16.msra.mxu0 0
        %8499 = vmatprep.subr.bf16.mxu0 0
        %8500 = vmatpush1.bf16.msra.mxu0 0
        %8501 = vmatprep.subr.bf16.mxu0 0
        %8502 = vmatpush1.bf16.msra.mxu0 0
        %8503 = vmatprep.subr.bf16.mxu0 0
        %8504 = vmatpush1.bf16.msra.mxu0 0
        %8505 = vmatprep.subr.bf16.mxu0 0
        %8506 = vmatpush1.bf16.msra.mxu0 0
        %8507 = vmatprep.subr.bf16.mxu0 0
        %8508 = vmatpush1.bf16.msra.mxu0 0
        %8509 = vmatprep.subr.bf16.mxu0 0
        %8510 = vmatpush1.bf16.msra.mxu0 0
        %8511 = vmatprep.mubr.bf16.mxu0 0
        %8512 = vmatmul.mubr.bf16.gmra.mrb[0].mxu0 %v8263
        %v8513 = vpop.f32.mrb[0].mxu0
        %v8514 = vadd.f32 0.0, %v8513
        %v8515 = vpop.f32.mrb[0].mxu0
        %v8516 = vadd.f32 0.0, %v8515
        %v8517 = vpop.f32.mrb[0].mxu0
        %v8518 = vpop.f32.mrb[0].mxu0
        %8519 = vdwg.mxu0
        %v8520 = vadd.f32 %v8239, %v8309
        %v8521 = vadd.f32 %v8240, %v8311
        %v8522 = vadd.f32 %v8241, %v8350
        %v8523 = vadd.f32 %v8242, %v8352
        %v8524 = vadd.f32 %v8243, %v8391
        %v8525 = vadd.f32 %v8244, %v8393
        %v8526 = vadd.f32 %v8245, %v8432
        %v8527 = vadd.f32 %v8246, %v8434
        %v8528 = vadd.f32 %v8247, %v8473
        %v8529 = vadd.f32 %v8248, %v8475
        %v8530 = vadd.f32 %v8249, %v8514
        %v8531 = vadd.f32 %v8250, %v8516
        %s8532 = scalar_lea.vmem %s4, 50
        %v8533 = vld [vmem:[%s8532] sm:$0x3]
        %8534 = vrot.lane.b32.xlu0 %v1052, 91
        %v8535 = vpop.permute.xlu0 %8534
        %8536 = vrot.lane.b32.xlu0 %v1053, 91
        %v8537 = vpop.permute.xlu0 %8536
        %8538 = vrot.lane.b32.xlu0 %v1054, 91
        %v8539 = vpop.permute.xlu0 %8538
        %v8540 = vsel %vm3400, %v6016, %v8535
        %v8541 = vsel %vm3400, %v8535, %v8537
        %v8542 = vsel %vm3400, %v8537, %v8539
        %v8544 = vsel %vm1110, %v8533, 0
        %v8547 = vsel %vm1114, %v8540, 0
        %v8550 = vsel %vm1114, %v8541, 0
        %v8553 = vsel %vm1114, %v8542, 0
        %8555 = vmatprep.subr.bf16.mxu0 %v3438
        %8556 = vmatpush1.bf16.msra.mxu0 %v3435
        %8557 = vmatprep.subr.bf16.mxu0 0
        %8558 = vmatpush1.bf16.msra.mxu0 0
        %8559 = vmatprep.subr.bf16.mxu0 0
        %8560 = vmatpush1.bf16.msra.mxu0 0
        %8561 = vmatprep.subr.bf16.mxu0 0
        %8562 = vmatpush1.bf16.msra.mxu0 0
        %8563 = vmatprep.subr.bf16.mxu0 0
        %8564 = vmatpush1.bf16.msra.mxu0 0
        %8565 = vmatprep.subr.bf16.mxu0 0
        %8566 = vmatpush1.bf16.msra.mxu0 0
        %8567 = vmatprep.subr.bf16.mxu0 0
        %8568 = vmatpush1.bf16.msra.mxu0 0
        %8569 = vmatprep.subr.bf16.mxu0 0
        %8570 = vmatpush1.bf16.msra.mxu0 0
        %8571 = vmatprep.subr.bf16.mxu0 0
        %8572 = vmatpush1.bf16.msra.mxu0 0
        %8573 = vmatprep.subr.bf16.mxu0 0
        %8574 = vmatpush1.bf16.msra.mxu0 0
        %8575 = vmatprep.subr.bf16.mxu0 0
        %8576 = vmatpush1.bf16.msra.mxu0 0
        %8577 = vmatprep.subr.bf16.mxu0 0
        %8578 = vmatpush1.bf16.msra.mxu0 0
        %8579 = vmatprep.subr.bf16.mxu0 0
        %8580 = vmatpush1.bf16.msra.mxu0 0
        %8581 = vmatprep.subr.bf16.mxu0 0
        %8582 = vmatpush1.bf16.msra.mxu0 0
        %8583 = vmatprep.subr.bf16.mxu0 0
        %8584 = vmatpush1.bf16.msra.mxu0 0
        %8585 = vmatprep.subr.bf16.mxu0 0
        %8586 = vmatpush1.bf16.msra.mxu0 0
        %8587 = vmatprep.mubr.bf16.mxu0 0
        %8588 = vmatmul.mubr.bf16.gmra.mrb[0].mxu0 %v8544
        %v8589 = vpop.f32.mrb[0].mxu0
        %v8590 = vadd.f32 0.0, %v8589
        %v8591 = vpop.f32.mrb[0].mxu0
        %v8592 = vadd.f32 0.0, %v8591
        %v8593 = vpop.f32.mrb[0].mxu0
        %v8594 = vpop.f32.mrb[0].mxu0
        %8595 = vdwg.mxu0
        %8596 = vmatprep.subr.bf16.mxu0 %v3444
        %8597 = vmatpush1.bf16.msra.mxu0 %v3441
        %8598 = vmatprep.subr.bf16.mxu0 0
        %8599 = vmatpush1.bf16.msra.mxu0 0
        %8600 = vmatprep.subr.bf16.mxu0 0
        %8601 = vmatpush1.bf16.msra.mxu0 0
        %8602 = vmatprep.subr.bf16.mxu0 0
        %8603 = vmatpush1.bf16.msra.mxu0 0
        %8604 = vmatprep.subr.bf16.mxu0 0
        %8605 = vmatpush1.bf16.msra.mxu0 0
        %8606 = vmatprep.subr.bf16.mxu0 0
        %8607 = vmatpush1.bf16.msra.mxu0 0
        %8608 = vmatprep.subr.bf16.mxu0 0
        %8609 = vmatpush1.bf16.msra.mxu0 0
        %8610 = vmatprep.subr.bf16.mxu0 0
        %8611 = vmatpush1.bf16.msra.mxu0 0
        %8612 = vmatprep.subr.bf16.mxu0 0
        %8613 = vmatpush1.bf16.msra.mxu0 0
        %8614 = vmatprep.subr.bf16.mxu0 0
        %8615 = vmatpush1.bf16.msra.mxu0 0
        %8616 = vmatprep.subr.bf16.mxu0 0
        %8617 = vmatpush1.bf16.msra.mxu0 0
        %8618 = vmatprep.subr.bf16.mxu0 0
        %8619 = vmatpush1.bf16.msra.mxu0 0
        %8620 = vmatprep.subr.bf16.mxu0 0
        %8621 = vmatpush1.bf16.msra.mxu0 0
        %8622 = vmatprep.subr.bf16.mxu0 0
        %8623 = vmatpush1.bf16.msra.mxu0 0
        %8624 = vmatprep.subr.bf16.mxu0 0
        %8625 = vmatpush1.bf16.msra.mxu0 0
        %8626 = vmatprep.subr.bf16.mxu0 0
        %8627 = vmatpush1.bf16.msra.mxu0 0
        %8628 = vmatprep.mubr.bf16.mxu0 0
        %8629 = vmatmul.mubr.bf16.gmra.mrb[0].mxu0 %v8544
        %v8630 = vpop.f32.mrb[0].mxu0
        %v8631 = vadd.f32 0.0, %v8630
        %v8632 = vpop.f32.mrb[0].mxu0
        %v8633 = vadd.f32 0.0, %v8632
        %v8634 = vpop.f32.mrb[0].mxu0
        %v8635 = vpop.f32.mrb[0].mxu0
        %8636 = vdwg.mxu0
        %8637 = vmatprep.subr.bf16.mxu0 %v3450
        %8638 = vmatpush1.bf16.msra.mxu0 %v3447
        %8639 = vmatprep.subr.bf16.mxu0 0
        %8640 = vmatpush1.bf16.msra.mxu0 0
        %8641 = vmatprep.subr.bf16.mxu0 0
        %8642 = vmatpush1.bf16.msra.mxu0 0
        %8643 = vmatprep.subr.bf16.mxu0 0
        %8644 = vmatpush1.bf16.msra.mxu0 0
        %8645 = vmatprep.subr.bf16.mxu0 0
        %8646 = vmatpush1.bf16.msra.mxu0 0
        %8647 = vmatprep.subr.bf16.mxu0 0
        %8648 = vmatpush1.bf16.msra.mxu0 0
        %8649 = vmatprep.subr.bf16.mxu0 0
        %8650 = vmatpush1.bf16.msra.mxu0 0
        %8651 = vmatprep.subr.bf16.mxu0 0
        %8652 = vmatpush1.bf16.msra.mxu0 0
        %8653 = vmatprep.subr.bf16.mxu0 0
        %8654 = vmatpush1.bf16.msra.mxu0 0
        %8655 = vmatprep.subr.bf16.mxu0 0
        %8656 = vmatpush1.bf16.msra.mxu0 0
        %8657 = vmatprep.subr.bf16.mxu0 0
        %8658 = vmatpush1.bf16.msra.mxu0 0
        %8659 = vmatprep.subr.bf16.mxu0 0
        %8660 = vmatpush1.bf16.msra.mxu0 0
        %8661 = vmatprep.subr.bf16.mxu0 0
        %8662 = vmatpush1.bf16.msra.mxu0 0
        %8663 = vmatprep.subr.bf16.mxu0 0
        %8664 = vmatpush1.bf16.msra.mxu0 0
        %8665 = vmatprep.subr.bf16.mxu0 0
        %8666 = vmatpush1.bf16.msra.mxu0 0
        %8667 = vmatprep.subr.bf16.mxu0 0
        %8668 = vmatpush1.bf16.msra.mxu0 0
        %8669 = vmatprep.mubr.bf16.mxu0 0
        %8670 = vmatmul.mubr.bf16.gmra.mrb[0].mxu0 %v8544
        %v8671 = vpop.f32.mrb[0].mxu0
        %v8672 = vadd.f32 0.0, %v8671
        %v8673 = vpop.f32.mrb[0].mxu0
        %v8674 = vadd.f32 0.0, %v8673
        %v8675 = vpop.f32.mrb[0].mxu0
        %v8676 = vpop.f32.mrb[0].mxu0
        %8677 = vdwg.mxu0
        %8678 = vmatprep.subr.bf16.mxu0 %v6027
        %8679 = vmatpush1.bf16.msra.mxu0 %v6024
        %8680 = vmatprep.subr.bf16.mxu0 0
        %8681 = vmatpush1.bf16.msra.mxu0 0
        %8682 = vmatprep.subr.bf16.mxu0 0
        %8683 = vmatpush1.bf16.msra.mxu0 0
        %8684 = vmatprep.subr.bf16.mxu0 0
        %8685 = vmatpush1.bf16.msra.mxu0 0
        %8686 = vmatprep.subr.bf16.mxu0 0
        %8687 = vmatpush1.bf16.msra.mxu0 0
        %8688 = vmatprep.subr.bf16.mxu0 0
        %8689 = vmatpush1.bf16.msra.mxu0 0
        %8690 = vmatprep.subr.bf16.mxu0 0
        %8691 = vmatpush1.bf16.msra.mxu0 0
        %8692 = vmatprep.subr.bf16.mxu0 0
        %8693 = vmatpush1.bf16.msra.mxu0 0
        %8694 = vmatprep.subr.bf16.mxu0 0
        %8695 = vmatpush1.bf16.msra.mxu0 0
        %8696 = vmatprep.subr.bf16.mxu0 0
        %8697 = vmatpush1.bf16.msra.mxu0 0
        %8698 = vmatprep.subr.bf16.mxu0 0
        %8699 = vmatpush1.bf16.msra.mxu0 0
        %8700 = vmatprep.subr.bf16.mxu0 0
        %8701 = vmatpush1.bf16.msra.mxu0 0
        %8702 = vmatprep.subr.bf16.mxu0 0
        %8703 = vmatpush1.bf16.msra.mxu0 0
        %8704 = vmatprep.subr.bf16.mxu0 0
        %8705 = vmatpush1.bf16.msra.mxu0 0
        %8706 = vmatprep.subr.bf16.mxu0 0
        %8707 = vmatpush1.bf16.msra.mxu0 0
        %8708 = vmatprep.subr.bf16.mxu0 0
        %8709 = vmatpush1.bf16.msra.mxu0 0
        %8710 = vmatprep.mubr.bf16.mxu0 0
        %8711 = vmatmul.mubr.bf16.gmra.mrb[0].mxu0 %v8544
        %v8712 = vpop.f32.mrb[0].mxu0
        %v8713 = vadd.f32 0.0, %v8712
        %v8714 = vpop.f32.mrb[0].mxu0
        %v8715 = vadd.f32 0.0, %v8714
        %v8716 = vpop.f32.mrb[0].mxu0
        %v8717 = vpop.f32.mrb[0].mxu0
        %8718 = vdwg.mxu0
        %8719 = vmatprep.subr.bf16.mxu0 %v8547
        %8720 = vmatpush1.bf16.msra.mxu0 %v6030
        %8721 = vmatprep.subr.bf16.mxu0 0
        %8722 = vmatpush1.bf16.msra.mxu0 0
        %8723 = vmatprep.subr.bf16.mxu0 0
        %8724 = vmatpush1.bf16.msra.mxu0 0
        %8725 = vmatprep.subr.bf16.mxu0 0
        %8726 = vmatpush1.bf16.msra.mxu0 0
        %8727 = vmatprep.subr.bf16.mxu0 0
        %8728 = vmatpush1.bf16.msra.mxu0 0
        %8729 = vmatprep.subr.bf16.mxu0 0
        %8730 = vmatpush1.bf16.msra.mxu0 0
        %8731 = vmatprep.subr.bf16.mxu0 0
        %8732 = vmatpush1.bf16.msra.mxu0 0
        %8733 = vmatprep.subr.bf16.mxu0 0
        %8734 = vmatpush1.bf16.msra.mxu0 0
        %8735 = vmatprep.subr.bf16.mxu0 0
        %8736 = vmatpush1.bf16.msra.mxu0 0
        %8737 = vmatprep.subr.bf16.mxu0 0
        %8738 = vmatpush1.bf16.msra.mxu0 0
        %8739 = vmatprep.subr.bf16.mxu0 0
        %8740 = vmatpush1.bf16.msra.mxu0 0
        %8741 = vmatprep.subr.bf16.mxu0 0
        %8742 = vmatpush1.bf16.msra.mxu0 0
        %8743 = vmatprep.subr.bf16.mxu0 0
        %8744 = vmatpush1.bf16.msra.mxu0 0
        %8745 = vmatprep.subr.bf16.mxu0 0
        %8746 = vmatpush1.bf16.msra.mxu0 0
        %8747 = vmatprep.subr.bf16.mxu0 0
        %8748 = vmatpush1.bf16.msra.mxu0 0
        %8749 = vmatprep.subr.bf16.mxu0 0
        %8750 = vmatpush1.bf16.msra.mxu0 0
        %8751 = vmatprep.mubr.bf16.mxu0 0
        %8752 = vmatmul.mubr.bf16.gmra.mrb[0].mxu0 %v8544
        %v8753 = vpop.f32.mrb[0].mxu0
        %v8754 = vadd.f32 0.0, %v8753
        %v8755 = vpop.f32.mrb[0].mxu0
        %v8756 = vadd.f32 0.0, %v8755
        %v8757 = vpop.f32.mrb[0].mxu0
        %v8758 = vpop.f32.mrb[0].mxu0
        %8759 = vdwg.mxu0
        %8760 = vmatprep.subr.bf16.mxu0 %v8553
        %8761 = vmatpush1.bf16.msra.mxu0 %v8550
        %8762 = vmatprep.subr.bf16.mxu0 0
        %8763 = vmatpush1.bf16.msra.mxu0 0
        %8764 = vmatprep.subr.bf16.mxu0 0
        %8765 = vmatpush1.bf16.msra.mxu0 0
        %8766 = vmatprep.subr.bf16.mxu0 0
        %8767 = vmatpush1.bf16.msra.mxu0 0
        %8768 = vmatprep.subr.bf16.mxu0 0
        %8769 = vmatpush1.bf16.msra.mxu0 0
        %8770 = vmatprep.subr.bf16.mxu0 0
        %8771 = vmatpush1.bf16.msra.mxu0 0
        %8772 = vmatprep.subr.bf16.mxu0 0
        %8773 = vmatpush1.bf16.msra.mxu0 0
        %8774 = vmatprep.subr.bf16.mxu0 0
        %8775 = vmatpush1.bf16.msra.mxu0 0
        %8776 = vmatprep.subr.bf16.mxu0 0
        %8777 = vmatpush1.bf16.msra.mxu0 0
        %8778 = vmatprep.subr.bf16.mxu0 0
        %8779 = vmatpush1.bf16.msra.mxu0 0
        %8780 = vmatprep.subr.bf16.mxu0 0
        %8781 = vmatpush1.bf16.msra.mxu0 0
        %8782 = vmatprep.subr.bf16.mxu0 0
        %8783 = vmatpush1.bf16.msra.mxu0 0
        %8784 = vmatprep.subr.bf16.mxu0 0
        %8785 = vmatpush1.bf16.msra.mxu0 0
        %8786 = vmatprep.subr.bf16.mxu0 0
        %8787 = vmatpush1.bf16.msra.mxu0 0
        %8788 = vmatprep.subr.bf16.mxu0 0
        %8789 = vmatpush1.bf16.msra.mxu0 0
        %8790 = vmatprep.subr.bf16.mxu0 0
        %8791 = vmatpush1.bf16.msra.mxu0 0
        %8792 = vmatprep.mubr.bf16.mxu0 0
        %8793 = vmatmul.mubr.bf16.gmra.mrb[0].mxu0 %v8544
        %v8794 = vpop.f32.mrb[0].mxu0
        %v8795 = vadd.f32 0.0, %v8794
        %v8796 = vpop.f32.mrb[0].mxu0
        %v8797 = vadd.f32 0.0, %v8796
        %v8798 = vpop.f32.mrb[0].mxu0
        %v8799 = vpop.f32.mrb[0].mxu0
        %8800 = vdwg.mxu0
        %v8801 = vadd.f32 %v8520, %v8590
        %v8802 = vadd.f32 %v8521, %v8592
        %v8803 = vadd.f32 %v8522, %v8631
        %v8804 = vadd.f32 %v8523, %v8633
        %v8805 = vadd.f32 %v8524, %v8672
        %v8806 = vadd.f32 %v8525, %v8674
        %v8807 = vadd.f32 %v8526, %v8713
        %v8808 = vadd.f32 %v8527, %v8715
        %v8809 = vadd.f32 %v8528, %v8754
        %v8810 = vadd.f32 %v8529, %v8756
        %v8811 = vadd.f32 %v8530, %v8795
        %v8812 = vadd.f32 %v8531, %v8797
        %s8813 = scalar_lea.vmem %s4, 52
        %v8814 = vld [vmem:[%s8813] sm:$0x3]
        %8815 = vrot.lane.b32.xlu0 %v1052, 90
        %v8816 = vpop.permute.xlu0 %8815
        %8817 = vrot.lane.b32.xlu0 %v1053, 90
        %v8818 = vpop.permute.xlu0 %8817
        %8819 = vrot.lane.b32.xlu0 %v1054, 90
        %v8820 = vpop.permute.xlu0 %8819
        %v8821 = vsel %vm3738, %v6297, %v8816
        %v8822 = vsel %vm3738, %v8816, %v8818
        %v8823 = vsel %vm3738, %v8818, %v8820
        %v8825 = vsel %vm1110, %v8814, 0
        %v8828 = vsel %vm1114, %v8821, 0
        %v8831 = vsel %vm1114, %v8822, 0
        %v8834 = vsel %vm1114, %v8823, 0
        %8836 = vmatprep.subr.bf16.mxu0 %v3776
        %8837 = vmatpush1.bf16.msra.mxu0 %v3773
        %8838 = vmatprep.subr.bf16.mxu0 0
        %8839 = vmatpush1.bf16.msra.mxu0 0
        %8840 = vmatprep.subr.bf16.mxu0 0
        %8841 = vmatpush1.bf16.msra.mxu0 0
        %8842 = vmatprep.subr.bf16.mxu0 0
        %8843 = vmatpush1.bf16.msra.mxu0 0
        %8844 = vmatprep.subr.bf16.mxu0 0
        %8845 = vmatpush1.bf16.msra.mxu0 0
        %8846 = vmatprep.subr.bf16.mxu0 0
        %8847 = vmatpush1.bf16.msra.mxu0 0
        %8848 = vmatprep.subr.bf16.mxu0 0
        %8849 = vmatpush1.bf16.msra.mxu0 0
        %8850 = vmatprep.subr.bf16.mxu0 0
        %8851 = vmatpush1.bf16.msra.mxu0 0
        %8852 = vmatprep.subr.bf16.mxu0 0
        %8853 = vmatpush1.bf16.msra.mxu0 0
        %8854 = vmatprep.subr.bf16.mxu0 0
        %8855 = vmatpush1.bf16.msra.mxu0 0
        %8856 = vmatprep.subr.bf16.mxu0 0
        %8857 = vmatpush1.bf16.msra.mxu0 0
        %8858 = vmatprep.subr.bf16.mxu0 0
        %8859 = vmatpush1.bf16.msra.mxu0 0
        %8860 = vmatprep.subr.bf16.mxu0 0
        %8861 = vmatpush1.bf16.msra.mxu0 0
        %8862 = vmatprep.subr.bf16.mxu0 0
        %8863 = vmatpush1.bf16.msra.mxu0 0
        %8864 = vmatprep.subr.bf16.mxu0 0
        %8865 = vmatpush1.bf16.msra.mxu0 0
        %8866 = vmatprep.subr.bf16.mxu0 0
        %8867 = vmatpush1.bf16.msra.mxu0 0
        %8868 = vmatprep.mubr.bf16.mxu0 0
        %8869 = vmatmul.mubr.bf16.gmra.mrb[0].mxu0 %v8825
        %v8870 = vpop.f32.mrb[0].mxu0
        %v8871 = vadd.f32 0.0, %v8870
        %v8872 = vpop.f32.mrb[0].mxu0
        %v8873 = vadd.f32 0.0, %v8872
        %v8874 = vpop.f32.mrb[0].mxu0
        %v8875 = vpop.f32.mrb[0].mxu0
        %8876 = vdwg.mxu0
        %8877 = vmatprep.subr.bf16.mxu0 %v3782
        %8878 = vmatpush1.bf16.msra.mxu0 %v3779
        %8879 = vmatprep.subr.bf16.mxu0 0
        %8880 = vmatpush1.bf16.msra.mxu0 0
        %8881 = vmatprep.subr.bf16.mxu0 0
        %8882 = vmatpush1.bf16.msra.mxu0 0
        %8883 = vmatprep.subr.bf16.mxu0 0
        %8884 = vmatpush1.bf16.msra.mxu0 0
        %8885 = vmatprep.subr.bf16.mxu0 0
        %8886 = vmatpush1.bf16.msra.mxu0 0
        %8887 = vmatprep.subr.bf16.mxu0 0
        %8888 = vmatpush1.bf16.msra.mxu0 0
        %8889 = vmatprep.subr.bf16.mxu0 0
        %8890 = vmatpush1.bf16.msra.mxu0 0
        %8891 = vmatprep.subr.bf16.mxu0 0
        %8892 = vmatpush1.bf16.msra.mxu0 0
        %8893 = vmatprep.subr.bf16.mxu0 0
        %8894 = vmatpush1.bf16.msra.mxu0 0
        %8895 = vmatprep.subr.bf16.mxu0 0
        %8896 = vmatpush1.bf16.msra.mxu0 0
        %8897 = vmatprep.subr.bf16.mxu0 0
        %8898 = vmatpush1.bf16.msra.mxu0 0
        %8899 = vmatprep.subr.bf16.mxu0 0
        %8900 = vmatpush1.bf16.msra.mxu0 0
        %8901 = vmatprep.subr.bf16.mxu0 0
        %8902 = vmatpush1.bf16.msra.mxu0 0
        %8903 = vmatprep.subr.bf16.mxu0 0
        %8904 = vmatpush1.bf16.msra.mxu0 0
        %8905 = vmatprep.subr.bf16.mxu0 0
        %8906 = vmatpush1.bf16.msra.mxu0 0
        %8907 = vmatprep.subr.bf16.mxu0 0
        %8908 = vmatpush1.bf16.msra.mxu0 0
        %8909 = vmatprep.mubr.bf16.mxu0 0
        %8910 = vmatmul.mubr.bf16.gmra.mrb[0].mxu0 %v8825
        %v8911 = vpop.f32.mrb[0].mxu0
        %v8912 = vadd.f32 0.0, %v8911
        %v8913 = vpop.f32.mrb[0].mxu0
        %v8914 = vadd.f32 0.0, %v8913
        %v8915 = vpop.f32.mrb[0].mxu0
        %v8916 = vpop.f32.mrb[0].mxu0
        %8917 = vdwg.mxu0
        %8918 = vmatprep.subr.bf16.mxu0 %v3788
        %8919 = vmatpush1.bf16.msra.mxu0 %v3785
        %8920 = vmatprep.subr.bf16.mxu0 0
        %8921 = vmatpush1.bf16.msra.mxu0 0
        %8922 = vmatprep.subr.bf16.mxu0 0
        %8923 = vmatpush1.bf16.msra.mxu0 0
        %8924 = vmatprep.subr.bf16.mxu0 0
        %8925 = vmatpush1.bf16.msra.mxu0 0
        %8926 = vmatprep.subr.bf16.mxu0 0
        %8927 = vmatpush1.bf16.msra.mxu0 0
        %8928 = vmatprep.subr.bf16.mxu0 0
        %8929 = vmatpush1.bf16.msra.mxu0 0
        %8930 = vmatprep.subr.bf16.mxu0 0
        %8931 = vmatpush1.bf16.msra.mxu0 0
        %8932 = vmatprep.subr.bf16.mxu0 0
        %8933 = vmatpush1.bf16.msra.mxu0 0
        %8934 = vmatprep.subr.bf16.mxu0 0
        %8935 = vmatpush1.bf16.msra.mxu0 0
        %8936 = vmatprep.subr.bf16.mxu0 0
        %8937 = vmatpush1.bf16.msra.mxu0 0
        %8938 = vmatprep.subr.bf16.mxu0 0
        %8939 = vmatpush1.bf16.msra.mxu0 0
        %8940 = vmatprep.subr.bf16.mxu0 0
        %8941 = vmatpush1.bf16.msra.mxu0 0
        %8942 = vmatprep.subr.bf16.mxu0 0
        %8943 = vmatpush1.bf16.msra.mxu0 0
        %8944 = vmatprep.subr.bf16.mxu0 0
        %8945 = vmatpush1.bf16.msra.mxu0 0
        %8946 = vmatprep.subr.bf16.mxu0 0
        %8947 = vmatpush1.bf16.msra.mxu0 0
        %8948 = vmatprep.subr.bf16.mxu0 0
        %8949 = vmatpush1.bf16.msra.mxu0 0
        %8950 = vmatprep.mubr.bf16.mxu0 0
        %8951 = vmatmul.mubr.bf16.gmra.mrb[0].mxu0 %v8825
        %v8952 = vpop.f32.mrb[0].mxu0
        %v8953 = vadd.f32 0.0, %v8952
        %v8954 = vpop.f32.mrb[0].mxu0
        %v8955 = vadd.f32 0.0, %v8954
        %v8956 = vpop.f32.mrb[0].mxu0
        %v8957 = vpop.f32.mrb[0].mxu0
        %8958 = vdwg.mxu0
        %8959 = vmatprep.subr.bf16.mxu0 %v6308
        %8960 = vmatpush1.bf16.msra.mxu0 %v6305
        %8961 = vmatprep.subr.bf16.mxu0 0
        %8962 = vmatpush1.bf16.msra.mxu0 0
        %8963 = vmatprep.subr.bf16.mxu0 0
        %8964 = vmatpush1.bf16.msra.mxu0 0
        %8965 = vmatprep.subr.bf16.mxu0 0
        %8966 = vmatpush1.bf16.msra.mxu0 0
        %8967 = vmatprep.subr.bf16.mxu0 0
        %8968 = vmatpush1.bf16.msra.mxu0 0
        %8969 = vmatprep.subr.bf16.mxu0 0
        %8970 = vmatpush1.bf16.msra.mxu0 0
        %8971 = vmatprep.subr.bf16.mxu0 0
        %8972 = vmatpush1.bf16.msra.mxu0 0
        %8973 = vmatprep.subr.bf16.mxu0 0
        %8974 = vmatpush1.bf16.msra.mxu0 0
        %8975 = vmatprep.subr.bf16.mxu0 0
        %8976 = vmatpush1.bf16.msra.mxu0 0
        %8977 = vmatprep.subr.bf16.mxu0 0
        %8978 = vmatpush1.bf16.msra.mxu0 0
        %8979 = vmatprep.subr.bf16.mxu0 0
        %8980 = vmatpush1.bf16.msra.mxu0 0
        %8981 = vmatprep.subr.bf16.mxu0 0
        %8982 = vmatpush1.bf16.msra.mxu0 0
        %8983 = vmatprep.subr.bf16.mxu0 0
        %8984 = vmatpush1.bf16.msra.mxu0 0
        %8985 = vmatprep.subr.bf16.mxu0 0
        %8986 = vmatpush1.bf16.msra.mxu0 0
        %8987 = vmatprep.subr.bf16.mxu0 0
        %8988 = vmatpush1.bf16.msra.mxu0 0
        %8989 = vmatprep.subr.bf16.mxu0 0
        %8990 = vmatpush1.bf16.msra.mxu0 0
        %8991 = vmatprep.mubr.bf16.mxu0 0
        %8992 = vmatmul.mubr.bf16.gmra.mrb[0].mxu0 %v8825
        %v8993 = vpop.f32.mrb[0].mxu0
        %v8994 = vadd.f32 0.0, %v8993
        %v8995 = vpop.f32.mrb[0].mxu0
        %v8996 = vadd.f32 0.0, %v8995
        %v8997 = vpop.f32.mrb[0].mxu0
        %v8998 = vpop.f32.mrb[0].mxu0
        %8999 = vdwg.mxu0
        %9000 = vmatprep.subr.bf16.mxu0 %v8828
        %9001 = vmatpush1.bf16.msra.mxu0 %v6311
        %9002 = vmatprep.subr.bf16.mxu0 0
        %9003 = vmatpush1.bf16.msra.mxu0 0
        %9004 = vmatprep.subr.bf16.mxu0 0
        %9005 = vmatpush1.bf16.msra.mxu0 0
        %9006 = vmatprep.subr.bf16.mxu0 0
        %9007 = vmatpush1.bf16.msra.mxu0 0
        %9008 = vmatprep.subr.bf16.mxu0 0
        %9009 = vmatpush1.bf16.msra.mxu0 0
        %9010 = vmatprep.subr.bf16.mxu0 0
        %9011 = vmatpush1.bf16.msra.mxu0 0
        %9012 = vmatprep.subr.bf16.mxu0 0
        %9013 = vmatpush1.bf16.msra.mxu0 0
        %9014 = vmatprep.subr.bf16.mxu0 0
        %9015 = vmatpush1.bf16.msra.mxu0 0
        %9016 = vmatprep.subr.bf16.mxu0 0
        %9017 = vmatpush1.bf16.msra.mxu0 0
        %9018 = vmatprep.subr.bf16.mxu0 0
        %9019 = vmatpush1.bf16.msra.mxu0 0
        %9020 = vmatprep.subr.bf16.mxu0 0
        %9021 = vmatpush1.bf16.msra.mxu0 0
        %9022 = vmatprep.subr.bf16.mxu0 0
        %9023 = vmatpush1.bf16.msra.mxu0 0
        %9024 = vmatprep.subr.bf16.mxu0 0
        %9025 = vmatpush1.bf16.msra.mxu0 0
        %9026 = vmatprep.subr.bf16.mxu0 0
        %9027 = vmatpush1.bf16.msra.mxu0 0
        %9028 = vmatprep.subr.bf16.mxu0 0
        %9029 = vmatpush1.bf16.msra.mxu0 0
        %9030 = vmatprep.subr.bf16.mxu0 0
        %9031 = vmatpush1.bf16.msra.mxu0 0
        %9032 = vmatprep.mubr.bf16.mxu0 0
        %9033 = vmatmul.mubr.bf16.gmra.mrb[0].mxu0 %v8825
        %v9034 = vpop.f32.mrb[0].mxu0
        %v9035 = vadd.f32 0.0, %v9034
        %v9036 = vpop.f32.mrb[0].mxu0
        %v9037 = vadd.f32 0.0, %v9036
        %v9038 = vpop.f32.mrb[0].mxu0
        %v9039 = vpop.f32.mrb[0].mxu0
        %9040 = vdwg.mxu0
        %9041 = vmatprep.subr.bf16.mxu0 %v8834
        %9042 = vmatpush1.bf16.msra.mxu0 %v8831
        %9043 = vmatprep.subr.bf16.mxu0 0
        %9044 = vmatpush1.bf16.msra.mxu0 0
        %9045 = vmatprep.subr.bf16.mxu0 0
        %9046 = vmatpush1.bf16.msra.mxu0 0
        %9047 = vmatprep.subr.bf16.mxu0 0
        %9048 = vmatpush1.bf16.msra.mxu0 0
        %9049 = vmatprep.subr.bf16.mxu0 0
        %9050 = vmatpush1.bf16.msra.mxu0 0
        %9051 = vmatprep.subr.bf16.mxu0 0
        %9052 = vmatpush1.bf16.msra.mxu0 0
        %9053 = vmatprep.subr.bf16.mxu0 0
        %9054 = vmatpush1.bf16.msra.mxu0 0
        %9055 = vmatprep.subr.bf16.mxu0 0
        %9056 = vmatpush1.bf16.msra.mxu0 0
        %9057 = vmatprep.subr.bf16.mxu0 0
        %9058 = vmatpush1.bf16.msra.mxu0 0
        %9059 = vmatprep.subr.bf16.mxu0 0
        %9060 = vmatpush1.bf16.msra.mxu0 0
        %9061 = vmatprep.subr.bf16.mxu0 0
        %9062 = vmatpush1.bf16.msra.mxu0 0
        %9063 = vmatprep.subr.bf16.mxu0 0
        %9064 = vmatpush1.bf16.msra.mxu0 0
        %9065 = vmatprep.subr.bf16.mxu0 0
        %9066 = vmatpush1.bf16.msra.mxu0 0
        %9067 = vmatprep.subr.bf16.mxu0 0
        %9068 = vmatpush1.bf16.msra.mxu0 0
        %9069 = vmatprep.subr.bf16.mxu0 0
        %9070 = vmatpush1.bf16.msra.mxu0 0
        %9071 = vmatprep.subr.bf16.mxu0 0
        %9072 = vmatpush1.bf16.msra.mxu0 0
        %9073 = vmatprep.mubr.bf16.mxu0 0
        %9074 = vmatmul.mubr.bf16.gmra.mrb[0].mxu0 %v8825
        %v9075 = vpop.f32.mrb[0].mxu0
        %v9076 = vadd.f32 0.0, %v9075
        %v9077 = vpop.f32.mrb[0].mxu0
        %v9078 = vadd.f32 0.0, %v9077
        %v9079 = vpop.f32.mrb[0].mxu0
        %v9080 = vpop.f32.mrb[0].mxu0
        %9081 = vdwg.mxu0
        %v9082 = vadd.f32 %v8801, %v8871
        %v9083 = vadd.f32 %v8802, %v8873
        %v9084 = vadd.f32 %v8803, %v8912
        %v9085 = vadd.f32 %v8804, %v8914
        %v9086 = vadd.f32 %v8805, %v8953
        %v9087 = vadd.f32 %v8806, %v8955
        %v9088 = vadd.f32 %v8807, %v8994
        %v9089 = vadd.f32 %v8808, %v8996
        %v9090 = vadd.f32 %v8809, %v9035
        %v9091 = vadd.f32 %v8810, %v9037
        %v9092 = vadd.f32 %v8811, %v9076
        %v9093 = vadd.f32 %v8812, %v9078
        %v9094 = vld [vmem:[%s5] sm:$0xf]
        %9096 = vset.pattern.permute.xlu0 0
        %9097 = vperm.xlu0 %9096, %v9094
        %v9098 = vpop.permute.xlu0 %9097
        %v9100 = vadd.f32 %v9082, %v9098
        %v9101 = vadd.f32 %v9083, %v9098
        %v9102 = vadd.f32 %v9084, %v9098
        %v9103 = vadd.f32 %v9085, %v9098
        %v9104 = vadd.f32 %v9086, %v9098
        %v9105 = vadd.f32 %v9087, %v9098
        %v9106 = vadd.f32 %v9088, %v9098
        %v9107 = vadd.f32 %v9089, %v9098
        %v9108 = vadd.f32 %v9090, %v9098
        %v9109 = vadd.f32 %v9091, %v9098
        %v9110 = vadd.f32 %v9092, %v9098
        %v9111 = vadd.f32 %v9093, %v9098
        %v9112 = vmax.f32 %v9100, 0.0
        %v9113 = vmax.f32 %v9101, 0.0
        %v9114 = vmax.f32 %v9102, 0.0
        %v9115 = vmax.f32 %v9103, 0.0
        %v9116 = vmax.f32 %v9104, 0.0
        %v9117 = vmax.f32 %v9105, 0.0
        %v9118 = vmax.f32 %v9106, 0.0
        %v9119 = vmax.f32 %v9107, 0.0
        %v9120 = vmax.f32 %v9108, 0.0
        %v9121 = vmax.f32 %v9109, 0.0
        %v9122 = vmax.f32 %v9110, 0.0
        %v9123 = vmax.f32 %v9111, 0.0
        %v9124 = vpack.c.bf16 %v9112, %v9112
        %v9125 = vpack.c.bf16 %v9113, %v9113
        %v9126 = vpack.c.bf16 %v9114, %v9114
        %v9127 = vpack.c.bf16 %v9115, %v9115
        %v9128 = vpack.c.bf16 %v9116, %v9116
        %v9129 = vpack.c.bf16 %v9117, %v9117
        %v9130 = vpack.c.bf16 %v9118, %v9118
        %v9131 = vpack.c.bf16 %v9119, %v9119
        %v9132 = vpack.c.bf16 %v9120, %v9120
        %v9133 = vpack.c.bf16 %v9121, %v9121
        %v9134 = vpack.c.bf16 %v9122, %v9122
        %v9135 = vpack.c.bf16 %v9123, %v9123
        %9136 = vrot.lane.b32.xlu0 %v362, 109
        %v9137 = vpop.permute.xlu0 %9136
        %9138 = vrot.lane.b32.xlu0 %v363, 109
        %v9139 = vpop.permute.xlu0 %9138
        %9140 = vrot.lane.b32.xlu0 %v364, 109
        %v9141 = vpop.permute.xlu0 %9140
        %9142 = vrot.lane.b32.xlu0 %v365, 109
        %v9143 = vpop.permute.xlu0 %9142
        %9144 = vrot.lane.b32.xlu0 %v366, 109
        %v9145 = vpop.permute.xlu0 %9144
        %9146 = vrot.lane.b32.xlu0 %v367, 109
        %v9147 = vpop.permute.xlu0 %9146
        %9148 = vrot.lane.b32.xlu0 %v368, 109
        %v9149 = vpop.permute.xlu0 %9148
        %9150 = vrot.lane.b32.xlu0 %v372, 109
        %v9151 = vpop.permute.xlu0 %9150
        %9152 = vrot.lane.b32.xlu0 %v373, 109
        %v9153 = vpop.permute.xlu0 %9152
        %9154 = vrot.lane.b32.xlu0 %v374, 109
        %v9155 = vpop.permute.xlu0 %9154
        %9156 = vrot.lane.b32.xlu0 %v375, 109
        %v9157 = vpop.permute.xlu0 %9156
        %9158 = vrot.lane.b32.xlu0 %v376, 109
        %v9159 = vpop.permute.xlu0 %9158
        %9160 = vrot.lane.b32.xlu0 %v377, 109
        %v9161 = vpop.permute.xlu0 %9160
        %9162 = vrot.lane.b32.xlu0 %v378, 109
        %v9163 = vpop.permute.xlu0 %9162
        %v9164 = vrot.slane %v9137, 4
        %v9165 = vrot.slane %v9139, 4
        %v9166 = vrot.slane %v9141, 4
        %v9167 = vrot.slane %v9143, 4
        %v9168 = vrot.slane %v9145, 4
        %v9169 = vrot.slane %v9147, 4
        %v9170 = vrot.slane %v9149, 4
        %v9171 = vrot.slane %v9151, 4
        %v9172 = vrot.slane %v9153, 4
        %v9173 = vrot.slane %v9155, 4
        %v9174 = vrot.slane %v9157, 4
        %v9175 = vrot.slane %v9159, 4
        %v9176 = vrot.slane %v9161, 4
        %v9177 = vrot.slane %v9163, 4
        %vm9178 = vcmask 1043456
        %v9179 = vsel %vm9178, %v9164, %v9165
        %v9180 = vsel %vm2386, %v9179, %v9139
        %v9181 = vsel %vm9178, %v9165, %v9166
        %v9182 = vsel %vm2386, %v9181, %v9141
        %v9183 = vsel %vm9178, %v9166, %v9167
        %v9184 = vsel %vm2386, %v9183, %v9143
        %v9185 = vsel %vm9178, %v9167, %v9168
        %v9186 = vsel %vm2386, %v9185, %v9145
        %v9187 = vsel %vm9178, %v9168, %v9169
        %v9188 = vsel %vm2386, %v9187, %v9147
        %v9189 = vsel %vm9178, %v9169, %v9170
        %v9190 = vsel %vm2386, %v9189, %v9149
        %v9191 = vsel %vm9178, %v9171, %v9172
        %v9192 = vsel %vm2386, %v9191, %v9153
        %v9193 = vsel %vm9178, %v9172, %v9173
        %v9194 = vsel %vm2386, %v9193, %v9155
        %v9195 = vsel %vm9178, %v9173, %v9174
        %v9196 = vsel %vm2386, %v9195, %v9157
        %v9197 = vsel %vm9178, %v9174, %v9175
        %v9198 = vsel %vm2386, %v9197, %v9159
        %v9199 = vsel %vm9178, %v9175, %v9176
        %v9200 = vsel %vm2386, %v9199, %v9161
        %v9201 = vsel %vm9178, %v9176, %v9177
        %v9202 = vsel %vm2386, %v9201, %v9163
        %v9215 = vunpack.c.l.bf16 %v9180
        %v9216 = vunpack.c.h.bf16 %v9180
        %v9217 = vunpack.c.l.bf16 %v9182
        %v9218 = vunpack.c.h.bf16 %v9182
        %v9219 = vunpack.c.l.bf16 %v9184
        %v9220 = vunpack.c.h.bf16 %v9184
        %v9221 = vunpack.c.l.bf16 %v9186
        %v9222 = vunpack.c.h.bf16 %v9186
        %v9223 = vunpack.c.l.bf16 %v9188
        %v9224 = vunpack.c.h.bf16 %v9188
        %v9225 = vunpack.c.l.bf16 %v9190
        %v9226 = vunpack.c.h.bf16 %v9190
        %v9227 = vunpack.c.l.bf16 %v9192
        %v9228 = vunpack.c.h.bf16 %v9192
        %v9229 = vunpack.c.l.bf16 %v9194
        %v9230 = vunpack.c.h.bf16 %v9194
        %v9231 = vunpack.c.l.bf16 %v9196
        %v9232 = vunpack.c.h.bf16 %v9196
        %v9233 = vunpack.c.l.bf16 %v9198
        %v9234 = vunpack.c.h.bf16 %v9198
        %v9235 = vunpack.c.l.bf16 %v9200
        %v9236 = vunpack.c.h.bf16 %v9200
        %v9237 = vunpack.c.l.bf16 %v9202
        %v9238 = vunpack.c.h.bf16 %v9202
        %v9239 = vld [vmem:[%s6] sm:$0xf]
        %v9240 = vld [vmem:[%s6 + $0x4] sm:$0xf]
        %v9241 = vld [vmem:[%s7] sm:$0xff]
        %v9242 = vld [vmem:[%s7 + $0x8] sm:$0xff]
        %9244 = vset.pattern.permute.xlu0 0
        %9245 = vperm.xlu0 %9244, %v9241
        %v9246 = vpop.permute.xlu0 %9245
        %9249 = vset.pattern.permute.xlu0 0
        %9250 = vperm.xlu0 %9249, %v9242
        %v9251 = vpop.permute.xlu0 %9250
        %v9255 = vunpack.c.l.b16 %v9239
        %v9256 = vunpack.c.l.b16 %v9240
        %v9257 = vpack.c.b16 %v9256, %v9255
        %v9259 = vsel %vm1110, %v9257, 0
        %v9262 = vsel %vm1114, %v9124, 0
        %v9265 = vsel %vm1114, %v9125, 0
        %v9268 = vsel %vm1114, %v9126, 0
        %v9271 = vsel %vm1114, %v9127, 0
        %v9274 = vsel %vm1114, %v9128, 0
        %v9277 = vsel %vm1114, %v9129, 0
        %v9280 = vsel %vm1114, %v9130, 0
        %v9283 = vsel %vm1114, %v9131, 0
        %v9286 = vsel %vm1114, %v9132, 0
        %v9289 = vsel %vm1114, %v9133, 0
        %v9292 = vsel %vm1114, %v9134, 0
        %v9295 = vsel %vm1114, %v9135, 0
        %9297 = vmatprep.subr.bf16.mxu0 %v9265
        %9298 = vmatpush1.bf16.msra.mxu0 %v9262
        %9299 = vmatprep.subr.bf16.mxu0 0
        %9300 = vmatpush1.bf16.msra.mxu0 0
        %9301 = vmatprep.subr.bf16.mxu0 0
        %9302 = vmatpush1.bf16.msra.mxu0 0
        %9303 = vmatprep.subr.bf16.mxu0 0
        %9304 = vmatpush1.bf16.msra.mxu0 0
        %9305 = vmatprep.subr.bf16.mxu0 0
        %9306 = vmatpush1.bf16.msra.mxu0 0
        %9307 = vmatprep.subr.bf16.mxu0 0
        %9308 = vmatpush1.bf16.msra.mxu0 0
        %9309 = vmatprep.subr.bf16.mxu0 0
        %9310 = vmatpush1.bf16.msra.mxu0 0
        %9311 = vmatprep.subr.bf16.mxu0 0
        %9312 = vmatpush1.bf16.msra.mxu0 0
        %9313 = vmatprep.subr.bf16.mxu0 0
        %9314 = vmatpush1.bf16.msra.mxu0 0
        %9315 = vmatprep.subr.bf16.mxu0 0
        %9316 = vmatpush1.bf16.msra.mxu0 0
        %9317 = vmatprep.subr.bf16.mxu0 0
        %9318 = vmatpush1.bf16.msra.mxu0 0
        %9319 = vmatprep.subr.bf16.mxu0 0
        %9320 = vmatpush1.bf16.msra.mxu0 0
        %9321 = vmatprep.subr.bf16.mxu0 0
        %9322 = vmatpush1.bf16.msra.mxu0 0
        %9323 = vmatprep.subr.bf16.mxu0 0
        %9324 = vmatpush1.bf16.msra.mxu0 0
        %9325 = vmatprep.subr.bf16.mxu0 0
        %9326 = vmatpush1.bf16.msra.mxu0 0
        %9327 = vmatprep.subr.bf16.mxu0 0
        %9328 = vmatpush1.bf16.msra.mxu0 0
        %9329 = vmatprep.mubr.bf16.mxu0 0
        %9330 = vmatmul.mubr.bf16.gmra.mrb[0].mxu0 %v9259
        %v9331 = vpop.f32.mrb[0].mxu0
        %v9332 = vadd.f32 %v9246, %v9331
        %v9333 = vpop.f32.mrb[0].mxu0
        %v9334 = vadd.f32 %v9246, %v9333
        %v9335 = vpop.f32.mrb[0].mxu0
        %v9336 = vadd.f32 %v9251, %v9335
        %v9337 = vpop.f32.mrb[0].mxu0
        %v9338 = vadd.f32 %v9251, %v9337
        %9339 = vdwg.mxu0
        %9340 = vmatprep.subr.bf16.mxu0 %v9271
        %9341 = vmatpush1.bf16.msra.mxu0 %v9268
        %9342 = vmatprep.subr.bf16.mxu0 0
        %9343 = vmatpush1.bf16.msra.mxu0 0
        %9344 = vmatprep.subr.bf16.mxu0 0
        %9345 = vmatpush1.bf16.msra.mxu0 0
        %9346 = vmatprep.subr.bf16.mxu0 0
        %9347 = vmatpush1.bf16.msra.mxu0 0
        %9348 = vmatprep.subr.bf16.mxu0 0
        %9349 = vmatpush1.bf16.msra.mxu0 0
        %9350 = vmatprep.subr.bf16.mxu0 0
        %9351 = vmatpush1.bf16.msra.mxu0 0
        %9352 = vmatprep.subr.bf16.mxu0 0
        %9353 = vmatpush1.bf16.msra.mxu0 0
        %9354 = vmatprep.subr.bf16.mxu0 0
        %9355 = vmatpush1.bf16.msra.mxu0 0
        %9356 = vmatprep.subr.bf16.mxu0 0
        %9357 = vmatpush1.bf16.msra.mxu0 0
        %9358 = vmatprep.subr.bf16.mxu0 0
        %9359 = vmatpush1.bf16.msra.mxu0 0
        %9360 = vmatprep.subr.bf16.mxu0 0
        %9361 = vmatpush1.bf16.msra.mxu0 0
        %9362 = vmatprep.subr.bf16.mxu0 0
        %9363 = vmatpush1.bf16.msra.mxu0 0
        %9364 = vmatprep.subr.bf16.mxu0 0
        %9365 = vmatpush1.bf16.msra.mxu0 0
        %9366 = vmatprep.subr.bf16.mxu0 0
        %9367 = vmatpush1.bf16.msra.mxu0 0
        %9368 = vmatprep.subr.bf16.mxu0 0
        %9369 = vmatpush1.bf16.msra.mxu0 0
        %9370 = vmatprep.subr.bf16.mxu0 0
        %9371 = vmatpush1.bf16.msra.mxu0 0
        %9372 = vmatprep.mubr.bf16.mxu0 0
        %9373 = vmatmul.mubr.bf16.gmra.mrb[0].mxu0 %v9259
        %v9374 = vpop.f32.mrb[0].mxu0
        %v9375 = vadd.f32 %v9246, %v9374
        %v9376 = vpop.f32.mrb[0].mxu0
        %v9377 = vadd.f32 %v9246, %v9376
        %v9378 = vpop.f32.mrb[0].mxu0
        %v9379 = vadd.f32 %v9251, %v9378
        %v9380 = vpop.f32.mrb[0].mxu0
        %v9381 = vadd.f32 %v9251, %v9380
        %9382 = vdwg.mxu0
        %9383 = vmatprep.subr.bf16.mxu0 %v9277
        %9384 = vmatpush1.bf16.msra.mxu0 %v9274
        %9385 = vmatprep.subr.bf16.mxu0 0
        %9386 = vmatpush1.bf16.msra.mxu0 0
        %9387 = vmatprep.subr.bf16.mxu0 0
        %9388 = vmatpush1.bf16.msra.mxu0 0
        %9389 = vmatprep.subr.bf16.mxu0 0
        %9390 = vmatpush1.bf16.msra.mxu0 0
        %9391 = vmatprep.subr.bf16.mxu0 0
        %9392 = vmatpush1.bf16.msra.mxu0 0
        %9393 = vmatprep.subr.bf16.mxu0 0
        %9394 = vmatpush1.bf16.msra.mxu0 0
        %9395 = vmatprep.subr.bf16.mxu0 0
        %9396 = vmatpush1.bf16.msra.mxu0 0
        %9397 = vmatprep.subr.bf16.mxu0 0
        %9398 = vmatpush1.bf16.msra.mxu0 0
        %9399 = vmatprep.subr.bf16.mxu0 0
        %9400 = vmatpush1.bf16.msra.mxu0 0
        %9401 = vmatprep.subr.bf16.mxu0 0
        %9402 = vmatpush1.bf16.msra.mxu0 0
        %9403 = vmatprep.subr.bf16.mxu0 0
        %9404 = vmatpush1.bf16.msra.mxu0 0
        %9405 = vmatprep.subr.bf16.mxu0 0
        %9406 = vmatpush1.bf16.msra.mxu0 0
        %9407 = vmatprep.subr.bf16.mxu0 0
        %9408 = vmatpush1.bf16.msra.mxu0 0
        %9409 = vmatprep.subr.bf16.mxu0 0
        %9410 = vmatpush1.bf16.msra.mxu0 0
        %9411 = vmatprep.subr.bf16.mxu0 0
        %9412 = vmatpush1.bf16.msra.mxu0 0
        %9413 = vmatprep.subr.bf16.mxu0 0
        %9414 = vmatpush1.bf16.msra.mxu0 0
        %9415 = vmatprep.mubr.bf16.mxu0 0
        %9416 = vmatmul.mubr.bf16.gmra.mrb[0].mxu0 %v9259
        %v9417 = vpop.f32.mrb[0].mxu0
        %v9418 = vadd.f32 %v9246, %v9417
        %v9419 = vpop.f32.mrb[0].mxu0
        %v9420 = vadd.f32 %v9246, %v9419
        %v9421 = vpop.f32.mrb[0].mxu0
        %v9422 = vadd.f32 %v9251, %v9421
        %v9423 = vpop.f32.mrb[0].mxu0
        %v9424 = vadd.f32 %v9251, %v9423
        %9425 = vdwg.mxu0
        %9426 = vmatprep.subr.bf16.mxu0 %v9283
        %9427 = vmatpush1.bf16.msra.mxu0 %v9280
        %9428 = vmatprep.subr.bf16.mxu0 0
        %9429 = vmatpush1.bf16.msra.mxu0 0
        %9430 = vmatprep.subr.bf16.mxu0 0
        %9431 = vmatpush1.bf16.msra.mxu0 0
        %9432 = vmatprep.subr.bf16.mxu0 0
        %9433 = vmatpush1.bf16.msra.mxu0 0
        %9434 = vmatprep.subr.bf16.mxu0 0
        %9435 = vmatpush1.bf16.msra.mxu0 0
        %9436 = vmatprep.subr.bf16.mxu0 0
        %9437 = vmatpush1.bf16.msra.mxu0 0
        %9438 = vmatprep.subr.bf16.mxu0 0
        %9439 = vmatpush1.bf16.msra.mxu0 0
        %9440 = vmatprep.subr.bf16.mxu0 0
        %9441 = vmatpush1.bf16.msra.mxu0 0
        %9442 = vmatprep.subr.bf16.mxu0 0
        %9443 = vmatpush1.bf16.msra.mxu0 0
        %9444 = vmatprep.subr.bf16.mxu0 0
        %9445 = vmatpush1.bf16.msra.mxu0 0
        %9446 = vmatprep.subr.bf16.mxu0 0
        %9447 = vmatpush1.bf16.msra.mxu0 0
        %9448 = vmatprep.subr.bf16.mxu0 0
        %9449 = vmatpush1.bf16.msra.mxu0 0
        %9450 = vmatprep.subr.bf16.mxu0 0
        %9451 = vmatpush1.bf16.msra.mxu0 0
        %9452 = vmatprep.subr.bf16.mxu0 0
        %9453 = vmatpush1.bf16.msra.mxu0 0
        %9454 = vmatprep.subr.bf16.mxu0 0
        %9455 = vmatpush1.bf16.msra.mxu0 0
        %9456 = vmatprep.subr.bf16.mxu0 0
        %9457 = vmatpush1.bf16.msra.mxu0 0
        %9458 = vmatprep.mubr.bf16.mxu0 0
        %9459 = vmatmul.mubr.bf16.gmra.mrb[0].mxu0 %v9259
        %v9460 = vpop.f32.mrb[0].mxu0
        %v9461 = vadd.f32 %v9246, %v9460
        %v9462 = vpop.f32.mrb[0].mxu0
        %v9463 = vadd.f32 %v9246, %v9462
        %v9464 = vpop.f32.mrb[0].mxu0
        %v9465 = vadd.f32 %v9251, %v9464
        %v9466 = vpop.f32.mrb[0].mxu0
        %v9467 = vadd.f32 %v9251, %v9466
        %9468 = vdwg.mxu0
        %9469 = vmatprep.subr.bf16.mxu0 %v9289
        %9470 = vmatpush1.bf16.msra.mxu0 %v9286
        %9471 = vmatprep.subr.bf16.mxu0 0
        %9472 = vmatpush1.bf16.msra.mxu0 0
        %9473 = vmatprep.subr.bf16.mxu0 0
        %9474 = vmatpush1.bf16.msra.mxu0 0
        %9475 = vmatprep.subr.bf16.mxu0 0
        %9476 = vmatpush1.bf16.msra.mxu0 0
        %9477 = vmatprep.subr.bf16.mxu0 0
        %9478 = vmatpush1.bf16.msra.mxu0 0
        %9479 = vmatprep.subr.bf16.mxu0 0
        %9480 = vmatpush1.bf16.msra.mxu0 0
        %9481 = vmatprep.subr.bf16.mxu0 0
        %9482 = vmatpush1.bf16.msra.mxu0 0
        %9483 = vmatprep.subr.bf16.mxu0 0
        %9484 = vmatpush1.bf16.msra.mxu0 0
        %9485 = vmatprep.subr.bf16.mxu0 0
        %9486 = vmatpush1.bf16.msra.mxu0 0
        %9487 = vmatprep.subr.bf16.mxu0 0
        %9488 = vmatpush1.bf16.msra.mxu0 0
        %9489 = vmatprep.subr.bf16.mxu0 0
        %9490 = vmatpush1.bf16.msra.mxu0 0
        %9491 = vmatprep.subr.bf16.mxu0 0
        %9492 = vmatpush1.bf16.msra.mxu0 0
        %9493 = vmatprep.subr.bf16.mxu0 0
        %9494 = vmatpush1.bf16.msra.mxu0 0
        %9495 = vmatprep.subr.bf16.mxu0 0
        %9496 = vmatpush1.bf16.msra.mxu0 0
        %9497 = vmatprep.subr.bf16.mxu0 0
        %9498 = vmatpush1.bf16.msra.mxu0 0
        %9499 = vmatprep.subr.bf16.mxu0 0
        %9500 = vmatpush1.bf16.msra.mxu0 0
        %9501 = vmatprep.mubr.bf16.mxu0 0
        %9502 = vmatmul.mubr.bf16.gmra.mrb[0].mxu0 %v9259
        %v9503 = vpop.f32.mrb[0].mxu0
        %v9504 = vadd.f32 %v9246, %v9503
        %v9505 = vpop.f32.mrb[0].mxu0
        %v9506 = vadd.f32 %v9246, %v9505
        %v9507 = vpop.f32.mrb[0].mxu0
        %v9508 = vadd.f32 %v9251, %v9507
        %v9509 = vpop.f32.mrb[0].mxu0
        %v9510 = vadd.f32 %v9251, %v9509
        %9511 = vdwg.mxu0
        %9512 = vmatprep.subr.bf16.mxu0 %v9295
        %9513 = vmatpush1.bf16.msra.mxu0 %v9292
        %9514 = vmatprep.subr.bf16.mxu0 0
        %9515 = vmatpush1.bf16.msra.mxu0 0
        %9516 = vmatprep.subr.bf16.mxu0 0
        %9517 = vmatpush1.bf16.msra.mxu0 0
        %9518 = vmatprep.subr.bf16.mxu0 0
        %9519 = vmatpush1.bf16.msra.mxu0 0
        %9520 = vmatprep.subr.bf16.mxu0 0
        %9521 = vmatpush1.bf16.msra.mxu0 0
        %9522 = vmatprep.subr.bf16.mxu0 0
        %9523 = vmatpush1.bf16.msra.mxu0 0
        %9524 = vmatprep.subr.bf16.mxu0 0
        %9525 = vmatpush1.bf16.msra.mxu0 0
        %9526 = vmatprep.subr.bf16.mxu0 0
        %9527 = vmatpush1.bf16.msra.mxu0 0
        %9528 = vmatprep.subr.bf16.mxu0 0
        %9529 = vmatpush1.bf16.msra.mxu0 0
        %9530 = vmatprep.subr.bf16.mxu0 0
        %9531 = vmatpush1.bf16.msra.mxu0 0
        %9532 = vmatprep.subr.bf16.mxu0 0
        %9533 = vmatpush1.bf16.msra.mxu0 0
        %9534 = vmatprep.subr.bf16.mxu0 0
        %9535 = vmatpush1.bf16.msra.mxu0 0
        %9536 = vmatprep.subr.bf16.mxu0 0
        %9537 = vmatpush1.bf16.msra.mxu0 0
        %9538 = vmatprep.subr.bf16.mxu0 0
        %9539 = vmatpush1.bf16.msra.mxu0 0
        %9540 = vmatprep.subr.bf16.mxu0 0
        %9541 = vmatpush1.bf16.msra.mxu0 0
        %9542 = vmatprep.subr.bf16.mxu0 0
        %9543 = vmatpush1.bf16.msra.mxu0 0
        %9544 = vmatprep.mubr.bf16.mxu0 0
        %9545 = vmatmul.mubr.bf16.gmra.mrb[0].mxu0 %v9259
        %v9546 = vpop.f32.mrb[0].mxu0
        %v9547 = vadd.f32 %v9246, %v9546
        %v9548 = vpop.f32.mrb[0].mxu0
        %v9549 = vadd.f32 %v9246, %v9548
        %v9550 = vpop.f32.mrb[0].mxu0
        %v9551 = vadd.f32 %v9251, %v9550
        %v9552 = vpop.f32.mrb[0].mxu0
        %v9553 = vadd.f32 %v9251, %v9552
        %9554 = vdwg.mxu0
        %v9555 = vadd.f32 %v9332, %v9215
        %v9556 = vadd.f32 %v9334, %v9216
        %v9557 = vadd.f32 %v9375, %v9217
        %v9558 = vadd.f32 %v9377, %v9218
        %v9559 = vadd.f32 %v9418, %v9219
        %v9560 = vadd.f32 %v9420, %v9220
        %v9561 = vadd.f32 %v9461, %v9221
        %v9562 = vadd.f32 %v9463, %v9222
        %v9563 = vadd.f32 %v9504, %v9223
        %v9564 = vadd.f32 %v9506, %v9224
        %v9565 = vadd.f32 %v9547, %v9225
        %v9566 = vadd.f32 %v9549, %v9226
        %v9567 = vadd.f32 %v9336, %v9227
        %v9568 = vadd.f32 %v9338, %v9228
        %v9569 = vadd.f32 %v9379, %v9229
        %v9570 = vadd.f32 %v9381, %v9230
        %v9571 = vadd.f32 %v9422, %v9231
        %v9572 = vadd.f32 %v9424, %v9232
        %v9573 = vadd.f32 %v9465, %v9233
        %v9574 = vadd.f32 %v9467, %v9234
        %v9575 = vadd.f32 %v9508, %v9235
        %v9576 = vadd.f32 %v9510, %v9236
        %v9577 = vadd.f32 %v9551, %v9237
        %v9578 = vadd.f32 %v9553, %v9238
        %v9579 = vmax.f32 %v9555, 0.0
        %v9580 = vmax.f32 %v9556, 0.0
        %v9581 = vmax.f32 %v9557, 0.0
        %v9582 = vmax.f32 %v9558, 0.0
        %v9583 = vmax.f32 %v9559, 0.0
        %v9584 = vmax.f32 %v9560, 0.0
        %v9585 = vmax.f32 %v9561, 0.0
        %v9586 = vmax.f32 %v9562, 0.0
        %v9587 = vmax.f32 %v9563, 0.0
        %v9588 = vmax.f32 %v9564, 0.0
        %v9589 = vmax.f32 %v9565, 0.0
        %v9590 = vmax.f32 %v9566, 0.0
        %v9591 = vmax.f32 %v9567, 0.0
        %v9592 = vmax.f32 %v9568, 0.0
        %v9593 = vmax.f32 %v9569, 0.0
        %v9594 = vmax.f32 %v9570, 0.0
        %v9595 = vmax.f32 %v9571, 0.0
        %v9596 = vmax.f32 %v9572, 0.0
        %v9597 = vmax.f32 %v9573, 0.0
        %v9598 = vmax.f32 %v9574, 0.0
        %v9599 = vmax.f32 %v9575, 0.0
        %v9600 = vmax.f32 %v9576, 0.0
        %v9601 = vmax.f32 %v9577, 0.0
        %v9602 = vmax.f32 %v9578, 0.0
        %9603 = vst [vmem:[%s354] sm:$0xff] %v9579
        %9604 = vst [vmem:[%s354 + $0x8] sm:$0xff] %v9580
        %9605 = vst [vmem:[%s354 + $0x10] sm:$0xff] %v9581
        %9606 = vst [vmem:[%s354 + $0x18] sm:$0xff] %v9582
        %9607 = vst [vmem:[%s354 + $0x20] sm:$0xff] %v9583
        %9608 = vst [vmem:[%s354 + $0x28] sm:$0xff] %v9584
        %9609 = vst [vmem:[%s354 + $0x30] sm:$0xff] %v9585
        %9610 = vst [vmem:[%s354 + $0x38] sm:$0xff] %v9586
        %9611 = vst [vmem:[%s354 + $0x40] sm:$0xff] %v9587
        %9612 = vst [vmem:[%s354 + $0x48] sm:$0xff] %v9588
        %9613 = vst [vmem:[%s354 + $0x50] sm:$0xff] %v9589
        %9614 = vst [vmem:[%s354 + $0x58] sm:$0xff] %v9590
        %9615 = vst [vmem:[%s354 + $0x60] sm:$0xff] %v9591
        %9616 = vst [vmem:[%s354 + $0x68] sm:$0xff] %v9592
        %9617 = vst [vmem:[%s354 + $0x70] sm:$0xff] %v9593
        %9618 = vst [vmem:[%s354 + $0x78] sm:$0xff] %v9594
        %9619 = vst [vmem:[%s354 + $0x80] sm:$0xff] %v9595
        %9620 = vst [vmem:[%s354 + $0x88] sm:$0xff] %v9596
        %9621 = vst [vmem:[%s354 + $0x90] sm:$0xff] %v9597
        %9622 = vst [vmem:[%s354 + $0x98] sm:$0xff] %v9598
        %9623 = vst [vmem:[%s354 + $0xa0] sm:$0xff] %v9599
        %9624 = vst [vmem:[%s354 + $0xa8] sm:$0xff] %v9600
        %9625 = vst [vmem:[%s354 + $0xb0] sm:$0xff] %v9601
        %9626 = vst [vmem:[%s354 + $0xb8] sm:$0xff] %v9602
        %s9627 = sand.u32 %s227, 1
        %s9628 = scalar_lea.sflag [#allocation4], %s9627
        %s9629 = sand.u32 %s227, 1
        %s9630 = smul.addr %s9629, 192
        %s9631 = scalar_lea.vmem [#allocation5], %s9630
        // Predicated region
        $region57: #{tpu_custom_call.1} parent=51 // pred_check
          %p9632 = pneg %p237
        $region58: #{tpu_custom_call.1} parent=51 // pred_check_branch
          %9634 = sbr.rel (%p9632) target = $region60
        $region59: #{tpu_custom_call.1} parent=51 // pred_region
          %s9635 = smul.u32 12, %s30
          %s9637 = ssub.s32 3072, 3072
          %9638 = vsyncadd %s9628, %s9637
          %s9639 = smul.addr %s29, 48
          %s9640 = sadd.s32 %s9635, %s9639
          %s9641 = smul.addr %s9640, 128
          %s9642 = scalar_lea.hbm %s8, %s9641
          %s9643 = sshll.u32 %s9631, 4
          %s9644 = int_to_ptr.vmem [resolvable:$true] %s9643
          %9649 = dma.vmem_to_hbm [thread:$0]  %s9644, 3072, %s9642, %s9628, 1536, 3072, 96
        $region60: #{tpu_custom_call.1} parent=51 // pred_fallthru
          _
      $region52: #{tpu_custom_call.1} parent=5 // pred_fallthru
        _
      %p9650 = scmp.le.s32.totalorder 2, %s20
      // Predicated region
      $region61: #{tpu_custom_call.1} parent=5 // pred_check
        %p9651 = pneg %p9650
      $region62: #{tpu_custom_call.1} parent=5 // pred_check_branch
        %9653 = sbr.rel (%p9651) target = $region64
      $region63: #{tpu_custom_call.1} parent=5 // pred_region
        %s9654 = ssub.s32 %s20, 2
        // Predicated region
        $region65: #{tpu_custom_call.1} parent=63 // pred_check
          %p9655 = pneg %p243
        $region66: #{tpu_custom_call.1} parent=63 // pred_check_branch
          %9657 = sbr.rel (%p9655) target = $region68
        $region67: #{tpu_custom_call.1} parent=63 // pred_region
          %s9658 = sand.u32 %s228, 1
          %s9659 = scalar_lea.sflag [#allocation4], %s9658
          %s9660 = sand.u32 %s228, 1
          %s9661 = smul.addr %s9660, 192
          %s9662 = scalar_lea.vmem [#allocation5], %s9661
          %9663 = dma.done %s9659, 3072
        $region68: #{tpu_custom_call.1} parent=63 // pred_fallthru
          _
      $region64: #{tpu_custom_call.1} parent=5 // pred_fallthru
        _
    $region6: #{tpu_custom_call.1} parent=1 // loop_footer
      %s24 = sadd.s32 1, %s20
    $region7: #{tpu_custom_call.1} parent=1 // loop_footer_branch
      %19 = sbr.rel target = $region3
    $region8: #{tpu_custom_call.1} parent=1 // loop_exit
      _
    %9664 = vsyncpa [#allocation3], 1
    %s9665 = scalar_lea.sflag [#allocation3], 1
    %9666 = vsyncpa %s9665, 1
    %9667 = vsyncpa [#allocation4], 1
    %s9668 = scalar_lea.sflag [#allocation4], 1
    %9669 = vsyncpa %s9668, 1

</llo_original>
